<compile_context>
chip_gen: v7x
topology: tpu7x:2x2x1
jax: 0.10.0
libtpu: 0.0.40
codegen_flags: <defaults>
</compile_context>

<pallas_src>
import functools

import jax
import jax.numpy as jnp
from jax.experimental import pallas as pl
from jax.experimental.pallas import tpu as pltpu


# ----------------------------------------------------------------------------
# helpers / hardware-aware defaults
# ----------------------------------------------------------------------------
_K_SINGLE_MAX = 2048     # K <= this -> single K block (full-dim block, no pad)
_TK_TILE = 512           # K tile once K-tiling kicks in
_TN_TILE = 512           # N tile once N > 512


def _round_up(x, m):
    return (x + m - 1) // m * m


@functools.lru_cache(maxsize=None)
def _hw_defaults():
    """(big_tm, vmem_limit_bytes) chosen per TPU generation."""
    vmem_cap = 64 * 1024 * 1024                      # conservative (v7x per-TC)
    try:
        vmem_cap = int(pltpu.get_tpu_info().vmem_capacity_bytes)
    except Exception:
        pass
    kind = ""
    try:
        kind = jax.devices()[0].device_kind.lower()
    except Exception:
        pass
    big_tm = 128 if "v5" in kind else 256            # v5e MXU is 128x128
    vmem_limit = min(int(vmem_cap * 3 // 4), 100 * 1024 * 1024)
    vmem_limit = max(vmem_limit, 32 * 1024 * 1024)
    return big_tm, vmem_limit


def _choose_tm(m, big_tm):
    if m >= 2 * big_tm:
        return big_tm
    if m >= 128:
        return 128
    return min(_round_up(m, 16), 128)   # small-M path (batch-sized FC rows)


def _padded_k(k):
    """No pad for single-K-step layers; pad to TK multiple only when K-tiled."""
    if k <= _K_SINGLE_MAX:
        return k
    return _round_up(k, _TK_TILE)


def _padded_n(n):
    if n <= _TN_TILE:
        return n
    return _round_up(n, _TN_TILE)


# ----------------------------------------------------------------------------
# Pallas kernels: (M,N[,K])-tiled matmul + bias (+ReLU), bf16 in, f32 math
# ----------------------------------------------------------------------------
def _matmul_bias_kernel_1k(x_ref, w_ref, b_ref, o_ref, *, relu):
    # Single K step: no scratch accumulator, one fused dot + bias (+ relu).
    out = jnp.dot(x_ref[...], w_ref[...],
                  preferred_element_type=jnp.float32) + b_ref[...]
    if relu:
        out = jnp.maximum(out, 0.0)
    o_ref[...] = out.astype(o_ref.dtype)


def _matmul_bias_kernel_kt(x_ref, w_ref, b_ref, o_ref, acc_ref, *, relu):
    k = pl.program_id(2)

    @pl.when(k == 0)
    def _():
        acc_ref[...] = jnp.zeros_like(acc_ref)

    acc_ref[...] += jnp.dot(x_ref[...], w_ref[...],
                            preferred_element_type=jnp.float32)

    @pl.when(k == pl.num_programs(2) - 1)
    def _():
        out = acc_ref[...] + b_ref[...]
        if relu:
            out = jnp.maximum(out, 0.0)
        o_ref[...] = out.astype(o_ref.dtype)


def matmul_bias_act(x, w, b, *, relu, out_dtype=jnp.bfloat16, n_out=None):
    """y = x @ w + b (optional ReLU) via a Pallas MXU kernel.

    x: (M, K) float.  w: (Kp, Np) bf16, K/N padded by prepare_params().
    b: (Np,) f32.  Returns (M, n_out) in out_dtype.
    """
    M, K = x.shape
    Kp, Np = w.shape
    assert K <= Kp, (K, Kp)

    x = x.astype(jnp.bfloat16)
    if Kp > K:                               # only for K-tiled layers (huge fc1)
        x = jnp.pad(x, ((0, 0), (0, Kp - K)))

    big_tm, vmem_limit = _hw_defaults()
    TM = _choose_tm(M, big_tm)
    Mp = _round_up(M, TM)
    if Mp > M:
        x = jnp.pad(x, ((0, Mp - M), (0, 0)))

    TN = Np if Np <= _TN_TILE else _TN_TILE
    TK = Kp if Kp <= _K_SINGLE_MAX else _TK_TILE
    nk = Kp // TK
    b2 = b.reshape(1, Np).astype(jnp.float32)

    if nk == 1:
        kernel = functools.partial(_matmul_bias_kernel_1k, relu=relu)
        grid = (Mp // TM, Np // TN)
        in_specs = [
            pl.BlockSpec((TM, TK), lambda i, n: (i, 0)),
            pl.BlockSpec((TK, TN), lambda i, n: (0, n)),
            pl.BlockSpec((1, TN), lambda i, n: (0, n)),
        ]
        out_specs = pl.BlockSpec((TM, TN), lambda i, n: (i, n))
        scratch = []
        semantics = ("parallel", "parallel")
    else:
        kernel = functools.partial(_matmul_bias_kernel_kt, relu=relu)
        grid = (Mp // TM, Np // TN, nk)
        in_specs = [
            pl.BlockSpec((TM, TK), lambda i, n, k: (i, k)),
            pl.BlockSpec((TK, TN), lambda i, n, k: (k, n)),
            pl.BlockSpec((1, TN), lambda i, n, k: (0, n)),
        ]
        out_specs = pl.BlockSpec((TM, TN), lambda i, n, k: (i, n))
        scratch = [pltpu.VMEM((TM, TN), jnp.float32)]
        semantics = ("parallel", "parallel", "arbitrary")

    out = pl.pallas_call(
        kernel,
        out_shape=jax.ShapeDtypeStruct((Mp, Np), out_dtype),
        grid=grid,
        in_specs=in_specs,
        out_specs=out_specs,
        scratch_shapes=scratch,
        compiler_params=pltpu.CompilerParams(
            dimension_semantics=semantics,
            vmem_limit_bytes=vmem_limit,
        ),
    )(x, w, b2)

    if n_out is None:
        n_out = Np
    return out[:M, :n_out]


# ----------------------------------------------------------------------------
# NHWC conv / conv-transpose built on the Pallas matmul kernel
# ----------------------------------------------------------------------------
def conv2d_nhwc(x, w, b, *, stride, pad, relu, k=3, out_dtype=jnp.bfloat16):
    """x: NHWC.  w: prepared (K, Cout) bf16 im2col weight (kh, kw, cin order)."""
    N, H, W, C = x.shape
    Ho = (H + 2 * pad - k) // stride + 1
    Wo = (W + 2 * pad - k) // stride + 1
    Cout = w.shape[1]                         # conv Cout <= 128 -> never N-padded
    xb = x.astype(jnp.bfloat16)
    xp = jnp.pad(xb, ((0, 0), (pad, pad), (pad, pad), (0, 0)))
    patches = [
        xp[:, kh:kh + stride * Ho:stride, kw:kw + stride * Wo:stride, :]
        for kh in range(k) for kw in range(k)
    ]
    cols = jnp.concatenate(patches, axis=-1).reshape(N * Ho * Wo, k * k * C)
    y = matmul_bias_act(cols, w, b, relu=relu, out_dtype=out_dtype)
    return y.reshape(N, Ho, Wo, Cout)         # already NHWC, no transpose


def conv_transpose2d_s2(x, w_sub, b_sub, *, relu):
    """3x3 ConvTranspose2d (stride=2, padding=1, output_padding=1) via sub-pixel
    decomposition: one fused (4*Cin -> 4*Cout) matmul on the UN-dilated input
    (no zero-stuffing -> no wasted MXU FLOPs), then phase interleave."""
    N, H, W, C = x.shape
    Cout = w_sub.shape[1] // 4
    xb = x.astype(jnp.bfloat16)
    xp = jnp.pad(xb, ((0, 0), (0, 1), (0, 1), (0, 0)))
    cols = jnp.concatenate(
        [xp[:, 0:H, 0:W, :], xp[:, 0:H, 1:W + 1, :],
         xp[:, 1:H + 1, 0:W, :], xp[:, 1:H + 1, 1:W + 1, :]],
        axis=-1).reshape(N * H * W, 4 * C)
    y = matmul_bias_act(cols, w_sub, b_sub, relu=relu, out_dtype=jnp.bfloat16)
    # Phase interleave left to XLA (a fused copy); folding it into the output
    # index_map is not a rectangular block pattern in (2H,2W) space.
    y = y.reshape(N, H, W, 2, 2, Cout).transpose(0, 1, 3, 2, 4, 5)
    return y.reshape(N, 2 * H, 2 * W, Cout)


def maxpool2d_nhwc(x, p):
    # Plain XLA reduction: for this tiny 1-channel mask a pallas_call launch
    # costs more than the compute, and XLA fuses it for free.
    N, H, W, C = x.shape
    return x.reshape(N, H // p, p, W // p, p, C).max(axis=(2, 4))


# ----------------------------------------------------------------------------
# One-time weight preparation (transposes/flips/sub-pixel repack, pad, bf16)
# ----------------------------------------------------------------------------
def _prep_matmul(wm, b, *, k_pad_to=None, n_pad_to=None):
    """(K, N) f32 weight + (N,) bias -> ((Kp, Np) bf16, (Np,) f32)."""
    K, N = wm.shape
    Kp = k_pad_to if k_pad_to is not None else _padded_k(K)
    Np = n_pad_to if n_pad_to is not None else _padded_n(N)
    assert Kp >= K and Np >= N
    if Kp > K or Np > N:
        wm = jnp.pad(wm, ((0, Kp - K), (0, Np - N)))
    b = jnp.asarray(b, jnp.float32)
    if Np > N:
        b = jnp.pad(b, (0, Np - N))
    return wm.astype(jnp.bfloat16), b


def _prep_conv(w_pt, b):
    """PyTorch Conv2d weight (Cout, Cin, k, k) -> (k*k*Cin [kh,kw,cin], Cout)."""
    Cout, Cin, k, _ = w_pt.shape
    wm = jnp.transpose(w_pt, (2, 3, 1, 0)).reshape(k * k * Cin, Cout)
    return _prep_matmul(wm, b)


def _prep_convt_s1(wt, b):
    """ConvTranspose2d (stride=1, pad=1) weight (Cin, Cout, 3, 3) -> equivalent
    direct-conv weight (flip spatially, swap in/out channels), then im2col form."""
    w = jnp.flip(wt, axis=(2, 3)).transpose(1, 0, 2, 3)       # (Cout, Cin, 3, 3)
    return _prep_conv(w, b)


def _prep_convt_s2(wt, b):
    """Sub-pixel repack of a stride-2 / pad-1 / output_padding-1 / 3x3
    ConvTranspose2d weight (Cin, Cout, 3, 3) into a fused matmul weight of shape
    (4*Cin, 4*Cout): rows = patches [(t,s),(t,s+1),(t+1,s),(t+1,s+1)],
    cols = output phases [(0,0),(0,1),(1,0),(1,1)] of the 2x upsampled grid."""
    Cin, Cout = wt.shape[0], wt.shape[1]
    w = jnp.flip(wt, axis=(2, 3)).transpose(1, 0, 2, 3)       # direct-conv taps

    def tap(a, c):                                            # (Cin, Cout)
        return w[:, :, a, c].T

    ws = jnp.zeros((4, Cin, 4, Cout), jnp.float32)
    ws = ws.at[0, :, 0, :].set(tap(1, 1))                     # phase (0,0)
    ws = ws.at[0, :, 1, :].set(tap(1, 0))                     # phase (0,1)
    ws = ws.at[1, :, 1, :].set(tap(1, 2))
    ws = ws.at[0, :, 2, :].set(tap(0, 1))                     # phase (1,0)
    ws = ws.at[2, :, 2, :].set(tap(2, 1))
    ws = ws.at[0, :, 3, :].set(tap(0, 0))                     # phase (1,1)
    ws = ws.at[1, :, 3, :].set(tap(0, 2))
    ws = ws.at[2, :, 3, :].set(tap(2, 0))
    ws = ws.at[3, :, 3, :].set(tap(2, 2))
    b_sub = jnp.tile(jnp.asarray(b, jnp.float32), 4)
    return _prep_matmul(ws.reshape(4 * Cin, 4 * Cout), b_sub)


def prepare_params(params):
    """One-time conversion of PyTorch-layout params into matmul-ready form."""
    prep = {}
    for name in ("enc1", "enc2", "enc3", "enc4"):
        prep[name + "_w"], prep[name + "_b"] = _prep_conv(
            params[name + "_w"], params[name + "_b"])
    # fc1: pad output 100 -> 128 (lane-dense stores); fc2: pad input 100 -> 128
    # so it can consume fc1's padded output directly (extra cols/rows are zero).
    prep["fc1_w"], prep["fc1_b"] = _prep_matmul(
        params["fc1_w"].T, params["fc1_b"], n_pad_to=128)
    prep["fc2_w"], prep["fc2_b"] = _prep_matmul(
        params["fc2_w"].T, params["fc2_b"], k_pad_to=128)
    for name in ("dec1", "dec2"):                             # stride-2 deconvs
        prep[name + "_w"], prep[name + "_b"] = _prep_convt_s2(
            params[name + "_w"], params[name + "_b"])
    for name in ("dec3", "dec4"):                             # stride-1 deconvs
        prep[name + "_w"], prep[name + "_b"] = _prep_convt_s1(
            params[name + "_w"], params[name + "_b"])
    return prep


# ----------------------------------------------------------------------------
# Parameter init (deterministic, synthetic, PyTorch layouts)
# ----------------------------------------------------------------------------
def init_params(image_size, latent_dim=100, seed=0):
    del1 = image_size // 4
    key = jax.random.PRNGKey(seed)
    params = {}

    def nxt():
        nonlocal key
        key, sub = jax.random.split(key)
        return sub

    def wconv(cout, cin, k=3):
        return 0.05 * jax.random.normal(nxt(), (cout, cin, k, k), jnp.float32)

    def wconvt(cin, cout, k=3):
        return 0.05 * jax.random.normal(nxt(), (cin, cout, k, k), jnp.float32)

    def bias(c):
        return 0.01 * jax.random.normal(nxt(), (c,), jnp.float32)

    params["enc1_w"], params["enc1_b"] = wconv(16, 3), bias(16)
    params["enc2_w"], params["enc2_b"] = wconv(32, 16), bias(32)
    params["enc3_w"], params["enc3_b"] = wconv(64, 32), bias(64)
    params["enc4_w"], params["enc4_b"] = wconv(128, 64), bias(128)

    fc_in = 128 * del1 * del1
    params["fc1_w"] = 0.02 * jax.random.normal(nxt(), (latent_dim, fc_in), jnp.float32)
    params["fc1_b"] = bias(latent_dim)
    params["fc2_w"] = 0.02 * jax.random.normal(nxt(), (fc_in, latent_dim), jnp.float32)
    params["fc2_b"] = bias(fc_in)

    params["dec1_w"], params["dec1_b"] = wconvt(129, 64), bias(64)
    params["dec2_w"], params["dec2_b"] = wconvt(65, 32), bias(32)
    params["dec3_w"], params["dec3_b"] = wconvt(33, 16), bias(16)
    params["dec4_w"], params["dec4_b"] = wconvt(17, 3), bias(3)
    return params


# ----------------------------------------------------------------------------
# DAE forward (mirrors the PyTorch module; NHWC/bf16 internally, NCHW/f32 edges)
# ----------------------------------------------------------------------------
def dae_forward(prep, x_nchw, mask_nchw, image_size, latent_dim=100):
    del1 = image_size // 4
    fc_in = 128 * del1 * del1
    n = x_nchw.shape[0]

    x = x_nchw.transpose(0, 2, 3, 1).astype(jnp.bfloat16)     # NHWC once
    mask = mask_nchw.transpose(0, 2, 3, 1).astype(jnp.bfloat16)

    # encoder (hidden activations stay bf16 -> half the HBM traffic)
    x = conv2d_nhwc(x, prep["enc1_w"], prep["enc1_b"], stride=1, pad=1, relu=True)
    x = conv2d_nhwc(x, prep["enc2_w"], prep["enc2_b"], stride=1, pad=1, relu=True)
    x = conv2d_nhwc(x, prep["enc3_w"], prep["enc3_b"], stride=2, pad=1, relu=True)
    x = conv2d_nhwc(x, prep["enc4_w"], prep["enc4_b"], stride=2, pad=1, relu=True)

    # bottleneck FC layers — flatten in NCHW order to match PyTorch's .view()
    z_in = x.transpose(0, 3, 1, 2).reshape(n, fc_in)
    z128 = matmul_bias_act(z_in, prep["fc1_w"], prep["fc1_b"],
                           relu=False, out_dtype=jnp.float32)           # (n,128)
    h = matmul_bias_act(z128, prep["fc2_w"], prep["fc2_b"],
                        relu=False, out_dtype=jnp.bfloat16, n_out=fc_in)
    x_hat = h.reshape(n, 128, del1, del1).transpose(0, 2, 3, 1)         # NHWC

    # decoder with mask skip-connections (channel concat = last axis in NHWC)
    mask_l1 = maxpool2d_nhwc(mask, 4)
    x_hat = jnp.concatenate((x_hat, mask_l1), axis=-1)
    x_hat = conv_transpose2d_s2(x_hat, prep["dec1_w"], prep["dec1_b"], relu=True)

    mask_l2 = maxpool2d_nhwc(mask, 2)
    x_hat = jnp.concatenate((x_hat, mask_l2), axis=-1)
    x_hat = conv_transpose2d_s2(x_hat, prep["dec2_w"], prep["dec2_b"], relu=True)

    x_hat = jnp.concatenate((x_hat, mask), axis=-1)
    x_hat = conv2d_nhwc(x_hat, prep["dec3_w"], prep["dec3_b"],
                        stride=1, pad=1, relu=True)

    x_hat = jnp.concatenate((x_hat, mask), axis=-1)
    x_hat = conv2d_nhwc(x_hat, prep["dec4_w"], prep["dec4_b"],
                        stride=1, pad=1, relu=False, out_dtype=jnp.float32)

    z = z128[:, :latent_dim]                                   # drop pad cols
    return z, x_hat.transpose(0, 3, 1, 2)                      # back to NCHW


if __name__ == "__main__":
    IMAGE_SIZE = 16   # small, divisible by 4 as the module requires
    BATCH = 2

    params = init_params(IMAGE_SIZE, seed=0)
    prep = prepare_params(params)             # one-time weight repack

    key = jax.random.PRNGKey(0)
    kx, km = jax.random.split(key)
    x = jax.random.normal(kx, (BATCH, 3, IMAGE_SIZE, IMAGE_SIZE), jnp.float32)
    mask = (jax.random.uniform(km, (BATCH, 1, IMAGE_SIZE, IMAGE_SIZE)) > 0.5
            ).astype(jnp.float32)

    fwd = jax.jit(functools.partial(dae_forward, image_size=IMAGE_SIZE))
    z, x_hat = fwd(prep, x, mask)
    jax.block_until_ready((z, x_hat))

    assert z.shape == (BATCH, 100), z.shape
    assert z.dtype == jnp.float32, z.dtype
    assert x_hat.shape == (BATCH, 3, IMAGE_SIZE, IMAGE_SIZE), x_hat.shape
    assert x_hat.dtype == jnp.float32, x_hat.dtype
    print("KERNEL_OK")
</pallas_src>

<mosaic_0001>
module attributes {stable_mosaic.version = 11 : i64} {
  func.func @_matmul_bias_kernel_1k(%arg0: i32, %arg1: i32, %arg2: memref<256x27xbf16, #tpu.memory_space<vmem>>, %arg3: memref<27x16xbf16, #tpu.memory_space<vmem>>, %arg4: memref<1x16xf32, #tpu.memory_space<vmem>>, %arg5: memref<256x16xbf16, #tpu.memory_space<vmem>>) attributes {dimension_semantics = [#tpu.dimension_semantics<parallel>, #tpu.dimension_semantics<parallel>], iteration_bounds = array<i64: 2, 1>, scalar_prefetch = 0 : i64, scratch_operands = 0 : i64, tpu.core_type = #tpu.core_type<tc>, window_params = [{transform_indices = @transform_0, window_bounds = array<i64: 256, 27>}, {transform_indices = @transform_1, window_bounds = array<i64: 27, 16>}, {transform_indices = @transform_2, window_bounds = array<i64: 1, 16>}, {transform_indices = @transform_3, window_bounds = array<i64: 256, 16>}]} {
    %c0 = arith.constant 0 : index
    %c0_0 = arith.constant 0 : index
    %0 = vector.load %arg2[%c0, %c0_0] : memref<256x27xbf16, #tpu.memory_space<vmem>>, vector<256x27xbf16>
    %c0_1 = arith.constant 0 : index
    %c0_2 = arith.constant 0 : index
    %1 = vector.load %arg3[%c0_1, %c0_2] : memref<27x16xbf16, #tpu.memory_space<vmem>>, vector<27x16xbf16>
    %cst = arith.constant dense<0.000000e+00> : vector<256x16xf32>
    %2 = tpu.matmul %0, %1, %cst {dimension_numbers = #tpu.dot_dimension_numbers<[1], [0], [0], [1], [0, 0, 1, 1], [], []>} : vector<256x27xbf16>, vector<27x16xbf16>, vector<256x16xf32> -> vector<256x16xf32>
    %c0_3 = arith.constant 0 : index
    %c0_4 = arith.constant 0 : index
    %3 = vector.load %arg4[%c0_3, %c0_4] : memref<1x16xf32, #tpu.memory_space<vmem>>, vector<1x16xf32>
    %4 = vector.broadcast %3 : vector<1x16xf32> to vector<256x16xf32>
    %5 = arith.addf %2, %4 : vector<256x16xf32>
    %cst_5 = arith.constant 0.000000e+00 : f32
    %6 = vector.broadcast %cst_5 : f32 to vector<256x16xf32>
    %7 = arith.maximumf %5, %6 : vector<256x16xf32>
    %8 = arith.truncf %7 : vector<256x16xf32> to vector<256x16xbf16>
    %c0_6 = arith.constant 0 : index
    %c0_7 = arith.constant 0 : index
    %9 = vector.load %arg5[%c0_6, %c0_7] : memref<256x16xbf16, #tpu.memory_space<vmem>>, vector<256x16xbf16>
    tpu.vector_store %arg5[%c0_6, %c0_7], %8 {strides = array<i32>} : memref<256x16xbf16, #tpu.memory_space<vmem>>, vector<256x16xbf16>,
    return
  }
  func.func @transform_0(%arg0: i32, %arg1: i32) -> (i32, i32) {
    %c0_i32 = arith.constant 0 : i32
    %c0_i32_0 = arith.constant 0 : i32
    return %arg0, %c0_i32 : i32, i32
  }
  func.func @transform_1(%arg0: i32, %arg1: i32) -> (i32, i32) {
    %c0_i32 = arith.constant 0 : i32
    %c0_i32_0 = arith.constant 0 : i32
    return %c0_i32, %arg1 : i32, i32
  }
  func.func @transform_2(%arg0: i32, %arg1: i32) -> (i32, i32) {
    %c0_i32 = arith.constant 0 : i32
    %c0_i32_0 = arith.constant 0 : i32
    return %c0_i32, %arg1 : i32, i32
  }
  func.func @transform_3(%arg0: i32, %arg1: i32) -> (i32, i32) {
    %c0_i32 = arith.constant 0 : i32
    return %arg0, %arg1 : i32, i32
  }
}

module attributes {stable_mosaic.version = 11 : i64} {
  func.func @_matmul_bias_kernel_1k(%arg0: i32, %arg1: i32, %arg2: memref<256x144xbf16, #tpu.memory_space<vmem>>, %arg3: memref<144x32xbf16, #tpu.memory_space<vmem>>, %arg4: memref<1x32xf32, #tpu.memory_space<vmem>>, %arg5: memref<256x32xbf16, #tpu.memory_space<vmem>>) attributes {dimension_semantics = [#tpu.dimension_semantics<parallel>, #tpu.dimension_semantics<parallel>], iteration_bounds = array<i64: 2, 1>, scalar_prefetch = 0 : i64, scratch_operands = 0 : i64, tpu.core_type = #tpu.core_type<tc>, window_params = [{transform_indices = @transform_0, window_bounds = array<i64: 256, 144>}, {transform_indices = @transform_1, window_bounds = array<i64: 144, 32>}, {transform_indices = @transform_2, window_bounds = array<i64: 1, 32>}, {transform_indices = @transform_3, window_bounds = array<i64: 256, 32>}]} {
    %c0 = arith.constant 0 : index
    %c0_0 = arith.constant 0 : index
    %0 = vector.load %arg2[%c0, %c0_0] : memref<256x144xbf16, #tpu.memory_space<vmem>>, vector<256x144xbf16>
    %c0_1 = arith.constant 0 : index
    %c0_2 = arith.constant 0 : index
    %1 = vector.load %arg3[%c0_1, %c0_2] : memref<144x32xbf16, #tpu.memory_space<vmem>>, vector<144x32xbf16>
    %cst = arith.constant dense<0.000000e+00> : vector<256x32xf32>
    %2 = tpu.matmul %0, %1, %cst {dimension_numbers = #tpu.dot_dimension_numbers<[1], [0], [0], [1], [0, 0, 1, 1], [], []>} : vector<256x144xbf16>, vector<144x32xbf16>, vector<256x32xf32> -> vector<256x32xf32>
    %c0_3 = arith.constant 0 : index
    %c0_4 = arith.constant 0 : index
    %3 = vector.load %arg4[%c0_3, %c0_4] : memref<1x32xf32, #tpu.memory_space<vmem>>, vector<1x32xf32>
    %4 = vector.broadcast %3 : vector<1x32xf32> to vector<256x32xf32>
    %5 = arith.addf %2, %4 : vector<256x32xf32>
    %cst_5 = arith.constant 0.000000e+00 : f32
    %6 = vector.broadcast %cst_5 : f32 to vector<256x32xf32>
    %7 = arith.maximumf %5, %6 : vector<256x32xf32>
    %8 = arith.truncf %7 : vector<256x32xf32> to vector<256x32xbf16>
    %c0_6 = arith.constant 0 : index
    %c0_7 = arith.constant 0 : index
    %9 = vector.load %arg5[%c0_6, %c0_7] : memref<256x32xbf16, #tpu.memory_space<vmem>>, vector<256x32xbf16>
    tpu.vector_store %arg5[%c0_6, %c0_7], %8 {strides = array<i32>} : memref<256x32xbf16, #tpu.memory_space<vmem>>, vector<256x32xbf16>,
    return
  }
  func.func @transform_0(%arg0: i32, %arg1: i32) -> (i32, i32) {
    %c0_i32 = arith.constant 0 : i32
    %c0_i32_0 = arith.constant 0 : i32
    return %arg0, %c0_i32 : i32, i32
  }
  func.func @transform_1(%arg0: i32, %arg1: i32) -> (i32, i32) {
    %c0_i32 = arith.constant 0 : i32
    %c0_i32_0 = arith.constant 0 : i32
    return %c0_i32, %arg1 : i32, i32
  }
  func.func @transform_2(%arg0: i32, %arg1: i32) -> (i32, i32) {
    %c0_i32 = arith.constant 0 : i32
    %c0_i32_0 = arith.constant 0 : i32
    return %c0_i32, %arg1 : i32, i32
  }
  func.func @transform_3(%arg0: i32, %arg1: i32) -> (i32, i32) {
    %c0_i32 = arith.constant 0 : i32
    return %arg0, %arg1 : i32, i32
  }
}

module attributes {stable_mosaic.version = 11 : i64} {
  func.func @_matmul_bias_kernel_1k(%arg0: i32, %arg1: i32, %arg2: memref<128x288xbf16, #tpu.memory_space<vmem>>, %arg3: memref<288x64xbf16, #tpu.memory_space<vmem>>, %arg4: memref<1x64xf32, #tpu.memory_space<vmem>>, %arg5: memref<128x64xbf16, #tpu.memory_space<vmem>>) attributes {dimension_semantics = [#tpu.dimension_semantics<parallel>, #tpu.dimension_semantics<parallel>], iteration_bounds = array<i64: 1, 1>, scalar_prefetch = 0 : i64, scratch_operands = 0 : i64, tpu.core_type = #tpu.core_type<tc>, window_params = [{transform_indices = @transform_0, window_bounds = array<i64: 128, 288>}, {transform_indices = @transform_1, window_bounds = array<i64: 288, 64>}, {transform_indices = @transform_2, window_bounds = array<i64: 1, 64>}, {transform_indices = @transform_3, window_bounds = array<i64: 128, 64>}]} {
    %c0 = arith.constant 0 : index
    %c0_0 = arith.constant 0 : index
    %0 = vector.load %arg2[%c0, %c0_0] : memref<128x288xbf16, #tpu.memory_space<vmem>>, vector<128x288xbf16>
    %c0_1 = arith.constant 0 : index
    %c0_2 = arith.constant 0 : index
    %1 = vector.load %arg3[%c0_1, %c0_2] : memref<288x64xbf16, #tpu.memory_space<vmem>>, vector<288x64xbf16>
    %cst = arith.constant dense<0.000000e+00> : vector<128x64xf32>
    %2 = tpu.matmul %0, %1, %cst {dimension_numbers = #tpu.dot_dimension_numbers<[1], [0], [0], [1], [0, 0, 1, 1], [], []>} : vector<128x288xbf16>, vector<288x64xbf16>, vector<128x64xf32> -> vector<128x64xf32>
    %c0_3 = arith.constant 0 : index
    %c0_4 = arith.constant 0 : index
    %3 = vector.load %arg4[%c0_3, %c0_4] : memref<1x64xf32, #tpu.memory_space<vmem>>, vector<1x64xf32>
    %4 = vector.broadcast %3 : vector<1x64xf32> to vector<128x64xf32>
    %5 = arith.addf %2, %4 : vector<128x64xf32>
    %cst_5 = arith.constant 0.000000e+00 : f32
    %6 = vector.broadcast %cst_5 : f32 to vector<128x64xf32>
    %7 = arith.maximumf %5, %6 : vector<128x64xf32>
    %8 = arith.truncf %7 : vector<128x64xf32> to vector<128x64xbf16>
    %c0_6 = arith.constant 0 : index
    %c0_7 = arith.constant 0 : index
    %9 = vector.load %arg5[%c0_6, %c0_7] : memref<128x64xbf16, #tpu.memory_space<vmem>>, vector<128x64xbf16>
    tpu.vector_store %arg5[%c0_6, %c0_7], %8 {strides = array<i32>} : memref<128x64xbf16, #tpu.memory_space<vmem>>, vector<128x64xbf16>,
    return
  }
  func.func @transform_0(%arg0: i32, %arg1: i32) -> (i32, i32) {
    %c0_i32 = arith.constant 0 : i32
    %c0_i32_0 = arith.constant 0 : i32
    return %arg0, %c0_i32 : i32, i32
  }
  func.func @transform_1(%arg0: i32, %arg1: i32) -> (i32, i32) {
    %c0_i32 = arith.constant 0 : i32
    %c0_i32_0 = arith.constant 0 : i32
    return %c0_i32, %arg1 : i32, i32
  }
  func.func @transform_2(%arg0: i32, %arg1: i32) -> (i32, i32) {
    %c0_i32 = arith.constant 0 : i32
    %c0_i32_0 = arith.constant 0 : i32
    return %c0_i32, %arg1 : i32, i32
  }
  func.func @transform_3(%arg0: i32, %arg1: i32) -> (i32, i32) {
    %c0_i32 = arith.constant 0 : i32
    return %arg0, %arg1 : i32, i32
  }
}

module attributes {stable_mosaic.version = 11 : i64} {
  func.func @_matmul_bias_kernel_1k(%arg0: i32, %arg1: i32, %arg2: memref<32x576xbf16, #tpu.memory_space<vmem>>, %arg3: memref<576x128xbf16, #tpu.memory_space<vmem>>, %arg4: memref<1x128xf32, #tpu.memory_space<vmem>>, %arg5: memref<32x128xbf16, #tpu.memory_space<vmem>>) attributes {dimension_semantics = [#tpu.dimension_semantics<parallel>, #tpu.dimension_semantics<parallel>], iteration_bounds = array<i64: 1, 1>, scalar_prefetch = 0 : i64, scratch_operands = 0 : i64, tpu.core_type = #tpu.core_type<tc>, window_params = [{transform_indices = @transform_0, window_bounds = array<i64: 32, 576>}, {transform_indices = @transform_1, window_bounds = array<i64: 576, 128>}, {transform_indices = @transform_2, window_bounds = array<i64: 1, 128>}, {transform_indices = @transform_3, window_bounds = array<i64: 32, 128>}]} {
    %c0 = arith.constant 0 : index
    %c0_0 = arith.constant 0 : index
    %0 = vector.load %arg2[%c0, %c0_0] : memref<32x576xbf16, #tpu.memory_space<vmem>>, vector<32x576xbf16>
    %c0_1 = arith.constant 0 : index
    %c0_2 = arith.constant 0 : index
    %1 = vector.load %arg3[%c0_1, %c0_2] : memref<576x128xbf16, #tpu.memory_space<vmem>>, vector<576x128xbf16>
    %cst = arith.constant dense<0.000000e+00> : vector<32x128xf32>
    %2 = tpu.matmul %0, %1, %cst {dimension_numbers = #tpu.dot_dimension_numbers<[1], [0], [0], [1], [0, 0, 1, 1], [], []>} : vector<32x576xbf16>, vector<576x128xbf16>, vector<32x128xf32> -> vector<32x128xf32>
    %c0_3 = arith.constant 0 : index
    %c0_4 = arith.constant 0 : index
    %3 = vector.load %arg4[%c0_3, %c0_4] : memref<1x128xf32, #tpu.memory_space<vmem>>, vector<1x128xf32>
    %4 = vector.broadcast %3 : vector<1x128xf32> to vector<32x128xf32>
    %5 = arith.addf %2, %4 : vector<32x128xf32>
    %cst_5 = arith.constant 0.000000e+00 : f32
    %6 = vector.broadcast %cst_5 : f32 to vector<32x128xf32>
    %7 = arith.maximumf %5, %6 : vector<32x128xf32>
    %8 = arith.truncf %7 : vector<32x128xf32> to vector<32x128xbf16>
    %c0_6 = arith.constant 0 : index
    %c0_7 = arith.constant 0 : index
    %9 = vector.load %arg5[%c0_6, %c0_7] : memref<32x128xbf16, #tpu.memory_space<vmem>>, vector<32x128xbf16>
    tpu.vector_store %arg5[%c0_6, %c0_7], %8 {strides = array<i32>} : memref<32x128xbf16, #tpu.memory_space<vmem>>, vector<32x128xbf16>,
    return
  }
  func.func @transform_0(%arg0: i32, %arg1: i32) -> (i32, i32) {
    %c0_i32 = arith.constant 0 : i32
    %c0_i32_0 = arith.constant 0 : i32
    return %arg0, %c0_i32 : i32, i32
  }
  func.func @transform_1(%arg0: i32, %arg1: i32) -> (i32, i32) {
    %c0_i32 = arith.constant 0 : i32
    %c0_i32_0 = arith.constant 0 : i32
    return %c0_i32, %arg1 : i32, i32
  }
  func.func @transform_2(%arg0: i32, %arg1: i32) -> (i32, i32) {
    %c0_i32 = arith.constant 0 : i32
    %c0_i32_0 = arith.constant 0 : i32
    return %c0_i32, %arg1 : i32, i32
  }
  func.func @transform_3(%arg0: i32, %arg1: i32) -> (i32, i32) {
    %c0_i32 = arith.constant 0 : i32
    return %arg0, %arg1 : i32, i32
  }
}

module attributes {stable_mosaic.version = 11 : i64} {
  func.func @_matmul_bias_kernel_1k(%arg0: i32, %arg1: i32, %arg2: memref<16x2048xbf16, #tpu.memory_space<vmem>>, %arg3: memref<2048x128xbf16, #tpu.memory_space<vmem>>, %arg4: memref<1x128xf32, #tpu.memory_space<vmem>>, %arg5: memref<16x128xf32, #tpu.memory_space<vmem>>) attributes {dimension_semantics = [#tpu.dimension_semantics<parallel>, #tpu.dimension_semantics<parallel>], iteration_bounds = array<i64: 1, 1>, scalar_prefetch = 0 : i64, scratch_operands = 0 : i64, tpu.core_type = #tpu.core_type<tc>, window_params = [{transform_indices = @transform_0, window_bounds = array<i64: 16, 2048>}, {transform_indices = @transform_1, window_bounds = array<i64: 2048, 128>}, {transform_indices = @transform_2, window_bounds = array<i64: 1, 128>}, {transform_indices = @transform_3, window_bounds = array<i64: 16, 128>}]} {
    %c0 = arith.constant 0 : index
    %c0_0 = arith.constant 0 : index
    %0 = vector.load %arg2[%c0, %c0_0] : memref<16x2048xbf16, #tpu.memory_space<vmem>>, vector<16x2048xbf16>
    %c0_1 = arith.constant 0 : index
    %c0_2 = arith.constant 0 : index
    %1 = vector.load %arg3[%c0_1, %c0_2] : memref<2048x128xbf16, #tpu.memory_space<vmem>>, vector<2048x128xbf16>
    %cst = arith.constant dense<0.000000e+00> : vector<16x128xf32>
    %2 = tpu.matmul %0, %1, %cst {dimension_numbers = #tpu.dot_dimension_numbers<[1], [0], [0], [1], [0, 0, 1, 1], [], []>} : vector<16x2048xbf16>, vector<2048x128xbf16>, vector<16x128xf32> -> vector<16x128xf32>
    %c0_3 = arith.constant 0 : index
    %c0_4 = arith.constant 0 : index
    %3 = vector.load %arg4[%c0_3, %c0_4] : memref<1x128xf32, #tpu.memory_space<vmem>>, vector<1x128xf32>
    %4 = vector.broadcast %3 : vector<1x128xf32> to vector<16x128xf32>
    %5 = arith.addf %2, %4 : vector<16x128xf32>
    %c0_5 = arith.constant 0 : index
    %c0_6 = arith.constant 0 : index
    %6 = vector.load %arg5[%c0_5, %c0_6] : memref<16x128xf32, #tpu.memory_space<vmem>>, vector<16x128xf32>
    tpu.vector_store %arg5[%c0_5, %c0_6], %5 {strides = array<i32>} : memref<16x128xf32, #tpu.memory_space<vmem>>, vector<16x128xf32>,
    return
  }
  func.func @transform_0(%arg0: i32, %arg1: i32) -> (i32, i32) {
    %c0_i32 = arith.constant 0 : i32
    %c0_i32_0 = arith.constant 0 : i32
    return %arg0, %c0_i32 : i32, i32
  }
  func.func @transform_1(%arg0: i32, %arg1: i32) -> (i32, i32) {
    %c0_i32 = arith.constant 0 : i32
    %c0_i32_0 = arith.constant 0 : i32
    return %c0_i32, %arg1 : i32, i32
  }
  func.func @transform_2(%arg0: i32, %arg1: i32) -> (i32, i32) {
    %c0_i32 = arith.constant 0 : i32
    %c0_i32_0 = arith.constant 0 : i32
    return %c0_i32, %arg1 : i32, i32
  }
  func.func @transform_3(%arg0: i32, %arg1: i32) -> (i32, i32) {
    %c0_i32 = arith.constant 0 : i32
    return %arg0, %arg1 : i32, i32
  }
}

module attributes {stable_mosaic.version = 11 : i64} {
  func.func @_matmul_bias_kernel_1k(%arg0: i32, %arg1: i32, %arg2: memref<16x128xbf16, #tpu.memory_space<vmem>>, %arg3: memref<128x512xbf16, #tpu.memory_space<vmem>>, %arg4: memref<1x512xf32, #tpu.memory_space<vmem>>, %arg5: memref<16x512xbf16, #tpu.memory_space<vmem>>) attributes {dimension_semantics = [#tpu.dimension_semantics<parallel>, #tpu.dimension_semantics<parallel>], iteration_bounds = array<i64: 1, 4>, scalar_prefetch = 0 : i64, scratch_operands = 0 : i64, tpu.core_type = #tpu.core_type<tc>, window_params = [{transform_indices = @transform_0, window_bounds = array<i64: 16, 128>}, {transform_indices = @transform_1, window_bounds = array<i64: 128, 512>}, {transform_indices = @transform_2, window_bounds = array<i64: 1, 512>}, {transform_indices = @transform_3, window_bounds = array<i64: 16, 512>}]} {
    %c0 = arith.constant 0 : index
    %c0_0 = arith.constant 0 : index
    %0 = vector.load %arg2[%c0, %c0_0] : memref<16x128xbf16, #tpu.memory_space<vmem>>, vector<16x128xbf16>
    %c0_1 = arith.constant 0 : index
    %c0_2 = arith.constant 0 : index
    %1 = vector.load %arg3[%c0_1, %c0_2] : memref<128x512xbf16, #tpu.memory_space<vmem>>, vector<128x512xbf16>
    %cst = arith.constant dense<0.000000e+00> : vector<16x512xf32>
    %2 = tpu.matmul %0, %1, %cst {dimension_numbers = #tpu.dot_dimension_numbers<[1], [0], [0], [1], [0, 0, 1, 1], [], []>} : vector<16x128xbf16>, vector<128x512xbf16>, vector<16x512xf32> -> vector<16x512xf32>
    %c0_3 = arith.constant 0 : index
    %c0_4 = arith.constant 0 : index
    %3 = vector.load %arg4[%c0_3, %c0_4] : memref<1x512xf32, #tpu.memory_space<vmem>>, vector<1x512xf32>
    %4 = vector.broadcast %3 : vector<1x512xf32> to vector<16x512xf32>
    %5 = arith.addf %2, %4 : vector<16x512xf32>
    %6 = arith.truncf %5 : vector<16x512xf32> to vector<16x512xbf16>
    %c0_5 = arith.constant 0 : index
    %c0_6 = arith.constant 0 : index
    %7 = vector.load %arg5[%c0_5, %c0_6] : memref<16x512xbf16, #tpu.memory_space<vmem>>, vector<16x512xbf16>
    tpu.vector_store %arg5[%c0_5, %c0_6], %6 {strides = array<i32>} : memref<16x512xbf16, #tpu.memory_space<vmem>>, vector<16x512xbf16>,
    return
  }
  func.func @transform_0(%arg0: i32, %arg1: i32) -> (i32, i32) {
    %c0_i32 = arith.constant 0 : i32
    %c0_i32_0 = arith.constant 0 : i32
    return %arg0, %c0_i32 : i32, i32
  }
  func.func @transform_1(%arg0: i32, %arg1: i32) -> (i32, i32) {
    %c0_i32 = arith.constant 0 : i32
    %c0_i32_0 = arith.constant 0 : i32
    return %c0_i32, %arg1 : i32, i32
  }
  func.func @transform_2(%arg0: i32, %arg1: i32) -> (i32, i32) {
    %c0_i32 = arith.constant 0 : i32
    %c0_i32_0 = arith.constant 0 : i32
    return %c0_i32, %arg1 : i32, i32
  }
  func.func @transform_3(%arg0: i32, %arg1: i32) -> (i32, i32) {
    %c0_i32 = arith.constant 0 : i32
    return %arg0, %arg1 : i32, i32
  }
}

module attributes {stable_mosaic.version = 11 : i64} {
  func.func @_matmul_bias_kernel_1k(%arg0: i32, %arg1: i32, %arg2: memref<32x516xbf16, #tpu.memory_space<vmem>>, %arg3: memref<516x256xbf16, #tpu.memory_space<vmem>>, %arg4: memref<1x256xf32, #tpu.memory_space<vmem>>, %arg5: memref<32x256xbf16, #tpu.memory_space<vmem>>) attributes {dimension_semantics = [#tpu.dimension_semantics<parallel>, #tpu.dimension_semantics<parallel>], iteration_bounds = array<i64: 1, 1>, scalar_prefetch = 0 : i64, scratch_operands = 0 : i64, tpu.core_type = #tpu.core_type<tc>, window_params = [{transform_indices = @transform_0, window_bounds = array<i64: 32, 516>}, {transform_indices = @transform_1, window_bounds = array<i64: 516, 256>}, {transform_indices = @transform_2, window_bounds = array<i64: 1, 256>}, {transform_indices = @transform_3, window_bounds = array<i64: 32, 256>}]} {
    %c0 = arith.constant 0 : index
    %c0_0 = arith.constant 0 : index
    %0 = vector.load %arg2[%c0, %c0_0] : memref<32x516xbf16, #tpu.memory_space<vmem>>, vector<32x516xbf16>
    %c0_1 = arith.constant 0 : index
    %c0_2 = arith.constant 0 : index
    %1 = vector.load %arg3[%c0_1, %c0_2] : memref<516x256xbf16, #tpu.memory_space<vmem>>, vector<516x256xbf16>
    %cst = arith.constant dense<0.000000e+00> : vector<32x256xf32>
    %2 = tpu.matmul %0, %1, %cst {dimension_numbers = #tpu.dot_dimension_numbers<[1], [0], [0], [1], [0, 0, 1, 1], [], []>} : vector<32x516xbf16>, vector<516x256xbf16>, vector<32x256xf32> -> vector<32x256xf32>
    %c0_3 = arith.constant 0 : index
    %c0_4 = arith.constant 0 : index
    %3 = vector.load %arg4[%c0_3, %c0_4] : memref<1x256xf32, #tpu.memory_space<vmem>>, vector<1x256xf32>
    %4 = vector.broadcast %3 : vector<1x256xf32> to vector<32x256xf32>
    %5 = arith.addf %2, %4 : vector<32x256xf32>
    %cst_5 = arith.constant 0.000000e+00 : f32
    %6 = vector.broadcast %cst_5 : f32 to vector<32x256xf32>
    %7 = arith.maximumf %5, %6 : vector<32x256xf32>
    %8 = arith.truncf %7 : vector<32x256xf32> to vector<32x256xbf16>
    %c0_6 = arith.constant 0 : index
    %c0_7 = arith.constant 0 : index
    %9 = vector.load %arg5[%c0_6, %c0_7] : memref<32x256xbf16, #tpu.memory_space<vmem>>, vector<32x256xbf16>
    tpu.vector_store %arg5[%c0_6, %c0_7], %8 {strides = array<i32>} : memref<32x256xbf16, #tpu.memory_space<vmem>>, vector<32x256xbf16>,
    return
  }
  func.func @transform_0(%arg0: i32, %arg1: i32) -> (i32, i32) {
    %c0_i32 = arith.constant 0 : i32
    %c0_i32_0 = arith.constant 0 : i32
    return %arg0, %c0_i32 : i32, i32
  }
  func.func @transform_1(%arg0: i32, %arg1: i32) -> (i32, i32) {
    %c0_i32 = arith.constant 0 : i32
    %c0_i32_0 = arith.constant 0 : i32
    return %c0_i32, %arg1 : i32, i32
  }
  func.func @transform_2(%arg0: i32, %arg1: i32) -> (i32, i32) {
    %c0_i32 = arith.constant 0 : i32
    %c0_i32_0 = arith.constant 0 : i32
    return %c0_i32, %arg1 : i32, i32
  }
  func.func @transform_3(%arg0: i32, %arg1: i32) -> (i32, i32) {
    %c0_i32 = arith.constant 0 : i32
    return %arg0, %arg1 : i32, i32
  }
}

module attributes {stable_mosaic.version = 11 : i64} {
  func.func @_matmul_bias_kernel_1k(%arg0: i32, %arg1: i32, %arg2: memref<128x260xbf16, #tpu.memory_space<vmem>>, %arg3: memref<260x128xbf16, #tpu.memory_space<vmem>>, %arg4: memref<1x128xf32, #tpu.memory_space<vmem>>, %arg5: memref<128x128xbf16, #tpu.memory_space<vmem>>) attributes {dimension_semantics = [#tpu.dimension_semantics<parallel>, #tpu.dimension_semantics<parallel>], iteration_bounds = array<i64: 1, 1>, scalar_prefetch = 0 : i64, scratch_operands = 0 : i64, tpu.core_type = #tpu.core_type<tc>, window_params = [{transform_indices = @transform_0, window_bounds = array<i64: 128, 260>}, {transform_indices = @transform_1, window_bounds = array<i64: 260, 128>}, {transform_indices = @transform_2, window_bounds = array<i64: 1, 128>}, {transform_indices = @transform_3, window_bounds = array<i64: 128, 128>}]} {
    %c0 = arith.constant 0 : index
    %c0_0 = arith.constant 0 : index
    %0 = vector.load %arg2[%c0, %c0_0] : memref<128x260xbf16, #tpu.memory_space<vmem>>, vector<128x260xbf16>
    %c0_1 = arith.constant 0 : index
    %c0_2 = arith.constant 0 : index
    %1 = vector.load %arg3[%c0_1, %c0_2] : memref<260x128xbf16, #tpu.memory_space<vmem>>, vector<260x128xbf16>
    %cst = arith.constant dense<0.000000e+00> : vector<128x128xf32>
    %2 = tpu.matmul %0, %1, %cst {dimension_numbers = #tpu.dot_dimension_numbers<[1], [0], [0], [1], [0, 0, 1, 1], [], []>} : vector<128x260xbf16>, vector<260x128xbf16>, vector<128x128xf32> -> vector<128x128xf32>
    %c0_3 = arith.constant 0 : index
    %c0_4 = arith.constant 0 : index
    %3 = vector.load %arg4[%c0_3, %c0_4] : memref<1x128xf32, #tpu.memory_space<vmem>>, vector<1x128xf32>
    %4 = vector.broadcast %3 : vector<1x128xf32> to vector<128x128xf32>
    %5 = arith.addf %2, %4 : vector<128x128xf32>
    %cst_5 = arith.constant 0.000000e+00 : f32
    %6 = vector.broadcast %cst_5 : f32 to vector<128x128xf32>
    %7 = arith.maximumf %5, %6 : vector<128x128xf32>
    %8 = arith.truncf %7 : vector<128x128xf32> to vector<128x128xbf16>
    %c0_6 = arith.constant 0 : index
    %c0_7 = arith.constant 0 : index
    %9 = vector.load %arg5[%c0_6, %c0_7] : memref<128x128xbf16, #tpu.memory_space<vmem>>, vector<128x128xbf16>
    tpu.vector_store %arg5[%c0_6, %c0_7], %8 {strides = array<i32>} : memref<128x128xbf16, #tpu.memory_space<vmem>>, vector<128x128xbf16>,
    return
  }
  func.func @transform_0(%arg0: i32, %arg1: i32) -> (i32, i32) {
    %c0_i32 = arith.constant 0 : i32
    %c0_i32_0 = arith.constant 0 : i32
    return %arg0, %c0_i32 : i32, i32
  }
  func.func @transform_1(%arg0: i32, %arg1: i32) -> (i32, i32) {
    %c0_i32 = arith.constant 0 : i32
    %c0_i32_0 = arith.constant 0 : i32
    return %c0_i32, %arg1 : i32, i32
  }
  func.func @transform_2(%arg0: i32, %arg1: i32) -> (i32, i32) {
    %c0_i32 = arith.constant 0 : i32
    %c0_i32_0 = arith.constant 0 : i32
    return %c0_i32, %arg1 : i32, i32
  }
  func.func @transform_3(%arg0: i32, %arg1: i32) -> (i32, i32) {
    %c0_i32 = arith.constant 0 : i32
    return %arg0, %arg1 : i32, i32
  }
}

module attributes {stable_mosaic.version = 11 : i64} {
  func.func @_matmul_bias_kernel_1k(%arg0: i32, %arg1: i32, %arg2: memref<256x297xbf16, #tpu.memory_space<vmem>>, %arg3: memref<297x16xbf16, #tpu.memory_space<vmem>>, %arg4: memref<1x16xf32, #tpu.memory_space<vmem>>, %arg5: memref<256x16xbf16, #tpu.memory_space<vmem>>) attributes {dimension_semantics = [#tpu.dimension_semantics<parallel>, #tpu.dimension_semantics<parallel>], iteration_bounds = array<i64: 2, 1>, scalar_prefetch = 0 : i64, scratch_operands = 0 : i64, tpu.core_type = #tpu.core_type<tc>, window_params = [{transform_indices = @transform_0, window_bounds = array<i64: 256, 297>}, {transform_indices = @transform_1, window_bounds = array<i64: 297, 16>}, {transform_indices = @transform_2, window_bounds = array<i64: 1, 16>}, {transform_indices = @transform_3, window_bounds = array<i64: 256, 16>}]} {
    %c0 = arith.constant 0 : index
    %c0_0 = arith.constant 0 : index
    %0 = vector.load %arg2[%c0, %c0_0] : memref<256x297xbf16, #tpu.memory_space<vmem>>, vector<256x297xbf16>
    %c0_1 = arith.constant 0 : index
    %c0_2 = arith.constant 0 : index
    %1 = vector.load %arg3[%c0_1, %c0_2] : memref<297x16xbf16, #tpu.memory_space<vmem>>, vector<297x16xbf16>
    %cst = arith.constant dense<0.000000e+00> : vector<256x16xf32>
    %2 = tpu.matmul %0, %1, %cst {dimension_numbers = #tpu.dot_dimension_numbers<[1], [0], [0], [1], [0, 0, 1, 1], [], []>} : vector<256x297xbf16>, vector<297x16xbf16>, vector<256x16xf32> -> vector<256x16xf32>
    %c0_3 = arith.constant 0 : index
    %c0_4 = arith.constant 0 : index
    %3 = vector.load %arg4[%c0_3, %c0_4] : memref<1x16xf32, #tpu.memory_space<vmem>>, vector<1x16xf32>
    %4 = vector.broadcast %3 : vector<1x16xf32> to vector<256x16xf32>
    %5 = arith.addf %2, %4 : vector<256x16xf32>
    %cst_5 = arith.constant 0.000000e+00 : f32
    %6 = vector.broadcast %cst_5 : f32 to vector<256x16xf32>
    %7 = arith.maximumf %5, %6 : vector<256x16xf32>
    %8 = arith.truncf %7 : vector<256x16xf32> to vector<256x16xbf16>
    %c0_6 = arith.constant 0 : index
    %c0_7 = arith.constant 0 : index
    %9 = vector.load %arg5[%c0_6, %c0_7] : memref<256x16xbf16, #tpu.memory_space<vmem>>, vector<256x16xbf16>
    tpu.vector_store %arg5[%c0_6, %c0_7], %8 {strides = array<i32>} : memref<256x16xbf16, #tpu.memory_space<vmem>>, vector<256x16xbf16>,
    return
  }
  func.func @transform_0(%arg0: i32, %arg1: i32) -> (i32, i32) {
    %c0_i32 = arith.constant 0 : i32
    %c0_i32_0 = arith.constant 0 : i32
    return %arg0, %c0_i32 : i32, i32
  }
  func.func @transform_1(%arg0: i32, %arg1: i32) -> (i32, i32) {
    %c0_i32 = arith.constant 0 : i32
    %c0_i32_0 = arith.constant 0 : i32
    return %c0_i32, %arg1 : i32, i32
  }
  func.func @transform_2(%arg0: i32, %arg1: i32) -> (i32, i32) {
    %c0_i32 = arith.constant 0 : i32
    %c0_i32_0 = arith.constant 0 : i32
    return %c0_i32, %arg1 : i32, i32
  }
  func.func @transform_3(%arg0: i32, %arg1: i32) -> (i32, i32) {
    %c0_i32 = arith.constant 0 : i32
    return %arg0, %arg1 : i32, i32
  }
}

module attributes {stable_mosaic.version = 11 : i64} {
  func.func @_matmul_bias_kernel_1k(%arg0: i32, %arg1: i32, %arg2: memref<256x153xbf16, #tpu.memory_space<vmem>>, %arg3: memref<153x3xbf16, #tpu.memory_space<vmem>>, %arg4: memref<1x3xf32, #tpu.memory_space<vmem>>, %arg5: memref<256x3xf32, #tpu.memory_space<vmem>>) attributes {dimension_semantics = [#tpu.dimension_semantics<parallel>, #tpu.dimension_semantics<parallel>], iteration_bounds = array<i64: 2, 1>, scalar_prefetch = 0 : i64, scratch_operands = 0 : i64, tpu.core_type = #tpu.core_type<tc>, window_params = [{transform_indices = @transform_0, window_bounds = array<i64: 256, 153>}, {transform_indices = @transform_1, window_bounds = array<i64: 153, 3>}, {transform_indices = @transform_2, window_bounds = array<i64: 1, 3>}, {transform_indices = @transform_3, window_bounds = array<i64: 256, 3>}]} {
    %c0 = arith.constant 0 : index
    %c0_0 = arith.constant 0 : index
    %0 = vector.load %arg2[%c0, %c0_0] : memref<256x153xbf16, #tpu.memory_space<vmem>>, vector<256x153xbf16>
    %c0_1 = arith.constant 0 : index
    %c0_2 = arith.constant 0 : index
    %1 = vector.load %arg3[%c0_1, %c0_2] : memref<153x3xbf16, #tpu.memory_space<vmem>>, vector<153x3xbf16>
    %cst = arith.constant dense<0.000000e+00> : vector<256x3xf32>
    %2 = tpu.matmul %0, %1, %cst {dimension_numbers = #tpu.dot_dimension_numbers<[1], [0], [0], [1], [0, 0, 1, 1], [], []>} : vector<256x153xbf16>, vector<153x3xbf16>, vector<256x3xf32> -> vector<256x3xf32>
    %c0_3 = arith.constant 0 : index
    %c0_4 = arith.constant 0 : index
    %3 = vector.load %arg4[%c0_3, %c0_4] : memref<1x3xf32, #tpu.memory_space<vmem>>, vector<1x3xf32>
    %4 = vector.broadcast %3 : vector<1x3xf32> to vector<256x3xf32>
    %5 = arith.addf %2, %4 : vector<256x3xf32>
    %c0_5 = arith.constant 0 : index
    %c0_6 = arith.constant 0 : index
    %6 = vector.load %arg5[%c0_5, %c0_6] : memref<256x3xf32, #tpu.memory_space<vmem>>, vector<256x3xf32>
    tpu.vector_store %arg5[%c0_5, %c0_6], %5 {strides = array<i32>} : memref<256x3xf32, #tpu.memory_space<vmem>>, vector<256x3xf32>,
    return
  }
  func.func @transform_0(%arg0: i32, %arg1: i32) -> (i32, i32) {
    %c0_i32 = arith.constant 0 : i32
    %c0_i32_0 = arith.constant 0 : i32
    return %arg0, %c0_i32 : i32, i32
  }
  func.func @transform_1(%arg0: i32, %arg1: i32) -> (i32, i32) {
    %c0_i32 = arith.constant 0 : i32
    %c0_i32_0 = arith.constant 0 : i32
    return %c0_i32, %arg1 : i32, i32
  }
  func.func @transform_2(%arg0: i32, %arg1: i32) -> (i32, i32) {
    %c0_i32 = arith.constant 0 : i32
    %c0_i32_0 = arith.constant 0 : i32
    return %c0_i32, %arg1 : i32, i32
  }
  func.func @transform_3(%arg0: i32, %arg1: i32) -> (i32, i32) {
    %c0_i32 = arith.constant 0 : i32
    return %arg0, %arg1 : i32, i32
  }
}

</mosaic_0001>

<llo_original>
// kernel: dae_forward.10
$region0: #{dae_forward.10}
  #allocation0 [shape = 'u32[]', space=smem, size = 0x4, offset = 0x4, fixed_abs, tag = 'smem constant byte address 0x4 - core index']
  #allocation1 [shape = 'u32[144,128]{1,0:T(1,128)}', space=vmem, size = 0x12000, scoped, tag = 'internal scratch']
  %s0 = inlined_call_operand.vmem [shape: bf16[512,27], index: 0, kind: input, shape index: {}]
  %s1 = inlined_call_operand.vmem [shape: bf16[27,16], index: 1, kind: input, shape index: {}]
  %s2 = inlined_call_operand.vmem [shape: f32[1,16], index: 2, kind: input, shape index: {}]
  %s3 = inlined_call_operand.vmem [shape: bf16[512,16], index: 3, kind: output, shape index: {}]
  %s4 = sld [smem:[#allocation0]]
  $region45: #{dae_forward.10} parent=0
    _
  %s6 = ssub.s32 1, %s4
  %s7 = scalar_select 0, %s6, %s4
  loop: start=0, step=1, limit=4
  $region2: #{dae_forward.10} parent=0 // loop_pre_header
    _
  $region3: #{dae_forward.10} parent=0 // loop_header
    %s9 = sphi 0, %s13
    %p10 = scmp.ge.s32.totalorder %s9, 4
    %s16 = sphi 0, %s28
    %s17 = sphi 0, %s24
    %s18 = sphi 0, %s16
    %s19 = sphi 0, %s17
    %s20 = sphi 0, %s18
    %s21 = sphi 0, %s19
    %s31 = sphi 0, %s33
    %s34 = sphi 0, %s31
    %s35 = sphi 0, %s34
    %s51 = sphi 0, %s35
    %s57 = sphi 0, %s59
    %s60 = sphi 0, %s57
    %s61 = sphi 0, %s60
    %s77 = sphi 0, %s61
    %s83 = sphi 0, %s85
    %s86 = sphi 0, %s83
    %s87 = sphi 0, %s86
    %s103 = sphi 0, %s87
    %s111 = sphi 0, %s113
    %s114 = sphi 0, %s111
    %s115 = sphi 0, %s114
    %s131 = sphi 0, %s115
  $region4: #{dae_forward.10} parent=0 // loop_header_branch
    %12 = sbr.rel (%p10) target = $region8
  $region5: #{dae_forward.10} parent=0 // loop_body
    %s14 = ssub.s32 %s9, 1
    %s15 = ssub.s32 %s9, 2
    %s22 = sadd.s32 1, %s17
    %p23 = scmp.ge.s32.totalorder %s22, 1
    %s24 = scalar_select %p23, 0, %s22
    %s25 = sadd.s32 1, %s16
    %s26 = scalar_select %p23, %s25, %s16
    %p27 = scmp.ge.s32.totalorder %s26, 2
    %s28 = scalar_select %p27, 0, %s26
    %s29 = ssub.s32 %s16, %s28
    %p30 = scmp.eq.s32.totalorder %s29, 0
    %s32 = sadd.s32 %s31, 1
    %s33 = scalar_select %p30, %s31, %s32
    %p36 = pneg %p30
    %p37 = scmp.eq.s32.totalorder %s9, 1
    %p38 = por %p36, %p37
    %p39 = scmp.ne.s32.totalorder %s31, %s34
    %p40 = scmp.eq.s32.totalorder %s9, 0
    %p41 = por %p39, %p40
    %p42 = scmp.ne.s32.totalorder %s31, %s34
    %p43 = scmp.eq.s32.totalorder %s14, 1
    %p44 = por %p42, %p43
    %p45 = scmp.ne.s32.totalorder %s34, %s35
    %p46 = scmp.eq.s32.totalorder %s14, 0
    %p47 = por %p45, %p46
    %p48 = scmp.ne.s32.totalorder %s34, %s35
    %p49 = scmp.eq.s32.totalorder %s15, 1
    %p50 = por %p48, %p49
    %p52 = scmp.ne.s32.totalorder %s35, %s51
    %p53 = scmp.eq.s32.totalorder %s15, 0
    %p54 = por %p52, %p53
    %s55 = ssub.s32 %s17, %s24
    %p56 = scmp.eq.s32.totalorder %s55, 0
    %s58 = sadd.s32 %s57, 1
    %s59 = scalar_select %p56, %s57, %s58
    %p62 = pneg %p56
    %p63 = scmp.eq.s32.totalorder %s9, 1
    %p64 = por %p62, %p63
    %p65 = scmp.ne.s32.totalorder %s57, %s60
    %p66 = scmp.eq.s32.totalorder %s9, 0
    %p67 = por %p65, %p66
    %p68 = scmp.ne.s32.totalorder %s57, %s60
    %p69 = scmp.eq.s32.totalorder %s14, 1
    %p70 = por %p68, %p69
    %p71 = scmp.ne.s32.totalorder %s60, %s61
    %p72 = scmp.eq.s32.totalorder %s14, 0
    %p73 = por %p71, %p72
    %p74 = scmp.ne.s32.totalorder %s60, %s61
    %p75 = scmp.eq.s32.totalorder %s15, 1
    %p76 = por %p74, %p75
    %p78 = scmp.ne.s32.totalorder %s61, %s77
    %p79 = scmp.eq.s32.totalorder %s15, 0
    %p80 = por %p78, %p79
    %s81 = ssub.s32 %s17, %s24
    %p82 = scmp.eq.s32.totalorder %s81, 0
    %s84 = sadd.s32 %s83, 1
    %s85 = scalar_select %p82, %s83, %s84
    %p88 = pneg %p82
    %p89 = scmp.eq.s32.totalorder %s9, 1
    %p90 = por %p88, %p89
    %p91 = scmp.ne.s32.totalorder %s83, %s86
    %p92 = scmp.eq.s32.totalorder %s9, 0
    %p93 = por %p91, %p92
    %p94 = scmp.ne.s32.totalorder %s83, %s86
    %p95 = scmp.eq.s32.totalorder %s14, 1
    %p96 = por %p94, %p95
    %p97 = scmp.ne.s32.totalorder %s86, %s87
    %p98 = scmp.eq.s32.totalorder %s14, 0
    %p99 = por %p97, %p98
    %p100 = scmp.ne.s32.totalorder %s86, %s87
    %p101 = scmp.eq.s32.totalorder %s15, 1
    %p102 = por %p100, %p101
    %p104 = scmp.ne.s32.totalorder %s87, %s103
    %p105 = scmp.eq.s32.totalorder %s15, 0
    %p106 = por %p104, %p105
    %s107 = ssub.s32 %s16, %s28
    %s108 = ssub.s32 %s17, %s24
    %s109 = sor.u32 %s107, %s108
    %p110 = scmp.eq.s32.totalorder %s109, 0
    %s112 = sadd.s32 %s111, 1
    %s113 = scalar_select %p110, %s111, %s112
    %p116 = pneg %p110
    %p117 = scmp.eq.s32.totalorder %s9, 1
    %p118 = por %p116, %p117
    %p119 = scmp.ne.s32.totalorder %s111, %s114
    %p120 = scmp.eq.s32.totalorder %s9, 0
    %p121 = por %p119, %p120
    %p122 = scmp.ne.s32.totalorder %s111, %s114
    %p123 = scmp.eq.s32.totalorder %s14, 1
    %p124 = por %p122, %p123
    %p125 = scmp.ne.s32.totalorder %s114, %s115
    %p126 = scmp.eq.s32.totalorder %s14, 0
    %p127 = por %p125, %p126
    %p128 = scmp.ne.s32.totalorder %s114, %s115
    %p129 = scmp.eq.s32.totalorder %s15, 1
    %p130 = por %p128, %p129
    %p132 = scmp.ne.s32.totalorder %s115, %s131
    %p133 = scmp.eq.s32.totalorder %s15, 0
    %p134 = por %p132, %p133
    %p135 = scmp.le.s32.totalorder 1, %s9
    %p136 = scmp.lt.s32.totalorder %s9, 3
    %p137 = pnand %p135, %p136
    %p138 = pneg %p137
    // Predicated region
    $region9: #{dae_forward.10} parent=5 // pred_check
      _
    $region10: #{dae_forward.10} parent=5 // pred_check_branch
      %140 = sbr.rel (%p137) target = $region12
    $region11: #{dae_forward.10} parent=5 // pred_region
      %s141 = ssub.s32 %s9, 1
      // Predicated region
      $region13: #{dae_forward.10} parent=11 // pred_check
        %p142 = pneg %p73
      $region14: #{dae_forward.10} parent=11 // pred_check_branch
        %144 = sbr.rel (%p142) target = $region16
      $region15: #{dae_forward.10} parent=11 // pred_region
        %p145 = scmp.lt.s32.totalorder %s19, 0
        %s146 = scalar_select %p145, %s19, 0
        %s147 = smul.addr %s146, 4
        %s148 = scalar_lea.vmem %s1, %s147
      $region16: #{dae_forward.10} parent=11 // pred_fallthru
        _
      // Predicated region
      $region17: #{dae_forward.10} parent=11 // pred_check
        %p149 = pneg %p99
      $region18: #{dae_forward.10} parent=11 // pred_check_branch
        %151 = sbr.rel (%p149) target = $region20
      $region19: #{dae_forward.10} parent=11 // pred_region
        %p152 = scmp.lt.s32.totalorder %s19, 0
        %s153 = scalar_select %p152, %s19, 0
        %s154 = scalar_lea.vmem %s2, %s153
      $region20: #{dae_forward.10} parent=11 // pred_fallthru
        _
    $region12: #{dae_forward.10} parent=5 // pred_fallthru
      _
    %p155 = scmp.lt.s32.totalorder %s9, 2
    // Predicated region
    $region21: #{dae_forward.10} parent=5 // pred_check
      %p156 = pneg %p155
    $region22: #{dae_forward.10} parent=5 // pred_check_branch
      %158 = sbr.rel (%p156) target = $region24
    $region23: #{dae_forward.10} parent=5 // pred_region
      // Predicated region
      $region25: #{dae_forward.10} parent=23 // pred_check
        %p159 = pneg %p41
      $region26: #{dae_forward.10} parent=23 // pred_check_branch
        %161 = sbr.rel (%p159) target = $region28
      $region27: #{dae_forward.10} parent=23 // pred_region
        %s162 = smul.u32 32, %s16
        %p163 = scmp.lt.s32.totalorder %s162, 63
        %s164 = scalar_select %p163, %s162, 63
        %s165 = smul.addr %s164, 4
        %s166 = scalar_lea.vmem %s0, %s165
        %s167 = smul.u32 32, %s16
      $region28: #{dae_forward.10} parent=23 // pred_fallthru
        _
    $region24: #{dae_forward.10} parent=5 // pred_fallthru
      _
    %p168 = scmp.le.s32.totalorder 1, %s9
    %p169 = scmp.lt.s32.totalorder %s9, 3
    %p170 = pnand %p168, %p169
    %p171 = pneg %p170
    // Predicated region
    $region29: #{dae_forward.10} parent=5 // pred_check
      _
    $region30: #{dae_forward.10} parent=5 // pred_check_branch
      %173 = sbr.rel (%p170) target = $region32
    $region31: #{dae_forward.10} parent=5 // pred_region
      %s174 = ssub.s32 %s9, 1
      %s175 = smul.u32 32, %s18
      %p176 = scmp.lt.s32.totalorder %s175, 63
      %s177 = scalar_select %p176, %s175, 63
      %s178 = smul.addr %s177, 4
      %s179 = scalar_lea.vmem %s0, %s178
      %p180 = pneg %p47
      %p181 = pneg %p44
      %p182 = scmp.lt.s32.totalorder %s19, 0
      %s183 = scalar_select %p182, %s19, 0
      %s184 = smul.addr %s183, 4
      %s185 = scalar_lea.vmem %s1, %s184
      %p186 = pneg %p73
      %p187 = pneg %p70
      %p188 = scmp.lt.s32.totalorder %s19, 0
      %s189 = scalar_select %p188, %s19, 0
      %s190 = scalar_lea.vmem %s2, %s189
      %p191 = pneg %p99
      %p192 = pneg %p96
      %p193 = pneg %p127
      %p194 = pneg %p124
      %s195 = smul.u32 32, %s18
      %p196 = scmp.lt.s32.totalorder %s195, 63
      %s197 = scalar_select %p196, %s195, 63
      %p198 = scmp.lt.s32.totalorder %s19, 0
      %s199 = scalar_select %p198, %s19, 0
      %s200 = sadd.s32 %s199, %s197
      %s201 = smul.addr %s200, 4
      %s202 = scalar_lea.vmem %s3, %s201
      %s203 = smul.u32 32, %s18
      %p204 = scmp.lt.s32.totalorder %s203, 63
      %s205 = scalar_select %p204, %s203, 63
      %s206 = smul.addr %s205, 4
      %s207 = scalar_lea.vmem %s0, %s206
      %s208 = smul.u32 32, %s18
      %p209 = scmp.lt.s32.totalorder %s19, 0
      %s210 = scalar_select %p209, %s19, 0
      %s211 = smul.addr %s210, 4
      %s212 = scalar_lea.vmem %s1, %s211
      %p213 = scmp.lt.s32.totalorder %s19, 0
      %s214 = scalar_select %p213, %s19, 0
      %s215 = scalar_lea.vmem %s2, %s214
      %s216 = smul.u32 32, %s18
      %p217 = scmp.lt.s32.totalorder %s216, 63
      %s218 = scalar_select %p217, %s216, 63
      %p219 = scmp.lt.s32.totalorder %s19, 0
      %s220 = scalar_select %p219, %s19, 0
      %s221 = sadd.s32 %s220, %s218
      %s222 = smul.addr %s221, 4
      %s223 = scalar_lea.vmem %s3, %s222
      %s224 = smul.u32 32, %s18
      %v226 = vld [vmem:[%s207] sm:$0xf]
      %v227 = vld [vmem:[%s207 + $0x4] sm:$0xf]
      %v228 = vld [vmem:[%s207 + $0x8] sm:$0xf]
      %v229 = vld [vmem:[%s207 + $0xc] sm:$0xf]
      %v230 = vld [vmem:[%s207 + $0x10] sm:$0xf]
      %v231 = vld [vmem:[%s207 + $0x14] sm:$0xf]
      %v232 = vld [vmem:[%s207 + $0x18] sm:$0xf]
      %v233 = vld [vmem:[%s207 + $0x1c] sm:$0xf]
      %v234 = vld [vmem:[%s207 + $0x20] sm:$0xf]
      %v235 = vld [vmem:[%s207 + $0x24] sm:$0xf]
      %v236 = vld [vmem:[%s207 + $0x28] sm:$0xf]
      %v237 = vld [vmem:[%s207 + $0x2c] sm:$0xf]
      %v238 = vld [vmem:[%s207 + $0x30] sm:$0xf]
      %v239 = vld [vmem:[%s207 + $0x34] sm:$0xf]
      %v240 = vld [vmem:[%s207 + $0x38] sm:$0xf]
      %v241 = vld [vmem:[%s207 + $0x3c] sm:$0xf]
      %v242 = vld [vmem:[%s207 + $0x40] sm:$0xf]
      %v243 = vld [vmem:[%s207 + $0x44] sm:$0xf]
      %v244 = vld [vmem:[%s207 + $0x48] sm:$0xf]
      %v245 = vld [vmem:[%s207 + $0x4c] sm:$0xf]
      %v246 = vld [vmem:[%s207 + $0x50] sm:$0xf]
      %v247 = vld [vmem:[%s207 + $0x54] sm:$0xf]
      %v248 = vld [vmem:[%s207 + $0x58] sm:$0xf]
      %v249 = vld [vmem:[%s207 + $0x5c] sm:$0xf]
      %v250 = vld [vmem:[%s207 + $0x60] sm:$0xf]
      %v251 = vld [vmem:[%s207 + $0x64] sm:$0xf]
      %v252 = vld [vmem:[%s207 + $0x68] sm:$0xf]
      %v253 = vld [vmem:[%s207 + $0x6c] sm:$0xf]
      %v254 = vld [vmem:[%s207 + $0x70] sm:$0xf]
      %v255 = vld [vmem:[%s207 + $0x74] sm:$0xf]
      %v256 = vld [vmem:[%s207 + $0x78] sm:$0xf]
      %v257 = vld [vmem:[%s207 + $0x7c] sm:$0xf]
      %v258 = vld [vmem:[%s212] sm:$0xf]
      %v259 = vld [vmem:[%s212 + $0x4] sm:$0xf]
      %v260 = vld [vmem:[%s212 + $0x8] sm:$0xf]
      %v261 = vld [vmem:[%s212 + $0xc] sm:$0x3]
      %v262 = vld [vmem:[%s215] sm:$0x1]
      %v264 = vlaneseq
      %v265 = vshrl.u32 %v264, 7
      %v266 = vsub.s32 0, %v265
      %v267 = vrot.slane %v262, %v266
      %v301 = vunpack.c.l.b16 %v226
      %v302 = vunpack.c.l.b16 %v227
      %v303 = vunpack.c.l.b16 %v228
      %v304 = vunpack.c.l.b16 %v229
      %v305 = vunpack.c.l.b16 %v230
      %v306 = vunpack.c.l.b16 %v231
      %v307 = vunpack.c.l.b16 %v232
      %v308 = vunpack.c.l.b16 %v233
      %v309 = vunpack.c.l.b16 %v234
      %v310 = vunpack.c.l.b16 %v235
      %v311 = vunpack.c.l.b16 %v236
      %v312 = vunpack.c.l.b16 %v237
      %v313 = vunpack.c.l.b16 %v238
      %v314 = vunpack.c.l.b16 %v239
      %v315 = vunpack.c.l.b16 %v240
      %v316 = vunpack.c.l.b16 %v241
      %v317 = vunpack.c.l.b16 %v242
      %v318 = vunpack.c.l.b16 %v243
      %v319 = vunpack.c.l.b16 %v244
      %v320 = vunpack.c.l.b16 %v245
      %v321 = vunpack.c.l.b16 %v246
      %v322 = vunpack.c.l.b16 %v247
      %v323 = vunpack.c.l.b16 %v248
      %v324 = vunpack.c.l.b16 %v249
      %v325 = vunpack.c.l.b16 %v250
      %v326 = vunpack.c.l.b16 %v251
      %v327 = vunpack.c.l.b16 %v252
      %v328 = vunpack.c.l.b16 %v253
      %v329 = vunpack.c.l.b16 %v254
      %v330 = vunpack.c.l.b16 %v255
      %v331 = vunpack.c.l.b16 %v256
      %v332 = vunpack.c.l.b16 %v257
      %v333 = vpack.c.b16 %v302, %v301
      %v334 = vpack.c.b16 %v304, %v303
      %v335 = vpack.c.b16 %v306, %v305
      %v336 = vpack.c.b16 %v308, %v307
      %v337 = vpack.c.b16 %v310, %v309
      %v338 = vpack.c.b16 %v312, %v311
      %v339 = vpack.c.b16 %v314, %v313
      %v340 = vpack.c.b16 %v316, %v315
      %v341 = vpack.c.b16 %v318, %v317
      %v342 = vpack.c.b16 %v320, %v319
      %v343 = vpack.c.b16 %v322, %v321
      %v344 = vpack.c.b16 %v324, %v323
      %v345 = vpack.c.b16 %v326, %v325
      %v346 = vpack.c.b16 %v328, %v327
      %v347 = vpack.c.b16 %v330, %v329
      %v348 = vpack.c.b16 %v332, %v331
      %v353 = vunpack.c.l.b16 %v258
      %v354 = vunpack.c.l.b16 %v259
      %v355 = vunpack.c.l.b16 %v260
      %v356 = vunpack.c.l.b16 %v261
      %v357 = vpack.c.b16 %v354, %v353
      %v358 = vpack.c.b16 %v356, %v355
      %vm360 = vcmask 220160
      %v362 = vsel %vm360, %v333, 0
      %v365 = vsel %vm360, %v334, 0
      %v368 = vsel %vm360, %v335, 0
      %v371 = vsel %vm360, %v336, 0
      %v374 = vsel %vm360, %v337, 0
      %v377 = vsel %vm360, %v338, 0
      %v380 = vsel %vm360, %v339, 0
      %v383 = vsel %vm360, %v340, 0
      %v386 = vsel %vm360, %v341, 0
      %v389 = vsel %vm360, %v342, 0
      %v392 = vsel %vm360, %v343, 0
      %v395 = vsel %vm360, %v344, 0
      %v398 = vsel %vm360, %v345, 0
      %v401 = vsel %vm360, %v346, 0
      %v404 = vsel %vm360, %v347, 0
      %v407 = vsel %vm360, %v348, 0
      %vm409 = vcmask 1044480
      %vm410 = vcmask 1045504
      %v411 = vsel %vm409, 4294967295, 65535
      %v412 = vsel %vm410, %v411, 0
      %v414 = vand.u32 %v358, %v412
      %416 = vmatprep.subr.bf16.mxu0 0
      %417 = vmatpush1.bf16.msra.mxu0 %v357
      %418 = vmatprep.subr.bf16.mxu0 0
      %419 = vmatpush1.bf16.msra.mxu0 %v414
      %420 = vmatprep.subr.bf16.mxu0 0
      %421 = vmatpush1.bf16.msra.mxu0 0
      %422 = vmatprep.subr.bf16.mxu0 0
      %423 = vmatpush1.bf16.msra.mxu0 0
      %424 = vmatprep.subr.bf16.mxu0 0
      %425 = vmatpush1.bf16.msra.mxu0 0
      %426 = vmatprep.subr.bf16.mxu0 0
      %427 = vmatpush1.bf16.msra.mxu0 0
      %428 = vmatprep.subr.bf16.mxu0 0
      %429 = vmatpush1.bf16.msra.mxu0 0
      %430 = vmatprep.subr.bf16.mxu0 0
      %431 = vmatpush1.bf16.msra.mxu0 0
      %432 = vmatprep.subr.bf16.mxu0 0
      %433 = vmatpush1.bf16.msra.mxu0 0
      %434 = vmatprep.subr.bf16.mxu0 0
      %435 = vmatpush1.bf16.msra.mxu0 0
      %436 = vmatprep.subr.bf16.mxu0 0
      %437 = vmatpush1.bf16.msra.mxu0 0
      %438 = vmatprep.subr.bf16.mxu0 0
      %439 = vmatpush1.bf16.msra.mxu0 0
      %440 = vmatprep.subr.bf16.mxu0 0
      %441 = vmatpush1.bf16.msra.mxu0 0
      %442 = vmatprep.subr.bf16.mxu0 0
      %443 = vmatpush1.bf16.msra.mxu0 0
      %444 = vmatprep.subr.bf16.mxu0 0
      %445 = vmatpush1.bf16.msra.mxu0 0
      %446 = vmatprep.subr.bf16.mxu0 0
      %447 = vmatpush1.bf16.msra.mxu0 0
      %448 = vmatprep.mubr.bf16.mxu0 0
      %449 = vmatmul.mubr.bf16.gmra.mrb[0].mxu0 %v362
      %v450 = vpop.f32.mrb[0].mxu0
      %v451 = vadd.f32 %v267, %v450
      %v452 = vpop.f32.mrb[0].mxu0
      %v453 = vpop.f32.mrb[0].mxu0
      %v454 = vadd.f32 %v267, %v453
      %v455 = vpop.f32.mrb[0].mxu0
      %456 = vmatprep.mubr.bf16.mxu0 0
      %457 = vmatmul.mubr.bf16.gmra.mrb[0].mxu0 %v365
      %v458 = vpop.f32.mrb[0].mxu0
      %v459 = vadd.f32 %v267, %v458
      %v460 = vpop.f32.mrb[0].mxu0
      %v461 = vpop.f32.mrb[0].mxu0
      %v462 = vadd.f32 %v267, %v461
      %v463 = vpop.f32.mrb[0].mxu0
      %464 = vmatprep.mubr.bf16.mxu0 0
      %465 = vmatmul.mubr.bf16.gmra.mrb[0].mxu0 %v368
      %v466 = vpop.f32.mrb[0].mxu0
      %v467 = vadd.f32 %v267, %v466
      %v468 = vpop.f32.mrb[0].mxu0
      %v469 = vpop.f32.mrb[0].mxu0
      %v470 = vadd.f32 %v267, %v469
      %v471 = vpop.f32.mrb[0].mxu0
      %472 = vmatprep.mubr.bf16.mxu0 0
      %473 = vmatmul.mubr.bf16.gmra.mrb[0].mxu0 %v371
      %v474 = vpop.f32.mrb[0].mxu0
      %v475 = vadd.f32 %v267, %v474
      %v476 = vpop.f32.mrb[0].mxu0
      %v477 = vpop.f32.mrb[0].mxu0
      %v478 = vadd.f32 %v267, %v477
      %v479 = vpop.f32.mrb[0].mxu0
      %480 = vmatprep.mubr.bf16.mxu0 0
      %481 = vmatmul.mubr.bf16.gmra.mrb[0].mxu0 %v374
      %v482 = vpop.f32.mrb[0].mxu0
      %v483 = vadd.f32 %v267, %v482
      %v484 = vpop.f32.mrb[0].mxu0
      %v485 = vpop.f32.mrb[0].mxu0
      %v486 = vadd.f32 %v267, %v485
      %v487 = vpop.f32.mrb[0].mxu0
      %488 = vmatprep.mubr.bf16.mxu0 0
      %489 = vmatmul.mubr.bf16.gmra.mrb[0].mxu0 %v377
      %v490 = vpop.f32.mrb[0].mxu0
      %v491 = vadd.f32 %v267, %v490
      %v492 = vpop.f32.mrb[0].mxu0
      %v493 = vpop.f32.mrb[0].mxu0
      %v494 = vadd.f32 %v267, %v493
      %v495 = vpop.f32.mrb[0].mxu0
      %496 = vmatprep.mubr.bf16.mxu0 0
      %497 = vmatmul.mubr.bf16.gmra.mrb[0].mxu0 %v380
      %v498 = vpop.f32.mrb[0].mxu0
      %v499 = vadd.f32 %v267, %v498
      %v500 = vpop.f32.mrb[0].mxu0
      %v501 = vpop.f32.mrb[0].mxu0
      %v502 = vadd.f32 %v267, %v501
      %v503 = vpop.f32.mrb[0].mxu0
      %504 = vmatprep.mubr.bf16.mxu0 0
      %505 = vmatmul.mubr.bf16.gmra.mrb[0].mxu0 %v383
      %v506 = vpop.f32.mrb[0].mxu0
      %v507 = vadd.f32 %v267, %v506
      %v508 = vpop.f32.mrb[0].mxu0
      %v509 = vpop.f32.mrb[0].mxu0
      %v510 = vadd.f32 %v267, %v509
      %v511 = vpop.f32.mrb[0].mxu0
      %512 = vmatprep.mubr.bf16.mxu0 0
      %513 = vmatmul.mubr.bf16.gmra.mrb[0].mxu0 %v386
      %v514 = vpop.f32.mrb[0].mxu0
      %v515 = vadd.f32 %v267, %v514
      %v516 = vpop.f32.mrb[0].mxu0
      %v517 = vpop.f32.mrb[0].mxu0
      %v518 = vadd.f32 %v267, %v517
      %v519 = vpop.f32.mrb[0].mxu0
      %520 = vmatprep.mubr.bf16.mxu0 0
      %521 = vmatmul.mubr.bf16.gmra.mrb[0].mxu0 %v389
      %v522 = vpop.f32.mrb[0].mxu0
      %v523 = vadd.f32 %v267, %v522
      %v524 = vpop.f32.mrb[0].mxu0
      %v525 = vpop.f32.mrb[0].mxu0
      %v526 = vadd.f32 %v267, %v525
      %v527 = vpop.f32.mrb[0].mxu0
      %528 = vmatprep.mubr.bf16.mxu0 0
      %529 = vmatmul.mubr.bf16.gmra.mrb[0].mxu0 %v392
      %v530 = vpop.f32.mrb[0].mxu0
      %v531 = vadd.f32 %v267, %v530
      %v532 = vpop.f32.mrb[0].mxu0
      %v533 = vpop.f32.mrb[0].mxu0
      %v534 = vadd.f32 %v267, %v533
      %v535 = vpop.f32.mrb[0].mxu0
      %536 = vmatprep.mubr.bf16.mxu0 0
      %537 = vmatmul.mubr.bf16.gmra.mrb[0].mxu0 %v395
      %v538 = vpop.f32.mrb[0].mxu0
      %v539 = vadd.f32 %v267, %v538
      %v540 = vpop.f32.mrb[0].mxu0
      %v541 = vpop.f32.mrb[0].mxu0
      %v542 = vadd.f32 %v267, %v541
      %v543 = vpop.f32.mrb[0].mxu0
      %544 = vmatprep.mubr.bf16.mxu0 0
      %545 = vmatmul.mubr.bf16.gmra.mrb[0].mxu0 %v398
      %v546 = vpop.f32.mrb[0].mxu0
      %v547 = vadd.f32 %v267, %v546
      %v548 = vpop.f32.mrb[0].mxu0
      %v549 = vpop.f32.mrb[0].mxu0
      %v550 = vadd.f32 %v267, %v549
      %v551 = vpop.f32.mrb[0].mxu0
      %552 = vmatprep.mubr.bf16.mxu0 0
      %553 = vmatmul.mubr.bf16.gmra.mrb[0].mxu0 %v401
      %v554 = vpop.f32.mrb[0].mxu0
      %v555 = vadd.f32 %v267, %v554
      %v556 = vpop.f32.mrb[0].mxu0
      %v557 = vpop.f32.mrb[0].mxu0
      %v558 = vadd.f32 %v267, %v557
      %v559 = vpop.f32.mrb[0].mxu0
      %560 = vmatprep.mubr.bf16.mxu0 0
      %561 = vmatmul.mubr.bf16.gmra.mrb[0].mxu0 %v404
      %v562 = vpop.f32.mrb[0].mxu0
      %v563 = vadd.f32 %v267, %v562
      %v564 = vpop.f32.mrb[0].mxu0
      %v565 = vpop.f32.mrb[0].mxu0
      %v566 = vadd.f32 %v267, %v565
      %v567 = vpop.f32.mrb[0].mxu0
      %568 = vmatprep.mubr.bf16.mxu0 0
      %569 = vmatmul.mubr.bf16.gmra.mrb[0].mxu0 %v407
      %v570 = vpop.f32.mrb[0].mxu0
      %v571 = vadd.f32 %v267, %v570
      %v572 = vpop.f32.mrb[0].mxu0
      %v573 = vpop.f32.mrb[0].mxu0
      %v574 = vadd.f32 %v267, %v573
      %v575 = vpop.f32.mrb[0].mxu0
      %576 = vdwg.mxu0
      %v577 = vmax.f32 %v451, 0.0
      %v578 = vmax.f32 %v454, 0.0
      %v579 = vmax.f32 %v459, 0.0
      %v580 = vmax.f32 %v462, 0.0
      %v581 = vmax.f32 %v467, 0.0
      %v582 = vmax.f32 %v470, 0.0
      %v583 = vmax.f32 %v475, 0.0
      %v584 = vmax.f32 %v478, 0.0
      %v585 = vmax.f32 %v483, 0.0
      %v586 = vmax.f32 %v486, 0.0
      %v587 = vmax.f32 %v491, 0.0
      %v588 = vmax.f32 %v494, 0.0
      %v589 = vmax.f32 %v499, 0.0
      %v590 = vmax.f32 %v502, 0.0
      %v591 = vmax.f32 %v507, 0.0
      %v592 = vmax.f32 %v510, 0.0
      %v593 = vmax.f32 %v515, 0.0
      %v594 = vmax.f32 %v518, 0.0
      %v595 = vmax.f32 %v523, 0.0
      %v596 = vmax.f32 %v526, 0.0
      %v597 = vmax.f32 %v531, 0.0
      %v598 = vmax.f32 %v534, 0.0
      %v599 = vmax.f32 %v539, 0.0
      %v600 = vmax.f32 %v542, 0.0
      %v601 = vmax.f32 %v547, 0.0
      %v602 = vmax.f32 %v550, 0.0
      %v603 = vmax.f32 %v555, 0.0
      %v604 = vmax.f32 %v558, 0.0
      %v605 = vmax.f32 %v563, 0.0
      %v606 = vmax.f32 %v566, 0.0
      %v607 = vmax.f32 %v571, 0.0
      %v608 = vmax.f32 %v574, 0.0
      %v609 = vpack.c.bf16 %v578, %v577
      %v610 = vpack.c.bf16 %v580, %v579
      %v611 = vpack.c.bf16 %v582, %v581
      %v612 = vpack.c.bf16 %v584, %v583
      %v613 = vpack.c.bf16 %v586, %v585
      %v614 = vpack.c.bf16 %v588, %v587
      %v615 = vpack.c.bf16 %v590, %v589
      %v616 = vpack.c.bf16 %v592, %v591
      %v617 = vpack.c.bf16 %v594, %v593
      %v618 = vpack.c.bf16 %v596, %v595
      %v619 = vpack.c.bf16 %v598, %v597
      %v620 = vpack.c.bf16 %v600, %v599
      %v621 = vpack.c.bf16 %v602, %v601
      %v622 = vpack.c.bf16 %v604, %v603
      %v623 = vpack.c.bf16 %v606, %v605
      %v624 = vpack.c.bf16 %v608, %v607
      %v641 = vunpack.c.l.b16 %v609
      %v642 = vunpack.c.h.b16 %v609
      %v643 = vunpack.c.l.b16 %v610
      %v644 = vunpack.c.h.b16 %v610
      %v645 = vunpack.c.l.b16 %v611
      %v646 = vunpack.c.h.b16 %v611
      %v647 = vunpack.c.l.b16 %v612
      %v648 = vunpack.c.h.b16 %v612
      %v649 = vunpack.c.l.b16 %v613
      %v650 = vunpack.c.h.b16 %v613
      %v651 = vunpack.c.l.b16 %v614
      %v652 = vunpack.c.h.b16 %v614
      %v653 = vunpack.c.l.b16 %v615
      %v654 = vunpack.c.h.b16 %v615
      %v655 = vunpack.c.l.b16 %v616
      %v656 = vunpack.c.h.b16 %v616
      %v657 = vunpack.c.l.b16 %v617
      %v658 = vunpack.c.h.b16 %v617
      %v659 = vunpack.c.l.b16 %v618
      %v660 = vunpack.c.h.b16 %v618
      %v661 = vunpack.c.l.b16 %v619
      %v662 = vunpack.c.h.b16 %v619
      %v663 = vunpack.c.l.b16 %v620
      %v664 = vunpack.c.h.b16 %v620
      %v665 = vunpack.c.l.b16 %v621
      %v666 = vunpack.c.h.b16 %v621
      %v667 = vunpack.c.l.b16 %v622
      %v668 = vunpack.c.h.b16 %v622
      %v669 = vunpack.c.l.b16 %v623
      %v670 = vunpack.c.h.b16 %v623
      %v671 = vunpack.c.l.b16 %v624
      %v672 = vunpack.c.h.b16 %v624
      %v673 = vpack.c.b16 %v641, %v641
      %v674 = vpack.c.b16 %v642, %v642
      %v675 = vpack.c.b16 %v643, %v643
      %v676 = vpack.c.b16 %v644, %v644
      %v677 = vpack.c.b16 %v645, %v645
      %v678 = vpack.c.b16 %v646, %v646
      %v679 = vpack.c.b16 %v647, %v647
      %v680 = vpack.c.b16 %v648, %v648
      %v681 = vpack.c.b16 %v649, %v649
      %v682 = vpack.c.b16 %v650, %v650
      %v683 = vpack.c.b16 %v651, %v651
      %v684 = vpack.c.b16 %v652, %v652
      %v685 = vpack.c.b16 %v653, %v653
      %v686 = vpack.c.b16 %v654, %v654
      %v687 = vpack.c.b16 %v655, %v655
      %v688 = vpack.c.b16 %v656, %v656
      %v689 = vpack.c.b16 %v657, %v657
      %v690 = vpack.c.b16 %v658, %v658
      %v691 = vpack.c.b16 %v659, %v659
      %v692 = vpack.c.b16 %v660, %v660
      %v693 = vpack.c.b16 %v661, %v661
      %v694 = vpack.c.b16 %v662, %v662
      %v695 = vpack.c.b16 %v663, %v663
      %v696 = vpack.c.b16 %v664, %v664
      %v697 = vpack.c.b16 %v665, %v665
      %v698 = vpack.c.b16 %v666, %v666
      %v699 = vpack.c.b16 %v667, %v667
      %v700 = vpack.c.b16 %v668, %v668
      %v701 = vpack.c.b16 %v669, %v669
      %v702 = vpack.c.b16 %v670, %v670
      %v703 = vpack.c.b16 %v671, %v671
      %v704 = vpack.c.b16 %v672, %v672
      %vm737 = vcmask 125952
      %738 = vst.msk [vmem:[%s223] sm:$0xf] %vm737, %v673
      %739 = vst.msk [vmem:[%s223 + $0x4] sm:$0xf] %vm737, %v674
      %740 = vst.msk [vmem:[%s223 + $0x8] sm:$0xf] %vm737, %v675
      %741 = vst.msk [vmem:[%s223 + $0xc] sm:$0xf] %vm737, %v676
      %742 = vst.msk [vmem:[%s223 + $0x10] sm:$0xf] %vm737, %v677
      %743 = vst.msk [vmem:[%s223 + $0x14] sm:$0xf] %vm737, %v678
      %744 = vst.msk [vmem:[%s223 + $0x18] sm:$0xf] %vm737, %v679
      %745 = vst.msk [vmem:[%s223 + $0x1c] sm:$0xf] %vm737, %v680
      %746 = vst.msk [vmem:[%s223 + $0x20] sm:$0xf] %vm737, %v681
      %747 = vst.msk [vmem:[%s223 + $0x24] sm:$0xf] %vm737, %v682
      %748 = vst.msk [vmem:[%s223 + $0x28] sm:$0xf] %vm737, %v683
      %749 = vst.msk [vmem:[%s223 + $0x2c] sm:$0xf] %vm737, %v684
      %750 = vst.msk [vmem:[%s223 + $0x30] sm:$0xf] %vm737, %v685
      %751 = vst.msk [vmem:[%s223 + $0x34] sm:$0xf] %vm737, %v686
      %752 = vst.msk [vmem:[%s223 + $0x38] sm:$0xf] %vm737, %v687
      %753 = vst.msk [vmem:[%s223 + $0x3c] sm:$0xf] %vm737, %v688
      %754 = vst.msk [vmem:[%s223 + $0x40] sm:$0xf] %vm737, %v689
      %755 = vst.msk [vmem:[%s223 + $0x44] sm:$0xf] %vm737, %v690
      %756 = vst.msk [vmem:[%s223 + $0x48] sm:$0xf] %vm737, %v691
      %757 = vst.msk [vmem:[%s223 + $0x4c] sm:$0xf] %vm737, %v692
      %758 = vst.msk [vmem:[%s223 + $0x50] sm:$0xf] %vm737, %v693
      %759 = vst.msk [vmem:[%s223 + $0x54] sm:$0xf] %vm737, %v694
      %760 = vst.msk [vmem:[%s223 + $0x58] sm:$0xf] %vm737, %v695
      %761 = vst.msk [vmem:[%s223 + $0x5c] sm:$0xf] %vm737, %v696
      %762 = vst.msk [vmem:[%s223 + $0x60] sm:$0xf] %vm737, %v697
      %763 = vst.msk [vmem:[%s223 + $0x64] sm:$0xf] %vm737, %v698
      %764 = vst.msk [vmem:[%s223 + $0x68] sm:$0xf] %vm737, %v699
      %765 = vst.msk [vmem:[%s223 + $0x6c] sm:$0xf] %vm737, %v700
      %766 = vst.msk [vmem:[%s223 + $0x70] sm:$0xf] %vm737, %v701
      %767 = vst.msk [vmem:[%s223 + $0x74] sm:$0xf] %vm737, %v702
      %768 = vst.msk [vmem:[%s223 + $0x78] sm:$0xf] %vm737, %v703
      %769 = vst.msk [vmem:[%s223 + $0x7c] sm:$0xf] %vm737, %v704
      %s770 = smul.u32 32, %s18
      %p771 = scmp.lt.s32.totalorder %s770, 63
      %s772 = scalar_select %p771, %s770, 63
      %p773 = scmp.lt.s32.totalorder %s19, 0
      %s774 = scalar_select %p773, %s19, 0
      %s775 = sadd.s32 %s774, %s772
      %s776 = smul.addr %s775, 4
      %s777 = scalar_lea.vmem %s3, %s776
      // Predicated region
      $region33: #{dae_forward.10} parent=31 // pred_check
        %p778 = pneg %p124
      $region34: #{dae_forward.10} parent=31 // pred_check_branch
        %780 = sbr.rel (%p778) target = $region36
      $region35: #{dae_forward.10} parent=31 // pred_region
        %s781 = smul.u32 32, %s18
      $region36: #{dae_forward.10} parent=31 // pred_fallthru
        _
    $region32: #{dae_forward.10} parent=5 // pred_fallthru
      _
    %p782 = scmp.le.s32.totalorder 2, %s9
    // Predicated region
    $region37: #{dae_forward.10} parent=5 // pred_check
      %p783 = pneg %p782
    $region38: #{dae_forward.10} parent=5 // pred_check_branch
      %785 = sbr.rel (%p783) target = $region40
    $region39: #{dae_forward.10} parent=5 // pred_region
      %s786 = ssub.s32 %s9, 2
      // Predicated region
      $region41: #{dae_forward.10} parent=39 // pred_check
        %p787 = pneg %p130
      $region42: #{dae_forward.10} parent=39 // pred_check_branch
        %789 = sbr.rel (%p787) target = $region44
      $region43: #{dae_forward.10} parent=39 // pred_region
        %s790 = smul.u32 32, %s20
        %p791 = scmp.lt.s32.totalorder %s790, 63
        %s792 = scalar_select %p791, %s790, 63
        %p793 = scmp.lt.s32.totalorder %s21, 0
        %s794 = scalar_select %p793, %s21, 0
        %s795 = sadd.s32 %s794, %s792
        %s796 = smul.addr %s795, 4
        %s797 = scalar_lea.vmem %s3, %s796
      $region44: #{dae_forward.10} parent=39 // pred_fallthru
        _
    $region40: #{dae_forward.10} parent=5 // pred_fallthru
      _
  $region6: #{dae_forward.10} parent=0 // loop_footer
    %s13 = sadd.s32 1, %s9
  $region7: #{dae_forward.10} parent=0 // loop_footer_branch
    %8 = sbr.rel target = $region3
  $region8: #{dae_forward.10} parent=0 // loop_exit
    _

// kernel: dae_forward.11
$region0: #{dae_forward.11}
  #allocation0 [shape = 'u32[]', space=smem, size = 0x4, offset = 0x4, fixed_abs, tag = 'smem constant byte address 0x4 - core index']
  #allocation1 [shape = 'u32[144,128]{1,0:T(1,128)}', space=vmem, size = 0x12000, scoped, tag = 'internal scratch']
  %s0 = inlined_call_operand.vmem [shape: bf16[512,144], index: 0, kind: input, shape index: {}]
  %s1 = inlined_call_operand.vmem [shape: bf16[144,32], index: 1, kind: input, shape index: {}]
  %s2 = inlined_call_operand.vmem [shape: f32[1,32], index: 2, kind: input, shape index: {}]
  %s3 = inlined_call_operand.vmem [shape: bf16[512,32], index: 3, kind: output, shape index: {}]
  %s4 = sld [smem:[#allocation0]]
  $region45: #{dae_forward.11} parent=0
    _
  %s6 = ssub.s32 1, %s4
  %s7 = scalar_select 0, %s6, %s4
  loop: start=0, step=1, limit=4
  $region2: #{dae_forward.11} parent=0 // loop_pre_header
    _
  $region3: #{dae_forward.11} parent=0 // loop_header
    %s9 = sphi 0, %s13
    %p10 = scmp.ge.s32.totalorder %s9, 4
    %s16 = sphi 0, %s28
    %s17 = sphi 0, %s24
    %s18 = sphi 0, %s16
    %s19 = sphi 0, %s17
    %s20 = sphi 0, %s18
    %s21 = sphi 0, %s19
    %s31 = sphi 0, %s33
    %s34 = sphi 0, %s31
    %s35 = sphi 0, %s34
    %s51 = sphi 0, %s35
    %s57 = sphi 0, %s59
    %s60 = sphi 0, %s57
    %s61 = sphi 0, %s60
    %s77 = sphi 0, %s61
    %s83 = sphi 0, %s85
    %s86 = sphi 0, %s83
    %s87 = sphi 0, %s86
    %s103 = sphi 0, %s87
    %s111 = sphi 0, %s113
    %s114 = sphi 0, %s111
    %s115 = sphi 0, %s114
    %s131 = sphi 0, %s115
  $region4: #{dae_forward.11} parent=0 // loop_header_branch
    %12 = sbr.rel (%p10) target = $region8
  $region5: #{dae_forward.11} parent=0 // loop_body
    %s14 = ssub.s32 %s9, 1
    %s15 = ssub.s32 %s9, 2
    %s22 = sadd.s32 1, %s17
    %p23 = scmp.ge.s32.totalorder %s22, 1
    %s24 = scalar_select %p23, 0, %s22
    %s25 = sadd.s32 1, %s16
    %s26 = scalar_select %p23, %s25, %s16
    %p27 = scmp.ge.s32.totalorder %s26, 2
    %s28 = scalar_select %p27, 0, %s26
    %s29 = ssub.s32 %s16, %s28
    %p30 = scmp.eq.s32.totalorder %s29, 0
    %s32 = sadd.s32 %s31, 1
    %s33 = scalar_select %p30, %s31, %s32
    %p36 = pneg %p30
    %p37 = scmp.eq.s32.totalorder %s9, 1
    %p38 = por %p36, %p37
    %p39 = scmp.ne.s32.totalorder %s31, %s34
    %p40 = scmp.eq.s32.totalorder %s9, 0
    %p41 = por %p39, %p40
    %p42 = scmp.ne.s32.totalorder %s31, %s34
    %p43 = scmp.eq.s32.totalorder %s14, 1
    %p44 = por %p42, %p43
    %p45 = scmp.ne.s32.totalorder %s34, %s35
    %p46 = scmp.eq.s32.totalorder %s14, 0
    %p47 = por %p45, %p46
    %p48 = scmp.ne.s32.totalorder %s34, %s35
    %p49 = scmp.eq.s32.totalorder %s15, 1
    %p50 = por %p48, %p49
    %p52 = scmp.ne.s32.totalorder %s35, %s51
    %p53 = scmp.eq.s32.totalorder %s15, 0
    %p54 = por %p52, %p53
    %s55 = ssub.s32 %s17, %s24
    %p56 = scmp.eq.s32.totalorder %s55, 0
    %s58 = sadd.s32 %s57, 1
    %s59 = scalar_select %p56, %s57, %s58
    %p62 = pneg %p56
    %p63 = scmp.eq.s32.totalorder %s9, 1
    %p64 = por %p62, %p63
    %p65 = scmp.ne.s32.totalorder %s57, %s60
    %p66 = scmp.eq.s32.totalorder %s9, 0
    %p67 = por %p65, %p66
    %p68 = scmp.ne.s32.totalorder %s57, %s60
    %p69 = scmp.eq.s32.totalorder %s14, 1
    %p70 = por %p68, %p69
    %p71 = scmp.ne.s32.totalorder %s60, %s61
    %p72 = scmp.eq.s32.totalorder %s14, 0
    %p73 = por %p71, %p72
    %p74 = scmp.ne.s32.totalorder %s60, %s61
    %p75 = scmp.eq.s32.totalorder %s15, 1
    %p76 = por %p74, %p75
    %p78 = scmp.ne.s32.totalorder %s61, %s77
    %p79 = scmp.eq.s32.totalorder %s15, 0
    %p80 = por %p78, %p79
    %s81 = ssub.s32 %s17, %s24
    %p82 = scmp.eq.s32.totalorder %s81, 0
    %s84 = sadd.s32 %s83, 1
    %s85 = scalar_select %p82, %s83, %s84
    %p88 = pneg %p82
    %p89 = scmp.eq.s32.totalorder %s9, 1
    %p90 = por %p88, %p89
    %p91 = scmp.ne.s32.totalorder %s83, %s86
    %p92 = scmp.eq.s32.totalorder %s9, 0
    %p93 = por %p91, %p92
    %p94 = scmp.ne.s32.totalorder %s83, %s86
    %p95 = scmp.eq.s32.totalorder %s14, 1
    %p96 = por %p94, %p95
    %p97 = scmp.ne.s32.totalorder %s86, %s87
    %p98 = scmp.eq.s32.totalorder %s14, 0
    %p99 = por %p97, %p98
    %p100 = scmp.ne.s32.totalorder %s86, %s87
    %p101 = scmp.eq.s32.totalorder %s15, 1
    %p102 = por %p100, %p101
    %p104 = scmp.ne.s32.totalorder %s87, %s103
    %p105 = scmp.eq.s32.totalorder %s15, 0
    %p106 = por %p104, %p105
    %s107 = ssub.s32 %s16, %s28
    %s108 = ssub.s32 %s17, %s24
    %s109 = sor.u32 %s107, %s108
    %p110 = scmp.eq.s32.totalorder %s109, 0
    %s112 = sadd.s32 %s111, 1
    %s113 = scalar_select %p110, %s111, %s112
    %p116 = pneg %p110
    %p117 = scmp.eq.s32.totalorder %s9, 1
    %p118 = por %p116, %p117
    %p119 = scmp.ne.s32.totalorder %s111, %s114
    %p120 = scmp.eq.s32.totalorder %s9, 0
    %p121 = por %p119, %p120
    %p122 = scmp.ne.s32.totalorder %s111, %s114
    %p123 = scmp.eq.s32.totalorder %s14, 1
    %p124 = por %p122, %p123
    %p125 = scmp.ne.s32.totalorder %s114, %s115
    %p126 = scmp.eq.s32.totalorder %s14, 0
    %p127 = por %p125, %p126
    %p128 = scmp.ne.s32.totalorder %s114, %s115
    %p129 = scmp.eq.s32.totalorder %s15, 1
    %p130 = por %p128, %p129
    %p132 = scmp.ne.s32.totalorder %s115, %s131
    %p133 = scmp.eq.s32.totalorder %s15, 0
    %p134 = por %p132, %p133
    %p135 = scmp.le.s32.totalorder 1, %s9
    %p136 = scmp.lt.s32.totalorder %s9, 3
    %p137 = pnand %p135, %p136
    %p138 = pneg %p137
    // Predicated region
    $region9: #{dae_forward.11} parent=5 // pred_check
      _
    $region10: #{dae_forward.11} parent=5 // pred_check_branch
      %140 = sbr.rel (%p137) target = $region12
    $region11: #{dae_forward.11} parent=5 // pred_region
      %s141 = ssub.s32 %s9, 1
      // Predicated region
      $region13: #{dae_forward.11} parent=11 // pred_check
        %p142 = pneg %p73
      $region14: #{dae_forward.11} parent=11 // pred_check_branch
        %144 = sbr.rel (%p142) target = $region16
      $region15: #{dae_forward.11} parent=11 // pred_region
        %p145 = scmp.lt.s32.totalorder %s19, 0
        %s146 = scalar_select %p145, %s19, 0
        %s147 = smul.addr %s146, 4
        %s148 = scalar_lea.vmem %s1, %s147
      $region16: #{dae_forward.11} parent=11 // pred_fallthru
        _
      // Predicated region
      $region17: #{dae_forward.11} parent=11 // pred_check
        %p149 = pneg %p99
      $region18: #{dae_forward.11} parent=11 // pred_check_branch
        %151 = sbr.rel (%p149) target = $region20
      $region19: #{dae_forward.11} parent=11 // pred_region
        %p152 = scmp.lt.s32.totalorder %s19, 0
        %s153 = scalar_select %p152, %s19, 0
        %s154 = scalar_lea.vmem %s2, %s153
      $region20: #{dae_forward.11} parent=11 // pred_fallthru
        _
    $region12: #{dae_forward.11} parent=5 // pred_fallthru
      _
    %p155 = scmp.lt.s32.totalorder %s9, 2
    // Predicated region
    $region21: #{dae_forward.11} parent=5 // pred_check
      %p156 = pneg %p155
    $region22: #{dae_forward.11} parent=5 // pred_check_branch
      %158 = sbr.rel (%p156) target = $region24
    $region23: #{dae_forward.11} parent=5 // pred_region
      // Predicated region
      $region25: #{dae_forward.11} parent=23 // pred_check
        %p159 = pneg %p41
      $region26: #{dae_forward.11} parent=23 // pred_check_branch
        %161 = sbr.rel (%p159) target = $region28
      $region27: #{dae_forward.11} parent=23 // pred_region
        %s162 = smul.u32 32, %s16
        %p163 = scmp.lt.s32.totalorder %s162, 63
        %s164 = scalar_select %p163, %s162, 63
        %s165 = smul.addr %s164, 2
        %s166 = smul.addr %s165, 4
        %s167 = scalar_lea.vmem %s0, %s166
        %s168 = smul.u32 32, %s16
      $region28: #{dae_forward.11} parent=23 // pred_fallthru
        _
    $region24: #{dae_forward.11} parent=5 // pred_fallthru
      _
    %p169 = scmp.le.s32.totalorder 1, %s9
    %p170 = scmp.lt.s32.totalorder %s9, 3
    %p171 = pnand %p169, %p170
    %p172 = pneg %p171
    // Predicated region
    $region29: #{dae_forward.11} parent=5 // pred_check
      _
    $region30: #{dae_forward.11} parent=5 // pred_check_branch
      %174 = sbr.rel (%p171) target = $region32
    $region31: #{dae_forward.11} parent=5 // pred_region
      %s175 = ssub.s32 %s9, 1
      %s176 = smul.u32 32, %s18
      %p177 = scmp.lt.s32.totalorder %s176, 63
      %s178 = scalar_select %p177, %s176, 63
      %s179 = smul.addr %s178, 2
      %s180 = smul.addr %s179, 4
      %s181 = scalar_lea.vmem %s0, %s180
      %p182 = pneg %p47
      %p183 = pneg %p44
      %p184 = scmp.lt.s32.totalorder %s19, 0
      %s185 = scalar_select %p184, %s19, 0
      %s186 = smul.addr %s185, 4
      %s187 = scalar_lea.vmem %s1, %s186
      %p188 = pneg %p73
      %p189 = pneg %p70
      %p190 = scmp.lt.s32.totalorder %s19, 0
      %s191 = scalar_select %p190, %s19, 0
      %s192 = scalar_lea.vmem %s2, %s191
      %p193 = pneg %p99
      %p194 = pneg %p96
      %p195 = pneg %p127
      %p196 = pneg %p124
      %s197 = smul.u32 32, %s18
      %p198 = scmp.lt.s32.totalorder %s197, 63
      %s199 = scalar_select %p198, %s197, 63
      %p200 = scmp.lt.s32.totalorder %s19, 0
      %s201 = scalar_select %p200, %s19, 0
      %s202 = sadd.s32 %s201, %s199
      %s203 = smul.addr %s202, 4
      %s204 = scalar_lea.vmem %s3, %s203
      %s205 = smul.u32 32, %s18
      %p206 = scmp.lt.s32.totalorder %s205, 63
      %s207 = scalar_select %p206, %s205, 63
      %s208 = smul.addr %s207, 2
      %s209 = smul.addr %s208, 4
      %s210 = scalar_lea.vmem %s0, %s209
      %s211 = smul.u32 32, %s18
      %p212 = scmp.lt.s32.totalorder %s19, 0
      %s213 = scalar_select %p212, %s19, 0
      %s214 = smul.addr %s213, 4
      %s215 = scalar_lea.vmem %s1, %s214
      %p216 = scmp.lt.s32.totalorder %s19, 0
      %s217 = scalar_select %p216, %s19, 0
      %s218 = scalar_lea.vmem %s2, %s217
      %s219 = smul.u32 32, %s18
      %p220 = scmp.lt.s32.totalorder %s219, 63
      %s221 = scalar_select %p220, %s219, 63
      %p222 = scmp.lt.s32.totalorder %s19, 0
      %s223 = scalar_select %p222, %s19, 0
      %s224 = sadd.s32 %s223, %s221
      %s225 = smul.addr %s224, 4
      %s226 = scalar_lea.vmem %s3, %s225
      %s227 = smul.u32 32, %s18
      %v229 = vld [vmem:[%s210] sm:$0xff]
      %v230 = vld [vmem:[%s210 + $0x8] sm:$0xff]
      %v231 = vld [vmem:[%s210 + $0x10] sm:$0xff]
      %v232 = vld [vmem:[%s210 + $0x18] sm:$0xff]
      %v233 = vld [vmem:[%s210 + $0x20] sm:$0xff]
      %v234 = vld [vmem:[%s210 + $0x28] sm:$0xff]
      %v235 = vld [vmem:[%s210 + $0x30] sm:$0xff]
      %v236 = vld [vmem:[%s210 + $0x38] sm:$0xff]
      %v237 = vld [vmem:[%s210 + $0x40] sm:$0xff]
      %v238 = vld [vmem:[%s210 + $0x48] sm:$0xff]
      %v239 = vld [vmem:[%s210 + $0x50] sm:$0xff]
      %v240 = vld [vmem:[%s210 + $0x58] sm:$0xff]
      %v241 = vld [vmem:[%s210 + $0x60] sm:$0xff]
      %v242 = vld [vmem:[%s210 + $0x68] sm:$0xff]
      %v243 = vld [vmem:[%s210 + $0x70] sm:$0xff]
      %v244 = vld [vmem:[%s210 + $0x78] sm:$0xff]
      %v245 = vld [vmem:[%s210 + $0x80] sm:$0xff]
      %v246 = vld [vmem:[%s210 + $0x88] sm:$0xff]
      %v247 = vld [vmem:[%s210 + $0x90] sm:$0xff]
      %v248 = vld [vmem:[%s210 + $0x98] sm:$0xff]
      %v249 = vld [vmem:[%s210 + $0xa0] sm:$0xff]
      %v250 = vld [vmem:[%s210 + $0xa8] sm:$0xff]
      %v251 = vld [vmem:[%s210 + $0xb0] sm:$0xff]
      %v252 = vld [vmem:[%s210 + $0xb8] sm:$0xff]
      %v253 = vld [vmem:[%s210 + $0xc0] sm:$0xff]
      %v254 = vld [vmem:[%s210 + $0xc8] sm:$0xff]
      %v255 = vld [vmem:[%s210 + $0xd0] sm:$0xff]
      %v256 = vld [vmem:[%s210 + $0xd8] sm:$0xff]
      %v257 = vld [vmem:[%s210 + $0xe0] sm:$0xff]
      %v258 = vld [vmem:[%s210 + $0xe8] sm:$0xff]
      %v259 = vld [vmem:[%s210 + $0xf0] sm:$0xff]
      %v260 = vld [vmem:[%s210 + $0xf8] sm:$0xff]
      %v261 = vld [vmem:[%s215] sm:$0xf]
      %v262 = vld [vmem:[%s215 + $0x4] sm:$0xf]
      %v263 = vld [vmem:[%s215 + $0x8] sm:$0xf]
      %v264 = vld [vmem:[%s215 + $0xc] sm:$0xf]
      %v265 = vld [vmem:[%s215 + $0x10] sm:$0xf]
      %v266 = vld [vmem:[%s215 + $0x14] sm:$0xf]
      %v267 = vld [vmem:[%s215 + $0x18] sm:$0xf]
      %v268 = vld [vmem:[%s215 + $0x1c] sm:$0xf]
      %v269 = vld [vmem:[%s215 + $0x20] sm:$0xf]
      %v270 = vld [vmem:[%s215 + $0x24] sm:$0xf]
      %v271 = vld [vmem:[%s215 + $0x28] sm:$0xf]
      %v272 = vld [vmem:[%s215 + $0x2c] sm:$0xf]
      %v273 = vld [vmem:[%s215 + $0x30] sm:$0xf]
      %v274 = vld [vmem:[%s215 + $0x34] sm:$0xf]
      %v275 = vld [vmem:[%s215 + $0x38] sm:$0xf]
      %v276 = vld [vmem:[%s215 + $0x3c] sm:$0xf]
      %v277 = vld [vmem:[%s215 + $0x40] sm:$0xf]
      %v278 = vld [vmem:[%s215 + $0x44] sm:$0xf]
      %v279 = vld [vmem:[%s218] sm:$0x1]
      %v281 = vlaneseq
      %v282 = vshrl.u32 %v281, 7
      %v283 = vsub.s32 0, %v282
      %v284 = vrot.slane %v279, %v283
      %v318 = vunpack.c.l.b16 %v229
      %v319 = vunpack.c.h.b16 %v229
      %v320 = vunpack.c.l.b16 %v230
      %v321 = vunpack.c.h.b16 %v230
      %v322 = vunpack.c.l.b16 %v231
      %v323 = vunpack.c.h.b16 %v231
      %v324 = vunpack.c.l.b16 %v232
      %v325 = vunpack.c.h.b16 %v232
      %v326 = vunpack.c.l.b16 %v233
      %v327 = vunpack.c.h.b16 %v233
      %v328 = vunpack.c.l.b16 %v234
      %v329 = vunpack.c.h.b16 %v234
      %v330 = vunpack.c.l.b16 %v235
      %v331 = vunpack.c.h.b16 %v235
      %v332 = vunpack.c.l.b16 %v236
      %v333 = vunpack.c.h.b16 %v236
      %v334 = vunpack.c.l.b16 %v237
      %v335 = vunpack.c.h.b16 %v237
      %v336 = vunpack.c.l.b16 %v238
      %v337 = vunpack.c.h.b16 %v238
      %v338 = vunpack.c.l.b16 %v239
      %v339 = vunpack.c.h.b16 %v239
      %v340 = vunpack.c.l.b16 %v240
      %v341 = vunpack.c.h.b16 %v240
      %v342 = vunpack.c.l.b16 %v241
      %v343 = vunpack.c.h.b16 %v241
      %v344 = vunpack.c.l.b16 %v242
      %v345 = vunpack.c.h.b16 %v242
      %v346 = vunpack.c.l.b16 %v243
      %v347 = vunpack.c.h.b16 %v243
      %v348 = vunpack.c.l.b16 %v244
      %v349 = vunpack.c.h.b16 %v244
      %v350 = vunpack.c.l.b16 %v245
      %v351 = vunpack.c.h.b16 %v245
      %v352 = vunpack.c.l.b16 %v246
      %v353 = vunpack.c.h.b16 %v246
      %v354 = vunpack.c.l.b16 %v247
      %v355 = vunpack.c.h.b16 %v247
      %v356 = vunpack.c.l.b16 %v248
      %v357 = vunpack.c.h.b16 %v248
      %v358 = vunpack.c.l.b16 %v249
      %v359 = vunpack.c.h.b16 %v249
      %v360 = vunpack.c.l.b16 %v250
      %v361 = vunpack.c.h.b16 %v250
      %v362 = vunpack.c.l.b16 %v251
      %v363 = vunpack.c.h.b16 %v251
      %v364 = vunpack.c.l.b16 %v252
      %v365 = vunpack.c.h.b16 %v252
      %v366 = vunpack.c.l.b16 %v253
      %v367 = vunpack.c.h.b16 %v253
      %v368 = vunpack.c.l.b16 %v254
      %v369 = vunpack.c.h.b16 %v254
      %v370 = vunpack.c.l.b16 %v255
      %v371 = vunpack.c.h.b16 %v255
      %v372 = vunpack.c.l.b16 %v256
      %v373 = vunpack.c.h.b16 %v256
      %v374 = vunpack.c.l.b16 %v257
      %v375 = vunpack.c.h.b16 %v257
      %v376 = vunpack.c.l.b16 %v258
      %v377 = vunpack.c.h.b16 %v258
      %v378 = vunpack.c.l.b16 %v259
      %v379 = vunpack.c.h.b16 %v259
      %v380 = vunpack.c.l.b16 %v260
      %v381 = vunpack.c.h.b16 %v260
      %v382 = vpack.c.b16 %v320, %v318
      %v383 = vpack.c.b16 %v321, %v319
      %v384 = vpack.c.b16 %v324, %v322
      %v385 = vpack.c.b16 %v325, %v323
      %v386 = vpack.c.b16 %v328, %v326
      %v387 = vpack.c.b16 %v329, %v327
      %v388 = vpack.c.b16 %v332, %v330
      %v389 = vpack.c.b16 %v333, %v331
      %v390 = vpack.c.b16 %v336, %v334
      %v391 = vpack.c.b16 %v337, %v335
      %v392 = vpack.c.b16 %v340, %v338
      %v393 = vpack.c.b16 %v341, %v339
      %v394 = vpack.c.b16 %v344, %v342
      %v395 = vpack.c.b16 %v345, %v343
      %v396 = vpack.c.b16 %v348, %v346
      %v397 = vpack.c.b16 %v349, %v347
      %v398 = vpack.c.b16 %v352, %v350
      %v399 = vpack.c.b16 %v353, %v351
      %v400 = vpack.c.b16 %v356, %v354
      %v401 = vpack.c.b16 %v357, %v355
      %v402 = vpack.c.b16 %v360, %v358
      %v403 = vpack.c.b16 %v361, %v359
      %v404 = vpack.c.b16 %v364, %v362
      %v405 = vpack.c.b16 %v365, %v363
      %v406 = vpack.c.b16 %v368, %v366
      %v407 = vpack.c.b16 %v369, %v367
      %v408 = vpack.c.b16 %v372, %v370
      %v409 = vpack.c.b16 %v373, %v371
      %v410 = vpack.c.b16 %v376, %v374
      %v411 = vpack.c.b16 %v377, %v375
      %v412 = vpack.c.b16 %v380, %v378
      %v413 = vpack.c.b16 %v381, %v379
      %v448 = vunpack.c.l.b16 %v261
      %v449 = vunpack.c.l.b16 %v262
      %v450 = vunpack.c.l.b16 %v263
      %v451 = vunpack.c.l.b16 %v264
      %v452 = vunpack.c.l.b16 %v265
      %v453 = vunpack.c.l.b16 %v266
      %v454 = vunpack.c.l.b16 %v267
      %v455 = vunpack.c.l.b16 %v268
      %v456 = vunpack.c.l.b16 %v269
      %v457 = vunpack.c.l.b16 %v270
      %v458 = vunpack.c.l.b16 %v271
      %v459 = vunpack.c.l.b16 %v272
      %v460 = vunpack.c.l.b16 %v273
      %v461 = vunpack.c.l.b16 %v274
      %v462 = vunpack.c.l.b16 %v275
      %v463 = vunpack.c.l.b16 %v276
      %v464 = vunpack.c.l.b16 %v277
      %v465 = vunpack.c.l.b16 %v278
      %v466 = vpack.c.b16 %v449, %v448
      %v467 = vpack.c.b16 %v451, %v450
      %v468 = vpack.c.b16 %v453, %v452
      %v469 = vpack.c.b16 %v455, %v454
      %v470 = vpack.c.b16 %v457, %v456
      %v471 = vpack.c.b16 %v459, %v458
      %v472 = vpack.c.b16 %v461, %v460
      %v473 = vpack.c.b16 %v463, %v462
      %v474 = vpack.c.b16 %v465, %v464
      %vm484 = vcmask 130048
      %v486 = vsel %vm484, %v383, 0
      %v489 = vsel %vm484, %v385, 0
      %v492 = vsel %vm484, %v387, 0
      %v495 = vsel %vm484, %v389, 0
      %v498 = vsel %vm484, %v391, 0
      %v501 = vsel %vm484, %v393, 0
      %v504 = vsel %vm484, %v395, 0
      %v507 = vsel %vm484, %v397, 0
      %v510 = vsel %vm484, %v399, 0
      %v513 = vsel %vm484, %v401, 0
      %v516 = vsel %vm484, %v403, 0
      %v519 = vsel %vm484, %v405, 0
      %v522 = vsel %vm484, %v407, 0
      %v525 = vsel %vm484, %v409, 0
      %v528 = vsel %vm484, %v411, 0
      %v531 = vsel %vm484, %v413, 0
      %533 = vmatprep.subr.bf16.mxu0 0
      %534 = vmatpush1.bf16.msra.mxu0 %v466
      %535 = vmatprep.subr.bf16.mxu0 0
      %536 = vmatpush1.bf16.msra.mxu0 %v467
      %537 = vmatprep.subr.bf16.mxu0 0
      %538 = vmatpush1.bf16.msra.mxu0 %v468
      %539 = vmatprep.subr.bf16.mxu0 0
      %540 = vmatpush1.bf16.msra.mxu0 %v469
      %541 = vmatprep.subr.bf16.mxu0 0
      %542 = vmatpush1.bf16.msra.mxu0 %v470
      %543 = vmatprep.subr.bf16.mxu0 0
      %544 = vmatpush1.bf16.msra.mxu0 %v471
      %545 = vmatprep.subr.bf16.mxu0 0
      %546 = vmatpush1.bf16.msra.mxu0 %v472
      %547 = vmatprep.subr.bf16.mxu0 0
      %548 = vmatpush1.bf16.msra.mxu0 %v473
      %549 = vmatprep.subr.bf16.mxu0 0
      %550 = vmatpush1.bf16.msra.mxu0 %v474
      %551 = vmatprep.subr.bf16.mxu0 0
      %552 = vmatpush1.bf16.msra.mxu0 0
      %553 = vmatprep.subr.bf16.mxu0 0
      %554 = vmatpush1.bf16.msra.mxu0 0
      %555 = vmatprep.subr.bf16.mxu0 0
      %556 = vmatpush1.bf16.msra.mxu0 0
      %557 = vmatprep.subr.bf16.mxu0 0
      %558 = vmatpush1.bf16.msra.mxu0 0
      %559 = vmatprep.subr.bf16.mxu0 0
      %560 = vmatpush1.bf16.msra.mxu0 0
      %561 = vmatprep.subr.bf16.mxu0 0
      %562 = vmatpush1.bf16.msra.mxu0 0
      %563 = vmatprep.subr.bf16.mxu0 0
      %564 = vmatpush1.bf16.msra.mxu0 0
      %565 = vmatprep.mubr.bf16.mxu0 %v486
      %566 = vmatmul.mubr.bf16.gmra.mrb[0].mxu0 %v382
      %v567 = vpop.f32.mrb[0].mxu0
      %v568 = vadd.f32 %v284, %v567
      %v569 = vpop.f32.mrb[0].mxu0
      %v570 = vpop.f32.mrb[0].mxu0
      %v571 = vadd.f32 %v284, %v570
      %v572 = vpop.f32.mrb[0].mxu0
      %573 = vmatprep.mubr.bf16.mxu0 %v489
      %574 = vmatmul.mubr.bf16.gmra.mrb[0].mxu0 %v384
      %v575 = vpop.f32.mrb[0].mxu0
      %v576 = vadd.f32 %v284, %v575
      %v577 = vpop.f32.mrb[0].mxu0
      %v578 = vpop.f32.mrb[0].mxu0
      %v579 = vadd.f32 %v284, %v578
      %v580 = vpop.f32.mrb[0].mxu0
      %581 = vmatprep.mubr.bf16.mxu0 %v492
      %582 = vmatmul.mubr.bf16.gmra.mrb[0].mxu0 %v386
      %v583 = vpop.f32.mrb[0].mxu0
      %v584 = vadd.f32 %v284, %v583
      %v585 = vpop.f32.mrb[0].mxu0
      %v586 = vpop.f32.mrb[0].mxu0
      %v587 = vadd.f32 %v284, %v586
      %v588 = vpop.f32.mrb[0].mxu0
      %589 = vmatprep.mubr.bf16.mxu0 %v495
      %590 = vmatmul.mubr.bf16.gmra.mrb[0].mxu0 %v388
      %v591 = vpop.f32.mrb[0].mxu0
      %v592 = vadd.f32 %v284, %v591
      %v593 = vpop.f32.mrb[0].mxu0
      %v594 = vpop.f32.mrb[0].mxu0
      %v595 = vadd.f32 %v284, %v594
      %v596 = vpop.f32.mrb[0].mxu0
      %597 = vmatprep.mubr.bf16.mxu0 %v498
      %598 = vmatmul.mubr.bf16.gmra.mrb[0].mxu0 %v390
      %v599 = vpop.f32.mrb[0].mxu0
      %v600 = vadd.f32 %v284, %v599
      %v601 = vpop.f32.mrb[0].mxu0
      %v602 = vpop.f32.mrb[0].mxu0
      %v603 = vadd.f32 %v284, %v602
      %v604 = vpop.f32.mrb[0].mxu0
      %605 = vmatprep.mubr.bf16.mxu0 %v501
      %606 = vmatmul.mubr.bf16.gmra.mrb[0].mxu0 %v392
      %v607 = vpop.f32.mrb[0].mxu0
      %v608 = vadd.f32 %v284, %v607
      %v609 = vpop.f32.mrb[0].mxu0
      %v610 = vpop.f32.mrb[0].mxu0
      %v611 = vadd.f32 %v284, %v610
      %v612 = vpop.f32.mrb[0].mxu0
      %613 = vmatprep.mubr.bf16.mxu0 %v504
      %614 = vmatmul.mubr.bf16.gmra.mrb[0].mxu0 %v394
      %v615 = vpop.f32.mrb[0].mxu0
      %v616 = vadd.f32 %v284, %v615
      %v617 = vpop.f32.mrb[0].mxu0
      %v618 = vpop.f32.mrb[0].mxu0
      %v619 = vadd.f32 %v284, %v618
      %v620 = vpop.f32.mrb[0].mxu0
      %621 = vmatprep.mubr.bf16.mxu0 %v507
      %622 = vmatmul.mubr.bf16.gmra.mrb[0].mxu0 %v396
      %v623 = vpop.f32.mrb[0].mxu0
      %v624 = vadd.f32 %v284, %v623
      %v625 = vpop.f32.mrb[0].mxu0
      %v626 = vpop.f32.mrb[0].mxu0
      %v627 = vadd.f32 %v284, %v626
      %v628 = vpop.f32.mrb[0].mxu0
      %629 = vmatprep.mubr.bf16.mxu0 %v510
      %630 = vmatmul.mubr.bf16.gmra.mrb[0].mxu0 %v398
      %v631 = vpop.f32.mrb[0].mxu0
      %v632 = vadd.f32 %v284, %v631
      %v633 = vpop.f32.mrb[0].mxu0
      %v634 = vpop.f32.mrb[0].mxu0
      %v635 = vadd.f32 %v284, %v634
      %v636 = vpop.f32.mrb[0].mxu0
      %637 = vmatprep.mubr.bf16.mxu0 %v513
      %638 = vmatmul.mubr.bf16.gmra.mrb[0].mxu0 %v400
      %v639 = vpop.f32.mrb[0].mxu0
      %v640 = vadd.f32 %v284, %v639
      %v641 = vpop.f32.mrb[0].mxu0
      %v642 = vpop.f32.mrb[0].mxu0
      %v643 = vadd.f32 %v284, %v642
      %v644 = vpop.f32.mrb[0].mxu0
      %645 = vmatprep.mubr.bf16.mxu0 %v516
      %646 = vmatmul.mubr.bf16.gmra.mrb[0].mxu0 %v402
      %v647 = vpop.f32.mrb[0].mxu0
      %v648 = vadd.f32 %v284, %v647
      %v649 = vpop.f32.mrb[0].mxu0
      %v650 = vpop.f32.mrb[0].mxu0
      %v651 = vadd.f32 %v284, %v650
      %v652 = vpop.f32.mrb[0].mxu0
      %653 = vmatprep.mubr.bf16.mxu0 %v519
      %654 = vmatmul.mubr.bf16.gmra.mrb[0].mxu0 %v404
      %v655 = vpop.f32.mrb[0].mxu0
      %v656 = vadd.f32 %v284, %v655
      %v657 = vpop.f32.mrb[0].mxu0
      %v658 = vpop.f32.mrb[0].mxu0
      %v659 = vadd.f32 %v284, %v658
      %v660 = vpop.f32.mrb[0].mxu0
      %661 = vmatprep.mubr.bf16.mxu0 %v522
      %662 = vmatmul.mubr.bf16.gmra.mrb[0].mxu0 %v406
      %v663 = vpop.f32.mrb[0].mxu0
      %v664 = vadd.f32 %v284, %v663
      %v665 = vpop.f32.mrb[0].mxu0
      %v666 = vpop.f32.mrb[0].mxu0
      %v667 = vadd.f32 %v284, %v666
      %v668 = vpop.f32.mrb[0].mxu0
      %669 = vmatprep.mubr.bf16.mxu0 %v525
      %670 = vmatmul.mubr.bf16.gmra.mrb[0].mxu0 %v408
      %v671 = vpop.f32.mrb[0].mxu0
      %v672 = vadd.f32 %v284, %v671
      %v673 = vpop.f32.mrb[0].mxu0
      %v674 = vpop.f32.mrb[0].mxu0
      %v675 = vadd.f32 %v284, %v674
      %v676 = vpop.f32.mrb[0].mxu0
      %677 = vmatprep.mubr.bf16.mxu0 %v528
      %678 = vmatmul.mubr.bf16.gmra.mrb[0].mxu0 %v410
      %v679 = vpop.f32.mrb[0].mxu0
      %v680 = vadd.f32 %v284, %v679
      %v681 = vpop.f32.mrb[0].mxu0
      %v682 = vpop.f32.mrb[0].mxu0
      %v683 = vadd.f32 %v284, %v682
      %v684 = vpop.f32.mrb[0].mxu0
      %685 = vmatprep.mubr.bf16.mxu0 %v531
      %686 = vmatmul.mubr.bf16.gmra.mrb[0].mxu0 %v412
      %v687 = vpop.f32.mrb[0].mxu0
      %v688 = vadd.f32 %v284, %v687
      %v689 = vpop.f32.mrb[0].mxu0
      %v690 = vpop.f32.mrb[0].mxu0
      %v691 = vadd.f32 %v284, %v690
      %v692 = vpop.f32.mrb[0].mxu0
      %693 = vdwg.mxu0
      %v694 = vmax.f32 %v568, 0.0
      %v695 = vmax.f32 %v571, 0.0
      %v696 = vmax.f32 %v576, 0.0
      %v697 = vmax.f32 %v579, 0.0
      %v698 = vmax.f32 %v584, 0.0
      %v699 = vmax.f32 %v587, 0.0
      %v700 = vmax.f32 %v592, 0.0
      %v701 = vmax.f32 %v595, 0.0
      %v702 = vmax.f32 %v600, 0.0
      %v703 = vmax.f32 %v603, 0.0
      %v704 = vmax.f32 %v608, 0.0
      %v705 = vmax.f32 %v611, 0.0
      %v706 = vmax.f32 %v616, 0.0
      %v707 = vmax.f32 %v619, 0.0
      %v708 = vmax.f32 %v624, 0.0
      %v709 = vmax.f32 %v627, 0.0
      %v710 = vmax.f32 %v632, 0.0
      %v711 = vmax.f32 %v635, 0.0
      %v712 = vmax.f32 %v640, 0.0
      %v713 = vmax.f32 %v643, 0.0
      %v714 = vmax.f32 %v648, 0.0
      %v715 = vmax.f32 %v651, 0.0
      %v716 = vmax.f32 %v656, 0.0
      %v717 = vmax.f32 %v659, 0.0
      %v718 = vmax.f32 %v664, 0.0
      %v719 = vmax.f32 %v667, 0.0
      %v720 = vmax.f32 %v672, 0.0
      %v721 = vmax.f32 %v675, 0.0
      %v722 = vmax.f32 %v680, 0.0
      %v723 = vmax.f32 %v683, 0.0
      %v724 = vmax.f32 %v688, 0.0
      %v725 = vmax.f32 %v691, 0.0
      %v726 = vpack.c.bf16 %v695, %v694
      %v727 = vpack.c.bf16 %v697, %v696
      %v728 = vpack.c.bf16 %v699, %v698
      %v729 = vpack.c.bf16 %v701, %v700
      %v730 = vpack.c.bf16 %v703, %v702
      %v731 = vpack.c.bf16 %v705, %v704
      %v732 = vpack.c.bf16 %v707, %v706
      %v733 = vpack.c.bf16 %v709, %v708
      %v734 = vpack.c.bf16 %v711, %v710
      %v735 = vpack.c.bf16 %v713, %v712
      %v736 = vpack.c.bf16 %v715, %v714
      %v737 = vpack.c.bf16 %v717, %v716
      %v738 = vpack.c.bf16 %v719, %v718
      %v739 = vpack.c.bf16 %v721, %v720
      %v740 = vpack.c.bf16 %v723, %v722
      %v741 = vpack.c.bf16 %v725, %v724
      %v758 = vunpack.c.l.b16 %v726
      %v759 = vunpack.c.h.b16 %v726
      %v760 = vunpack.c.l.b16 %v727
      %v761 = vunpack.c.h.b16 %v727
      %v762 = vunpack.c.l.b16 %v728
      %v763 = vunpack.c.h.b16 %v728
      %v764 = vunpack.c.l.b16 %v729
      %v765 = vunpack.c.h.b16 %v729
      %v766 = vunpack.c.l.b16 %v730
      %v767 = vunpack.c.h.b16 %v730
      %v768 = vunpack.c.l.b16 %v731
      %v769 = vunpack.c.h.b16 %v731
      %v770 = vunpack.c.l.b16 %v732
      %v771 = vunpack.c.h.b16 %v732
      %v772 = vunpack.c.l.b16 %v733
      %v773 = vunpack.c.h.b16 %v733
      %v774 = vunpack.c.l.b16 %v734
      %v775 = vunpack.c.h.b16 %v734
      %v776 = vunpack.c.l.b16 %v735
      %v777 = vunpack.c.h.b16 %v735
      %v778 = vunpack.c.l.b16 %v736
      %v779 = vunpack.c.h.b16 %v736
      %v780 = vunpack.c.l.b16 %v737
      %v781 = vunpack.c.h.b16 %v737
      %v782 = vunpack.c.l.b16 %v738
      %v783 = vunpack.c.h.b16 %v738
      %v784 = vunpack.c.l.b16 %v739
      %v785 = vunpack.c.h.b16 %v739
      %v786 = vunpack.c.l.b16 %v740
      %v787 = vunpack.c.h.b16 %v740
      %v788 = vunpack.c.l.b16 %v741
      %v789 = vunpack.c.h.b16 %v741
      %v790 = vpack.c.b16 %v758, %v758
      %v791 = vpack.c.b16 %v759, %v759
      %v792 = vpack.c.b16 %v760, %v760
      %v793 = vpack.c.b16 %v761, %v761
      %v794 = vpack.c.b16 %v762, %v762
      %v795 = vpack.c.b16 %v763, %v763
      %v796 = vpack.c.b16 %v764, %v764
      %v797 = vpack.c.b16 %v765, %v765
      %v798 = vpack.c.b16 %v766, %v766
      %v799 = vpack.c.b16 %v767, %v767
      %v800 = vpack.c.b16 %v768, %v768
      %v801 = vpack.c.b16 %v769, %v769
      %v802 = vpack.c.b16 %v770, %v770
      %v803 = vpack.c.b16 %v771, %v771
      %v804 = vpack.c.b16 %v772, %v772
      %v805 = vpack.c.b16 %v773, %v773
      %v806 = vpack.c.b16 %v774, %v774
      %v807 = vpack.c.b16 %v775, %v775
      %v808 = vpack.c.b16 %v776, %v776
      %v809 = vpack.c.b16 %v777, %v777
      %v810 = vpack.c.b16 %v778, %v778
      %v811 = vpack.c.b16 %v779, %v779
      %v812 = vpack.c.b16 %v780, %v780
      %v813 = vpack.c.b16 %v781, %v781
      %v814 = vpack.c.b16 %v782, %v782
      %v815 = vpack.c.b16 %v783, %v783
      %v816 = vpack.c.b16 %v784, %v784
      %v817 = vpack.c.b16 %v785, %v785
      %v818 = vpack.c.b16 %v786, %v786
      %v819 = vpack.c.b16 %v787, %v787
      %v820 = vpack.c.b16 %v788, %v788
      %v821 = vpack.c.b16 %v789, %v789
      %vm854 = vcmask 257024
      %855 = vst.msk [vmem:[%s226] sm:$0xf] %vm854, %v790
      %856 = vst.msk [vmem:[%s226 + $0x4] sm:$0xf] %vm854, %v791
      %857 = vst.msk [vmem:[%s226 + $0x8] sm:$0xf] %vm854, %v792
      %858 = vst.msk [vmem:[%s226 + $0xc] sm:$0xf] %vm854, %v793
      %859 = vst.msk [vmem:[%s226 + $0x10] sm:$0xf] %vm854, %v794
      %860 = vst.msk [vmem:[%s226 + $0x14] sm:$0xf] %vm854, %v795
      %861 = vst.msk [vmem:[%s226 + $0x18] sm:$0xf] %vm854, %v796
      %862 = vst.msk [vmem:[%s226 + $0x1c] sm:$0xf] %vm854, %v797
      %863 = vst.msk [vmem:[%s226 + $0x20] sm:$0xf] %vm854, %v798
      %864 = vst.msk [vmem:[%s226 + $0x24] sm:$0xf] %vm854, %v799
      %865 = vst.msk [vmem:[%s226 + $0x28] sm:$0xf] %vm854, %v800
      %866 = vst.msk [vmem:[%s226 + $0x2c] sm:$0xf] %vm854, %v801
      %867 = vst.msk [vmem:[%s226 + $0x30] sm:$0xf] %vm854, %v802
      %868 = vst.msk [vmem:[%s226 + $0x34] sm:$0xf] %vm854, %v803
      %869 = vst.msk [vmem:[%s226 + $0x38] sm:$0xf] %vm854, %v804
      %870 = vst.msk [vmem:[%s226 + $0x3c] sm:$0xf] %vm854, %v805
      %871 = vst.msk [vmem:[%s226 + $0x40] sm:$0xf] %vm854, %v806
      %872 = vst.msk [vmem:[%s226 + $0x44] sm:$0xf] %vm854, %v807
      %873 = vst.msk [vmem:[%s226 + $0x48] sm:$0xf] %vm854, %v808
      %874 = vst.msk [vmem:[%s226 + $0x4c] sm:$0xf] %vm854, %v809
      %875 = vst.msk [vmem:[%s226 + $0x50] sm:$0xf] %vm854, %v810
      %876 = vst.msk [vmem:[%s226 + $0x54] sm:$0xf] %vm854, %v811
      %877 = vst.msk [vmem:[%s226 + $0x58] sm:$0xf] %vm854, %v812
      %878 = vst.msk [vmem:[%s226 + $0x5c] sm:$0xf] %vm854, %v813
      %879 = vst.msk [vmem:[%s226 + $0x60] sm:$0xf] %vm854, %v814
      %880 = vst.msk [vmem:[%s226 + $0x64] sm:$0xf] %vm854, %v815
      %881 = vst.msk [vmem:[%s226 + $0x68] sm:$0xf] %vm854, %v816
      %882 = vst.msk [vmem:[%s226 + $0x6c] sm:$0xf] %vm854, %v817
      %883 = vst.msk [vmem:[%s226 + $0x70] sm:$0xf] %vm854, %v818
      %884 = vst.msk [vmem:[%s226 + $0x74] sm:$0xf] %vm854, %v819
      %885 = vst.msk [vmem:[%s226 + $0x78] sm:$0xf] %vm854, %v820
      %886 = vst.msk [vmem:[%s226 + $0x7c] sm:$0xf] %vm854, %v821
      %s887 = smul.u32 32, %s18
      %p888 = scmp.lt.s32.totalorder %s887, 63
      %s889 = scalar_select %p888, %s887, 63
      %p890 = scmp.lt.s32.totalorder %s19, 0
      %s891 = scalar_select %p890, %s19, 0
      %s892 = sadd.s32 %s891, %s889
      %s893 = smul.addr %s892, 4
      %s894 = scalar_lea.vmem %s3, %s893
      // Predicated region
      $region33: #{dae_forward.11} parent=31 // pred_check
        %p895 = pneg %p124
      $region34: #{dae_forward.11} parent=31 // pred_check_branch
        %897 = sbr.rel (%p895) target = $region36
      $region35: #{dae_forward.11} parent=31 // pred_region
        %s898 = smul.u32 32, %s18
      $region36: #{dae_forward.11} parent=31 // pred_fallthru
        _
    $region32: #{dae_forward.11} parent=5 // pred_fallthru
      _
    %p899 = scmp.le.s32.totalorder 2, %s9
    // Predicated region
    $region37: #{dae_forward.11} parent=5 // pred_check
      %p900 = pneg %p899
    $region38: #{dae_forward.11} parent=5 // pred_check_branch
      %902 = sbr.rel (%p900) target = $region40
    $region39: #{dae_forward.11} parent=5 // pred_region
      %s903 = ssub.s32 %s9, 2
      // Predicated region
      $region41: #{dae_forward.11} parent=39 // pred_check
        %p904 = pneg %p130
      $region42: #{dae_forward.11} parent=39 // pred_check_branch
        %906 = sbr.rel (%p904) target = $region44
      $region43: #{dae_forward.11} parent=39 // pred_region
        %s907 = smul.u32 32, %s20
        %p908 = scmp.lt.s32.totalorder %s907, 63
        %s909 = scalar_select %p908, %s907, 63
        %p910 = scmp.lt.s32.totalorder %s21, 0
        %s911 = scalar_select %p910, %s21, 0
        %s912 = sadd.s32 %s911, %s909
        %s913 = smul.addr %s912, 4
        %s914 = scalar_lea.vmem %s3, %s913
      $region44: #{dae_forward.11} parent=39 // pred_fallthru
        _
    $region40: #{dae_forward.11} parent=5 // pred_fallthru
      _
  $region6: #{dae_forward.11} parent=0 // loop_footer
    %s13 = sadd.s32 1, %s9
  $region7: #{dae_forward.11} parent=0 // loop_footer_branch
    %8 = sbr.rel target = $region3
  $region8: #{dae_forward.11} parent=0 // loop_exit
    _

// kernel: dae_forward.12
$region0: #{dae_forward.12}
  #allocation0 [shape = 'u32[]', space=smem, size = 0x4, offset = 0x4, fixed_abs, tag = 'smem constant byte address 0x4 - core index']
  #allocation1 [shape = 'u32[144,128]{1,0:T(1,128)}', space=vmem, size = 0x12000, scoped, tag = 'internal scratch']
  %s0 = inlined_call_operand.vmem [shape: bf16[128,288], index: 0, kind: input, shape index: {}]
  %s1 = inlined_call_operand.vmem [shape: bf16[288,64], index: 1, kind: input, shape index: {}]
  %s2 = inlined_call_operand.vmem [shape: f32[1,64], index: 2, kind: input, shape index: {}]
  %s3 = inlined_call_operand.vmem [shape: bf16[128,64], index: 3, kind: output, shape index: {}]
  %s4 = sld [smem:[#allocation0]]
  $region22: #{dae_forward.12} parent=0
    _
  %s6 = ssub.s32 1, %s4
  %s7 = scalar_select 0, %s6, %s4
  // Predicated region
  $region2: #{dae_forward.12} parent=0 // pred_check
    _
  $region3: #{dae_forward.12} parent=0 // pred_check_branch
    %9 = sbr.rel (0) target = $region5
  $region4: #{dae_forward.12} parent=0 // pred_region
    _
  $region5: #{dae_forward.12} parent=0 // pred_fallthru
    _
  // Predicated region
  $region6: #{dae_forward.12} parent=0 // pred_check
    _
  $region7: #{dae_forward.12} parent=0 // pred_check_branch
    %11 = sbr.rel (0) target = $region9
  $region8: #{dae_forward.12} parent=0 // pred_region
    _
  $region9: #{dae_forward.12} parent=0 // pred_fallthru
    _
  // Predicated region
  $region10: #{dae_forward.12} parent=0 // pred_check
    _
  $region11: #{dae_forward.12} parent=0 // pred_check_branch
    %13 = sbr.rel (0) target = $region13
  $region12: #{dae_forward.12} parent=0 // pred_region
    _
  $region13: #{dae_forward.12} parent=0 // pred_fallthru
    _
  %v15 = vld [vmem:[%s0] sm:$0xff]
  %v16 = vld [vmem:[%s0 + $0x8] sm:$0xf]
  %v17 = vld [vmem:[%s0 + $0xc] sm:$0xff]
  %v18 = vld [vmem:[%s0 + $0x14] sm:$0xf]
  %v19 = vld [vmem:[%s0 + $0x18] sm:$0xff]
  %v20 = vld [vmem:[%s0 + $0x20] sm:$0xf]
  %v21 = vld [vmem:[%s0 + $0x24] sm:$0xff]
  %v22 = vld [vmem:[%s0 + $0x2c] sm:$0xf]
  %v23 = vld [vmem:[%s0 + $0x30] sm:$0xff]
  %v24 = vld [vmem:[%s0 + $0x38] sm:$0xf]
  %v25 = vld [vmem:[%s0 + $0x3c] sm:$0xff]
  %v26 = vld [vmem:[%s0 + $0x44] sm:$0xf]
  %v27 = vld [vmem:[%s0 + $0x48] sm:$0xff]
  %v28 = vld [vmem:[%s0 + $0x50] sm:$0xf]
  %v29 = vld [vmem:[%s0 + $0x54] sm:$0xff]
  %v30 = vld [vmem:[%s0 + $0x5c] sm:$0xf]
  %v31 = vld [vmem:[%s0 + $0x60] sm:$0xff]
  %v32 = vld [vmem:[%s0 + $0x68] sm:$0xf]
  %v33 = vld [vmem:[%s0 + $0x6c] sm:$0xff]
  %v34 = vld [vmem:[%s0 + $0x74] sm:$0xf]
  %v35 = vld [vmem:[%s0 + $0x78] sm:$0xff]
  %v36 = vld [vmem:[%s0 + $0x80] sm:$0xf]
  %v37 = vld [vmem:[%s0 + $0x84] sm:$0xff]
  %v38 = vld [vmem:[%s0 + $0x8c] sm:$0xf]
  %v39 = vld [vmem:[%s0 + $0x90] sm:$0xff]
  %v40 = vld [vmem:[%s0 + $0x98] sm:$0xf]
  %v41 = vld [vmem:[%s0 + $0x9c] sm:$0xff]
  %v42 = vld [vmem:[%s0 + $0xa4] sm:$0xf]
  %v43 = vld [vmem:[%s0 + $0xa8] sm:$0xff]
  %v44 = vld [vmem:[%s0 + $0xb0] sm:$0xf]
  %v45 = vld [vmem:[%s0 + $0xb4] sm:$0xff]
  %v46 = vld [vmem:[%s0 + $0xbc] sm:$0xf]
  %v47 = vld [vmem:[%s1] sm:$0xf]
  %v48 = vld [vmem:[%s1 + $0x4] sm:$0xf]
  %v49 = vld [vmem:[%s1 + $0x8] sm:$0xf]
  %v50 = vld [vmem:[%s1 + $0xc] sm:$0xf]
  %v51 = vld [vmem:[%s1 + $0x10] sm:$0xf]
  %v52 = vld [vmem:[%s1 + $0x14] sm:$0xf]
  %v53 = vld [vmem:[%s1 + $0x18] sm:$0xf]
  %v54 = vld [vmem:[%s1 + $0x1c] sm:$0xf]
  %v55 = vld [vmem:[%s1 + $0x20] sm:$0xf]
  %v56 = vld [vmem:[%s1 + $0x24] sm:$0xf]
  %v57 = vld [vmem:[%s1 + $0x28] sm:$0xf]
  %v58 = vld [vmem:[%s1 + $0x2c] sm:$0xf]
  %v59 = vld [vmem:[%s1 + $0x30] sm:$0xf]
  %v60 = vld [vmem:[%s1 + $0x34] sm:$0xf]
  %v61 = vld [vmem:[%s1 + $0x38] sm:$0xf]
  %v62 = vld [vmem:[%s1 + $0x3c] sm:$0xf]
  %v63 = vld [vmem:[%s1 + $0x40] sm:$0xf]
  %v64 = vld [vmem:[%s1 + $0x44] sm:$0xf]
  %v65 = vld [vmem:[%s1 + $0x48] sm:$0xf]
  %v66 = vld [vmem:[%s1 + $0x4c] sm:$0xf]
  %v67 = vld [vmem:[%s1 + $0x50] sm:$0xf]
  %v68 = vld [vmem:[%s1 + $0x54] sm:$0xf]
  %v69 = vld [vmem:[%s1 + $0x58] sm:$0xf]
  %v70 = vld [vmem:[%s1 + $0x5c] sm:$0xf]
  %v71 = vld [vmem:[%s1 + $0x60] sm:$0xf]
  %v72 = vld [vmem:[%s1 + $0x64] sm:$0xf]
  %v73 = vld [vmem:[%s1 + $0x68] sm:$0xf]
  %v74 = vld [vmem:[%s1 + $0x6c] sm:$0xf]
  %v75 = vld [vmem:[%s1 + $0x70] sm:$0xf]
  %v76 = vld [vmem:[%s1 + $0x74] sm:$0xf]
  %v77 = vld [vmem:[%s1 + $0x78] sm:$0xf]
  %v78 = vld [vmem:[%s1 + $0x7c] sm:$0xf]
  %v79 = vld [vmem:[%s1 + $0x80] sm:$0xf]
  %v80 = vld [vmem:[%s1 + $0x84] sm:$0xf]
  %v81 = vld [vmem:[%s1 + $0x88] sm:$0xf]
  %v82 = vld [vmem:[%s1 + $0x8c] sm:$0xf]
  %v83 = vld [vmem:[%s2] sm:$0x1]
  %v85 = vlaneseq
  %v86 = vshrl.u32 %v85, 7
  %v87 = vsub.s32 0, %v86
  %v88 = vrot.slane %v83, %v87
  %v122 = vunpack.c.l.b16 %v15
  %v123 = vunpack.c.h.b16 %v15
  %v124 = vunpack.c.l.b16 %v16
  %v125 = vunpack.c.l.b16 %v17
  %v126 = vunpack.c.h.b16 %v17
  %v127 = vunpack.c.l.b16 %v18
  %v128 = vunpack.c.l.b16 %v19
  %v129 = vunpack.c.h.b16 %v19
  %v130 = vunpack.c.l.b16 %v20
  %v131 = vunpack.c.l.b16 %v21
  %v132 = vunpack.c.h.b16 %v21
  %v133 = vunpack.c.l.b16 %v22
  %v134 = vunpack.c.l.b16 %v23
  %v135 = vunpack.c.h.b16 %v23
  %v136 = vunpack.c.l.b16 %v24
  %v137 = vunpack.c.l.b16 %v25
  %v138 = vunpack.c.h.b16 %v25
  %v139 = vunpack.c.l.b16 %v26
  %v140 = vunpack.c.l.b16 %v27
  %v141 = vunpack.c.h.b16 %v27
  %v142 = vunpack.c.l.b16 %v28
  %v143 = vunpack.c.l.b16 %v29
  %v144 = vunpack.c.h.b16 %v29
  %v145 = vunpack.c.l.b16 %v30
  %v146 = vunpack.c.l.b16 %v31
  %v147 = vunpack.c.h.b16 %v31
  %v148 = vunpack.c.l.b16 %v32
  %v149 = vunpack.c.l.b16 %v33
  %v150 = vunpack.c.h.b16 %v33
  %v151 = vunpack.c.l.b16 %v34
  %v152 = vunpack.c.l.b16 %v35
  %v153 = vunpack.c.h.b16 %v35
  %v154 = vunpack.c.l.b16 %v36
  %v155 = vunpack.c.l.b16 %v37
  %v156 = vunpack.c.h.b16 %v37
  %v157 = vunpack.c.l.b16 %v38
  %v158 = vunpack.c.l.b16 %v39
  %v159 = vunpack.c.h.b16 %v39
  %v160 = vunpack.c.l.b16 %v40
  %v161 = vunpack.c.l.b16 %v41
  %v162 = vunpack.c.h.b16 %v41
  %v163 = vunpack.c.l.b16 %v42
  %v164 = vunpack.c.l.b16 %v43
  %v165 = vunpack.c.h.b16 %v43
  %v166 = vunpack.c.l.b16 %v44
  %v167 = vunpack.c.l.b16 %v45
  %v168 = vunpack.c.h.b16 %v45
  %v169 = vunpack.c.l.b16 %v46
  %v170 = vpack.c.b16 %v125, %v122
  %v171 = vpack.c.b16 %v126, %v123
  %v172 = vpack.c.b16 %v127, %v124
  %v173 = vpack.c.b16 %v131, %v128
  %v174 = vpack.c.b16 %v132, %v129
  %v175 = vpack.c.b16 %v133, %v130
  %v176 = vpack.c.b16 %v137, %v134
  %v177 = vpack.c.b16 %v138, %v135
  %v178 = vpack.c.b16 %v139, %v136
  %v179 = vpack.c.b16 %v143, %v140
  %v180 = vpack.c.b16 %v144, %v141
  %v181 = vpack.c.b16 %v145, %v142
  %v182 = vpack.c.b16 %v149, %v146
  %v183 = vpack.c.b16 %v150, %v147
  %v184 = vpack.c.b16 %v151, %v148
  %v185 = vpack.c.b16 %v155, %v152
  %v186 = vpack.c.b16 %v156, %v153
  %v187 = vpack.c.b16 %v157, %v154
  %v188 = vpack.c.b16 %v161, %v158
  %v189 = vpack.c.b16 %v162, %v159
  %v190 = vpack.c.b16 %v163, %v160
  %v191 = vpack.c.b16 %v167, %v164
  %v192 = vpack.c.b16 %v168, %v165
  %v193 = vpack.c.b16 %v169, %v166
  %v246 = vunpack.c.l.b16 %v47
  %v247 = vunpack.c.l.b16 %v48
  %v248 = vunpack.c.l.b16 %v49
  %v249 = vunpack.c.l.b16 %v50
  %v250 = vunpack.c.l.b16 %v51
  %v251 = vunpack.c.l.b16 %v52
  %v252 = vunpack.c.l.b16 %v53
  %v253 = vunpack.c.l.b16 %v54
  %v254 = vunpack.c.l.b16 %v55
  %v255 = vunpack.c.l.b16 %v56
  %v256 = vunpack.c.l.b16 %v57
  %v257 = vunpack.c.l.b16 %v58
  %v258 = vunpack.c.l.b16 %v59
  %v259 = vunpack.c.l.b16 %v60
  %v260 = vunpack.c.l.b16 %v61
  %v261 = vunpack.c.l.b16 %v62
  %v262 = vunpack.c.l.b16 %v63
  %v263 = vunpack.c.l.b16 %v64
  %v264 = vunpack.c.l.b16 %v65
  %v265 = vunpack.c.l.b16 %v66
  %v266 = vunpack.c.l.b16 %v67
  %v267 = vunpack.c.l.b16 %v68
  %v268 = vunpack.c.l.b16 %v69
  %v269 = vunpack.c.l.b16 %v70
  %v270 = vunpack.c.l.b16 %v71
  %v271 = vunpack.c.l.b16 %v72
  %v272 = vunpack.c.l.b16 %v73
  %v273 = vunpack.c.l.b16 %v74
  %v274 = vunpack.c.l.b16 %v75
  %v275 = vunpack.c.l.b16 %v76
  %v276 = vunpack.c.l.b16 %v77
  %v277 = vunpack.c.l.b16 %v78
  %v278 = vunpack.c.l.b16 %v79
  %v279 = vunpack.c.l.b16 %v80
  %v280 = vunpack.c.l.b16 %v81
  %v281 = vunpack.c.l.b16 %v82
  %v282 = vpack.c.b16 %v247, %v246
  %v283 = vpack.c.b16 %v249, %v248
  %v284 = vpack.c.b16 %v251, %v250
  %v285 = vpack.c.b16 %v253, %v252
  %v286 = vpack.c.b16 %v255, %v254
  %v287 = vpack.c.b16 %v257, %v256
  %v288 = vpack.c.b16 %v259, %v258
  %v289 = vpack.c.b16 %v261, %v260
  %v290 = vpack.c.b16 %v263, %v262
  %v291 = vpack.c.b16 %v265, %v264
  %v292 = vpack.c.b16 %v267, %v266
  %v293 = vpack.c.b16 %v269, %v268
  %v294 = vpack.c.b16 %v271, %v270
  %v295 = vpack.c.b16 %v273, %v272
  %v296 = vpack.c.b16 %v275, %v274
  %v297 = vpack.c.b16 %v277, %v276
  %v298 = vpack.c.b16 %v279, %v278
  %v299 = vpack.c.b16 %v281, %v280
  %vm318 = vcmask 261120
  %v320 = vsel %vm318, %v172, 0
  %v323 = vsel %vm318, %v175, 0
  %v326 = vsel %vm318, %v178, 0
  %v329 = vsel %vm318, %v181, 0
  %v332 = vsel %vm318, %v184, 0
  %v335 = vsel %vm318, %v187, 0
  %v338 = vsel %vm318, %v190, 0
  %v341 = vsel %vm318, %v193, 0
  %343 = vmatprep.subr.bf16.mxu0 0
  %344 = vmatpush1.bf16.msra.mxu0 %v282
  %345 = vmatprep.subr.bf16.mxu0 0
  %346 = vmatpush1.bf16.msra.mxu0 %v283
  %347 = vmatprep.subr.bf16.mxu0 0
  %348 = vmatpush1.bf16.msra.mxu0 %v284
  %349 = vmatprep.subr.bf16.mxu0 0
  %350 = vmatpush1.bf16.msra.mxu0 %v285
  %351 = vmatprep.subr.bf16.mxu0 0
  %352 = vmatpush1.bf16.msra.mxu0 %v286
  %353 = vmatprep.subr.bf16.mxu0 0
  %354 = vmatpush1.bf16.msra.mxu0 %v287
  %355 = vmatprep.subr.bf16.mxu0 0
  %356 = vmatpush1.bf16.msra.mxu0 %v288
  %357 = vmatprep.subr.bf16.mxu0 0
  %358 = vmatpush1.bf16.msra.mxu0 %v289
  %359 = vmatprep.subr.bf16.mxu0 0
  %360 = vmatpush1.bf16.msra.mxu0 %v290
  %361 = vmatprep.subr.bf16.mxu0 0
  %362 = vmatpush1.bf16.msra.mxu0 %v291
  %363 = vmatprep.subr.bf16.mxu0 0
  %364 = vmatpush1.bf16.msra.mxu0 %v292
  %365 = vmatprep.subr.bf16.mxu0 0
  %366 = vmatpush1.bf16.msra.mxu0 %v293
  %367 = vmatprep.subr.bf16.mxu0 0
  %368 = vmatpush1.bf16.msra.mxu0 %v294
  %369 = vmatprep.subr.bf16.mxu0 0
  %370 = vmatpush1.bf16.msra.mxu0 %v295
  %371 = vmatprep.subr.bf16.mxu0 0
  %372 = vmatpush1.bf16.msra.mxu0 %v296
  %373 = vmatprep.subr.bf16.mxu0 0
  %374 = vmatpush1.bf16.msra.mxu0 %v297
  %375 = vmatprep.mubr.bf16.mxu0 %v171
  %376 = vmatmul.mubr.bf16.gmra.mrb[0].mxu0 %v170
  %v377 = vpop.f32.mrb[0].mxu0
  %v378 = vadd.f32 %v88, %v377
  %v379 = vpop.f32.mrb[0].mxu0
  %v380 = vpop.f32.mrb[0].mxu0
  %v381 = vadd.f32 %v88, %v380
  %v382 = vpop.f32.mrb[0].mxu0
  %383 = vmatprep.mubr.bf16.mxu0 %v174
  %384 = vmatmul.mubr.bf16.gmra.mrb[0].mxu0 %v173
  %v385 = vpop.f32.mrb[0].mxu0
  %v386 = vadd.f32 %v88, %v385
  %v387 = vpop.f32.mrb[0].mxu0
  %v388 = vpop.f32.mrb[0].mxu0
  %v389 = vadd.f32 %v88, %v388
  %v390 = vpop.f32.mrb[0].mxu0
  %391 = vmatprep.mubr.bf16.mxu0 %v177
  %392 = vmatmul.mubr.bf16.gmra.mrb[0].mxu0 %v176
  %v393 = vpop.f32.mrb[0].mxu0
  %v394 = vadd.f32 %v88, %v393
  %v395 = vpop.f32.mrb[0].mxu0
  %v396 = vpop.f32.mrb[0].mxu0
  %v397 = vadd.f32 %v88, %v396
  %v398 = vpop.f32.mrb[0].mxu0
  %399 = vmatprep.mubr.bf16.mxu0 %v180
  %400 = vmatmul.mubr.bf16.gmra.mrb[0].mxu0 %v179
  %v401 = vpop.f32.mrb[0].mxu0
  %v402 = vadd.f32 %v88, %v401
  %v403 = vpop.f32.mrb[0].mxu0
  %v404 = vpop.f32.mrb[0].mxu0
  %v405 = vadd.f32 %v88, %v404
  %v406 = vpop.f32.mrb[0].mxu0
  %407 = vmatprep.mubr.bf16.mxu0 %v183
  %408 = vmatmul.mubr.bf16.gmra.mrb[0].mxu0 %v182
  %v409 = vpop.f32.mrb[0].mxu0
  %v410 = vadd.f32 %v88, %v409
  %v411 = vpop.f32.mrb[0].mxu0
  %v412 = vpop.f32.mrb[0].mxu0
  %v413 = vadd.f32 %v88, %v412
  %v414 = vpop.f32.mrb[0].mxu0
  %415 = vmatprep.mubr.bf16.mxu0 %v186
  %416 = vmatmul.mubr.bf16.gmra.mrb[0].mxu0 %v185
  %v417 = vpop.f32.mrb[0].mxu0
  %v418 = vadd.f32 %v88, %v417
  %v419 = vpop.f32.mrb[0].mxu0
  %v420 = vpop.f32.mrb[0].mxu0
  %v421 = vadd.f32 %v88, %v420
  %v422 = vpop.f32.mrb[0].mxu0
  %423 = vmatprep.mubr.bf16.mxu0 %v189
  %424 = vmatmul.mubr.bf16.gmra.mrb[0].mxu0 %v188
  %v425 = vpop.f32.mrb[0].mxu0
  %v426 = vadd.f32 %v88, %v425
  %v427 = vpop.f32.mrb[0].mxu0
  %v428 = vpop.f32.mrb[0].mxu0
  %v429 = vadd.f32 %v88, %v428
  %v430 = vpop.f32.mrb[0].mxu0
  %431 = vmatprep.mubr.bf16.mxu0 %v192
  %432 = vmatmul.mubr.bf16.gmra.mrb[0].mxu0 %v191
  %v433 = vpop.f32.mrb[0].mxu0
  %v434 = vadd.f32 %v88, %v433
  %v435 = vpop.f32.mrb[0].mxu0
  %v436 = vpop.f32.mrb[0].mxu0
  %v437 = vadd.f32 %v88, %v436
  %v438 = vpop.f32.mrb[0].mxu0
  %439 = vdwg.mxu0
  %440 = vmatprep.subr.bf16.mxu0 0
  %441 = vmatpush1.bf16.msra.mxu0 %v298
  %442 = vmatprep.subr.bf16.mxu0 0
  %443 = vmatpush1.bf16.msra.mxu0 %v299
  %444 = vmatprep.subr.bf16.mxu0 0
  %445 = vmatpush1.bf16.msra.mxu0 0
  %446 = vmatprep.subr.bf16.mxu0 0
  %447 = vmatpush1.bf16.msra.mxu0 0
  %448 = vmatprep.subr.bf16.mxu0 0
  %449 = vmatpush1.bf16.msra.mxu0 0
  %450 = vmatprep.subr.bf16.mxu0 0
  %451 = vmatpush1.bf16.msra.mxu0 0
  %452 = vmatprep.subr.bf16.mxu0 0
  %453 = vmatpush1.bf16.msra.mxu0 0
  %454 = vmatprep.subr.bf16.mxu0 0
  %455 = vmatpush1.bf16.msra.mxu0 0
  %456 = vmatprep.subr.bf16.mxu0 0
  %457 = vmatpush1.bf16.msra.mxu0 0
  %458 = vmatprep.subr.bf16.mxu0 0
  %459 = vmatpush1.bf16.msra.mxu0 0
  %460 = vmatprep.subr.bf16.mxu0 0
  %461 = vmatpush1.bf16.msra.mxu0 0
  %462 = vmatprep.subr.bf16.mxu0 0
  %463 = vmatpush1.bf16.msra.mxu0 0
  %464 = vmatprep.subr.bf16.mxu0 0
  %465 = vmatpush1.bf16.msra.mxu0 0
  %466 = vmatprep.subr.bf16.mxu0 0
  %467 = vmatpush1.bf16.msra.mxu0 0
  %468 = vmatprep.subr.bf16.mxu0 0
  %469 = vmatpush1.bf16.msra.mxu0 0
  %470 = vmatprep.subr.bf16.mxu0 0
  %471 = vmatpush1.bf16.msra.mxu0 0
  %472 = vmatprep.mubr.bf16.mxu0 0
  %473 = vmatmul.mubr.bf16.gmra.mrb[0].mxu0 %v320
  %v474 = vpop.f32.mrb[0].mxu0
  %v475 = vadd.f32 %v378, %v474
  %v476 = vpop.f32.mrb[0].mxu0
  %v477 = vpop.f32.mrb[0].mxu0
  %v478 = vadd.f32 %v381, %v477
  %v479 = vpop.f32.mrb[0].mxu0
  %480 = vmatprep.mubr.bf16.mxu0 0
  %481 = vmatmul.mubr.bf16.gmra.mrb[0].mxu0 %v323
  %v482 = vpop.f32.mrb[0].mxu0
  %v483 = vadd.f32 %v386, %v482
  %v484 = vpop.f32.mrb[0].mxu0
  %v485 = vpop.f32.mrb[0].mxu0
  %v486 = vadd.f32 %v389, %v485
  %v487 = vpop.f32.mrb[0].mxu0
  %488 = vmatprep.mubr.bf16.mxu0 0
  %489 = vmatmul.mubr.bf16.gmra.mrb[0].mxu0 %v326
  %v490 = vpop.f32.mrb[0].mxu0
  %v491 = vadd.f32 %v394, %v490
  %v492 = vpop.f32.mrb[0].mxu0
  %v493 = vpop.f32.mrb[0].mxu0
  %v494 = vadd.f32 %v397, %v493
  %v495 = vpop.f32.mrb[0].mxu0
  %496 = vmatprep.mubr.bf16.mxu0 0
  %497 = vmatmul.mubr.bf16.gmra.mrb[0].mxu0 %v329
  %v498 = vpop.f32.mrb[0].mxu0
  %v499 = vadd.f32 %v402, %v498
  %v500 = vpop.f32.mrb[0].mxu0
  %v501 = vpop.f32.mrb[0].mxu0
  %v502 = vadd.f32 %v405, %v501
  %v503 = vpop.f32.mrb[0].mxu0
  %504 = vmatprep.mubr.bf16.mxu0 0
  %505 = vmatmul.mubr.bf16.gmra.mrb[0].mxu0 %v332
  %v506 = vpop.f32.mrb[0].mxu0
  %v507 = vadd.f32 %v410, %v506
  %v508 = vpop.f32.mrb[0].mxu0
  %v509 = vpop.f32.mrb[0].mxu0
  %v510 = vadd.f32 %v413, %v509
  %v511 = vpop.f32.mrb[0].mxu0
  %512 = vmatprep.mubr.bf16.mxu0 0
  %513 = vmatmul.mubr.bf16.gmra.mrb[0].mxu0 %v335
  %v514 = vpop.f32.mrb[0].mxu0
  %v515 = vadd.f32 %v418, %v514
  %v516 = vpop.f32.mrb[0].mxu0
  %v517 = vpop.f32.mrb[0].mxu0
  %v518 = vadd.f32 %v421, %v517
  %v519 = vpop.f32.mrb[0].mxu0
  %520 = vmatprep.mubr.bf16.mxu0 0
  %521 = vmatmul.mubr.bf16.gmra.mrb[0].mxu0 %v338
  %v522 = vpop.f32.mrb[0].mxu0
  %v523 = vadd.f32 %v426, %v522
  %v524 = vpop.f32.mrb[0].mxu0
  %v525 = vpop.f32.mrb[0].mxu0
  %v526 = vadd.f32 %v429, %v525
  %v527 = vpop.f32.mrb[0].mxu0
  %528 = vmatprep.mubr.bf16.mxu0 0
  %529 = vmatmul.mubr.bf16.gmra.mrb[0].mxu0 %v341
  %v530 = vpop.f32.mrb[0].mxu0
  %v531 = vadd.f32 %v434, %v530
  %v532 = vpop.f32.mrb[0].mxu0
  %v533 = vpop.f32.mrb[0].mxu0
  %v534 = vadd.f32 %v437, %v533
  %v535 = vpop.f32.mrb[0].mxu0
  %536 = vdwg.mxu0
  %v537 = vmax.f32 %v475, 0.0
  %v538 = vmax.f32 %v478, 0.0
  %v539 = vmax.f32 %v483, 0.0
  %v540 = vmax.f32 %v486, 0.0
  %v541 = vmax.f32 %v491, 0.0
  %v542 = vmax.f32 %v494, 0.0
  %v543 = vmax.f32 %v499, 0.0
  %v544 = vmax.f32 %v502, 0.0
  %v545 = vmax.f32 %v507, 0.0
  %v546 = vmax.f32 %v510, 0.0
  %v547 = vmax.f32 %v515, 0.0
  %v548 = vmax.f32 %v518, 0.0
  %v549 = vmax.f32 %v523, 0.0
  %v550 = vmax.f32 %v526, 0.0
  %v551 = vmax.f32 %v531, 0.0
  %v552 = vmax.f32 %v534, 0.0
  %v553 = vpack.c.bf16 %v538, %v537
  %v554 = vpack.c.bf16 %v540, %v539
  %v555 = vpack.c.bf16 %v542, %v541
  %v556 = vpack.c.bf16 %v544, %v543
  %v557 = vpack.c.bf16 %v546, %v545
  %v558 = vpack.c.bf16 %v548, %v547
  %v559 = vpack.c.bf16 %v550, %v549
  %v560 = vpack.c.bf16 %v552, %v551
  %v569 = vunpack.c.l.b16 %v553
  %v570 = vunpack.c.h.b16 %v553
  %v571 = vunpack.c.l.b16 %v554
  %v572 = vunpack.c.h.b16 %v554
  %v573 = vunpack.c.l.b16 %v555
  %v574 = vunpack.c.h.b16 %v555
  %v575 = vunpack.c.l.b16 %v556
  %v576 = vunpack.c.h.b16 %v556
  %v577 = vunpack.c.l.b16 %v557
  %v578 = vunpack.c.h.b16 %v557
  %v579 = vunpack.c.l.b16 %v558
  %v580 = vunpack.c.h.b16 %v558
  %v581 = vunpack.c.l.b16 %v559
  %v582 = vunpack.c.h.b16 %v559
  %v583 = vunpack.c.l.b16 %v560
  %v584 = vunpack.c.h.b16 %v560
  %v585 = vpack.c.b16 %v569, %v569
  %v586 = vpack.c.b16 %v570, %v570
  %v587 = vpack.c.b16 %v571, %v571
  %v588 = vpack.c.b16 %v572, %v572
  %v589 = vpack.c.b16 %v573, %v573
  %v590 = vpack.c.b16 %v574, %v574
  %v591 = vpack.c.b16 %v575, %v575
  %v592 = vpack.c.b16 %v576, %v576
  %v593 = vpack.c.b16 %v577, %v577
  %v594 = vpack.c.b16 %v578, %v578
  %v595 = vpack.c.b16 %v579, %v579
  %v596 = vpack.c.b16 %v580, %v580
  %v597 = vpack.c.b16 %v581, %v581
  %v598 = vpack.c.b16 %v582, %v582
  %v599 = vpack.c.b16 %v583, %v583
  %v600 = vpack.c.b16 %v584, %v584
  %vm617 = vcmask 519168
  %618 = vst.msk [vmem:[%s3] sm:$0xf] %vm617, %v585
  %619 = vst.msk [vmem:[%s3 + $0x4] sm:$0xf] %vm617, %v586
  %620 = vst.msk [vmem:[%s3 + $0x8] sm:$0xf] %vm617, %v587
  %621 = vst.msk [vmem:[%s3 + $0xc] sm:$0xf] %vm617, %v588
  %622 = vst.msk [vmem:[%s3 + $0x10] sm:$0xf] %vm617, %v589
  %623 = vst.msk [vmem:[%s3 + $0x14] sm:$0xf] %vm617, %v590
  %624 = vst.msk [vmem:[%s3 + $0x18] sm:$0xf] %vm617, %v591
  %625 = vst.msk [vmem:[%s3 + $0x1c] sm:$0xf] %vm617, %v592
  %626 = vst.msk [vmem:[%s3 + $0x20] sm:$0xf] %vm617, %v593
  %627 = vst.msk [vmem:[%s3 + $0x24] sm:$0xf] %vm617, %v594
  %628 = vst.msk [vmem:[%s3 + $0x28] sm:$0xf] %vm617, %v595
  %629 = vst.msk [vmem:[%s3 + $0x2c] sm:$0xf] %vm617, %v596
  %630 = vst.msk [vmem:[%s3 + $0x30] sm:$0xf] %vm617, %v597
  %631 = vst.msk [vmem:[%s3 + $0x34] sm:$0xf] %vm617, %v598
  %632 = vst.msk [vmem:[%s3 + $0x38] sm:$0xf] %vm617, %v599
  %633 = vst.msk [vmem:[%s3 + $0x3c] sm:$0xf] %vm617, %v600
  // Predicated region
  $region14: #{dae_forward.12} parent=0 // pred_check
    _
  $region15: #{dae_forward.12} parent=0 // pred_check_branch
    %635 = sbr.rel (0) target = $region17
  $region16: #{dae_forward.12} parent=0 // pred_region
    _
  $region17: #{dae_forward.12} parent=0 // pred_fallthru
    _
  // Predicated region
  $region18: #{dae_forward.12} parent=0 // pred_check
    _
  $region19: #{dae_forward.12} parent=0 // pred_check_branch
    %637 = sbr.rel (0) target = $region21
  $region20: #{dae_forward.12} parent=0 // pred_region
    _
  $region21: #{dae_forward.12} parent=0 // pred_fallthru
    _

// kernel: dae_forward.13
$region0: #{dae_forward.13}
  #allocation0 [shape = 'u32[]', space=smem, size = 0x4, offset = 0x4, fixed_abs, tag = 'smem constant byte address 0x4 - core index']
  #allocation1 [shape = 'u32[144,128]{1,0:T(1,128)}', space=vmem, size = 0x12000, scoped, tag = 'internal scratch']
  %s0 = inlined_call_operand.vmem [shape: bf16[32,576], index: 0, kind: input, shape index: {}]
  %s1 = inlined_call_operand.vmem [shape: bf16[576,128], index: 1, kind: input, shape index: {}]
  %s2 = inlined_call_operand.vmem [shape: f32[1,128], index: 2, kind: input, shape index: {}]
  %s3 = inlined_call_operand.vmem [shape: bf16[32,128], index: 3, kind: output, shape index: {}]
  %s4 = sld [smem:[#allocation0]]
  $region22: #{dae_forward.13} parent=0
    _
  %s6 = ssub.s32 1, %s4
  %s7 = scalar_select 0, %s6, %s4
  // Predicated region
  $region2: #{dae_forward.13} parent=0 // pred_check
    _
  $region3: #{dae_forward.13} parent=0 // pred_check_branch
    %9 = sbr.rel (0) target = $region5
  $region4: #{dae_forward.13} parent=0 // pred_region
    _
  $region5: #{dae_forward.13} parent=0 // pred_fallthru
    _
  // Predicated region
  $region6: #{dae_forward.13} parent=0 // pred_check
    _
  $region7: #{dae_forward.13} parent=0 // pred_check_branch
    %11 = sbr.rel (0) target = $region9
  $region8: #{dae_forward.13} parent=0 // pred_region
    _
  $region9: #{dae_forward.13} parent=0 // pred_fallthru
    _
  // Predicated region
  $region10: #{dae_forward.13} parent=0 // pred_check
    _
  $region11: #{dae_forward.13} parent=0 // pred_check_branch
    %13 = sbr.rel (0) target = $region13
  $region12: #{dae_forward.13} parent=0 // pred_region
    _
  $region13: #{dae_forward.13} parent=0 // pred_fallthru
    _
  %v15 = vld [vmem:[%s0] sm:$0xff]
  %v16 = vld [vmem:[%s0 + $0x8] sm:$0xff]
  %v17 = vld [vmem:[%s0 + $0x10] sm:$0xf]
  %v18 = vld [vmem:[%s0 + $0x14] sm:$0xff]
  %v19 = vld [vmem:[%s0 + $0x1c] sm:$0xff]
  %v20 = vld [vmem:[%s0 + $0x24] sm:$0xf]
  %v21 = vld [vmem:[%s0 + $0x28] sm:$0xff]
  %v22 = vld [vmem:[%s0 + $0x30] sm:$0xff]
  %v23 = vld [vmem:[%s0 + $0x38] sm:$0xf]
  %v24 = vld [vmem:[%s0 + $0x3c] sm:$0xff]
  %v25 = vld [vmem:[%s0 + $0x44] sm:$0xff]
  %v26 = vld [vmem:[%s0 + $0x4c] sm:$0xf]
  %v27 = vld [vmem:[%s1] sm:$0xf]
  %v28 = vld [vmem:[%s1 + $0x4] sm:$0xf]
  %v29 = vld [vmem:[%s1 + $0x8] sm:$0xf]
  %v30 = vld [vmem:[%s1 + $0xc] sm:$0xf]
  %v31 = vld [vmem:[%s1 + $0x10] sm:$0xf]
  %v32 = vld [vmem:[%s1 + $0x14] sm:$0xf]
  %v33 = vld [vmem:[%s1 + $0x18] sm:$0xf]
  %v34 = vld [vmem:[%s1 + $0x1c] sm:$0xf]
  %v35 = vld [vmem:[%s1 + $0x20] sm:$0xf]
  %v36 = vld [vmem:[%s1 + $0x24] sm:$0xf]
  %v37 = vld [vmem:[%s1 + $0x28] sm:$0xf]
  %v38 = vld [vmem:[%s1 + $0x2c] sm:$0xf]
  %v39 = vld [vmem:[%s1 + $0x30] sm:$0xf]
  %v40 = vld [vmem:[%s1 + $0x34] sm:$0xf]
  %v41 = vld [vmem:[%s1 + $0x38] sm:$0xf]
  %v42 = vld [vmem:[%s1 + $0x3c] sm:$0xf]
  %v43 = vld [vmem:[%s1 + $0x40] sm:$0xf]
  %v44 = vld [vmem:[%s1 + $0x44] sm:$0xf]
  %v45 = vld [vmem:[%s1 + $0x48] sm:$0xf]
  %v46 = vld [vmem:[%s1 + $0x4c] sm:$0xf]
  %v47 = vld [vmem:[%s1 + $0x50] sm:$0xf]
  %v48 = vld [vmem:[%s1 + $0x54] sm:$0xf]
  %v49 = vld [vmem:[%s1 + $0x58] sm:$0xf]
  %v50 = vld [vmem:[%s1 + $0x5c] sm:$0xf]
  %v51 = vld [vmem:[%s1 + $0x60] sm:$0xf]
  %v52 = vld [vmem:[%s1 + $0x64] sm:$0xf]
  %v53 = vld [vmem:[%s1 + $0x68] sm:$0xf]
  %v54 = vld [vmem:[%s1 + $0x6c] sm:$0xf]
  %v55 = vld [vmem:[%s1 + $0x70] sm:$0xf]
  %v56 = vld [vmem:[%s1 + $0x74] sm:$0xf]
  %v57 = vld [vmem:[%s1 + $0x78] sm:$0xf]
  %v58 = vld [vmem:[%s1 + $0x7c] sm:$0xf]
  %v59 = vld [vmem:[%s1 + $0x80] sm:$0xf]
  %v60 = vld [vmem:[%s1 + $0x84] sm:$0xf]
  %v61 = vld [vmem:[%s1 + $0x88] sm:$0xf]
  %v62 = vld [vmem:[%s1 + $0x8c] sm:$0xf]
  %v63 = vld [vmem:[%s1 + $0x90] sm:$0xf]
  %v64 = vld [vmem:[%s1 + $0x94] sm:$0xf]
  %v65 = vld [vmem:[%s1 + $0x98] sm:$0xf]
  %v66 = vld [vmem:[%s1 + $0x9c] sm:$0xf]
  %v67 = vld [vmem:[%s1 + $0xa0] sm:$0xf]
  %v68 = vld [vmem:[%s1 + $0xa4] sm:$0xf]
  %v69 = vld [vmem:[%s1 + $0xa8] sm:$0xf]
  %v70 = vld [vmem:[%s1 + $0xac] sm:$0xf]
  %v71 = vld [vmem:[%s1 + $0xb0] sm:$0xf]
  %v72 = vld [vmem:[%s1 + $0xb4] sm:$0xf]
  %v73 = vld [vmem:[%s1 + $0xb8] sm:$0xf]
  %v74 = vld [vmem:[%s1 + $0xbc] sm:$0xf]
  %v75 = vld [vmem:[%s1 + $0xc0] sm:$0xf]
  %v76 = vld [vmem:[%s1 + $0xc4] sm:$0xf]
  %v77 = vld [vmem:[%s1 + $0xc8] sm:$0xf]
  %v78 = vld [vmem:[%s1 + $0xcc] sm:$0xf]
  %v79 = vld [vmem:[%s1 + $0xd0] sm:$0xf]
  %v80 = vld [vmem:[%s1 + $0xd4] sm:$0xf]
  %v81 = vld [vmem:[%s1 + $0xd8] sm:$0xf]
  %v82 = vld [vmem:[%s1 + $0xdc] sm:$0xf]
  %v83 = vld [vmem:[%s1 + $0xe0] sm:$0xf]
  %v84 = vld [vmem:[%s1 + $0xe4] sm:$0xf]
  %v85 = vld [vmem:[%s1 + $0xe8] sm:$0xf]
  %v86 = vld [vmem:[%s1 + $0xec] sm:$0xf]
  %v87 = vld [vmem:[%s1 + $0xf0] sm:$0xf]
  %v88 = vld [vmem:[%s1 + $0xf4] sm:$0xf]
  %v89 = vld [vmem:[%s1 + $0xf8] sm:$0xf]
  %v90 = vld [vmem:[%s1 + $0xfc] sm:$0xf]
  %v91 = vld [vmem:[%s1 + $0x100] sm:$0xf]
  %v92 = vld [vmem:[%s1 + $0x104] sm:$0xf]
  %v93 = vld [vmem:[%s1 + $0x108] sm:$0xf]
  %v94 = vld [vmem:[%s1 + $0x10c] sm:$0xf]
  %v95 = vld [vmem:[%s1 + $0x110] sm:$0xf]
  %v96 = vld [vmem:[%s1 + $0x114] sm:$0xf]
  %v97 = vld [vmem:[%s1 + $0x118] sm:$0xf]
  %v98 = vld [vmem:[%s1 + $0x11c] sm:$0xf]
  %v99 = vld [vmem:[%s2] sm:$0x1]
  %v101 = vlaneseq
  %v102 = vshrl.u32 %v101, 7
  %v103 = vsub.s32 0, %v102
  %v104 = vrot.slane %v99, %v103
  %v118 = vunpack.c.l.b16 %v15
  %v119 = vunpack.c.h.b16 %v15
  %v120 = vunpack.c.l.b16 %v16
  %v121 = vunpack.c.h.b16 %v16
  %v122 = vunpack.c.l.b16 %v17
  %v123 = vunpack.c.l.b16 %v18
  %v124 = vunpack.c.h.b16 %v18
  %v125 = vunpack.c.l.b16 %v19
  %v126 = vunpack.c.h.b16 %v19
  %v127 = vunpack.c.l.b16 %v20
  %v128 = vunpack.c.l.b16 %v21
  %v129 = vunpack.c.h.b16 %v21
  %v130 = vunpack.c.l.b16 %v22
  %v131 = vunpack.c.h.b16 %v22
  %v132 = vunpack.c.l.b16 %v23
  %v133 = vunpack.c.l.b16 %v24
  %v134 = vunpack.c.h.b16 %v24
  %v135 = vunpack.c.l.b16 %v25
  %v136 = vunpack.c.h.b16 %v25
  %v137 = vunpack.c.l.b16 %v26
  %v138 = vpack.c.b16 %v123, %v118
  %v139 = vpack.c.b16 %v124, %v119
  %v140 = vpack.c.b16 %v125, %v120
  %v141 = vpack.c.b16 %v126, %v121
  %v142 = vpack.c.b16 %v127, %v122
  %v143 = vpack.c.b16 %v133, %v128
  %v144 = vpack.c.b16 %v134, %v129
  %v145 = vpack.c.b16 %v135, %v130
  %v146 = vpack.c.b16 %v136, %v131
  %v147 = vpack.c.b16 %v137, %v132
  %v228 = vunpack.c.l.b16 %v27
  %v229 = vunpack.c.l.b16 %v28
  %v230 = vunpack.c.l.b16 %v29
  %v231 = vunpack.c.l.b16 %v30
  %v232 = vunpack.c.l.b16 %v31
  %v233 = vunpack.c.l.b16 %v32
  %v234 = vunpack.c.l.b16 %v33
  %v235 = vunpack.c.l.b16 %v34
  %v236 = vunpack.c.l.b16 %v35
  %v237 = vunpack.c.l.b16 %v36
  %v238 = vunpack.c.l.b16 %v37
  %v239 = vunpack.c.l.b16 %v38
  %v240 = vunpack.c.l.b16 %v39
  %v241 = vunpack.c.l.b16 %v40
  %v242 = vunpack.c.l.b16 %v41
  %v243 = vunpack.c.l.b16 %v42
  %v244 = vunpack.c.l.b16 %v43
  %v245 = vunpack.c.l.b16 %v44
  %v246 = vunpack.c.l.b16 %v45
  %v247 = vunpack.c.l.b16 %v46
  %v248 = vunpack.c.l.b16 %v47
  %v249 = vunpack.c.l.b16 %v48
  %v250 = vunpack.c.l.b16 %v49
  %v251 = vunpack.c.l.b16 %v50
  %v252 = vunpack.c.l.b16 %v51
  %v253 = vunpack.c.l.b16 %v52
  %v254 = vunpack.c.l.b16 %v53
  %v255 = vunpack.c.l.b16 %v54
  %v256 = vunpack.c.l.b16 %v55
  %v257 = vunpack.c.l.b16 %v56
  %v258 = vunpack.c.l.b16 %v57
  %v259 = vunpack.c.l.b16 %v58
  %v260 = vunpack.c.l.b16 %v59
  %v261 = vunpack.c.l.b16 %v60
  %v262 = vunpack.c.l.b16 %v61
  %v263 = vunpack.c.l.b16 %v62
  %v264 = vunpack.c.l.b16 %v63
  %v265 = vunpack.c.l.b16 %v64
  %v266 = vunpack.c.l.b16 %v65
  %v267 = vunpack.c.l.b16 %v66
  %v268 = vunpack.c.l.b16 %v67
  %v269 = vunpack.c.l.b16 %v68
  %v270 = vunpack.c.l.b16 %v69
  %v271 = vunpack.c.l.b16 %v70
  %v272 = vunpack.c.l.b16 %v71
  %v273 = vunpack.c.l.b16 %v72
  %v274 = vunpack.c.l.b16 %v73
  %v275 = vunpack.c.l.b16 %v74
  %v276 = vunpack.c.l.b16 %v75
  %v277 = vunpack.c.l.b16 %v76
  %v278 = vunpack.c.l.b16 %v77
  %v279 = vunpack.c.l.b16 %v78
  %v280 = vunpack.c.l.b16 %v79
  %v281 = vunpack.c.l.b16 %v80
  %v282 = vunpack.c.l.b16 %v81
  %v283 = vunpack.c.l.b16 %v82
  %v284 = vunpack.c.l.b16 %v83
  %v285 = vunpack.c.l.b16 %v84
  %v286 = vunpack.c.l.b16 %v85
  %v287 = vunpack.c.l.b16 %v86
  %v288 = vunpack.c.l.b16 %v87
  %v289 = vunpack.c.l.b16 %v88
  %v290 = vunpack.c.l.b16 %v89
  %v291 = vunpack.c.l.b16 %v90
  %v292 = vunpack.c.l.b16 %v91
  %v293 = vunpack.c.l.b16 %v92
  %v294 = vunpack.c.l.b16 %v93
  %v295 = vunpack.c.l.b16 %v94
  %v296 = vunpack.c.l.b16 %v95
  %v297 = vunpack.c.l.b16 %v96
  %v298 = vunpack.c.l.b16 %v97
  %v299 = vunpack.c.l.b16 %v98
  %v300 = vpack.c.b16 %v229, %v228
  %v301 = vpack.c.b16 %v231, %v230
  %v302 = vpack.c.b16 %v233, %v232
  %v303 = vpack.c.b16 %v235, %v234
  %v304 = vpack.c.b16 %v237, %v236
  %v305 = vpack.c.b16 %v239, %v238
  %v306 = vpack.c.b16 %v241, %v240
  %v307 = vpack.c.b16 %v243, %v242
  %v308 = vpack.c.b16 %v245, %v244
  %v309 = vpack.c.b16 %v247, %v246
  %v310 = vpack.c.b16 %v249, %v248
  %v311 = vpack.c.b16 %v251, %v250
  %v312 = vpack.c.b16 %v253, %v252
  %v313 = vpack.c.b16 %v255, %v254
  %v314 = vpack.c.b16 %v257, %v256
  %v315 = vpack.c.b16 %v259, %v258
  %v316 = vpack.c.b16 %v261, %v260
  %v317 = vpack.c.b16 %v263, %v262
  %v318 = vpack.c.b16 %v265, %v264
  %v319 = vpack.c.b16 %v267, %v266
  %v320 = vpack.c.b16 %v269, %v268
  %v321 = vpack.c.b16 %v271, %v270
  %v322 = vpack.c.b16 %v273, %v272
  %v323 = vpack.c.b16 %v275, %v274
  %v324 = vpack.c.b16 %v277, %v276
  %v325 = vpack.c.b16 %v279, %v278
  %v326 = vpack.c.b16 %v281, %v280
  %v327 = vpack.c.b16 %v283, %v282
  %v328 = vpack.c.b16 %v285, %v284
  %v329 = vpack.c.b16 %v287, %v286
  %v330 = vpack.c.b16 %v289, %v288
  %v331 = vpack.c.b16 %v291, %v290
  %v332 = vpack.c.b16 %v293, %v292
  %v333 = vpack.c.b16 %v295, %v294
  %v334 = vpack.c.b16 %v297, %v296
  %v335 = vpack.c.b16 %v299, %v298
  %vm372 = vcmask 523264
  %v374 = vsel %vm372, %v142, 0
  %v377 = vsel %vm372, %v147, 0
  %379 = vmatprep.subr.bf16.mxu0 0
  %380 = vmatpush1.bf16.msra.mxu0 %v300
  %381 = vmatprep.subr.bf16.mxu0 0
  %382 = vmatpush1.bf16.msra.mxu0 %v301
  %383 = vmatprep.subr.bf16.mxu0 0
  %384 = vmatpush1.bf16.msra.mxu0 %v302
  %385 = vmatprep.subr.bf16.mxu0 0
  %386 = vmatpush1.bf16.msra.mxu0 %v303
  %387 = vmatprep.subr.bf16.mxu0 0
  %388 = vmatpush1.bf16.msra.mxu0 %v304
  %389 = vmatprep.subr.bf16.mxu0 0
  %390 = vmatpush1.bf16.msra.mxu0 %v305
  %391 = vmatprep.subr.bf16.mxu0 0
  %392 = vmatpush1.bf16.msra.mxu0 %v306
  %393 = vmatprep.subr.bf16.mxu0 0
  %394 = vmatpush1.bf16.msra.mxu0 %v307
  %395 = vmatprep.subr.bf16.mxu0 0
  %396 = vmatpush1.bf16.msra.mxu0 %v308
  %397 = vmatprep.subr.bf16.mxu0 0
  %398 = vmatpush1.bf16.msra.mxu0 %v309
  %399 = vmatprep.subr.bf16.mxu0 0
  %400 = vmatpush1.bf16.msra.mxu0 %v310
  %401 = vmatprep.subr.bf16.mxu0 0
  %402 = vmatpush1.bf16.msra.mxu0 %v311
  %403 = vmatprep.subr.bf16.mxu0 0
  %404 = vmatpush1.bf16.msra.mxu0 %v312
  %405 = vmatprep.subr.bf16.mxu0 0
  %406 = vmatpush1.bf16.msra.mxu0 %v313
  %407 = vmatprep.subr.bf16.mxu0 0
  %408 = vmatpush1.bf16.msra.mxu0 %v314
  %409 = vmatprep.subr.bf16.mxu0 0
  %410 = vmatpush1.bf16.msra.mxu0 %v315
  %411 = vmatprep.mubr.bf16.mxu0 %v139
  %412 = vmatmul.mubr.bf16.gmra.mrb[0].mxu0 %v138
  %v413 = vpop.f32.mrb[0].mxu0
  %v414 = vadd.f32 %v104, %v413
  %v415 = vpop.f32.mrb[0].mxu0
  %v416 = vpop.f32.mrb[0].mxu0
  %v417 = vadd.f32 %v104, %v416
  %v418 = vpop.f32.mrb[0].mxu0
  %419 = vmatprep.mubr.bf16.mxu0 %v144
  %420 = vmatmul.mubr.bf16.gmra.mrb[0].mxu0 %v143
  %v421 = vpop.f32.mrb[0].mxu0
  %v422 = vadd.f32 %v104, %v421
  %v423 = vpop.f32.mrb[0].mxu0
  %v424 = vpop.f32.mrb[0].mxu0
  %v425 = vadd.f32 %v104, %v424
  %v426 = vpop.f32.mrb[0].mxu0
  %427 = vdwg.mxu0
  %428 = vmatprep.subr.bf16.mxu0 0
  %429 = vmatpush1.bf16.msra.mxu0 %v316
  %430 = vmatprep.subr.bf16.mxu0 0
  %431 = vmatpush1.bf16.msra.mxu0 %v317
  %432 = vmatprep.subr.bf16.mxu0 0
  %433 = vmatpush1.bf16.msra.mxu0 %v318
  %434 = vmatprep.subr.bf16.mxu0 0
  %435 = vmatpush1.bf16.msra.mxu0 %v319
  %436 = vmatprep.subr.bf16.mxu0 0
  %437 = vmatpush1.bf16.msra.mxu0 %v320
  %438 = vmatprep.subr.bf16.mxu0 0
  %439 = vmatpush1.bf16.msra.mxu0 %v321
  %440 = vmatprep.subr.bf16.mxu0 0
  %441 = vmatpush1.bf16.msra.mxu0 %v322
  %442 = vmatprep.subr.bf16.mxu0 0
  %443 = vmatpush1.bf16.msra.mxu0 %v323
  %444 = vmatprep.subr.bf16.mxu0 0
  %445 = vmatpush1.bf16.msra.mxu0 %v324
  %446 = vmatprep.subr.bf16.mxu0 0
  %447 = vmatpush1.bf16.msra.mxu0 %v325
  %448 = vmatprep.subr.bf16.mxu0 0
  %449 = vmatpush1.bf16.msra.mxu0 %v326
  %450 = vmatprep.subr.bf16.mxu0 0
  %451 = vmatpush1.bf16.msra.mxu0 %v327
  %452 = vmatprep.subr.bf16.mxu0 0
  %453 = vmatpush1.bf16.msra.mxu0 %v328
  %454 = vmatprep.subr.bf16.mxu0 0
  %455 = vmatpush1.bf16.msra.mxu0 %v329
  %456 = vmatprep.subr.bf16.mxu0 0
  %457 = vmatpush1.bf16.msra.mxu0 %v330
  %458 = vmatprep.subr.bf16.mxu0 0
  %459 = vmatpush1.bf16.msra.mxu0 %v331
  %460 = vmatprep.mubr.bf16.mxu0 %v141
  %461 = vmatmul.mubr.bf16.gmra.mrb[0].mxu0 %v140
  %v462 = vpop.f32.mrb[0].mxu0
  %v463 = vadd.f32 %v414, %v462
  %v464 = vpop.f32.mrb[0].mxu0
  %v465 = vpop.f32.mrb[0].mxu0
  %v466 = vadd.f32 %v417, %v465
  %v467 = vpop.f32.mrb[0].mxu0
  %468 = vmatprep.mubr.bf16.mxu0 %v146
  %469 = vmatmul.mubr.bf16.gmra.mrb[0].mxu0 %v145
  %v470 = vpop.f32.mrb[0].mxu0
  %v471 = vadd.f32 %v422, %v470
  %v472 = vpop.f32.mrb[0].mxu0
  %v473 = vpop.f32.mrb[0].mxu0
  %v474 = vadd.f32 %v425, %v473
  %v475 = vpop.f32.mrb[0].mxu0
  %476 = vdwg.mxu0
  %477 = vmatprep.subr.bf16.mxu0 0
  %478 = vmatpush1.bf16.msra.mxu0 %v332
  %479 = vmatprep.subr.bf16.mxu0 0
  %480 = vmatpush1.bf16.msra.mxu0 %v333
  %481 = vmatprep.subr.bf16.mxu0 0
  %482 = vmatpush1.bf16.msra.mxu0 %v334
  %483 = vmatprep.subr.bf16.mxu0 0
  %484 = vmatpush1.bf16.msra.mxu0 %v335
  %485 = vmatprep.subr.bf16.mxu0 0
  %486 = vmatpush1.bf16.msra.mxu0 0
  %487 = vmatprep.subr.bf16.mxu0 0
  %488 = vmatpush1.bf16.msra.mxu0 0
  %489 = vmatprep.subr.bf16.mxu0 0
  %490 = vmatpush1.bf16.msra.mxu0 0
  %491 = vmatprep.subr.bf16.mxu0 0
  %492 = vmatpush1.bf16.msra.mxu0 0
  %493 = vmatprep.subr.bf16.mxu0 0
  %494 = vmatpush1.bf16.msra.mxu0 0
  %495 = vmatprep.subr.bf16.mxu0 0
  %496 = vmatpush1.bf16.msra.mxu0 0
  %497 = vmatprep.subr.bf16.mxu0 0
  %498 = vmatpush1.bf16.msra.mxu0 0
  %499 = vmatprep.subr.bf16.mxu0 0
  %500 = vmatpush1.bf16.msra.mxu0 0
  %501 = vmatprep.subr.bf16.mxu0 0
  %502 = vmatpush1.bf16.msra.mxu0 0
  %503 = vmatprep.subr.bf16.mxu0 0
  %504 = vmatpush1.bf16.msra.mxu0 0
  %505 = vmatprep.subr.bf16.mxu0 0
  %506 = vmatpush1.bf16.msra.mxu0 0
  %507 = vmatprep.subr.bf16.mxu0 0
  %508 = vmatpush1.bf16.msra.mxu0 0
  %509 = vmatprep.mubr.bf16.mxu0 0
  %510 = vmatmul.mubr.bf16.gmra.mrb[0].mxu0 %v374
  %v511 = vpop.f32.mrb[0].mxu0
  %v512 = vadd.f32 %v463, %v511
  %v513 = vpop.f32.mrb[0].mxu0
  %v514 = vpop.f32.mrb[0].mxu0
  %v515 = vadd.f32 %v466, %v514
  %v516 = vpop.f32.mrb[0].mxu0
  %517 = vmatprep.mubr.bf16.mxu0 0
  %518 = vmatmul.mubr.bf16.gmra.mrb[0].mxu0 %v377
  %v519 = vpop.f32.mrb[0].mxu0
  %v520 = vadd.f32 %v471, %v519
  %v521 = vpop.f32.mrb[0].mxu0
  %v522 = vpop.f32.mrb[0].mxu0
  %v523 = vadd.f32 %v474, %v522
  %v524 = vpop.f32.mrb[0].mxu0
  %525 = vdwg.mxu0
  %v526 = vmax.f32 %v512, 0.0
  %v527 = vmax.f32 %v515, 0.0
  %v528 = vmax.f32 %v520, 0.0
  %v529 = vmax.f32 %v523, 0.0
  %v530 = vpack.c.bf16 %v527, %v526
  %v531 = vpack.c.bf16 %v529, %v528
  %v534 = vunpack.c.l.b16 %v530
  %v535 = vunpack.c.h.b16 %v530
  %v536 = vunpack.c.l.b16 %v531
  %v537 = vunpack.c.h.b16 %v531
  %v538 = vpack.c.b16 %v534, %v534
  %v539 = vpack.c.b16 %v535, %v535
  %v540 = vpack.c.b16 %v536, %v536
  %v541 = vpack.c.b16 %v537, %v537
  %546 = vst [vmem:[%s3] sm:$0xf] %v538
  %547 = vst [vmem:[%s3 + $0x4] sm:$0xf] %v539
  %548 = vst [vmem:[%s3 + $0x8] sm:$0xf] %v540
  %549 = vst [vmem:[%s3 + $0xc] sm:$0xf] %v541
  // Predicated region
  $region14: #{dae_forward.13} parent=0 // pred_check
    _
  $region15: #{dae_forward.13} parent=0 // pred_check_branch
    %551 = sbr.rel (0) target = $region17
  $region16: #{dae_forward.13} parent=0 // pred_region
    _
  $region17: #{dae_forward.13} parent=0 // pred_fallthru
    _
  // Predicated region
  $region18: #{dae_forward.13} parent=0 // pred_check
    _
  $region19: #{dae_forward.13} parent=0 // pred_check_branch
    %553 = sbr.rel (0) target = $region21
  $region20: #{dae_forward.13} parent=0 // pred_region
    _
  $region21: #{dae_forward.13} parent=0 // pred_fallthru
    _

// kernel: dae_forward.15
$region0: #{dae_forward.15}
  #allocation0 [shape = 'u32[]', space=smem, size = 0x4, offset = 0x4, fixed_abs, tag = 'smem constant byte address 0x4 - core index']
  #allocation1 [shape = 'u32[144,128]{1,0:T(1,128)}', space=vmem, size = 0x12000, scoped, tag = 'internal scratch']
  %s0 = inlined_call_operand.vmem [shape: bf16[16,128], index: 0, kind: input, shape index: {}]
  %s1 = inlined_call_operand.vmem [shape: bf16[128,2048], index: 1, kind: input, shape index: {}]
  %s2 = inlined_call_operand.vmem [shape: f32[1,2048], index: 2, kind: input, shape index: {}]
  %s3 = inlined_call_operand.vmem [shape: bf16[16,2048], index: 3, kind: output, shape index: {}]
  %s4 = sld [smem:[#allocation0]]
  $region87: #{dae_forward.15} parent=0
    _
  %s6 = ssub.s32 1, %s4
  %s7 = scalar_select 0, %s6, %s4
  $region1: #{dae_forward.15} parent=0
    #allocation2 [shape = 'u8[262144]{0}', space=vmem, size = 0x40000, scoped, tag = 'input window, operand 1']
    #allocation3 [shape = 'u8[32768]{0}', space=vmem, size = 0x8000, scoped, tag = 'output window, operand 0']
    loop: start=0, step=1, limit=6
    $region2: #{dae_forward.15} parent=1 // loop_pre_header
      _
    $region3: #{dae_forward.15} parent=1 // loop_header
      %s9 = sphi 0, %s13
      %p10 = scmp.ge.s32.totalorder %s9, 6
      %s16 = sphi 0, %s28
      %s17 = sphi 0, %s24
      %s18 = sphi 0, %s16
      %s19 = sphi 0, %s17
      %s20 = sphi 0, %s18
      %s21 = sphi 0, %s19
      %s31 = sphi 0, %s33
      %s34 = sphi 0, %s31
      %s35 = sphi 0, %s34
      %s51 = sphi 0, %s35
      %s57 = sphi 0, %s59
      %s60 = sphi 0, %s57
      %s61 = sphi 0, %s60
      %s77 = sphi 0, %s61
      %s83 = sphi 0, %s85
      %s86 = sphi 0, %s83
      %s87 = sphi 0, %s86
      %s103 = sphi 0, %s87
      %s111 = sphi 0, %s113
      %s114 = sphi 0, %s111
      %s115 = sphi 0, %s114
      %s131 = sphi 0, %s115
    $region4: #{dae_forward.15} parent=1 // loop_header_branch
      %12 = sbr.rel (%p10) target = $region8
    $region5: #{dae_forward.15} parent=1 // loop_body
      %s14 = ssub.s32 %s9, 1
      %s15 = ssub.s32 %s9, 2
      %s22 = sadd.s32 1, %s17
      %p23 = scmp.ge.s32.totalorder %s22, 4
      %s24 = scalar_select %p23, 0, %s22
      %s25 = sadd.s32 1, %s16
      %s26 = scalar_select %p23, %s25, %s16
      %p27 = scmp.ge.s32.totalorder %s26, 1
      %s28 = scalar_select %p27, 0, %s26
      %s29 = ssub.s32 %s16, %s28
      %p30 = scmp.eq.s32.totalorder %s29, 0
      %s32 = sadd.s32 %s31, 1
      %s33 = scalar_select %p30, %s31, %s32
      %p36 = pneg %p30
      %p37 = scmp.eq.s32.totalorder %s9, 3
      %p38 = por %p36, %p37
      %p39 = scmp.ne.s32.totalorder %s31, %s34
      %p40 = scmp.eq.s32.totalorder %s9, 0
      %p41 = por %p39, %p40
      %p42 = scmp.ne.s32.totalorder %s31, %s34
      %p43 = scmp.eq.s32.totalorder %s14, 3
      %p44 = por %p42, %p43
      %p45 = scmp.ne.s32.totalorder %s34, %s35
      %p46 = scmp.eq.s32.totalorder %s14, 0
      %p47 = por %p45, %p46
      %p48 = scmp.ne.s32.totalorder %s34, %s35
      %p49 = scmp.eq.s32.totalorder %s15, 3
      %p50 = por %p48, %p49
      %p52 = scmp.ne.s32.totalorder %s35, %s51
      %p53 = scmp.eq.s32.totalorder %s15, 0
      %p54 = por %p52, %p53
      %s55 = ssub.s32 %s17, %s24
      %p56 = scmp.eq.s32.totalorder %s55, 0
      %s58 = sadd.s32 %s57, 1
      %s59 = scalar_select %p56, %s57, %s58
      %p62 = pneg %p56
      %p63 = scmp.eq.s32.totalorder %s9, 3
      %p64 = por %p62, %p63
      %p65 = scmp.ne.s32.totalorder %s57, %s60
      %p66 = scmp.eq.s32.totalorder %s9, 0
      %p67 = por %p65, %p66
      %p68 = scmp.ne.s32.totalorder %s57, %s60
      %p69 = scmp.eq.s32.totalorder %s14, 3
      %p70 = por %p68, %p69
      %p71 = scmp.ne.s32.totalorder %s60, %s61
      %p72 = scmp.eq.s32.totalorder %s14, 0
      %p73 = por %p71, %p72
      %p74 = scmp.ne.s32.totalorder %s60, %s61
      %p75 = scmp.eq.s32.totalorder %s15, 3
      %p76 = por %p74, %p75
      %p78 = scmp.ne.s32.totalorder %s61, %s77
      %p79 = scmp.eq.s32.totalorder %s15, 0
      %p80 = por %p78, %p79
      %s81 = ssub.s32 %s17, %s24
      %p82 = scmp.eq.s32.totalorder %s81, 0
      %s84 = sadd.s32 %s83, 1
      %s85 = scalar_select %p82, %s83, %s84
      %p88 = pneg %p82
      %p89 = scmp.eq.s32.totalorder %s9, 3
      %p90 = por %p88, %p89
      %p91 = scmp.ne.s32.totalorder %s83, %s86
      %p92 = scmp.eq.s32.totalorder %s9, 0
      %p93 = por %p91, %p92
      %p94 = scmp.ne.s32.totalorder %s83, %s86
      %p95 = scmp.eq.s32.totalorder %s14, 3
      %p96 = por %p94, %p95
      %p97 = scmp.ne.s32.totalorder %s86, %s87
      %p98 = scmp.eq.s32.totalorder %s14, 0
      %p99 = por %p97, %p98
      %p100 = scmp.ne.s32.totalorder %s86, %s87
      %p101 = scmp.eq.s32.totalorder %s15, 3
      %p102 = por %p100, %p101
      %p104 = scmp.ne.s32.totalorder %s87, %s103
      %p105 = scmp.eq.s32.totalorder %s15, 0
      %p106 = por %p104, %p105
      %s107 = ssub.s32 %s16, %s28
      %s108 = ssub.s32 %s17, %s24
      %s109 = sor.u32 %s107, %s108
      %p110 = scmp.eq.s32.totalorder %s109, 0
      %s112 = sadd.s32 %s111, 1
      %s113 = scalar_select %p110, %s111, %s112
      %p116 = pneg %p110
      %p117 = scmp.eq.s32.totalorder %s9, 3
      %p118 = por %p116, %p117
      %p119 = scmp.ne.s32.totalorder %s111, %s114
      %p120 = scmp.eq.s32.totalorder %s9, 0
      %p121 = por %p119, %p120
      %p122 = scmp.ne.s32.totalorder %s111, %s114
      %p123 = scmp.eq.s32.totalorder %s14, 3
      %p124 = por %p122, %p123
      %p125 = scmp.ne.s32.totalorder %s114, %s115
      %p126 = scmp.eq.s32.totalorder %s14, 0
      %p127 = por %p125, %p126
      %p128 = scmp.ne.s32.totalorder %s114, %s115
      %p129 = scmp.eq.s32.totalorder %s15, 3
      %p130 = por %p128, %p129
      %p132 = scmp.ne.s32.totalorder %s115, %s131
      %p133 = scmp.eq.s32.totalorder %s15, 0
      %p134 = por %p132, %p133
      %p135 = scmp.le.s32.totalorder 1, %s9
      %p136 = scmp.lt.s32.totalorder %s9, 5
      %p137 = pnand %p135, %p136
      %p138 = pneg %p137
      // Predicated region
      $region9: #{dae_forward.15} parent=5 // pred_check
        _
      $region10: #{dae_forward.15} parent=5 // pred_check_branch
        %140 = sbr.rel (%p137) target = $region12
      $region11: #{dae_forward.15} parent=5 // pred_region
        %s141 = ssub.s32 %s9, 1
        // Predicated region
        $region13: #{dae_forward.15} parent=11 // pred_check
          %p142 = pneg %p47
        $region14: #{dae_forward.15} parent=11 // pred_check_branch
          %144 = sbr.rel (%p142) target = $region16
        $region15: #{dae_forward.15} parent=11 // pred_region
          %s145 = smul.u32 2, %s18
          %p146 = scmp.lt.s32.totalorder %s145, 1
          %s147 = scalar_select %p146, %s145, 1
          %s148 = smul.addr %s147, 4
          %s149 = scalar_lea.vmem %s0, %s148
          %s150 = smul.u32 2, %s18
        $region16: #{dae_forward.15} parent=11 // pred_fallthru
          _
      $region12: #{dae_forward.15} parent=5 // pred_fallthru
        _
      %p151 = scmp.lt.s32.totalorder %s9, 4
      // Predicated region
      $region17: #{dae_forward.15} parent=5 // pred_check
        %p152 = pneg %p151
      $region18: #{dae_forward.15} parent=5 // pred_check_branch
        %154 = sbr.rel (%p152) target = $region20
      $region19: #{dae_forward.15} parent=5 // pred_region
        // Predicated region
        $region21: #{dae_forward.15} parent=19 // pred_check
          %p155 = pneg %p67
        $region22: #{dae_forward.15} parent=19 // pred_check_branch
          %157 = sbr.rel (%p155) target = $region24
        $region23: #{dae_forward.15} parent=19 // pred_region
          %s158 = sand.u32 %s57, 1
          %s159 = sand.u32 %s57, 1
          %s160 = smul.addr %s159, 256
          %s161 = scalar_lea.vmem [#allocation2], %s160
          %s162 = smul.u32 4, %s17
          %s163 = smul.addr %s162, 4
          %s164 = scalar_lea.vmem %s1, %s163
          // Predicated region
          $region25: #{dae_forward.15} parent=23 // pred_check
            _
          $region26: #{dae_forward.15} parent=23 // pred_check_branch
            %166 = sbr.rel (0) target = $region28
          $region27: #{dae_forward.15} parent=23 // pred_region
            // Predicated region
            $region29: #{dae_forward.15} parent=27 // pred_check
              _
            $region30: #{dae_forward.15} parent=27 // pred_check_branch
              %168 = sbr.rel (0) target = $region32
            $region31: #{dae_forward.15} parent=27 // pred_region
              loop: start=0, step=1, limit=1
              $region33: #{dae_forward.15} parent=31 // loop_pre_header
                _
              $region34: #{dae_forward.15} parent=31 // loop_header
                %s170 = sphi 0, %s174
                %p171 = scmp.ge.s32.totalorder %s170, 1
                %s175 = sphi %s164, %s164
                %s176 = sphi %s161, %s161
              $region35: #{dae_forward.15} parent=31 // loop_header_branch
                %173 = sbr.rel (%p171) target = $region39
              $region36: #{dae_forward.15} parent=31 // loop_body
                %v177 = vld [vmem:[%s175] sm:$0xff]
                %178 = vst [vmem:[%s176] sm:$0xff] %v177
                %v179 = vld [vmem:[%s175 + $0x8] sm:$0xff]
                %180 = vst [vmem:[%s176 + $0x8] sm:$0xff] %v179
                %v181 = vld [vmem:[%s175 + $0x40] sm:$0xff]
                %182 = vst [vmem:[%s176 + $0x10] sm:$0xff] %v181
                %v183 = vld [vmem:[%s175 + $0x48] sm:$0xff]
                %184 = vst [vmem:[%s176 + $0x18] sm:$0xff] %v183
                %v185 = vld [vmem:[%s175 + $0x80] sm:$0xff]
                %186 = vst [vmem:[%s176 + $0x20] sm:$0xff] %v185
                %v187 = vld [vmem:[%s175 + $0x88] sm:$0xff]
                %188 = vst [vmem:[%s176 + $0x28] sm:$0xff] %v187
                %v189 = vld [vmem:[%s175 + $0xc0] sm:$0xff]
                %190 = vst [vmem:[%s176 + $0x30] sm:$0xff] %v189
                %v191 = vld [vmem:[%s175 + $0xc8] sm:$0xff]
                %192 = vst [vmem:[%s176 + $0x38] sm:$0xff] %v191
                %v193 = vld [vmem:[%s175 + $0x100] sm:$0xff]
                %194 = vst [vmem:[%s176 + $0x40] sm:$0xff] %v193
                %v195 = vld [vmem:[%s175 + $0x108] sm:$0xff]
                %196 = vst [vmem:[%s176 + $0x48] sm:$0xff] %v195
                %v197 = vld [vmem:[%s175 + $0x140] sm:$0xff]
                %198 = vst [vmem:[%s176 + $0x50] sm:$0xff] %v197
                %v199 = vld [vmem:[%s175 + $0x148] sm:$0xff]
                %200 = vst [vmem:[%s176 + $0x58] sm:$0xff] %v199
                %v201 = vld [vmem:[%s175 + $0x180] sm:$0xff]
                %202 = vst [vmem:[%s176 + $0x60] sm:$0xff] %v201
                %v203 = vld [vmem:[%s175 + $0x188] sm:$0xff]
                %204 = vst [vmem:[%s176 + $0x68] sm:$0xff] %v203
                %v205 = vld [vmem:[%s175 + $0x1c0] sm:$0xff]
                %206 = vst [vmem:[%s176 + $0x70] sm:$0xff] %v205
                %v207 = vld [vmem:[%s175 + $0x1c8] sm:$0xff]
                %208 = vst [vmem:[%s176 + $0x78] sm:$0xff] %v207
                %v209 = vld [vmem:[%s175 + $0x200] sm:$0xff]
                %210 = vst [vmem:[%s176 + $0x80] sm:$0xff] %v209
                %v211 = vld [vmem:[%s175 + $0x208] sm:$0xff]
                %212 = vst [vmem:[%s176 + $0x88] sm:$0xff] %v211
                %v213 = vld [vmem:[%s175 + $0x240] sm:$0xff]
                %214 = vst [vmem:[%s176 + $0x90] sm:$0xff] %v213
                %v215 = vld [vmem:[%s175 + $0x248] sm:$0xff]
                %216 = vst [vmem:[%s176 + $0x98] sm:$0xff] %v215
                %v217 = vld [vmem:[%s175 + $0x280] sm:$0xff]
                %218 = vst [vmem:[%s176 + $0xa0] sm:$0xff] %v217
                %v219 = vld [vmem:[%s175 + $0x288] sm:$0xff]
                %220 = vst [vmem:[%s176 + $0xa8] sm:$0xff] %v219
                %v221 = vld [vmem:[%s175 + $0x2c0] sm:$0xff]
                %222 = vst [vmem:[%s176 + $0xb0] sm:$0xff] %v221
                %v223 = vld [vmem:[%s175 + $0x2c8] sm:$0xff]
                %224 = vst [vmem:[%s176 + $0xb8] sm:$0xff] %v223
                %v225 = vld [vmem:[%s175 + $0x300] sm:$0xff]
                %226 = vst [vmem:[%s176 + $0xc0] sm:$0xff] %v225
                %v227 = vld [vmem:[%s175 + $0x308] sm:$0xff]
                %228 = vst [vmem:[%s176 + $0xc8] sm:$0xff] %v227
                %v229 = vld [vmem:[%s175 + $0x340] sm:$0xff]
                %230 = vst [vmem:[%s176 + $0xd0] sm:$0xff] %v229
                %v231 = vld [vmem:[%s175 + $0x348] sm:$0xff]
                %232 = vst [vmem:[%s176 + $0xd8] sm:$0xff] %v231
                %v233 = vld [vmem:[%s175 + $0x380] sm:$0xff]
                %234 = vst [vmem:[%s176 + $0xe0] sm:$0xff] %v233
                %v235 = vld [vmem:[%s175 + $0x388] sm:$0xff]
                %236 = vst [vmem:[%s176 + $0xe8] sm:$0xff] %v235
                %v237 = vld [vmem:[%s175 + $0x3c0] sm:$0xff]
                %238 = vst [vmem:[%s176 + $0xf0] sm:$0xff] %v237
                %v239 = vld [vmem:[%s175 + $0x3c8] sm:$0xff]
                %240 = vst [vmem:[%s176 + $0xf8] sm:$0xff] %v239
              $region37: #{dae_forward.15} parent=31 // loop_footer
                %s174 = sadd.s32 1, %s170
              $region38: #{dae_forward.15} parent=31 // loop_footer_branch
                %169 = sbr.rel target = $region34
              $region39: #{dae_forward.15} parent=31 // loop_exit
                _
            $region32: #{dae_forward.15} parent=27 // pred_fallthru
              _
            // Predicated region
            $region40: #{dae_forward.15} parent=27 // pred_check
              _
            $region41: #{dae_forward.15} parent=27 // pred_check_branch
              %242 = sbr.rel target = $region43
            $region42: #{dae_forward.15} parent=27 // pred_region
              _
            $region43: #{dae_forward.15} parent=27 // pred_fallthru
              _
          $region28: #{dae_forward.15} parent=23 // pred_fallthru
            _
          %243 = vnop
        $region24: #{dae_forward.15} parent=19 // pred_fallthru
          _
        // Predicated region
        $region44: #{dae_forward.15} parent=19 // pred_check
          %p244 = pneg %p93
        $region45: #{dae_forward.15} parent=19 // pred_check_branch
          %246 = sbr.rel (%p244) target = $region47
        $region46: #{dae_forward.15} parent=19 // pred_region
          %s247 = smul.u32 4, %s17
          %p248 = scmp.lt.s32.totalorder %s247, 15
          %s249 = scalar_select %p248, %s247, 15
          %s250 = scalar_lea.vmem %s2, %s249
          %s251 = smul.u32 4, %s17
        $region47: #{dae_forward.15} parent=19 // pred_fallthru
          _
      $region20: #{dae_forward.15} parent=5 // pred_fallthru
        _
      %p252 = scmp.le.s32.totalorder 1, %s9
      %p253 = scmp.lt.s32.totalorder %s9, 5
      %p254 = pnand %p252, %p253
      %p255 = pneg %p254
      // Predicated region
      $region48: #{dae_forward.15} parent=5 // pred_check
        _
      $region49: #{dae_forward.15} parent=5 // pred_check_branch
        %257 = sbr.rel (%p254) target = $region51
      $region50: #{dae_forward.15} parent=5 // pred_region
        %s258 = ssub.s32 %s9, 1
        %s259 = sand.u32 %s60, 1
        %s260 = sand.u32 %s60, 1
        %s261 = smul.addr %s260, 256
        %s262 = scalar_lea.vmem [#allocation2], %s261
        // Predicated region
        $region52: #{dae_forward.15} parent=50 // pred_check
          %p263 = pneg %p73
        $region53: #{dae_forward.15} parent=50 // pred_check_branch
          %265 = sbr.rel (%p263) target = $region55
        $region54: #{dae_forward.15} parent=50 // pred_region
          _
        $region55: #{dae_forward.15} parent=50 // pred_fallthru
          _
        %s266 = smul.u32 2, %s18
        %p267 = scmp.lt.s32.totalorder %s266, 1
        %s268 = scalar_select %p267, %s266, 1
        %s269 = smul.addr %s268, 4
        %s270 = scalar_lea.vmem %s0, %s269
        %p271 = pneg %p47
        %p272 = pneg %p44
        %s273 = sand.u32 %s60, 1
        %s274 = sand.u32 %s60, 1
        %s275 = smul.addr %s274, 256
        %s276 = scalar_lea.vmem [#allocation2], %s275
        %p277 = pneg %p73
        %p278 = pneg %p70
        %s279 = smul.u32 4, %s19
        %p280 = scmp.lt.s32.totalorder %s279, 15
        %s281 = scalar_select %p280, %s279, 15
        %s282 = scalar_lea.vmem %s2, %s281
        %p283 = pneg %p99
        %p284 = pneg %p96
        %p285 = pneg %p127
        %p286 = pneg %p124
        %s287 = sand.u32 %s114, 1
        %s288 = sand.u32 %s114, 1
        %s289 = smul.addr %s288, 32
        %s290 = scalar_lea.vmem [#allocation3], %s289
        %s291 = smul.u32 2, %s18
        %p292 = scmp.lt.s32.totalorder %s291, 1
        %s293 = scalar_select %p292, %s291, 1
        %s294 = smul.addr %s293, 4
        %s295 = scalar_lea.vmem %s0, %s294
        %s296 = smul.u32 2, %s18
        %s297 = smul.u32 4, %s19
        %s298 = smul.u32 4, %s19
        %p299 = scmp.lt.s32.totalorder %s298, 15
        %s300 = scalar_select %p299, %s298, 15
        %s301 = scalar_lea.vmem %s2, %s300
        %s302 = smul.u32 4, %s19
        %s303 = smul.u32 2, %s18
        %s304 = smul.u32 4, %s19
        %v306 = vld [vmem:[%s295] sm:$0xf]
        %v307 = vld [vmem:[%s295 + $0x4] sm:$0xf]
        %v308 = vld [vmem:[%s262] sm:$0xff]
        %v309 = vld [vmem:[%s262 + $0x8] sm:$0xff]
        %v310 = vld [vmem:[%s262 + $0x10] sm:$0xff]
        %v311 = vld [vmem:[%s262 + $0x18] sm:$0xff]
        %v312 = vld [vmem:[%s262 + $0x20] sm:$0xff]
        %v313 = vld [vmem:[%s262 + $0x28] sm:$0xff]
        %v314 = vld [vmem:[%s262 + $0x30] sm:$0xff]
        %v315 = vld [vmem:[%s262 + $0x38] sm:$0xff]
        %v316 = vld [vmem:[%s262 + $0x40] sm:$0xff]
        %v317 = vld [vmem:[%s262 + $0x48] sm:$0xff]
        %v318 = vld [vmem:[%s262 + $0x50] sm:$0xff]
        %v319 = vld [vmem:[%s262 + $0x58] sm:$0xff]
        %v320 = vld [vmem:[%s262 + $0x60] sm:$0xff]
        %v321 = vld [vmem:[%s262 + $0x68] sm:$0xff]
        %v322 = vld [vmem:[%s262 + $0x70] sm:$0xff]
        %v323 = vld [vmem:[%s262 + $0x78] sm:$0xff]
        %v324 = vld [vmem:[%s262 + $0x80] sm:$0xff]
        %v325 = vld [vmem:[%s262 + $0x88] sm:$0xff]
        %v326 = vld [vmem:[%s262 + $0x90] sm:$0xff]
        %v327 = vld [vmem:[%s262 + $0x98] sm:$0xff]
        %v328 = vld [vmem:[%s262 + $0xa0] sm:$0xff]
        %v329 = vld [vmem:[%s262 + $0xa8] sm:$0xff]
        %v330 = vld [vmem:[%s262 + $0xb0] sm:$0xff]
        %v331 = vld [vmem:[%s262 + $0xb8] sm:$0xff]
        %v332 = vld [vmem:[%s262 + $0xc0] sm:$0xff]
        %v333 = vld [vmem:[%s262 + $0xc8] sm:$0xff]
        %v334 = vld [vmem:[%s262 + $0xd0] sm:$0xff]
        %v335 = vld [vmem:[%s262 + $0xd8] sm:$0xff]
        %v336 = vld [vmem:[%s262 + $0xe0] sm:$0xff]
        %v337 = vld [vmem:[%s262 + $0xe8] sm:$0xff]
        %v338 = vld [vmem:[%s262 + $0xf0] sm:$0xff]
        %v339 = vld [vmem:[%s262 + $0xf8] sm:$0xff]
        %v340 = vld [vmem:[%s301] sm:$0xf]
        %v342 = vlaneseq
        %v343 = vshrl.u32 %v342, 7
        %v344 = vsub.s32 0, %v343
        %v345 = vrot.slane %v340, %v344
        %v346 = vlaneseq
        %v347 = vshrl.u32 %v346, 7
        %v348 = vsub.s32 1, %v347
        %v349 = vrot.slane %v340, %v348
        %v350 = vlaneseq
        %v351 = vshrl.u32 %v350, 7
        %v352 = vsub.s32 2, %v351
        %v353 = vrot.slane %v340, %v352
        %v354 = vlaneseq
        %v355 = vshrl.u32 %v354, 7
        %v356 = vsub.s32 3, %v355
        %v357 = vrot.slane %v340, %v356
        %v364 = vunpack.c.l.b16 %v306
        %v365 = vunpack.c.l.b16 %v307
        %v366 = vpack.c.b16 %v365, %v364
        %v400 = vunpack.c.l.b16 %v308
        %v401 = vunpack.c.h.b16 %v308
        %v402 = vunpack.c.l.b16 %v309
        %v403 = vunpack.c.h.b16 %v309
        %v404 = vunpack.c.l.b16 %v310
        %v405 = vunpack.c.h.b16 %v310
        %v406 = vunpack.c.l.b16 %v311
        %v407 = vunpack.c.h.b16 %v311
        %v408 = vunpack.c.l.b16 %v312
        %v409 = vunpack.c.h.b16 %v312
        %v410 = vunpack.c.l.b16 %v313
        %v411 = vunpack.c.h.b16 %v313
        %v412 = vunpack.c.l.b16 %v314
        %v413 = vunpack.c.h.b16 %v314
        %v414 = vunpack.c.l.b16 %v315
        %v415 = vunpack.c.h.b16 %v315
        %v416 = vunpack.c.l.b16 %v316
        %v417 = vunpack.c.h.b16 %v316
        %v418 = vunpack.c.l.b16 %v317
        %v419 = vunpack.c.h.b16 %v317
        %v420 = vunpack.c.l.b16 %v318
        %v421 = vunpack.c.h.b16 %v318
        %v422 = vunpack.c.l.b16 %v319
        %v423 = vunpack.c.h.b16 %v319
        %v424 = vunpack.c.l.b16 %v320
        %v425 = vunpack.c.h.b16 %v320
        %v426 = vunpack.c.l.b16 %v321
        %v427 = vunpack.c.h.b16 %v321
        %v428 = vunpack.c.l.b16 %v322
        %v429 = vunpack.c.h.b16 %v322
        %v430 = vunpack.c.l.b16 %v323
        %v431 = vunpack.c.h.b16 %v323
        %v432 = vunpack.c.l.b16 %v324
        %v433 = vunpack.c.h.b16 %v324
        %v434 = vunpack.c.l.b16 %v325
        %v435 = vunpack.c.h.b16 %v325
        %v436 = vunpack.c.l.b16 %v326
        %v437 = vunpack.c.h.b16 %v326
        %v438 = vunpack.c.l.b16 %v327
        %v439 = vunpack.c.h.b16 %v327
        %v440 = vunpack.c.l.b16 %v328
        %v441 = vunpack.c.h.b16 %v328
        %v442 = vunpack.c.l.b16 %v329
        %v443 = vunpack.c.h.b16 %v329
        %v444 = vunpack.c.l.b16 %v330
        %v445 = vunpack.c.h.b16 %v330
        %v446 = vunpack.c.l.b16 %v331
        %v447 = vunpack.c.h.b16 %v331
        %v448 = vunpack.c.l.b16 %v332
        %v449 = vunpack.c.h.b16 %v332
        %v450 = vunpack.c.l.b16 %v333
        %v451 = vunpack.c.h.b16 %v333
        %v452 = vunpack.c.l.b16 %v334
        %v453 = vunpack.c.h.b16 %v334
        %v454 = vunpack.c.l.b16 %v335
        %v455 = vunpack.c.h.b16 %v335
        %v456 = vunpack.c.l.b16 %v336
        %v457 = vunpack.c.h.b16 %v336
        %v458 = vunpack.c.l.b16 %v337
        %v459 = vunpack.c.h.b16 %v337
        %v460 = vunpack.c.l.b16 %v338
        %v461 = vunpack.c.h.b16 %v338
        %v462 = vunpack.c.l.b16 %v339
        %v463 = vunpack.c.h.b16 %v339
        %v464 = vpack.c.b16 %v404, %v400
        %v465 = vpack.c.b16 %v405, %v401
        %v466 = vpack.c.b16 %v406, %v402
        %v467 = vpack.c.b16 %v407, %v403
        %v468 = vpack.c.b16 %v412, %v408
        %v469 = vpack.c.b16 %v413, %v409
        %v470 = vpack.c.b16 %v414, %v410
        %v471 = vpack.c.b16 %v415, %v411
        %v472 = vpack.c.b16 %v420, %v416
        %v473 = vpack.c.b16 %v421, %v417
        %v474 = vpack.c.b16 %v422, %v418
        %v475 = vpack.c.b16 %v423, %v419
        %v476 = vpack.c.b16 %v428, %v424
        %v477 = vpack.c.b16 %v429, %v425
        %v478 = vpack.c.b16 %v430, %v426
        %v479 = vpack.c.b16 %v431, %v427
        %v480 = vpack.c.b16 %v436, %v432
        %v481 = vpack.c.b16 %v437, %v433
        %v482 = vpack.c.b16 %v438, %v434
        %v483 = vpack.c.b16 %v439, %v435
        %v484 = vpack.c.b16 %v444, %v440
        %v485 = vpack.c.b16 %v445, %v441
        %v486 = vpack.c.b16 %v446, %v442
        %v487 = vpack.c.b16 %v447, %v443
        %v488 = vpack.c.b16 %v452, %v448
        %v489 = vpack.c.b16 %v453, %v449
        %v490 = vpack.c.b16 %v454, %v450
        %v491 = vpack.c.b16 %v455, %v451
        %v492 = vpack.c.b16 %v460, %v456
        %v493 = vpack.c.b16 %v461, %v457
        %v494 = vpack.c.b16 %v462, %v458
        %v495 = vpack.c.b16 %v463, %v459
        %528 = vmatprep.subr.bf16.mxu0 %v465
        %529 = vmatpush1.bf16.msra.mxu0 %v464
        %530 = vmatprep.subr.bf16.mxu0 %v469
        %531 = vmatpush1.bf16.msra.mxu0 %v468
        %532 = vmatprep.subr.bf16.mxu0 %v473
        %533 = vmatpush1.bf16.msra.mxu0 %v472
        %534 = vmatprep.subr.bf16.mxu0 %v477
        %535 = vmatpush1.bf16.msra.mxu0 %v476
        %536 = vmatprep.subr.bf16.mxu0 %v481
        %537 = vmatpush1.bf16.msra.mxu0 %v480
        %538 = vmatprep.subr.bf16.mxu0 %v485
        %539 = vmatpush1.bf16.msra.mxu0 %v484
        %540 = vmatprep.subr.bf16.mxu0 %v489
        %541 = vmatpush1.bf16.msra.mxu0 %v488
        %542 = vmatprep.subr.bf16.mxu0 %v493
        %543 = vmatpush1.bf16.msra.mxu0 %v492
        %544 = vmatprep.subr.bf16.mxu0 0
        %545 = vmatpush1.bf16.msra.mxu0 0
        %546 = vmatprep.subr.bf16.mxu0 0
        %547 = vmatpush1.bf16.msra.mxu0 0
        %548 = vmatprep.subr.bf16.mxu0 0
        %549 = vmatpush1.bf16.msra.mxu0 0
        %550 = vmatprep.subr.bf16.mxu0 0
        %551 = vmatpush1.bf16.msra.mxu0 0
        %552 = vmatprep.subr.bf16.mxu0 0
        %553 = vmatpush1.bf16.msra.mxu0 0
        %554 = vmatprep.subr.bf16.mxu0 0
        %555 = vmatpush1.bf16.msra.mxu0 0
        %556 = vmatprep.subr.bf16.mxu0 0
        %557 = vmatpush1.bf16.msra.mxu0 0
        %558 = vmatprep.subr.bf16.mxu0 0
        %559 = vmatpush1.bf16.msra.mxu0 0
        %560 = vmatprep.mubr.bf16.mxu0 0
        %561 = vmatmul.mubr.bf16.gmra.mrb[0].mxu0 %v366
        %v562 = vpop.f32.mrb[0].mxu0
        %v563 = vadd.f32 %v345, %v562
        %v564 = vpop.f32.mrb[0].mxu0
        %v565 = vadd.f32 %v349, %v564
        %v566 = vpop.f32.mrb[0].mxu0
        %v567 = vadd.f32 %v345, %v566
        %v568 = vpop.f32.mrb[0].mxu0
        %v569 = vadd.f32 %v349, %v568
        %570 = vdwg.mxu0
        %571 = vmatprep.subr.bf16.mxu0 %v467
        %572 = vmatpush1.bf16.msra.mxu0 %v466
        %573 = vmatprep.subr.bf16.mxu0 %v471
        %574 = vmatpush1.bf16.msra.mxu0 %v470
        %575 = vmatprep.subr.bf16.mxu0 %v475
        %576 = vmatpush1.bf16.msra.mxu0 %v474
        %577 = vmatprep.subr.bf16.mxu0 %v479
        %578 = vmatpush1.bf16.msra.mxu0 %v478
        %579 = vmatprep.subr.bf16.mxu0 %v483
        %580 = vmatpush1.bf16.msra.mxu0 %v482
        %581 = vmatprep.subr.bf16.mxu0 %v487
        %582 = vmatpush1.bf16.msra.mxu0 %v486
        %583 = vmatprep.subr.bf16.mxu0 %v491
        %584 = vmatpush1.bf16.msra.mxu0 %v490
        %585 = vmatprep.subr.bf16.mxu0 %v495
        %586 = vmatpush1.bf16.msra.mxu0 %v494
        %587 = vmatprep.subr.bf16.mxu0 0
        %588 = vmatpush1.bf16.msra.mxu0 0
        %589 = vmatprep.subr.bf16.mxu0 0
        %590 = vmatpush1.bf16.msra.mxu0 0
        %591 = vmatprep.subr.bf16.mxu0 0
        %592 = vmatpush1.bf16.msra.mxu0 0
        %593 = vmatprep.subr.bf16.mxu0 0
        %594 = vmatpush1.bf16.msra.mxu0 0
        %595 = vmatprep.subr.bf16.mxu0 0
        %596 = vmatpush1.bf16.msra.mxu0 0
        %597 = vmatprep.subr.bf16.mxu0 0
        %598 = vmatpush1.bf16.msra.mxu0 0
        %599 = vmatprep.subr.bf16.mxu0 0
        %600 = vmatpush1.bf16.msra.mxu0 0
        %601 = vmatprep.subr.bf16.mxu0 0
        %602 = vmatpush1.bf16.msra.mxu0 0
        %603 = vmatprep.mubr.bf16.mxu0 0
        %604 = vmatmul.mubr.bf16.gmra.mrb[0].mxu0 %v366
        %v605 = vpop.f32.mrb[0].mxu0
        %v606 = vadd.f32 %v353, %v605
        %v607 = vpop.f32.mrb[0].mxu0
        %v608 = vadd.f32 %v357, %v607
        %v609 = vpop.f32.mrb[0].mxu0
        %v610 = vadd.f32 %v353, %v609
        %v611 = vpop.f32.mrb[0].mxu0
        %v612 = vadd.f32 %v357, %v611
        %613 = vdwg.mxu0
        %v614 = vpack.c.bf16 %v567, %v563
        %v615 = vpack.c.bf16 %v569, %v565
        %v616 = vpack.c.bf16 %v610, %v606
        %v617 = vpack.c.bf16 %v612, %v608
        %v622 = vunpack.c.l.b16 %v614
        %v623 = vunpack.c.l.b16 %v615
        %v624 = vunpack.c.l.b16 %v616
        %v625 = vunpack.c.l.b16 %v617
        %v626 = vunpack.c.h.b16 %v614
        %v627 = vunpack.c.h.b16 %v615
        %v628 = vunpack.c.h.b16 %v616
        %v629 = vunpack.c.h.b16 %v617
        %v630 = vpack.c.b16 %v623, %v622
        %v631 = vpack.c.b16 %v625, %v624
        %v632 = vpack.c.b16 %v627, %v626
        %v633 = vpack.c.b16 %v629, %v628
        %638 = vst [vmem:[%s290] sm:$0xff] %v630
        %639 = vst [vmem:[%s290 + $0x8] sm:$0xff] %v631
        %640 = vst [vmem:[%s290 + $0x10] sm:$0xff] %v632
        %641 = vst [vmem:[%s290 + $0x18] sm:$0xff] %v633
        %s642 = sand.u32 %s114, 1
        %s643 = sand.u32 %s114, 1
        %s644 = smul.addr %s643, 32
        %s645 = scalar_lea.vmem [#allocation3], %s644
        // Predicated region
        $region56: #{dae_forward.15} parent=50 // pred_check
          %p646 = pneg %p124
        $region57: #{dae_forward.15} parent=50 // pred_check_branch
          %648 = sbr.rel (%p646) target = $region59
        $region58: #{dae_forward.15} parent=50 // pred_region
          %s649 = smul.u32 2, %s18
          %s650 = smul.u32 4, %s19
          %s651 = smul.addr %s649, 16
          %s652 = sadd.s32 %s650, %s651
          %s653 = smul.addr %s652, 4
          %s654 = scalar_lea.vmem %s3, %s653
          // Predicated region
          $region60: #{dae_forward.15} parent=58 // pred_check
            _
          $region61: #{dae_forward.15} parent=58 // pred_check_branch
            %656 = sbr.rel (0) target = $region63
          $region62: #{dae_forward.15} parent=58 // pred_region
            // Predicated region
            $region64: #{dae_forward.15} parent=62 // pred_check
              _
            $region65: #{dae_forward.15} parent=62 // pred_check_branch
              %658 = sbr.rel (0) target = $region67
            $region66: #{dae_forward.15} parent=62 // pred_region
              loop: start=0, step=1, limit=1
              $region68: #{dae_forward.15} parent=66 // loop_pre_header
                _
              $region69: #{dae_forward.15} parent=66 // loop_header
                %s660 = sphi 0, %s664
                %p661 = scmp.ge.s32.totalorder %s660, 1
                %s665 = sphi %s645, %s645
                %s666 = sphi %s654, %s654
              $region70: #{dae_forward.15} parent=66 // loop_header_branch
                %663 = sbr.rel (%p661) target = $region74
              $region71: #{dae_forward.15} parent=66 // loop_body
                %v667 = vld [vmem:[%s665] sm:$0xff]
                %668 = vst [vmem:[%s666] sm:$0xff] %v667
                %v669 = vld [vmem:[%s665 + $0x8] sm:$0xff]
                %670 = vst [vmem:[%s666 + $0x8] sm:$0xff] %v669
                %v671 = vld [vmem:[%s665 + $0x10] sm:$0xff]
                %672 = vst [vmem:[%s666 + $0x40] sm:$0xff] %v671
                %v673 = vld [vmem:[%s665 + $0x18] sm:$0xff]
                %674 = vst [vmem:[%s666 + $0x48] sm:$0xff] %v673
              $region72: #{dae_forward.15} parent=66 // loop_footer
                %s664 = sadd.s32 1, %s660
              $region73: #{dae_forward.15} parent=66 // loop_footer_branch
                %659 = sbr.rel target = $region69
              $region74: #{dae_forward.15} parent=66 // loop_exit
                _
            $region67: #{dae_forward.15} parent=62 // pred_fallthru
              _
            // Predicated region
            $region75: #{dae_forward.15} parent=62 // pred_check
              _
            $region76: #{dae_forward.15} parent=62 // pred_check_branch
              %676 = sbr.rel target = $region78
            $region77: #{dae_forward.15} parent=62 // pred_region
              _
            $region78: #{dae_forward.15} parent=62 // pred_fallthru
              _
          $region63: #{dae_forward.15} parent=58 // pred_fallthru
            _
          %677 = vnop
        $region59: #{dae_forward.15} parent=50 // pred_fallthru
          _
      $region51: #{dae_forward.15} parent=5 // pred_fallthru
        _
      %p678 = scmp.le.s32.totalorder 2, %s9
      // Predicated region
      $region79: #{dae_forward.15} parent=5 // pred_check
        %p679 = pneg %p678
      $region80: #{dae_forward.15} parent=5 // pred_check_branch
        %681 = sbr.rel (%p679) target = $region82
      $region81: #{dae_forward.15} parent=5 // pred_region
        %s682 = ssub.s32 %s9, 2
        // Predicated region
        $region83: #{dae_forward.15} parent=81 // pred_check
          %p683 = pneg %p130
        $region84: #{dae_forward.15} parent=81 // pred_check_branch
          %685 = sbr.rel (%p683) target = $region86
        $region85: #{dae_forward.15} parent=81 // pred_region
          %s686 = sand.u32 %s115, 1
          %s687 = sand.u32 %s115, 1
          %s688 = smul.addr %s687, 32
          %s689 = scalar_lea.vmem [#allocation3], %s688
        $region86: #{dae_forward.15} parent=81 // pred_fallthru
          _
      $region82: #{dae_forward.15} parent=5 // pred_fallthru
        _
    $region6: #{dae_forward.15} parent=1 // loop_footer
      %s13 = sadd.s32 1, %s9
    $region7: #{dae_forward.15} parent=1 // loop_footer_branch
      %8 = sbr.rel target = $region3
    $region8: #{dae_forward.15} parent=1 // loop_exit
      _

// kernel: dae_forward.14
$region0: #{dae_forward.14}
  #allocation0 [shape = 'u32[]', space=smem, size = 0x4, offset = 0x4, fixed_abs, tag = 'smem constant byte address 0x4 - core index']
  #allocation1 [shape = 'u32[144,128]{1,0:T(1,128)}', space=vmem, size = 0x12000, scoped, tag = 'internal scratch']
  %s0 = inlined_call_operand.vmem [shape: bf16[16,2048], index: 0, kind: input, shape index: {}]
  %s1 = inlined_call_operand.vmem [shape: bf16[2048,128], index: 1, kind: input, shape index: {}]
  %s2 = inlined_call_operand.vmem [shape: f32[1,128], index: 2, kind: input, shape index: {}]
  %s3 = inlined_call_operand.vmem [shape: f32[16,128], index: 3, kind: output, shape index: {}]
  %s4 = sld [smem:[#allocation0]]
  $region22: #{dae_forward.14} parent=0
    _
  %s6 = ssub.s32 1, %s4
  %s7 = scalar_select 0, %s6, %s4
  // Predicated region
  $region2: #{dae_forward.14} parent=0 // pred_check
    _
  $region3: #{dae_forward.14} parent=0 // pred_check_branch
    %9 = sbr.rel (0) target = $region5
  $region4: #{dae_forward.14} parent=0 // pred_region
    _
  $region5: #{dae_forward.14} parent=0 // pred_fallthru
    _
  // Predicated region
  $region6: #{dae_forward.14} parent=0 // pred_check
    _
  $region7: #{dae_forward.14} parent=0 // pred_check_branch
    %11 = sbr.rel (0) target = $region9
  $region8: #{dae_forward.14} parent=0 // pred_region
    _
  $region9: #{dae_forward.14} parent=0 // pred_fallthru
    _
  // Predicated region
  $region10: #{dae_forward.14} parent=0 // pred_check
    _
  $region11: #{dae_forward.14} parent=0 // pred_check_branch
    %13 = sbr.rel (0) target = $region13
  $region12: #{dae_forward.14} parent=0 // pred_region
    _
  $region13: #{dae_forward.14} parent=0 // pred_fallthru
    _
  %v15 = vld [vmem:[%s0] sm:$0xff]
  %v16 = vld [vmem:[%s0 + $0x8] sm:$0xff]
  %v17 = vld [vmem:[%s0 + $0x10] sm:$0xff]
  %v18 = vld [vmem:[%s0 + $0x18] sm:$0xff]
  %v19 = vld [vmem:[%s0 + $0x20] sm:$0xff]
  %v20 = vld [vmem:[%s0 + $0x28] sm:$0xff]
  %v21 = vld [vmem:[%s0 + $0x30] sm:$0xff]
  %v22 = vld [vmem:[%s0 + $0x38] sm:$0xff]
  %v23 = vld [vmem:[%s0 + $0x40] sm:$0xff]
  %v24 = vld [vmem:[%s0 + $0x48] sm:$0xff]
  %v25 = vld [vmem:[%s0 + $0x50] sm:$0xff]
  %v26 = vld [vmem:[%s0 + $0x58] sm:$0xff]
  %v27 = vld [vmem:[%s0 + $0x60] sm:$0xff]
  %v28 = vld [vmem:[%s0 + $0x68] sm:$0xff]
  %v29 = vld [vmem:[%s0 + $0x70] sm:$0xff]
  %v30 = vld [vmem:[%s0 + $0x78] sm:$0xff]
  %v31 = vld [vmem:[%s1] sm:$0xf]
  %v32 = vld [vmem:[%s1 + $0x4] sm:$0xf]
  %v33 = vld [vmem:[%s1 + $0x8] sm:$0xf]
  %v34 = vld [vmem:[%s1 + $0xc] sm:$0xf]
  %v35 = vld [vmem:[%s1 + $0x10] sm:$0xf]
  %v36 = vld [vmem:[%s1 + $0x14] sm:$0xf]
  %v37 = vld [vmem:[%s1 + $0x18] sm:$0xf]
  %v38 = vld [vmem:[%s1 + $0x1c] sm:$0xf]
  %v39 = vld [vmem:[%s1 + $0x20] sm:$0xf]
  %v40 = vld [vmem:[%s1 + $0x24] sm:$0xf]
  %v41 = vld [vmem:[%s1 + $0x28] sm:$0xf]
  %v42 = vld [vmem:[%s1 + $0x2c] sm:$0xf]
  %v43 = vld [vmem:[%s1 + $0x30] sm:$0xf]
  %v44 = vld [vmem:[%s1 + $0x34] sm:$0xf]
  %v45 = vld [vmem:[%s1 + $0x38] sm:$0xf]
  %v46 = vld [vmem:[%s1 + $0x3c] sm:$0xf]
  %v47 = vld [vmem:[%s1 + $0x40] sm:$0xf]
  %v48 = vld [vmem:[%s1 + $0x44] sm:$0xf]
  %v49 = vld [vmem:[%s1 + $0x48] sm:$0xf]
  %v50 = vld [vmem:[%s1 + $0x4c] sm:$0xf]
  %v51 = vld [vmem:[%s1 + $0x50] sm:$0xf]
  %v52 = vld [vmem:[%s1 + $0x54] sm:$0xf]
  %v53 = vld [vmem:[%s1 + $0x58] sm:$0xf]
  %v54 = vld [vmem:[%s1 + $0x5c] sm:$0xf]
  %v55 = vld [vmem:[%s1 + $0x60] sm:$0xf]
  %v56 = vld [vmem:[%s1 + $0x64] sm:$0xf]
  %v57 = vld [vmem:[%s1 + $0x68] sm:$0xf]
  %v58 = vld [vmem:[%s1 + $0x6c] sm:$0xf]
  %v59 = vld [vmem:[%s1 + $0x70] sm:$0xf]
  %v60 = vld [vmem:[%s1 + $0x74] sm:$0xf]
  %v61 = vld [vmem:[%s1 + $0x78] sm:$0xf]
  %v62 = vld [vmem:[%s1 + $0x7c] sm:$0xf]
  %v63 = vld [vmem:[%s1 + $0x80] sm:$0xf]
  %v64 = vld [vmem:[%s1 + $0x84] sm:$0xf]
  %v65 = vld [vmem:[%s1 + $0x88] sm:$0xf]
  %v66 = vld [vmem:[%s1 + $0x8c] sm:$0xf]
  %v67 = vld [vmem:[%s1 + $0x90] sm:$0xf]
  %v68 = vld [vmem:[%s1 + $0x94] sm:$0xf]
  %v69 = vld [vmem:[%s1 + $0x98] sm:$0xf]
  %v70 = vld [vmem:[%s1 + $0x9c] sm:$0xf]
  %v71 = vld [vmem:[%s1 + $0xa0] sm:$0xf]
  %v72 = vld [vmem:[%s1 + $0xa4] sm:$0xf]
  %v73 = vld [vmem:[%s1 + $0xa8] sm:$0xf]
  %v74 = vld [vmem:[%s1 + $0xac] sm:$0xf]
  %v75 = vld [vmem:[%s1 + $0xb0] sm:$0xf]
  %v76 = vld [vmem:[%s1 + $0xb4] sm:$0xf]
  %v77 = vld [vmem:[%s1 + $0xb8] sm:$0xf]
  %v78 = vld [vmem:[%s1 + $0xbc] sm:$0xf]
  %v79 = vld [vmem:[%s1 + $0xc0] sm:$0xf]
  %v80 = vld [vmem:[%s1 + $0xc4] sm:$0xf]
  %v81 = vld [vmem:[%s1 + $0xc8] sm:$0xf]
  %v82 = vld [vmem:[%s1 + $0xcc] sm:$0xf]
  %v83 = vld [vmem:[%s1 + $0xd0] sm:$0xf]
  %v84 = vld [vmem:[%s1 + $0xd4] sm:$0xf]
  %v85 = vld [vmem:[%s1 + $0xd8] sm:$0xf]
  %v86 = vld [vmem:[%s1 + $0xdc] sm:$0xf]
  %v87 = vld [vmem:[%s1 + $0xe0] sm:$0xf]
  %v88 = vld [vmem:[%s1 + $0xe4] sm:$0xf]
  %v89 = vld [vmem:[%s1 + $0xe8] sm:$0xf]
  %v90 = vld [vmem:[%s1 + $0xec] sm:$0xf]
  %v91 = vld [vmem:[%s1 + $0xf0] sm:$0xf]
  %v92 = vld [vmem:[%s1 + $0xf4] sm:$0xf]
  %v93 = vld [vmem:[%s1 + $0xf8] sm:$0xf]
  %v94 = vld [vmem:[%s1 + $0xfc] sm:$0xf]
  %v95 = vld [vmem:[%s1 + $0x100] sm:$0xf]
  %v96 = vld [vmem:[%s1 + $0x104] sm:$0xf]
  %v97 = vld [vmem:[%s1 + $0x108] sm:$0xf]
  %v98 = vld [vmem:[%s1 + $0x10c] sm:$0xf]
  %v99 = vld [vmem:[%s1 + $0x110] sm:$0xf]
  %v100 = vld [vmem:[%s1 + $0x114] sm:$0xf]
  %v101 = vld [vmem:[%s1 + $0x118] sm:$0xf]
  %v102 = vld [vmem:[%s1 + $0x11c] sm:$0xf]
  %v103 = vld [vmem:[%s1 + $0x120] sm:$0xf]
  %v104 = vld [vmem:[%s1 + $0x124] sm:$0xf]
  %v105 = vld [vmem:[%s1 + $0x128] sm:$0xf]
  %v106 = vld [vmem:[%s1 + $0x12c] sm:$0xf]
  %v107 = vld [vmem:[%s1 + $0x130] sm:$0xf]
  %v108 = vld [vmem:[%s1 + $0x134] sm:$0xf]
  %v109 = vld [vmem:[%s1 + $0x138] sm:$0xf]
  %v110 = vld [vmem:[%s1 + $0x13c] sm:$0xf]
  %v111 = vld [vmem:[%s1 + $0x140] sm:$0xf]
  %v112 = vld [vmem:[%s1 + $0x144] sm:$0xf]
  %v113 = vld [vmem:[%s1 + $0x148] sm:$0xf]
  %v114 = vld [vmem:[%s1 + $0x14c] sm:$0xf]
  %v115 = vld [vmem:[%s1 + $0x150] sm:$0xf]
  %v116 = vld [vmem:[%s1 + $0x154] sm:$0xf]
  %v117 = vld [vmem:[%s1 + $0x158] sm:$0xf]
  %v118 = vld [vmem:[%s1 + $0x15c] sm:$0xf]
  %v119 = vld [vmem:[%s1 + $0x160] sm:$0xf]
  %v120 = vld [vmem:[%s1 + $0x164] sm:$0xf]
  %v121 = vld [vmem:[%s1 + $0x168] sm:$0xf]
  %v122 = vld [vmem:[%s1 + $0x16c] sm:$0xf]
  %v123 = vld [vmem:[%s1 + $0x170] sm:$0xf]
  %v124 = vld [vmem:[%s1 + $0x174] sm:$0xf]
  %v125 = vld [vmem:[%s1 + $0x178] sm:$0xf]
  %v126 = vld [vmem:[%s1 + $0x17c] sm:$0xf]
  %v127 = vld [vmem:[%s1 + $0x180] sm:$0xf]
  %v128 = vld [vmem:[%s1 + $0x184] sm:$0xf]
  %v129 = vld [vmem:[%s1 + $0x188] sm:$0xf]
  %v130 = vld [vmem:[%s1 + $0x18c] sm:$0xf]
  %v131 = vld [vmem:[%s1 + $0x190] sm:$0xf]
  %v132 = vld [vmem:[%s1 + $0x194] sm:$0xf]
  %v133 = vld [vmem:[%s1 + $0x198] sm:$0xf]
  %v134 = vld [vmem:[%s1 + $0x19c] sm:$0xf]
  %v135 = vld [vmem:[%s1 + $0x1a0] sm:$0xf]
  %v136 = vld [vmem:[%s1 + $0x1a4] sm:$0xf]
  %v137 = vld [vmem:[%s1 + $0x1a8] sm:$0xf]
  %v138 = vld [vmem:[%s1 + $0x1ac] sm:$0xf]
  %v139 = vld [vmem:[%s1 + $0x1b0] sm:$0xf]
  %v140 = vld [vmem:[%s1 + $0x1b4] sm:$0xf]
  %v141 = vld [vmem:[%s1 + $0x1b8] sm:$0xf]
  %v142 = vld [vmem:[%s1 + $0x1bc] sm:$0xf]
  %v143 = vld [vmem:[%s1 + $0x1c0] sm:$0xf]
  %v144 = vld [vmem:[%s1 + $0x1c4] sm:$0xf]
  %v145 = vld [vmem:[%s1 + $0x1c8] sm:$0xf]
  %v146 = vld [vmem:[%s1 + $0x1cc] sm:$0xf]
  %v147 = vld [vmem:[%s1 + $0x1d0] sm:$0xf]
  %v148 = vld [vmem:[%s1 + $0x1d4] sm:$0xf]
  %v149 = vld [vmem:[%s1 + $0x1d8] sm:$0xf]
  %v150 = vld [vmem:[%s1 + $0x1dc] sm:$0xf]
  %v151 = vld [vmem:[%s1 + $0x1e0] sm:$0xf]
  %v152 = vld [vmem:[%s1 + $0x1e4] sm:$0xf]
  %v153 = vld [vmem:[%s1 + $0x1e8] sm:$0xf]
  %v154 = vld [vmem:[%s1 + $0x1ec] sm:$0xf]
  %v155 = vld [vmem:[%s1 + $0x1f0] sm:$0xf]
  %v156 = vld [vmem:[%s1 + $0x1f4] sm:$0xf]
  %v157 = vld [vmem:[%s1 + $0x1f8] sm:$0xf]
  %v158 = vld [vmem:[%s1 + $0x1fc] sm:$0xf]
  %v159 = vld [vmem:[%s1 + $0x200] sm:$0xf]
  %v160 = vld [vmem:[%s1 + $0x204] sm:$0xf]
  %v161 = vld [vmem:[%s1 + $0x208] sm:$0xf]
  %v162 = vld [vmem:[%s1 + $0x20c] sm:$0xf]
  %v163 = vld [vmem:[%s1 + $0x210] sm:$0xf]
  %v164 = vld [vmem:[%s1 + $0x214] sm:$0xf]
  %v165 = vld [vmem:[%s1 + $0x218] sm:$0xf]
  %v166 = vld [vmem:[%s1 + $0x21c] sm:$0xf]
  %v167 = vld [vmem:[%s1 + $0x220] sm:$0xf]
  %v168 = vld [vmem:[%s1 + $0x224] sm:$0xf]
  %v169 = vld [vmem:[%s1 + $0x228] sm:$0xf]
  %v170 = vld [vmem:[%s1 + $0x22c] sm:$0xf]
  %v171 = vld [vmem:[%s1 + $0x230] sm:$0xf]
  %v172 = vld [vmem:[%s1 + $0x234] sm:$0xf]
  %v173 = vld [vmem:[%s1 + $0x238] sm:$0xf]
  %v174 = vld [vmem:[%s1 + $0x23c] sm:$0xf]
  %v175 = vld [vmem:[%s1 + $0x240] sm:$0xf]
  %v176 = vld [vmem:[%s1 + $0x244] sm:$0xf]
  %v177 = vld [vmem:[%s1 + $0x248] sm:$0xf]
  %v178 = vld [vmem:[%s1 + $0x24c] sm:$0xf]
  %v179 = vld [vmem:[%s1 + $0x250] sm:$0xf]
  %v180 = vld [vmem:[%s1 + $0x254] sm:$0xf]
  %v181 = vld [vmem:[%s1 + $0x258] sm:$0xf]
  %v182 = vld [vmem:[%s1 + $0x25c] sm:$0xf]
  %v183 = vld [vmem:[%s1 + $0x260] sm:$0xf]
  %v184 = vld [vmem:[%s1 + $0x264] sm:$0xf]
  %v185 = vld [vmem:[%s1 + $0x268] sm:$0xf]
  %v186 = vld [vmem:[%s1 + $0x26c] sm:$0xf]
  %v187 = vld [vmem:[%s1 + $0x270] sm:$0xf]
  %v188 = vld [vmem:[%s1 + $0x274] sm:$0xf]
  %v189 = vld [vmem:[%s1 + $0x278] sm:$0xf]
  %v190 = vld [vmem:[%s1 + $0x27c] sm:$0xf]
  %v191 = vld [vmem:[%s1 + $0x280] sm:$0xf]
  %v192 = vld [vmem:[%s1 + $0x284] sm:$0xf]
  %v193 = vld [vmem:[%s1 + $0x288] sm:$0xf]
  %v194 = vld [vmem:[%s1 + $0x28c] sm:$0xf]
  %v195 = vld [vmem:[%s1 + $0x290] sm:$0xf]
  %v196 = vld [vmem:[%s1 + $0x294] sm:$0xf]
  %v197 = vld [vmem:[%s1 + $0x298] sm:$0xf]
  %v198 = vld [vmem:[%s1 + $0x29c] sm:$0xf]
  %v199 = vld [vmem:[%s1 + $0x2a0] sm:$0xf]
  %v200 = vld [vmem:[%s1 + $0x2a4] sm:$0xf]
  %v201 = vld [vmem:[%s1 + $0x2a8] sm:$0xf]
  %v202 = vld [vmem:[%s1 + $0x2ac] sm:$0xf]
  %v203 = vld [vmem:[%s1 + $0x2b0] sm:$0xf]
  %v204 = vld [vmem:[%s1 + $0x2b4] sm:$0xf]
  %v205 = vld [vmem:[%s1 + $0x2b8] sm:$0xf]
  %v206 = vld [vmem:[%s1 + $0x2bc] sm:$0xf]
  %v207 = vld [vmem:[%s1 + $0x2c0] sm:$0xf]
  %v208 = vld [vmem:[%s1 + $0x2c4] sm:$0xf]
  %v209 = vld [vmem:[%s1 + $0x2c8] sm:$0xf]
  %v210 = vld [vmem:[%s1 + $0x2cc] sm:$0xf]
  %v211 = vld [vmem:[%s1 + $0x2d0] sm:$0xf]
  %v212 = vld [vmem:[%s1 + $0x2d4] sm:$0xf]
  %v213 = vld [vmem:[%s1 + $0x2d8] sm:$0xf]
  %v214 = vld [vmem:[%s1 + $0x2dc] sm:$0xf]
  %v215 = vld [vmem:[%s1 + $0x2e0] sm:$0xf]
  %v216 = vld [vmem:[%s1 + $0x2e4] sm:$0xf]
  %v217 = vld [vmem:[%s1 + $0x2e8] sm:$0xf]
  %v218 = vld [vmem:[%s1 + $0x2ec] sm:$0xf]
  %v219 = vld [vmem:[%s1 + $0x2f0] sm:$0xf]
  %v220 = vld [vmem:[%s1 + $0x2f4] sm:$0xf]
  %v221 = vld [vmem:[%s1 + $0x2f8] sm:$0xf]
  %v222 = vld [vmem:[%s1 + $0x2fc] sm:$0xf]
  %v223 = vld [vmem:[%s1 + $0x300] sm:$0xf]
  %v224 = vld [vmem:[%s1 + $0x304] sm:$0xf]
  %v225 = vld [vmem:[%s1 + $0x308] sm:$0xf]
  %v226 = vld [vmem:[%s1 + $0x30c] sm:$0xf]
  %v227 = vld [vmem:[%s1 + $0x310] sm:$0xf]
  %v228 = vld [vmem:[%s1 + $0x314] sm:$0xf]
  %v229 = vld [vmem:[%s1 + $0x318] sm:$0xf]
  %v230 = vld [vmem:[%s1 + $0x31c] sm:$0xf]
  %v231 = vld [vmem:[%s1 + $0x320] sm:$0xf]
  %v232 = vld [vmem:[%s1 + $0x324] sm:$0xf]
  %v233 = vld [vmem:[%s1 + $0x328] sm:$0xf]
  %v234 = vld [vmem:[%s1 + $0x32c] sm:$0xf]
  %v235 = vld [vmem:[%s1 + $0x330] sm:$0xf]
  %v236 = vld [vmem:[%s1 + $0x334] sm:$0xf]
  %v237 = vld [vmem:[%s1 + $0x338] sm:$0xf]
  %v238 = vld [vmem:[%s1 + $0x33c] sm:$0xf]
  %v239 = vld [vmem:[%s1 + $0x340] sm:$0xf]
  %v240 = vld [vmem:[%s1 + $0x344] sm:$0xf]
  %v241 = vld [vmem:[%s1 + $0x348] sm:$0xf]
  %v242 = vld [vmem:[%s1 + $0x34c] sm:$0xf]
  %v243 = vld [vmem:[%s1 + $0x350] sm:$0xf]
  %v244 = vld [vmem:[%s1 + $0x354] sm:$0xf]
  %v245 = vld [vmem:[%s1 + $0x358] sm:$0xf]
  %v246 = vld [vmem:[%s1 + $0x35c] sm:$0xf]
  %v247 = vld [vmem:[%s1 + $0x360] sm:$0xf]
  %v248 = vld [vmem:[%s1 + $0x364] sm:$0xf]
  %v249 = vld [vmem:[%s1 + $0x368] sm:$0xf]
  %v250 = vld [vmem:[%s1 + $0x36c] sm:$0xf]
  %v251 = vld [vmem:[%s1 + $0x370] sm:$0xf]
  %v252 = vld [vmem:[%s1 + $0x374] sm:$0xf]
  %v253 = vld [vmem:[%s1 + $0x378] sm:$0xf]
  %v254 = vld [vmem:[%s1 + $0x37c] sm:$0xf]
  %v255 = vld [vmem:[%s1 + $0x380] sm:$0xf]
  %v256 = vld [vmem:[%s1 + $0x384] sm:$0xf]
  %v257 = vld [vmem:[%s1 + $0x388] sm:$0xf]
  %v258 = vld [vmem:[%s1 + $0x38c] sm:$0xf]
  %v259 = vld [vmem:[%s1 + $0x390] sm:$0xf]
  %v260 = vld [vmem:[%s1 + $0x394] sm:$0xf]
  %v261 = vld [vmem:[%s1 + $0x398] sm:$0xf]
  %v262 = vld [vmem:[%s1 + $0x39c] sm:$0xf]
  %v263 = vld [vmem:[%s1 + $0x3a0] sm:$0xf]
  %v264 = vld [vmem:[%s1 + $0x3a4] sm:$0xf]
  %v265 = vld [vmem:[%s1 + $0x3a8] sm:$0xf]
  %v266 = vld [vmem:[%s1 + $0x3ac] sm:$0xf]
  %v267 = vld [vmem:[%s1 + $0x3b0] sm:$0xf]
  %v268 = vld [vmem:[%s1 + $0x3b4] sm:$0xf]
  %v269 = vld [vmem:[%s1 + $0x3b8] sm:$0xf]
  %v270 = vld [vmem:[%s1 + $0x3bc] sm:$0xf]
  %v271 = vld [vmem:[%s1 + $0x3c0] sm:$0xf]
  %v272 = vld [vmem:[%s1 + $0x3c4] sm:$0xf]
  %v273 = vld [vmem:[%s1 + $0x3c8] sm:$0xf]
  %v274 = vld [vmem:[%s1 + $0x3cc] sm:$0xf]
  %v275 = vld [vmem:[%s1 + $0x3d0] sm:$0xf]
  %v276 = vld [vmem:[%s1 + $0x3d4] sm:$0xf]
  %v277 = vld [vmem:[%s1 + $0x3d8] sm:$0xf]
  %v278 = vld [vmem:[%s1 + $0x3dc] sm:$0xf]
  %v279 = vld [vmem:[%s1 + $0x3e0] sm:$0xf]
  %v280 = vld [vmem:[%s1 + $0x3e4] sm:$0xf]
  %v281 = vld [vmem:[%s1 + $0x3e8] sm:$0xf]
  %v282 = vld [vmem:[%s1 + $0x3ec] sm:$0xf]
  %v283 = vld [vmem:[%s1 + $0x3f0] sm:$0xf]
  %v284 = vld [vmem:[%s1 + $0x3f4] sm:$0xf]
  %v285 = vld [vmem:[%s1 + $0x3f8] sm:$0xf]
  %v286 = vld [vmem:[%s1 + $0x3fc] sm:$0xf]
  %v287 = vld [vmem:[%s2] sm:$0x1]
  %v289 = vlaneseq
  %v290 = vshrl.u32 %v289, 7
  %v291 = vsub.s32 0, %v290
  %v292 = vrot.slane %v287, %v291
  %v310 = vunpack.c.l.b16 %v15
  %v311 = vunpack.c.h.b16 %v15
  %v312 = vunpack.c.l.b16 %v16
  %v313 = vunpack.c.h.b16 %v16
  %v314 = vunpack.c.l.b16 %v17
  %v315 = vunpack.c.h.b16 %v17
  %v316 = vunpack.c.l.b16 %v18
  %v317 = vunpack.c.h.b16 %v18
  %v318 = vunpack.c.l.b16 %v19
  %v319 = vunpack.c.h.b16 %v19
  %v320 = vunpack.c.l.b16 %v20
  %v321 = vunpack.c.h.b16 %v20
  %v322 = vunpack.c.l.b16 %v21
  %v323 = vunpack.c.h.b16 %v21
  %v324 = vunpack.c.l.b16 %v22
  %v325 = vunpack.c.h.b16 %v22
  %v326 = vunpack.c.l.b16 %v23
  %v327 = vunpack.c.h.b16 %v23
  %v328 = vunpack.c.l.b16 %v24
  %v329 = vunpack.c.h.b16 %v24
  %v330 = vunpack.c.l.b16 %v25
  %v331 = vunpack.c.h.b16 %v25
  %v332 = vunpack.c.l.b16 %v26
  %v333 = vunpack.c.h.b16 %v26
  %v334 = vunpack.c.l.b16 %v27
  %v335 = vunpack.c.h.b16 %v27
  %v336 = vunpack.c.l.b16 %v28
  %v337 = vunpack.c.h.b16 %v28
  %v338 = vunpack.c.l.b16 %v29
  %v339 = vunpack.c.h.b16 %v29
  %v340 = vunpack.c.l.b16 %v30
  %v341 = vunpack.c.h.b16 %v30
  %v342 = vpack.c.b16 %v326, %v310
  %v343 = vpack.c.b16 %v327, %v311
  %v344 = vpack.c.b16 %v328, %v312
  %v345 = vpack.c.b16 %v329, %v313
  %v346 = vpack.c.b16 %v330, %v314
  %v347 = vpack.c.b16 %v331, %v315
  %v348 = vpack.c.b16 %v332, %v316
  %v349 = vpack.c.b16 %v333, %v317
  %v350 = vpack.c.b16 %v334, %v318
  %v351 = vpack.c.b16 %v335, %v319
  %v352 = vpack.c.b16 %v336, %v320
  %v353 = vpack.c.b16 %v337, %v321
  %v354 = vpack.c.b16 %v338, %v322
  %v355 = vpack.c.b16 %v339, %v323
  %v356 = vpack.c.b16 %v340, %v324
  %v357 = vpack.c.b16 %v341, %v325
  %v630 = vunpack.c.l.b16 %v31
  %v631 = vunpack.c.l.b16 %v32
  %v632 = vunpack.c.l.b16 %v33
  %v633 = vunpack.c.l.b16 %v34
  %v634 = vunpack.c.l.b16 %v35
  %v635 = vunpack.c.l.b16 %v36
  %v636 = vunpack.c.l.b16 %v37
  %v637 = vunpack.c.l.b16 %v38
  %v638 = vunpack.c.l.b16 %v39
  %v639 = vunpack.c.l.b16 %v40
  %v640 = vunpack.c.l.b16 %v41
  %v641 = vunpack.c.l.b16 %v42
  %v642 = vunpack.c.l.b16 %v43
  %v643 = vunpack.c.l.b16 %v44
  %v644 = vunpack.c.l.b16 %v45
  %v645 = vunpack.c.l.b16 %v46
  %v646 = vunpack.c.l.b16 %v47
  %v647 = vunpack.c.l.b16 %v48
  %v648 = vunpack.c.l.b16 %v49
  %v649 = vunpack.c.l.b16 %v50
  %v650 = vunpack.c.l.b16 %v51
  %v651 = vunpack.c.l.b16 %v52
  %v652 = vunpack.c.l.b16 %v53
  %v653 = vunpack.c.l.b16 %v54
  %v654 = vunpack.c.l.b16 %v55
  %v655 = vunpack.c.l.b16 %v56
  %v656 = vunpack.c.l.b16 %v57
  %v657 = vunpack.c.l.b16 %v58
  %v658 = vunpack.c.l.b16 %v59
  %v659 = vunpack.c.l.b16 %v60
  %v660 = vunpack.c.l.b16 %v61
  %v661 = vunpack.c.l.b16 %v62
  %v662 = vunpack.c.l.b16 %v63
  %v663 = vunpack.c.l.b16 %v64
  %v664 = vunpack.c.l.b16 %v65
  %v665 = vunpack.c.l.b16 %v66
  %v666 = vunpack.c.l.b16 %v67
  %v667 = vunpack.c.l.b16 %v68
  %v668 = vunpack.c.l.b16 %v69
  %v669 = vunpack.c.l.b16 %v70
  %v670 = vunpack.c.l.b16 %v71
  %v671 = vunpack.c.l.b16 %v72
  %v672 = vunpack.c.l.b16 %v73
  %v673 = vunpack.c.l.b16 %v74
  %v674 = vunpack.c.l.b16 %v75
  %v675 = vunpack.c.l.b16 %v76
  %v676 = vunpack.c.l.b16 %v77
  %v677 = vunpack.c.l.b16 %v78
  %v678 = vunpack.c.l.b16 %v79
  %v679 = vunpack.c.l.b16 %v80
  %v680 = vunpack.c.l.b16 %v81
  %v681 = vunpack.c.l.b16 %v82
  %v682 = vunpack.c.l.b16 %v83
  %v683 = vunpack.c.l.b16 %v84
  %v684 = vunpack.c.l.b16 %v85
  %v685 = vunpack.c.l.b16 %v86
  %v686 = vunpack.c.l.b16 %v87
  %v687 = vunpack.c.l.b16 %v88
  %v688 = vunpack.c.l.b16 %v89
  %v689 = vunpack.c.l.b16 %v90
  %v690 = vunpack.c.l.b16 %v91
  %v691 = vunpack.c.l.b16 %v92
  %v692 = vunpack.c.l.b16 %v93
  %v693 = vunpack.c.l.b16 %v94
  %v694 = vunpack.c.l.b16 %v95
  %v695 = vunpack.c.l.b16 %v96
  %v696 = vunpack.c.l.b16 %v97
  %v697 = vunpack.c.l.b16 %v98
  %v698 = vunpack.c.l.b16 %v99
  %v699 = vunpack.c.l.b16 %v100
  %v700 = vunpack.c.l.b16 %v101
  %v701 = vunpack.c.l.b16 %v102
  %v702 = vunpack.c.l.b16 %v103
  %v703 = vunpack.c.l.b16 %v104
  %v704 = vunpack.c.l.b16 %v105
  %v705 = vunpack.c.l.b16 %v106
  %v706 = vunpack.c.l.b16 %v107
  %v707 = vunpack.c.l.b16 %v108
  %v708 = vunpack.c.l.b16 %v109
  %v709 = vunpack.c.l.b16 %v110
  %v710 = vunpack.c.l.b16 %v111
  %v711 = vunpack.c.l.b16 %v112
  %v712 = vunpack.c.l.b16 %v113
  %v713 = vunpack.c.l.b16 %v114
  %v714 = vunpack.c.l.b16 %v115
  %v715 = vunpack.c.l.b16 %v116
  %v716 = vunpack.c.l.b16 %v117
  %v717 = vunpack.c.l.b16 %v118
  %v718 = vunpack.c.l.b16 %v119
  %v719 = vunpack.c.l.b16 %v120
  %v720 = vunpack.c.l.b16 %v121
  %v721 = vunpack.c.l.b16 %v122
  %v722 = vunpack.c.l.b16 %v123
  %v723 = vunpack.c.l.b16 %v124
  %v724 = vunpack.c.l.b16 %v125
  %v725 = vunpack.c.l.b16 %v126
  %v726 = vunpack.c.l.b16 %v127
  %v727 = vunpack.c.l.b16 %v128
  %v728 = vunpack.c.l.b16 %v129
  %v729 = vunpack.c.l.b16 %v130
  %v730 = vunpack.c.l.b16 %v131
  %v731 = vunpack.c.l.b16 %v132
  %v732 = vunpack.c.l.b16 %v133
  %v733 = vunpack.c.l.b16 %v134
  %v734 = vunpack.c.l.b16 %v135
  %v735 = vunpack.c.l.b16 %v136
  %v736 = vunpack.c.l.b16 %v137
  %v737 = vunpack.c.l.b16 %v138
  %v738 = vunpack.c.l.b16 %v139
  %v739 = vunpack.c.l.b16 %v140
  %v740 = vunpack.c.l.b16 %v141
  %v741 = vunpack.c.l.b16 %v142
  %v742 = vunpack.c.l.b16 %v143
  %v743 = vunpack.c.l.b16 %v144
  %v744 = vunpack.c.l.b16 %v145
  %v745 = vunpack.c.l.b16 %v146
  %v746 = vunpack.c.l.b16 %v147
  %v747 = vunpack.c.l.b16 %v148
  %v748 = vunpack.c.l.b16 %v149
  %v749 = vunpack.c.l.b16 %v150
  %v750 = vunpack.c.l.b16 %v151
  %v751 = vunpack.c.l.b16 %v152
  %v752 = vunpack.c.l.b16 %v153
  %v753 = vunpack.c.l.b16 %v154
  %v754 = vunpack.c.l.b16 %v155
  %v755 = vunpack.c.l.b16 %v156
  %v756 = vunpack.c.l.b16 %v157
  %v757 = vunpack.c.l.b16 %v158
  %v758 = vunpack.c.l.b16 %v159
  %v759 = vunpack.c.l.b16 %v160
  %v760 = vunpack.c.l.b16 %v161
  %v761 = vunpack.c.l.b16 %v162
  %v762 = vunpack.c.l.b16 %v163
  %v763 = vunpack.c.l.b16 %v164
  %v764 = vunpack.c.l.b16 %v165
  %v765 = vunpack.c.l.b16 %v166
  %v766 = vunpack.c.l.b16 %v167
  %v767 = vunpack.c.l.b16 %v168
  %v768 = vunpack.c.l.b16 %v169
  %v769 = vunpack.c.l.b16 %v170
  %v770 = vunpack.c.l.b16 %v171
  %v771 = vunpack.c.l.b16 %v172
  %v772 = vunpack.c.l.b16 %v173
  %v773 = vunpack.c.l.b16 %v174
  %v774 = vunpack.c.l.b16 %v175
  %v775 = vunpack.c.l.b16 %v176
  %v776 = vunpack.c.l.b16 %v177
  %v777 = vunpack.c.l.b16 %v178
  %v778 = vunpack.c.l.b16 %v179
  %v779 = vunpack.c.l.b16 %v180
  %v780 = vunpack.c.l.b16 %v181
  %v781 = vunpack.c.l.b16 %v182
  %v782 = vunpack.c.l.b16 %v183
  %v783 = vunpack.c.l.b16 %v184
  %v784 = vunpack.c.l.b16 %v185
  %v785 = vunpack.c.l.b16 %v186
  %v786 = vunpack.c.l.b16 %v187
  %v787 = vunpack.c.l.b16 %v188
  %v788 = vunpack.c.l.b16 %v189
  %v789 = vunpack.c.l.b16 %v190
  %v790 = vunpack.c.l.b16 %v191
  %v791 = vunpack.c.l.b16 %v192
  %v792 = vunpack.c.l.b16 %v193
  %v793 = vunpack.c.l.b16 %v194
  %v794 = vunpack.c.l.b16 %v195
  %v795 = vunpack.c.l.b16 %v196
  %v796 = vunpack.c.l.b16 %v197
  %v797 = vunpack.c.l.b16 %v198
  %v798 = vunpack.c.l.b16 %v199
  %v799 = vunpack.c.l.b16 %v200
  %v800 = vunpack.c.l.b16 %v201
  %v801 = vunpack.c.l.b16 %v202
  %v802 = vunpack.c.l.b16 %v203
  %v803 = vunpack.c.l.b16 %v204
  %v804 = vunpack.c.l.b16 %v205
  %v805 = vunpack.c.l.b16 %v206
  %v806 = vunpack.c.l.b16 %v207
  %v807 = vunpack.c.l.b16 %v208
  %v808 = vunpack.c.l.b16 %v209
  %v809 = vunpack.c.l.b16 %v210
  %v810 = vunpack.c.l.b16 %v211
  %v811 = vunpack.c.l.b16 %v212
  %v812 = vunpack.c.l.b16 %v213
  %v813 = vunpack.c.l.b16 %v214
  %v814 = vunpack.c.l.b16 %v215
  %v815 = vunpack.c.l.b16 %v216
  %v816 = vunpack.c.l.b16 %v217
  %v817 = vunpack.c.l.b16 %v218
  %v818 = vunpack.c.l.b16 %v219
  %v819 = vunpack.c.l.b16 %v220
  %v820 = vunpack.c.l.b16 %v221
  %v821 = vunpack.c.l.b16 %v222
  %v822 = vunpack.c.l.b16 %v223
  %v823 = vunpack.c.l.b16 %v224
  %v824 = vunpack.c.l.b16 %v225
  %v825 = vunpack.c.l.b16 %v226
  %v826 = vunpack.c.l.b16 %v227
  %v827 = vunpack.c.l.b16 %v228
  %v828 = vunpack.c.l.b16 %v229
  %v829 = vunpack.c.l.b16 %v230
  %v830 = vunpack.c.l.b16 %v231
  %v831 = vunpack.c.l.b16 %v232
  %v832 = vunpack.c.l.b16 %v233
  %v833 = vunpack.c.l.b16 %v234
  %v834 = vunpack.c.l.b16 %v235
  %v835 = vunpack.c.l.b16 %v236
  %v836 = vunpack.c.l.b16 %v237
  %v837 = vunpack.c.l.b16 %v238
  %v838 = vunpack.c.l.b16 %v239
  %v839 = vunpack.c.l.b16 %v240
  %v840 = vunpack.c.l.b16 %v241
  %v841 = vunpack.c.l.b16 %v242
  %v842 = vunpack.c.l.b16 %v243
  %v843 = vunpack.c.l.b16 %v244
  %v844 = vunpack.c.l.b16 %v245
  %v845 = vunpack.c.l.b16 %v246
  %v846 = vunpack.c.l.b16 %v247
  %v847 = vunpack.c.l.b16 %v248
  %v848 = vunpack.c.l.b16 %v249
  %v849 = vunpack.c.l.b16 %v250
  %v850 = vunpack.c.l.b16 %v251
  %v851 = vunpack.c.l.b16 %v252
  %v852 = vunpack.c.l.b16 %v253
  %v853 = vunpack.c.l.b16 %v254
  %v854 = vunpack.c.l.b16 %v255
  %v855 = vunpack.c.l.b16 %v256
  %v856 = vunpack.c.l.b16 %v257
  %v857 = vunpack.c.l.b16 %v258
  %v858 = vunpack.c.l.b16 %v259
  %v859 = vunpack.c.l.b16 %v260
  %v860 = vunpack.c.l.b16 %v261
  %v861 = vunpack.c.l.b16 %v262
  %v862 = vunpack.c.l.b16 %v263
  %v863 = vunpack.c.l.b16 %v264
  %v864 = vunpack.c.l.b16 %v265
  %v865 = vunpack.c.l.b16 %v266
  %v866 = vunpack.c.l.b16 %v267
  %v867 = vunpack.c.l.b16 %v268
  %v868 = vunpack.c.l.b16 %v269
  %v869 = vunpack.c.l.b16 %v270
  %v870 = vunpack.c.l.b16 %v271
  %v871 = vunpack.c.l.b16 %v272
  %v872 = vunpack.c.l.b16 %v273
  %v873 = vunpack.c.l.b16 %v274
  %v874 = vunpack.c.l.b16 %v275
  %v875 = vunpack.c.l.b16 %v276
  %v876 = vunpack.c.l.b16 %v277
  %v877 = vunpack.c.l.b16 %v278
  %v878 = vunpack.c.l.b16 %v279
  %v879 = vunpack.c.l.b16 %v280
  %v880 = vunpack.c.l.b16 %v281
  %v881 = vunpack.c.l.b16 %v282
  %v882 = vunpack.c.l.b16 %v283
  %v883 = vunpack.c.l.b16 %v284
  %v884 = vunpack.c.l.b16 %v285
  %v885 = vunpack.c.l.b16 %v286
  %v886 = vpack.c.b16 %v631, %v630
  %v887 = vpack.c.b16 %v633, %v632
  %v888 = vpack.c.b16 %v635, %v634
  %v889 = vpack.c.b16 %v637, %v636
  %v890 = vpack.c.b16 %v639, %v638
  %v891 = vpack.c.b16 %v641, %v640
  %v892 = vpack.c.b16 %v643, %v642
  %v893 = vpack.c.b16 %v645, %v644
  %v894 = vpack.c.b16 %v647, %v646
  %v895 = vpack.c.b16 %v649, %v648
  %v896 = vpack.c.b16 %v651, %v650
  %v897 = vpack.c.b16 %v653, %v652
  %v898 = vpack.c.b16 %v655, %v654
  %v899 = vpack.c.b16 %v657, %v656
  %v900 = vpack.c.b16 %v659, %v658
  %v901 = vpack.c.b16 %v661, %v660
  %v902 = vpack.c.b16 %v663, %v662
  %v903 = vpack.c.b16 %v665, %v664
  %v904 = vpack.c.b16 %v667, %v666
  %v905 = vpack.c.b16 %v669, %v668
  %v906 = vpack.c.b16 %v671, %v670
  %v907 = vpack.c.b16 %v673, %v672
  %v908 = vpack.c.b16 %v675, %v674
  %v909 = vpack.c.b16 %v677, %v676
  %v910 = vpack.c.b16 %v679, %v678
  %v911 = vpack.c.b16 %v681, %v680
  %v912 = vpack.c.b16 %v683, %v682
  %v913 = vpack.c.b16 %v685, %v684
  %v914 = vpack.c.b16 %v687, %v686
  %v915 = vpack.c.b16 %v689, %v688
  %v916 = vpack.c.b16 %v691, %v690
  %v917 = vpack.c.b16 %v693, %v692
  %v918 = vpack.c.b16 %v695, %v694
  %v919 = vpack.c.b16 %v697, %v696
  %v920 = vpack.c.b16 %v699, %v698
  %v921 = vpack.c.b16 %v701, %v700
  %v922 = vpack.c.b16 %v703, %v702
  %v923 = vpack.c.b16 %v705, %v704
  %v924 = vpack.c.b16 %v707, %v706
  %v925 = vpack.c.b16 %v709, %v708
  %v926 = vpack.c.b16 %v711, %v710
  %v927 = vpack.c.b16 %v713, %v712
  %v928 = vpack.c.b16 %v715, %v714
  %v929 = vpack.c.b16 %v717, %v716
  %v930 = vpack.c.b16 %v719, %v718
  %v931 = vpack.c.b16 %v721, %v720
  %v932 = vpack.c.b16 %v723, %v722
  %v933 = vpack.c.b16 %v725, %v724
  %v934 = vpack.c.b16 %v727, %v726
  %v935 = vpack.c.b16 %v729, %v728
  %v936 = vpack.c.b16 %v731, %v730
  %v937 = vpack.c.b16 %v733, %v732
  %v938 = vpack.c.b16 %v735, %v734
  %v939 = vpack.c.b16 %v737, %v736
  %v940 = vpack.c.b16 %v739, %v738
  %v941 = vpack.c.b16 %v741, %v740
  %v942 = vpack.c.b16 %v743, %v742
  %v943 = vpack.c.b16 %v745, %v744
  %v944 = vpack.c.b16 %v747, %v746
  %v945 = vpack.c.b16 %v749, %v748
  %v946 = vpack.c.b16 %v751, %v750
  %v947 = vpack.c.b16 %v753, %v752
  %v948 = vpack.c.b16 %v755, %v754
  %v949 = vpack.c.b16 %v757, %v756
  %v950 = vpack.c.b16 %v759, %v758
  %v951 = vpack.c.b16 %v761, %v760
  %v952 = vpack.c.b16 %v763, %v762
  %v953 = vpack.c.b16 %v765, %v764
  %v954 = vpack.c.b16 %v767, %v766
  %v955 = vpack.c.b16 %v769, %v768
  %v956 = vpack.c.b16 %v771, %v770
  %v957 = vpack.c.b16 %v773, %v772
  %v958 = vpack.c.b16 %v775, %v774
  %v959 = vpack.c.b16 %v777, %v776
  %v960 = vpack.c.b16 %v779, %v778
  %v961 = vpack.c.b16 %v781, %v780
  %v962 = vpack.c.b16 %v783, %v782
  %v963 = vpack.c.b16 %v785, %v784
  %v964 = vpack.c.b16 %v787, %v786
  %v965 = vpack.c.b16 %v789, %v788
  %v966 = vpack.c.b16 %v791, %v790
  %v967 = vpack.c.b16 %v793, %v792
  %v968 = vpack.c.b16 %v795, %v794
  %v969 = vpack.c.b16 %v797, %v796
  %v970 = vpack.c.b16 %v799, %v798
  %v971 = vpack.c.b16 %v801, %v800
  %v972 = vpack.c.b16 %v803, %v802
  %v973 = vpack.c.b16 %v805, %v804
  %v974 = vpack.c.b16 %v807, %v806
  %v975 = vpack.c.b16 %v809, %v808
  %v976 = vpack.c.b16 %v811, %v810
  %v977 = vpack.c.b16 %v813, %v812
  %v978 = vpack.c.b16 %v815, %v814
  %v979 = vpack.c.b16 %v817, %v816
  %v980 = vpack.c.b16 %v819, %v818
  %v981 = vpack.c.b16 %v821, %v820
  %v982 = vpack.c.b16 %v823, %v822
  %v983 = vpack.c.b16 %v825, %v824
  %v984 = vpack.c.b16 %v827, %v826
  %v985 = vpack.c.b16 %v829, %v828
  %v986 = vpack.c.b16 %v831, %v830
  %v987 = vpack.c.b16 %v833, %v832
  %v988 = vpack.c.b16 %v835, %v834
  %v989 = vpack.c.b16 %v837, %v836
  %v990 = vpack.c.b16 %v839, %v838
  %v991 = vpack.c.b16 %v841, %v840
  %v992 = vpack.c.b16 %v843, %v842
  %v993 = vpack.c.b16 %v845, %v844
  %v994 = vpack.c.b16 %v847, %v846
  %v995 = vpack.c.b16 %v849, %v848
  %v996 = vpack.c.b16 %v851, %v850
  %v997 = vpack.c.b16 %v853, %v852
  %v998 = vpack.c.b16 %v855, %v854
  %v999 = vpack.c.b16 %v857, %v856
  %v1000 = vpack.c.b16 %v859, %v858
  %v1001 = vpack.c.b16 %v861, %v860
  %v1002 = vpack.c.b16 %v863, %v862
  %v1003 = vpack.c.b16 %v865, %v864
  %v1004 = vpack.c.b16 %v867, %v866
  %v1005 = vpack.c.b16 %v869, %v868
  %v1006 = vpack.c.b16 %v871, %v870
  %v1007 = vpack.c.b16 %v873, %v872
  %v1008 = vpack.c.b16 %v875, %v874
  %v1009 = vpack.c.b16 %v877, %v876
  %v1010 = vpack.c.b16 %v879, %v878
  %v1011 = vpack.c.b16 %v881, %v880
  %v1012 = vpack.c.b16 %v883, %v882
  %v1013 = vpack.c.b16 %v885, %v884
  %1142 = vmatprep.subr.bf16.mxu0 0
  %1143 = vmatpush1.bf16.msra.mxu0 %v886
  %1144 = vmatprep.subr.bf16.mxu0 0
  %1145 = vmatpush1.bf16.msra.mxu0 %v887
  %1146 = vmatprep.subr.bf16.mxu0 0
  %1147 = vmatpush1.bf16.msra.mxu0 %v888
  %1148 = vmatprep.subr.bf16.mxu0 0
  %1149 = vmatpush1.bf16.msra.mxu0 %v889
  %1150 = vmatprep.subr.bf16.mxu0 0
  %1151 = vmatpush1.bf16.msra.mxu0 %v890
  %1152 = vmatprep.subr.bf16.mxu0 0
  %1153 = vmatpush1.bf16.msra.mxu0 %v891
  %1154 = vmatprep.subr.bf16.mxu0 0
  %1155 = vmatpush1.bf16.msra.mxu0 %v892
  %1156 = vmatprep.subr.bf16.mxu0 0
  %1157 = vmatpush1.bf16.msra.mxu0 %v893
  %1158 = vmatprep.subr.bf16.mxu0 0
  %1159 = vmatpush1.bf16.msra.mxu0 %v894
  %1160 = vmatprep.subr.bf16.mxu0 0
  %1161 = vmatpush1.bf16.msra.mxu0 %v895
  %1162 = vmatprep.subr.bf16.mxu0 0
  %1163 = vmatpush1.bf16.msra.mxu0 %v896
  %1164 = vmatprep.subr.bf16.mxu0 0
  %1165 = vmatpush1.bf16.msra.mxu0 %v897
  %1166 = vmatprep.subr.bf16.mxu0 0
  %1167 = vmatpush1.bf16.msra.mxu0 %v898
  %1168 = vmatprep.subr.bf16.mxu0 0
  %1169 = vmatpush1.bf16.msra.mxu0 %v899
  %1170 = vmatprep.subr.bf16.mxu0 0
  %1171 = vmatpush1.bf16.msra.mxu0 %v900
  %1172 = vmatprep.subr.bf16.mxu0 0
  %1173 = vmatpush1.bf16.msra.mxu0 %v901
  %1174 = vmatprep.mubr.bf16.mxu0 %v343
  %1175 = vmatmul.mubr.bf16.gmra.mrb[0].mxu0 %v342
  %v1176 = vpop.f32.mrb[0].mxu0
  %v1177 = vadd.f32 %v292, %v1176
  %v1178 = vpop.f32.mrb[0].mxu0
  %v1179 = vpop.f32.mrb[0].mxu0
  %v1180 = vadd.f32 %v292, %v1179
  %v1181 = vpop.f32.mrb[0].mxu0
  %1182 = vdwg.mxu0
  %1183 = vmatprep.subr.bf16.mxu0 0
  %1184 = vmatpush1.bf16.msra.mxu0 %v902
  %1185 = vmatprep.subr.bf16.mxu0 0
  %1186 = vmatpush1.bf16.msra.mxu0 %v903
  %1187 = vmatprep.subr.bf16.mxu0 0
  %1188 = vmatpush1.bf16.msra.mxu0 %v904
  %1189 = vmatprep.subr.bf16.mxu0 0
  %1190 = vmatpush1.bf16.msra.mxu0 %v905
  %1191 = vmatprep.subr.bf16.mxu0 0
  %1192 = vmatpush1.bf16.msra.mxu0 %v906
  %1193 = vmatprep.subr.bf16.mxu0 0
  %1194 = vmatpush1.bf16.msra.mxu0 %v907
  %1195 = vmatprep.subr.bf16.mxu0 0
  %1196 = vmatpush1.bf16.msra.mxu0 %v908
  %1197 = vmatprep.subr.bf16.mxu0 0
  %1198 = vmatpush1.bf16.msra.mxu0 %v909
  %1199 = vmatprep.subr.bf16.mxu0 0
  %1200 = vmatpush1.bf16.msra.mxu0 %v910
  %1201 = vmatprep.subr.bf16.mxu0 0
  %1202 = vmatpush1.bf16.msra.mxu0 %v911
  %1203 = vmatprep.subr.bf16.mxu0 0
  %1204 = vmatpush1.bf16.msra.mxu0 %v912
  %1205 = vmatprep.subr.bf16.mxu0 0
  %1206 = vmatpush1.bf16.msra.mxu0 %v913
  %1207 = vmatprep.subr.bf16.mxu0 0
  %1208 = vmatpush1.bf16.msra.mxu0 %v914
  %1209 = vmatprep.subr.bf16.mxu0 0
  %1210 = vmatpush1.bf16.msra.mxu0 %v915
  %1211 = vmatprep.subr.bf16.mxu0 0
  %1212 = vmatpush1.bf16.msra.mxu0 %v916
  %1213 = vmatprep.subr.bf16.mxu0 0
  %1214 = vmatpush1.bf16.msra.mxu0 %v917
  %1215 = vmatprep.mubr.bf16.mxu0 %v345
  %1216 = vmatmul.mubr.bf16.gmra.mrb[0].mxu0 %v344
  %v1217 = vpop.f32.mrb[0].mxu0
  %v1218 = vadd.f32 %v1177, %v1217
  %v1219 = vpop.f32.mrb[0].mxu0
  %v1220 = vpop.f32.mrb[0].mxu0
  %v1221 = vadd.f32 %v1180, %v1220
  %v1222 = vpop.f32.mrb[0].mxu0
  %1223 = vdwg.mxu0
  %1224 = vmatprep.subr.bf16.mxu0 0
  %1225 = vmatpush1.bf16.msra.mxu0 %v918
  %1226 = vmatprep.subr.bf16.mxu0 0
  %1227 = vmatpush1.bf16.msra.mxu0 %v919
  %1228 = vmatprep.subr.bf16.mxu0 0
  %1229 = vmatpush1.bf16.msra.mxu0 %v920
  %1230 = vmatprep.subr.bf16.mxu0 0
  %1231 = vmatpush1.bf16.msra.mxu0 %v921
  %1232 = vmatprep.subr.bf16.mxu0 0
  %1233 = vmatpush1.bf16.msra.mxu0 %v922
  %1234 = vmatprep.subr.bf16.mxu0 0
  %1235 = vmatpush1.bf16.msra.mxu0 %v923
  %1236 = vmatprep.subr.bf16.mxu0 0
  %1237 = vmatpush1.bf16.msra.mxu0 %v924
  %1238 = vmatprep.subr.bf16.mxu0 0
  %1239 = vmatpush1.bf16.msra.mxu0 %v925
  %1240 = vmatprep.subr.bf16.mxu0 0
  %1241 = vmatpush1.bf16.msra.mxu0 %v926
  %1242 = vmatprep.subr.bf16.mxu0 0
  %1243 = vmatpush1.bf16.msra.mxu0 %v927
  %1244 = vmatprep.subr.bf16.mxu0 0
  %1245 = vmatpush1.bf16.msra.mxu0 %v928
  %1246 = vmatprep.subr.bf16.mxu0 0
  %1247 = vmatpush1.bf16.msra.mxu0 %v929
  %1248 = vmatprep.subr.bf16.mxu0 0
  %1249 = vmatpush1.bf16.msra.mxu0 %v930
  %1250 = vmatprep.subr.bf16.mxu0 0
  %1251 = vmatpush1.bf16.msra.mxu0 %v931
  %1252 = vmatprep.subr.bf16.mxu0 0
  %1253 = vmatpush1.bf16.msra.mxu0 %v932
  %1254 = vmatprep.subr.bf16.mxu0 0
  %1255 = vmatpush1.bf16.msra.mxu0 %v933
  %1256 = vmatprep.mubr.bf16.mxu0 %v347
  %1257 = vmatmul.mubr.bf16.gmra.mrb[0].mxu0 %v346
  %v1258 = vpop.f32.mrb[0].mxu0
  %v1259 = vadd.f32 %v1218, %v1258
  %v1260 = vpop.f32.mrb[0].mxu0
  %v1261 = vpop.f32.mrb[0].mxu0
  %v1262 = vadd.f32 %v1221, %v1261
  %v1263 = vpop.f32.mrb[0].mxu0
  %1264 = vdwg.mxu0
  %1265 = vmatprep.subr.bf16.mxu0 0
  %1266 = vmatpush1.bf16.msra.mxu0 %v934
  %1267 = vmatprep.subr.bf16.mxu0 0
  %1268 = vmatpush1.bf16.msra.mxu0 %v935
  %1269 = vmatprep.subr.bf16.mxu0 0
  %1270 = vmatpush1.bf16.msra.mxu0 %v936
  %1271 = vmatprep.subr.bf16.mxu0 0
  %1272 = vmatpush1.bf16.msra.mxu0 %v937
  %1273 = vmatprep.subr.bf16.mxu0 0
  %1274 = vmatpush1.bf16.msra.mxu0 %v938
  %1275 = vmatprep.subr.bf16.mxu0 0
  %1276 = vmatpush1.bf16.msra.mxu0 %v939
  %1277 = vmatprep.subr.bf16.mxu0 0
  %1278 = vmatpush1.bf16.msra.mxu0 %v940
  %1279 = vmatprep.subr.bf16.mxu0 0
  %1280 = vmatpush1.bf16.msra.mxu0 %v941
  %1281 = vmatprep.subr.bf16.mxu0 0
  %1282 = vmatpush1.bf16.msra.mxu0 %v942
  %1283 = vmatprep.subr.bf16.mxu0 0
  %1284 = vmatpush1.bf16.msra.mxu0 %v943
  %1285 = vmatprep.subr.bf16.mxu0 0
  %1286 = vmatpush1.bf16.msra.mxu0 %v944
  %1287 = vmatprep.subr.bf16.mxu0 0
  %1288 = vmatpush1.bf16.msra.mxu0 %v945
  %1289 = vmatprep.subr.bf16.mxu0 0
  %1290 = vmatpush1.bf16.msra.mxu0 %v946
  %1291 = vmatprep.subr.bf16.mxu0 0
  %1292 = vmatpush1.bf16.msra.mxu0 %v947
  %1293 = vmatprep.subr.bf16.mxu0 0
  %1294 = vmatpush1.bf16.msra.mxu0 %v948
  %1295 = vmatprep.subr.bf16.mxu0 0
  %1296 = vmatpush1.bf16.msra.mxu0 %v949
  %1297 = vmatprep.mubr.bf16.mxu0 %v349
  %1298 = vmatmul.mubr.bf16.gmra.mrb[0].mxu0 %v348
  %v1299 = vpop.f32.mrb[0].mxu0
  %v1300 = vadd.f32 %v1259, %v1299
  %v1301 = vpop.f32.mrb[0].mxu0
  %v1302 = vpop.f32.mrb[0].mxu0
  %v1303 = vadd.f32 %v1262, %v1302
  %v1304 = vpop.f32.mrb[0].mxu0
  %1305 = vdwg.mxu0
  %1306 = vmatprep.subr.bf16.mxu0 0
  %1307 = vmatpush1.bf16.msra.mxu0 %v950
  %1308 = vmatprep.subr.bf16.mxu0 0
  %1309 = vmatpush1.bf16.msra.mxu0 %v951
  %1310 = vmatprep.subr.bf16.mxu0 0
  %1311 = vmatpush1.bf16.msra.mxu0 %v952
  %1312 = vmatprep.subr.bf16.mxu0 0
  %1313 = vmatpush1.bf16.msra.mxu0 %v953
  %1314 = vmatprep.subr.bf16.mxu0 0
  %1315 = vmatpush1.bf16.msra.mxu0 %v954
  %1316 = vmatprep.subr.bf16.mxu0 0
  %1317 = vmatpush1.bf16.msra.mxu0 %v955
  %1318 = vmatprep.subr.bf16.mxu0 0
  %1319 = vmatpush1.bf16.msra.mxu0 %v956
  %1320 = vmatprep.subr.bf16.mxu0 0
  %1321 = vmatpush1.bf16.msra.mxu0 %v957
  %1322 = vmatprep.subr.bf16.mxu0 0
  %1323 = vmatpush1.bf16.msra.mxu0 %v958
  %1324 = vmatprep.subr.bf16.mxu0 0
  %1325 = vmatpush1.bf16.msra.mxu0 %v959
  %1326 = vmatprep.subr.bf16.mxu0 0
  %1327 = vmatpush1.bf16.msra.mxu0 %v960
  %1328 = vmatprep.subr.bf16.mxu0 0
  %1329 = vmatpush1.bf16.msra.mxu0 %v961
  %1330 = vmatprep.subr.bf16.mxu0 0
  %1331 = vmatpush1.bf16.msra.mxu0 %v962
  %1332 = vmatprep.subr.bf16.mxu0 0
  %1333 = vmatpush1.bf16.msra.mxu0 %v963
  %1334 = vmatprep.subr.bf16.mxu0 0
  %1335 = vmatpush1.bf16.msra.mxu0 %v964
  %1336 = vmatprep.subr.bf16.mxu0 0
  %1337 = vmatpush1.bf16.msra.mxu0 %v965
  %1338 = vmatprep.mubr.bf16.mxu0 %v351
  %1339 = vmatmul.mubr.bf16.gmra.mrb[0].mxu0 %v350
  %v1340 = vpop.f32.mrb[0].mxu0
  %v1341 = vadd.f32 %v1300, %v1340
  %v1342 = vpop.f32.mrb[0].mxu0
  %v1343 = vpop.f32.mrb[0].mxu0
  %v1344 = vadd.f32 %v1303, %v1343
  %v1345 = vpop.f32.mrb[0].mxu0
  %1346 = vdwg.mxu0
  %1347 = vmatprep.subr.bf16.mxu0 0
  %1348 = vmatpush1.bf16.msra.mxu0 %v966
  %1349 = vmatprep.subr.bf16.mxu0 0
  %1350 = vmatpush1.bf16.msra.mxu0 %v967
  %1351 = vmatprep.subr.bf16.mxu0 0
  %1352 = vmatpush1.bf16.msra.mxu0 %v968
  %1353 = vmatprep.subr.bf16.mxu0 0
  %1354 = vmatpush1.bf16.msra.mxu0 %v969
  %1355 = vmatprep.subr.bf16.mxu0 0
  %1356 = vmatpush1.bf16.msra.mxu0 %v970
  %1357 = vmatprep.subr.bf16.mxu0 0
  %1358 = vmatpush1.bf16.msra.mxu0 %v971
  %1359 = vmatprep.subr.bf16.mxu0 0
  %1360 = vmatpush1.bf16.msra.mxu0 %v972
  %1361 = vmatprep.subr.bf16.mxu0 0
  %1362 = vmatpush1.bf16.msra.mxu0 %v973
  %1363 = vmatprep.subr.bf16.mxu0 0
  %1364 = vmatpush1.bf16.msra.mxu0 %v974
  %1365 = vmatprep.subr.bf16.mxu0 0
  %1366 = vmatpush1.bf16.msra.mxu0 %v975
  %1367 = vmatprep.subr.bf16.mxu0 0
  %1368 = vmatpush1.bf16.msra.mxu0 %v976
  %1369 = vmatprep.subr.bf16.mxu0 0
  %1370 = vmatpush1.bf16.msra.mxu0 %v977
  %1371 = vmatprep.subr.bf16.mxu0 0
  %1372 = vmatpush1.bf16.msra.mxu0 %v978
  %1373 = vmatprep.subr.bf16.mxu0 0
  %1374 = vmatpush1.bf16.msra.mxu0 %v979
  %1375 = vmatprep.subr.bf16.mxu0 0
  %1376 = vmatpush1.bf16.msra.mxu0 %v980
  %1377 = vmatprep.subr.bf16.mxu0 0
  %1378 = vmatpush1.bf16.msra.mxu0 %v981
  %1379 = vmatprep.mubr.bf16.mxu0 %v353
  %1380 = vmatmul.mubr.bf16.gmra.mrb[0].mxu0 %v352
  %v1381 = vpop.f32.mrb[0].mxu0
  %v1382 = vadd.f32 %v1341, %v1381
  %v1383 = vpop.f32.mrb[0].mxu0
  %v1384 = vpop.f32.mrb[0].mxu0
  %v1385 = vadd.f32 %v1344, %v1384
  %v1386 = vpop.f32.mrb[0].mxu0
  %1387 = vdwg.mxu0
  %1388 = vmatprep.subr.bf16.mxu0 0
  %1389 = vmatpush1.bf16.msra.mxu0 %v982
  %1390 = vmatprep.subr.bf16.mxu0 0
  %1391 = vmatpush1.bf16.msra.mxu0 %v983
  %1392 = vmatprep.subr.bf16.mxu0 0
  %1393 = vmatpush1.bf16.msra.mxu0 %v984
  %1394 = vmatprep.subr.bf16.mxu0 0
  %1395 = vmatpush1.bf16.msra.mxu0 %v985
  %1396 = vmatprep.subr.bf16.mxu0 0
  %1397 = vmatpush1.bf16.msra.mxu0 %v986
  %1398 = vmatprep.subr.bf16.mxu0 0
  %1399 = vmatpush1.bf16.msra.mxu0 %v987
  %1400 = vmatprep.subr.bf16.mxu0 0
  %1401 = vmatpush1.bf16.msra.mxu0 %v988
  %1402 = vmatprep.subr.bf16.mxu0 0
  %1403 = vmatpush1.bf16.msra.mxu0 %v989
  %1404 = vmatprep.subr.bf16.mxu0 0
  %1405 = vmatpush1.bf16.msra.mxu0 %v990
  %1406 = vmatprep.subr.bf16.mxu0 0
  %1407 = vmatpush1.bf16.msra.mxu0 %v991
  %1408 = vmatprep.subr.bf16.mxu0 0
  %1409 = vmatpush1.bf16.msra.mxu0 %v992
  %1410 = vmatprep.subr.bf16.mxu0 0
  %1411 = vmatpush1.bf16.msra.mxu0 %v993
  %1412 = vmatprep.subr.bf16.mxu0 0
  %1413 = vmatpush1.bf16.msra.mxu0 %v994
  %1414 = vmatprep.subr.bf16.mxu0 0
  %1415 = vmatpush1.bf16.msra.mxu0 %v995
  %1416 = vmatprep.subr.bf16.mxu0 0
  %1417 = vmatpush1.bf16.msra.mxu0 %v996
  %1418 = vmatprep.subr.bf16.mxu0 0
  %1419 = vmatpush1.bf16.msra.mxu0 %v997
  %1420 = vmatprep.mubr.bf16.mxu0 %v355
  %1421 = vmatmul.mubr.bf16.gmra.mrb[0].mxu0 %v354
  %v1422 = vpop.f32.mrb[0].mxu0
  %v1423 = vadd.f32 %v1382, %v1422
  %v1424 = vpop.f32.mrb[0].mxu0
  %v1425 = vpop.f32.mrb[0].mxu0
  %v1426 = vadd.f32 %v1385, %v1425
  %v1427 = vpop.f32.mrb[0].mxu0
  %1428 = vdwg.mxu0
  %1429 = vmatprep.subr.bf16.mxu0 0
  %1430 = vmatpush1.bf16.msra.mxu0 %v998
  %1431 = vmatprep.subr.bf16.mxu0 0
  %1432 = vmatpush1.bf16.msra.mxu0 %v999
  %1433 = vmatprep.subr.bf16.mxu0 0
  %1434 = vmatpush1.bf16.msra.mxu0 %v1000
  %1435 = vmatprep.subr.bf16.mxu0 0
  %1436 = vmatpush1.bf16.msra.mxu0 %v1001
  %1437 = vmatprep.subr.bf16.mxu0 0
  %1438 = vmatpush1.bf16.msra.mxu0 %v1002
  %1439 = vmatprep.subr.bf16.mxu0 0
  %1440 = vmatpush1.bf16.msra.mxu0 %v1003
  %1441 = vmatprep.subr.bf16.mxu0 0
  %1442 = vmatpush1.bf16.msra.mxu0 %v1004
  %1443 = vmatprep.subr.bf16.mxu0 0
  %1444 = vmatpush1.bf16.msra.mxu0 %v1005
  %1445 = vmatprep.subr.bf16.mxu0 0
  %1446 = vmatpush1.bf16.msra.mxu0 %v1006
  %1447 = vmatprep.subr.bf16.mxu0 0
  %1448 = vmatpush1.bf16.msra.mxu0 %v1007
  %1449 = vmatprep.subr.bf16.mxu0 0
  %1450 = vmatpush1.bf16.msra.mxu0 %v1008
  %1451 = vmatprep.subr.bf16.mxu0 0
  %1452 = vmatpush1.bf16.msra.mxu0 %v1009
  %1453 = vmatprep.subr.bf16.mxu0 0
  %1454 = vmatpush1.bf16.msra.mxu0 %v1010
  %1455 = vmatprep.subr.bf16.mxu0 0
  %1456 = vmatpush1.bf16.msra.mxu0 %v1011
  %1457 = vmatprep.subr.bf16.mxu0 0
  %1458 = vmatpush1.bf16.msra.mxu0 %v1012
  %1459 = vmatprep.subr.bf16.mxu0 0
  %1460 = vmatpush1.bf16.msra.mxu0 %v1013
  %1461 = vmatprep.mubr.bf16.mxu0 %v357
  %1462 = vmatmul.mubr.bf16.gmra.mrb[0].mxu0 %v356
  %v1463 = vpop.f32.mrb[0].mxu0
  %v1464 = vadd.f32 %v1423, %v1463
  %v1465 = vpop.f32.mrb[0].mxu0
  %v1466 = vpop.f32.mrb[0].mxu0
  %v1467 = vadd.f32 %v1426, %v1466
  %v1468 = vpop.f32.mrb[0].mxu0
  %1469 = vdwg.mxu0
  %1470 = vst [vmem:[%s3] sm:$0xff] %v1464
  %1471 = vst [vmem:[%s3 + $0x8] sm:$0xff] %v1467
  // Predicated region
  $region14: #{dae_forward.14} parent=0 // pred_check
    _
  $region15: #{dae_forward.14} parent=0 // pred_check_branch
    %1473 = sbr.rel (0) target = $region17
  $region16: #{dae_forward.14} parent=0 // pred_region
    _
  $region17: #{dae_forward.14} parent=0 // pred_fallthru
    _
  // Predicated region
  $region18: #{dae_forward.14} parent=0 // pred_check
    _
  $region19: #{dae_forward.14} parent=0 // pred_check_branch
    %1475 = sbr.rel (0) target = $region21
  $region20: #{dae_forward.14} parent=0 // pred_region
    _
  $region21: #{dae_forward.14} parent=0 // pred_fallthru
    _

// kernel: dae_forward.16
$region0: #{dae_forward.16}
  #allocation0 [shape = 'u32[]', space=smem, size = 0x4, offset = 0x4, fixed_abs, tag = 'smem constant byte address 0x4 - core index']
  #allocation1 [shape = 'u32[144,128]{1,0:T(1,128)}', space=vmem, size = 0x12000, scoped, tag = 'internal scratch']
  %s0 = inlined_call_operand.vmem [shape: bf16[32,516], index: 0, kind: input, shape index: {}]
  %s1 = inlined_call_operand.vmem [shape: bf16[516,256], index: 1, kind: input, shape index: {}]
  %s2 = inlined_call_operand.vmem [shape: f32[1,256], index: 2, kind: input, shape index: {}]
  %s3 = inlined_call_operand.vmem [shape: bf16[32,256], index: 3, kind: output, shape index: {}]
  %s4 = sld [smem:[#allocation0]]
  $region22: #{dae_forward.16} parent=0
    _
  %s6 = ssub.s32 1, %s4
  %s7 = scalar_select 0, %s6, %s4
  // Predicated region
  $region2: #{dae_forward.16} parent=0 // pred_check
    _
  $region3: #{dae_forward.16} parent=0 // pred_check_branch
    %9 = sbr.rel (0) target = $region5
  $region4: #{dae_forward.16} parent=0 // pred_region
    _
  $region5: #{dae_forward.16} parent=0 // pred_fallthru
    _
  // Predicated region
  $region6: #{dae_forward.16} parent=0 // pred_check
    _
  $region7: #{dae_forward.16} parent=0 // pred_check_branch
    %11 = sbr.rel (0) target = $region9
  $region8: #{dae_forward.16} parent=0 // pred_region
    _
  $region9: #{dae_forward.16} parent=0 // pred_fallthru
    _
  // Predicated region
  $region10: #{dae_forward.16} parent=0 // pred_check
    _
  $region11: #{dae_forward.16} parent=0 // pred_check_branch
    %13 = sbr.rel (0) target = $region13
  $region12: #{dae_forward.16} parent=0 // pred_region
    _
  $region13: #{dae_forward.16} parent=0 // pred_fallthru
    _
  %v15 = vld [vmem:[%s0] sm:$0xff]
  %v16 = vld [vmem:[%s0 + $0x8] sm:$0xff]
  %v17 = vld [vmem:[%s0 + $0x10] sm:$0xf]
  %v18 = vld [vmem:[%s0 + $0x14] sm:$0xff]
  %v19 = vld [vmem:[%s0 + $0x1c] sm:$0xff]
  %v20 = vld [vmem:[%s0 + $0x24] sm:$0xf]
  %v21 = vld [vmem:[%s0 + $0x28] sm:$0xff]
  %v22 = vld [vmem:[%s0 + $0x30] sm:$0xff]
  %v23 = vld [vmem:[%s0 + $0x38] sm:$0xf]
  %v24 = vld [vmem:[%s0 + $0x3c] sm:$0xff]
  %v25 = vld [vmem:[%s0 + $0x44] sm:$0xff]
  %v26 = vld [vmem:[%s0 + $0x4c] sm:$0xf]
  %v27 = vld [vmem:[%s1] sm:$0xff]
  %v28 = vld [vmem:[%s1 + $0x8] sm:$0xff]
  %v29 = vld [vmem:[%s1 + $0x10] sm:$0xff]
  %v30 = vld [vmem:[%s1 + $0x18] sm:$0xff]
  %v31 = vld [vmem:[%s1 + $0x20] sm:$0xff]
  %v32 = vld [vmem:[%s1 + $0x28] sm:$0xff]
  %v33 = vld [vmem:[%s1 + $0x30] sm:$0xff]
  %v34 = vld [vmem:[%s1 + $0x38] sm:$0xff]
  %v35 = vld [vmem:[%s1 + $0x40] sm:$0xff]
  %v36 = vld [vmem:[%s1 + $0x48] sm:$0xff]
  %v37 = vld [vmem:[%s1 + $0x50] sm:$0xff]
  %v38 = vld [vmem:[%s1 + $0x58] sm:$0xff]
  %v39 = vld [vmem:[%s1 + $0x60] sm:$0xff]
  %v40 = vld [vmem:[%s1 + $0x68] sm:$0xff]
  %v41 = vld [vmem:[%s1 + $0x70] sm:$0xff]
  %v42 = vld [vmem:[%s1 + $0x78] sm:$0xff]
  %v43 = vld [vmem:[%s1 + $0x80] sm:$0xff]
  %v44 = vld [vmem:[%s1 + $0x88] sm:$0xff]
  %v45 = vld [vmem:[%s1 + $0x90] sm:$0xff]
  %v46 = vld [vmem:[%s1 + $0x98] sm:$0xff]
  %v47 = vld [vmem:[%s1 + $0xa0] sm:$0xff]
  %v48 = vld [vmem:[%s1 + $0xa8] sm:$0xff]
  %v49 = vld [vmem:[%s1 + $0xb0] sm:$0xff]
  %v50 = vld [vmem:[%s1 + $0xb8] sm:$0xff]
  %v51 = vld [vmem:[%s1 + $0xc0] sm:$0xff]
  %v52 = vld [vmem:[%s1 + $0xc8] sm:$0xff]
  %v53 = vld [vmem:[%s1 + $0xd0] sm:$0xff]
  %v54 = vld [vmem:[%s1 + $0xd8] sm:$0xff]
  %v55 = vld [vmem:[%s1 + $0xe0] sm:$0xff]
  %v56 = vld [vmem:[%s1 + $0xe8] sm:$0xff]
  %v57 = vld [vmem:[%s1 + $0xf0] sm:$0xff]
  %v58 = vld [vmem:[%s1 + $0xf8] sm:$0xff]
  %v59 = vld [vmem:[%s1 + $0x100] sm:$0xff]
  %v60 = vld [vmem:[%s1 + $0x108] sm:$0xff]
  %v61 = vld [vmem:[%s1 + $0x110] sm:$0xff]
  %v62 = vld [vmem:[%s1 + $0x118] sm:$0xff]
  %v63 = vld [vmem:[%s1 + $0x120] sm:$0xff]
  %v64 = vld [vmem:[%s1 + $0x128] sm:$0xff]
  %v65 = vld [vmem:[%s1 + $0x130] sm:$0xff]
  %v66 = vld [vmem:[%s1 + $0x138] sm:$0xff]
  %v67 = vld [vmem:[%s1 + $0x140] sm:$0xff]
  %v68 = vld [vmem:[%s1 + $0x148] sm:$0xff]
  %v69 = vld [vmem:[%s1 + $0x150] sm:$0xff]
  %v70 = vld [vmem:[%s1 + $0x158] sm:$0xff]
  %v71 = vld [vmem:[%s1 + $0x160] sm:$0xff]
  %v72 = vld [vmem:[%s1 + $0x168] sm:$0xff]
  %v73 = vld [vmem:[%s1 + $0x170] sm:$0xff]
  %v74 = vld [vmem:[%s1 + $0x178] sm:$0xff]
  %v75 = vld [vmem:[%s1 + $0x180] sm:$0xff]
  %v76 = vld [vmem:[%s1 + $0x188] sm:$0xff]
  %v77 = vld [vmem:[%s1 + $0x190] sm:$0xff]
  %v78 = vld [vmem:[%s1 + $0x198] sm:$0xff]
  %v79 = vld [vmem:[%s1 + $0x1a0] sm:$0xff]
  %v80 = vld [vmem:[%s1 + $0x1a8] sm:$0xff]
  %v81 = vld [vmem:[%s1 + $0x1b0] sm:$0xff]
  %v82 = vld [vmem:[%s1 + $0x1b8] sm:$0xff]
  %v83 = vld [vmem:[%s1 + $0x1c0] sm:$0xff]
  %v84 = vld [vmem:[%s1 + $0x1c8] sm:$0xff]
  %v85 = vld [vmem:[%s1 + $0x1d0] sm:$0xff]
  %v86 = vld [vmem:[%s1 + $0x1d8] sm:$0xff]
  %v87 = vld [vmem:[%s1 + $0x1e0] sm:$0xff]
  %v88 = vld [vmem:[%s1 + $0x1e8] sm:$0xff]
  %v89 = vld [vmem:[%s1 + $0x1f0] sm:$0xff]
  %v90 = vld [vmem:[%s1 + $0x1f8] sm:$0xff]
  %v91 = vld [vmem:[%s1 + $0x200] sm:$0x33]
  %v92 = vld [vmem:[%s2] sm:$0x3]
  %v94 = vlaneseq
  %v95 = vshrl.u32 %v94, 7
  %v96 = vsub.s32 0, %v95
  %v97 = vrot.slane %v92, %v96
  %v98 = vlaneseq
  %v99 = vshrl.u32 %v98, 7
  %v100 = vsub.s32 1, %v99
  %v101 = vrot.slane %v92, %v100
  %v116 = vunpack.c.l.b16 %v15
  %v117 = vunpack.c.h.b16 %v15
  %v118 = vunpack.c.l.b16 %v16
  %v119 = vunpack.c.h.b16 %v16
  %v120 = vunpack.c.l.b16 %v17
  %v121 = vunpack.c.l.b16 %v18
  %v122 = vunpack.c.h.b16 %v18
  %v123 = vunpack.c.l.b16 %v19
  %v124 = vunpack.c.h.b16 %v19
  %v125 = vunpack.c.l.b16 %v20
  %v126 = vunpack.c.l.b16 %v21
  %v127 = vunpack.c.h.b16 %v21
  %v128 = vunpack.c.l.b16 %v22
  %v129 = vunpack.c.h.b16 %v22
  %v130 = vunpack.c.l.b16 %v23
  %v131 = vunpack.c.l.b16 %v24
  %v132 = vunpack.c.h.b16 %v24
  %v133 = vunpack.c.l.b16 %v25
  %v134 = vunpack.c.h.b16 %v25
  %v135 = vunpack.c.l.b16 %v26
  %v136 = vpack.c.b16 %v121, %v116
  %v137 = vpack.c.b16 %v122, %v117
  %v138 = vpack.c.b16 %v123, %v118
  %v139 = vpack.c.b16 %v124, %v119
  %v140 = vpack.c.b16 %v125, %v120
  %v141 = vpack.c.b16 %v131, %v126
  %v142 = vpack.c.b16 %v132, %v127
  %v143 = vpack.c.b16 %v133, %v128
  %v144 = vpack.c.b16 %v134, %v129
  %v145 = vpack.c.b16 %v135, %v130
  %v219 = vunpack.c.l.b16 %v27
  %v220 = vunpack.c.h.b16 %v27
  %v221 = vunpack.c.l.b16 %v28
  %v222 = vunpack.c.h.b16 %v28
  %v223 = vunpack.c.l.b16 %v29
  %v224 = vunpack.c.h.b16 %v29
  %v225 = vunpack.c.l.b16 %v30
  %v226 = vunpack.c.h.b16 %v30
  %v227 = vunpack.c.l.b16 %v31
  %v228 = vunpack.c.h.b16 %v31
  %v229 = vunpack.c.l.b16 %v32
  %v230 = vunpack.c.h.b16 %v32
  %v231 = vunpack.c.l.b16 %v33
  %v232 = vunpack.c.h.b16 %v33
  %v233 = vunpack.c.l.b16 %v34
  %v234 = vunpack.c.h.b16 %v34
  %v235 = vunpack.c.l.b16 %v35
  %v236 = vunpack.c.h.b16 %v35
  %v237 = vunpack.c.l.b16 %v36
  %v238 = vunpack.c.h.b16 %v36
  %v239 = vunpack.c.l.b16 %v37
  %v240 = vunpack.c.h.b16 %v37
  %v241 = vunpack.c.l.b16 %v38
  %v242 = vunpack.c.h.b16 %v38
  %v243 = vunpack.c.l.b16 %v39
  %v244 = vunpack.c.h.b16 %v39
  %v245 = vunpack.c.l.b16 %v40
  %v246 = vunpack.c.h.b16 %v40
  %v247 = vunpack.c.l.b16 %v41
  %v248 = vunpack.c.h.b16 %v41
  %v249 = vunpack.c.l.b16 %v42
  %v250 = vunpack.c.h.b16 %v42
  %v251 = vunpack.c.l.b16 %v43
  %v252 = vunpack.c.h.b16 %v43
  %v253 = vunpack.c.l.b16 %v44
  %v254 = vunpack.c.h.b16 %v44
  %v255 = vunpack.c.l.b16 %v45
  %v256 = vunpack.c.h.b16 %v45
  %v257 = vunpack.c.l.b16 %v46
  %v258 = vunpack.c.h.b16 %v46
  %v259 = vunpack.c.l.b16 %v47
  %v260 = vunpack.c.h.b16 %v47
  %v261 = vunpack.c.l.b16 %v48
  %v262 = vunpack.c.h.b16 %v48
  %v263 = vunpack.c.l.b16 %v49
  %v264 = vunpack.c.h.b16 %v49
  %v265 = vunpack.c.l.b16 %v50
  %v266 = vunpack.c.h.b16 %v50
  %v267 = vunpack.c.l.b16 %v51
  %v268 = vunpack.c.h.b16 %v51
  %v269 = vunpack.c.l.b16 %v52
  %v270 = vunpack.c.h.b16 %v52
  %v271 = vunpack.c.l.b16 %v53
  %v272 = vunpack.c.h.b16 %v53
  %v273 = vunpack.c.l.b16 %v54
  %v274 = vunpack.c.h.b16 %v54
  %v275 = vunpack.c.l.b16 %v55
  %v276 = vunpack.c.h.b16 %v55
  %v277 = vunpack.c.l.b16 %v56
  %v278 = vunpack.c.h.b16 %v56
  %v279 = vunpack.c.l.b16 %v57
  %v280 = vunpack.c.h.b16 %v57
  %v281 = vunpack.c.l.b16 %v58
  %v282 = vunpack.c.h.b16 %v58
  %v283 = vunpack.c.l.b16 %v59
  %v284 = vunpack.c.h.b16 %v59
  %v285 = vunpack.c.l.b16 %v60
  %v286 = vunpack.c.h.b16 %v60
  %v287 = vunpack.c.l.b16 %v61
  %v288 = vunpack.c.h.b16 %v61
  %v289 = vunpack.c.l.b16 %v62
  %v290 = vunpack.c.h.b16 %v62
  %v291 = vunpack.c.l.b16 %v63
  %v292 = vunpack.c.h.b16 %v63
  %v293 = vunpack.c.l.b16 %v64
  %v294 = vunpack.c.h.b16 %v64
  %v295 = vunpack.c.l.b16 %v65
  %v296 = vunpack.c.h.b16 %v65
  %v297 = vunpack.c.l.b16 %v66
  %v298 = vunpack.c.h.b16 %v66
  %v299 = vunpack.c.l.b16 %v67
  %v300 = vunpack.c.h.b16 %v67
  %v301 = vunpack.c.l.b16 %v68
  %v302 = vunpack.c.h.b16 %v68
  %v303 = vunpack.c.l.b16 %v69
  %v304 = vunpack.c.h.b16 %v69
  %v305 = vunpack.c.l.b16 %v70
  %v306 = vunpack.c.h.b16 %v70
  %v307 = vunpack.c.l.b16 %v71
  %v308 = vunpack.c.h.b16 %v71
  %v309 = vunpack.c.l.b16 %v72
  %v310 = vunpack.c.h.b16 %v72
  %v311 = vunpack.c.l.b16 %v73
  %v312 = vunpack.c.h.b16 %v73
  %v313 = vunpack.c.l.b16 %v74
  %v314 = vunpack.c.h.b16 %v74
  %v315 = vunpack.c.l.b16 %v75
  %v316 = vunpack.c.h.b16 %v75
  %v317 = vunpack.c.l.b16 %v76
  %v318 = vunpack.c.h.b16 %v76
  %v319 = vunpack.c.l.b16 %v77
  %v320 = vunpack.c.h.b16 %v77
  %v321 = vunpack.c.l.b16 %v78
  %v322 = vunpack.c.h.b16 %v78
  %v323 = vunpack.c.l.b16 %v79
  %v324 = vunpack.c.h.b16 %v79
  %v325 = vunpack.c.l.b16 %v80
  %v326 = vunpack.c.h.b16 %v80
  %v327 = vunpack.c.l.b16 %v81
  %v328 = vunpack.c.h.b16 %v81
  %v329 = vunpack.c.l.b16 %v82
  %v330 = vunpack.c.h.b16 %v82
  %v331 = vunpack.c.l.b16 %v83
  %v332 = vunpack.c.h.b16 %v83
  %v333 = vunpack.c.l.b16 %v84
  %v334 = vunpack.c.h.b16 %v84
  %v335 = vunpack.c.l.b16 %v85
  %v336 = vunpack.c.h.b16 %v85
  %v337 = vunpack.c.l.b16 %v86
  %v338 = vunpack.c.h.b16 %v86
  %v339 = vunpack.c.l.b16 %v87
  %v340 = vunpack.c.h.b16 %v87
  %v341 = vunpack.c.l.b16 %v88
  %v342 = vunpack.c.h.b16 %v88
  %v343 = vunpack.c.l.b16 %v89
  %v344 = vunpack.c.h.b16 %v89
  %v345 = vunpack.c.l.b16 %v90
  %v346 = vunpack.c.h.b16 %v90
  %v347 = vunpack.c.l.b16 %v91
  %v348 = vunpack.c.h.b16 %v91
  %v349 = vpack.c.b16 %v221, %v219
  %v350 = vpack.c.b16 %v222, %v220
  %v351 = vpack.c.b16 %v225, %v223
  %v352 = vpack.c.b16 %v226, %v224
  %v353 = vpack.c.b16 %v229, %v227
  %v354 = vpack.c.b16 %v230, %v228
  %v355 = vpack.c.b16 %v233, %v231
  %v356 = vpack.c.b16 %v234, %v232
  %v357 = vpack.c.b16 %v237, %v235
  %v358 = vpack.c.b16 %v238, %v236
  %v359 = vpack.c.b16 %v241, %v239
  %v360 = vpack.c.b16 %v242, %v240
  %v361 = vpack.c.b16 %v245, %v243
  %v362 = vpack.c.b16 %v246, %v244
  %v363 = vpack.c.b16 %v249, %v247
  %v364 = vpack.c.b16 %v250, %v248
  %v365 = vpack.c.b16 %v253, %v251
  %v366 = vpack.c.b16 %v254, %v252
  %v367 = vpack.c.b16 %v257, %v255
  %v368 = vpack.c.b16 %v258, %v256
  %v369 = vpack.c.b16 %v261, %v259
  %v370 = vpack.c.b16 %v262, %v260
  %v371 = vpack.c.b16 %v265, %v263
  %v372 = vpack.c.b16 %v266, %v264
  %v373 = vpack.c.b16 %v269, %v267
  %v374 = vpack.c.b16 %v270, %v268
  %v375 = vpack.c.b16 %v273, %v271
  %v376 = vpack.c.b16 %v274, %v272
  %v377 = vpack.c.b16 %v277, %v275
  %v378 = vpack.c.b16 %v278, %v276
  %v379 = vpack.c.b16 %v281, %v279
  %v380 = vpack.c.b16 %v282, %v280
  %v381 = vpack.c.b16 %v285, %v283
  %v382 = vpack.c.b16 %v286, %v284
  %v383 = vpack.c.b16 %v289, %v287
  %v384 = vpack.c.b16 %v290, %v288
  %v385 = vpack.c.b16 %v293, %v291
  %v386 = vpack.c.b16 %v294, %v292
  %v387 = vpack.c.b16 %v297, %v295
  %v388 = vpack.c.b16 %v298, %v296
  %v389 = vpack.c.b16 %v301, %v299
  %v390 = vpack.c.b16 %v302, %v300
  %v391 = vpack.c.b16 %v305, %v303
  %v392 = vpack.c.b16 %v306, %v304
  %v393 = vpack.c.b16 %v309, %v307
  %v394 = vpack.c.b16 %v310, %v308
  %v395 = vpack.c.b16 %v313, %v311
  %v396 = vpack.c.b16 %v314, %v312
  %v397 = vpack.c.b16 %v317, %v315
  %v398 = vpack.c.b16 %v318, %v316
  %v399 = vpack.c.b16 %v321, %v319
  %v400 = vpack.c.b16 %v322, %v320
  %v401 = vpack.c.b16 %v325, %v323
  %v402 = vpack.c.b16 %v326, %v324
  %v403 = vpack.c.b16 %v329, %v327
  %v404 = vpack.c.b16 %v330, %v328
  %v405 = vpack.c.b16 %v333, %v331
  %v406 = vpack.c.b16 %v334, %v332
  %v407 = vpack.c.b16 %v337, %v335
  %v408 = vpack.c.b16 %v338, %v336
  %v409 = vpack.c.b16 %v341, %v339
  %v410 = vpack.c.b16 %v342, %v340
  %v411 = vpack.c.b16 %v345, %v343
  %v412 = vpack.c.b16 %v346, %v344
  %v413 = vpack.c.b16 %v347, %v347
  %v414 = vpack.c.b16 %v348, %v348
  %vm479 = vcmask 31744
  %v481 = vsel %vm479, %v140, 0
  %v484 = vsel %vm479, %v145, 0
  %vm486 = vcmask 1041408
  %v488 = vsel %vm486, %v413, 0
  %v491 = vsel %vm486, %v414, 0
  %493 = vmatprep.subr.bf16.mxu0 %v350
  %494 = vmatpush1.bf16.msra.mxu0 %v349
  %495 = vmatprep.subr.bf16.mxu0 %v352
  %496 = vmatpush1.bf16.msra.mxu0 %v351
  %497 = vmatprep.subr.bf16.mxu0 %v354
  %498 = vmatpush1.bf16.msra.mxu0 %v353
  %499 = vmatprep.subr.bf16.mxu0 %v356
  %500 = vmatpush1.bf16.msra.mxu0 %v355
  %501 = vmatprep.subr.bf16.mxu0 %v358
  %502 = vmatpush1.bf16.msra.mxu0 %v357
  %503 = vmatprep.subr.bf16.mxu0 %v360
  %504 = vmatpush1.bf16.msra.mxu0 %v359
  %505 = vmatprep.subr.bf16.mxu0 %v362
  %506 = vmatpush1.bf16.msra.mxu0 %v361
  %507 = vmatprep.subr.bf16.mxu0 %v364
  %508 = vmatpush1.bf16.msra.mxu0 %v363
  %509 = vmatprep.subr.bf16.mxu0 %v366
  %510 = vmatpush1.bf16.msra.mxu0 %v365
  %511 = vmatprep.subr.bf16.mxu0 %v368
  %512 = vmatpush1.bf16.msra.mxu0 %v367
  %513 = vmatprep.subr.bf16.mxu0 %v370
  %514 = vmatpush1.bf16.msra.mxu0 %v369
  %515 = vmatprep.subr.bf16.mxu0 %v372
  %516 = vmatpush1.bf16.msra.mxu0 %v371
  %517 = vmatprep.subr.bf16.mxu0 %v374
  %518 = vmatpush1.bf16.msra.mxu0 %v373
  %519 = vmatprep.subr.bf16.mxu0 %v376
  %520 = vmatpush1.bf16.msra.mxu0 %v375
  %521 = vmatprep.subr.bf16.mxu0 %v378
  %522 = vmatpush1.bf16.msra.mxu0 %v377
  %523 = vmatprep.subr.bf16.mxu0 %v380
  %524 = vmatpush1.bf16.msra.mxu0 %v379
  %525 = vmatprep.mubr.bf16.mxu0 %v137
  %526 = vmatmul.mubr.bf16.gmra.mrb[0].mxu0 %v136
  %v527 = vpop.f32.mrb[0].mxu0
  %v528 = vadd.f32 %v97, %v527
  %v529 = vpop.f32.mrb[0].mxu0
  %v530 = vadd.f32 %v101, %v529
  %v531 = vpop.f32.mrb[0].mxu0
  %v532 = vadd.f32 %v97, %v531
  %v533 = vpop.f32.mrb[0].mxu0
  %v534 = vadd.f32 %v101, %v533
  %535 = vmatprep.mubr.bf16.mxu0 %v142
  %536 = vmatmul.mubr.bf16.gmra.mrb[0].mxu0 %v141
  %v537 = vpop.f32.mrb[0].mxu0
  %v538 = vadd.f32 %v97, %v537
  %v539 = vpop.f32.mrb[0].mxu0
  %v540 = vadd.f32 %v101, %v539
  %v541 = vpop.f32.mrb[0].mxu0
  %v542 = vadd.f32 %v97, %v541
  %v543 = vpop.f32.mrb[0].mxu0
  %v544 = vadd.f32 %v101, %v543
  %545 = vdwg.mxu0
  %546 = vmatprep.subr.bf16.mxu0 %v382
  %547 = vmatpush1.bf16.msra.mxu0 %v381
  %548 = vmatprep.subr.bf16.mxu0 %v384
  %549 = vmatpush1.bf16.msra.mxu0 %v383
  %550 = vmatprep.subr.bf16.mxu0 %v386
  %551 = vmatpush1.bf16.msra.mxu0 %v385
  %552 = vmatprep.subr.bf16.mxu0 %v388
  %553 = vmatpush1.bf16.msra.mxu0 %v387
  %554 = vmatprep.subr.bf16.mxu0 %v390
  %555 = vmatpush1.bf16.msra.mxu0 %v389
  %556 = vmatprep.subr.bf16.mxu0 %v392
  %557 = vmatpush1.bf16.msra.mxu0 %v391
  %558 = vmatprep.subr.bf16.mxu0 %v394
  %559 = vmatpush1.bf16.msra.mxu0 %v393
  %560 = vmatprep.subr.bf16.mxu0 %v396
  %561 = vmatpush1.bf16.msra.mxu0 %v395
  %562 = vmatprep.subr.bf16.mxu0 %v398
  %563 = vmatpush1.bf16.msra.mxu0 %v397
  %564 = vmatprep.subr.bf16.mxu0 %v400
  %565 = vmatpush1.bf16.msra.mxu0 %v399
  %566 = vmatprep.subr.bf16.mxu0 %v402
  %567 = vmatpush1.bf16.msra.mxu0 %v401
  %568 = vmatprep.subr.bf16.mxu0 %v404
  %569 = vmatpush1.bf16.msra.mxu0 %v403
  %570 = vmatprep.subr.bf16.mxu0 %v406
  %571 = vmatpush1.bf16.msra.mxu0 %v405
  %572 = vmatprep.subr.bf16.mxu0 %v408
  %573 = vmatpush1.bf16.msra.mxu0 %v407
  %574 = vmatprep.subr.bf16.mxu0 %v410
  %575 = vmatpush1.bf16.msra.mxu0 %v409
  %576 = vmatprep.subr.bf16.mxu0 %v412
  %577 = vmatpush1.bf16.msra.mxu0 %v411
  %578 = vmatprep.mubr.bf16.mxu0 %v139
  %579 = vmatmul.mubr.bf16.gmra.mrb[0].mxu0 %v138
  %v580 = vpop.f32.mrb[0].mxu0
  %v581 = vadd.f32 %v528, %v580
  %v582 = vpop.f32.mrb[0].mxu0
  %v583 = vadd.f32 %v530, %v582
  %v584 = vpop.f32.mrb[0].mxu0
  %v585 = vadd.f32 %v532, %v584
  %v586 = vpop.f32.mrb[0].mxu0
  %v587 = vadd.f32 %v534, %v586
  %588 = vmatprep.mubr.bf16.mxu0 %v144
  %589 = vmatmul.mubr.bf16.gmra.mrb[0].mxu0 %v143
  %v590 = vpop.f32.mrb[0].mxu0
  %v591 = vadd.f32 %v538, %v590
  %v592 = vpop.f32.mrb[0].mxu0
  %v593 = vadd.f32 %v540, %v592
  %v594 = vpop.f32.mrb[0].mxu0
  %v595 = vadd.f32 %v542, %v594
  %v596 = vpop.f32.mrb[0].mxu0
  %v597 = vadd.f32 %v544, %v596
  %598 = vdwg.mxu0
  %599 = vmatprep.subr.bf16.mxu0 %v491
  %600 = vmatpush1.bf16.msra.mxu0 %v488
  %601 = vmatprep.subr.bf16.mxu0 0
  %602 = vmatpush1.bf16.msra.mxu0 0
  %603 = vmatprep.subr.bf16.mxu0 0
  %604 = vmatpush1.bf16.msra.mxu0 0
  %605 = vmatprep.subr.bf16.mxu0 0
  %606 = vmatpush1.bf16.msra.mxu0 0
  %607 = vmatprep.subr.bf16.mxu0 0
  %608 = vmatpush1.bf16.msra.mxu0 0
  %609 = vmatprep.subr.bf16.mxu0 0
  %610 = vmatpush1.bf16.msra.mxu0 0
  %611 = vmatprep.subr.bf16.mxu0 0
  %612 = vmatpush1.bf16.msra.mxu0 0
  %613 = vmatprep.subr.bf16.mxu0 0
  %614 = vmatpush1.bf16.msra.mxu0 0
  %615 = vmatprep.subr.bf16.mxu0 0
  %616 = vmatpush1.bf16.msra.mxu0 0
  %617 = vmatprep.subr.bf16.mxu0 0
  %618 = vmatpush1.bf16.msra.mxu0 0
  %619 = vmatprep.subr.bf16.mxu0 0
  %620 = vmatpush1.bf16.msra.mxu0 0
  %621 = vmatprep.subr.bf16.mxu0 0
  %622 = vmatpush1.bf16.msra.mxu0 0
  %623 = vmatprep.subr.bf16.mxu0 0
  %624 = vmatpush1.bf16.msra.mxu0 0
  %625 = vmatprep.subr.bf16.mxu0 0
  %626 = vmatpush1.bf16.msra.mxu0 0
  %627 = vmatprep.subr.bf16.mxu0 0
  %628 = vmatpush1.bf16.msra.mxu0 0
  %629 = vmatprep.subr.bf16.mxu0 0
  %630 = vmatpush1.bf16.msra.mxu0 0
  %631 = vmatprep.mubr.bf16.mxu0 0
  %632 = vmatmul.mubr.bf16.gmra.mrb[0].mxu0 %v481
  %v633 = vpop.f32.mrb[0].mxu0
  %v634 = vadd.f32 %v581, %v633
  %v635 = vpop.f32.mrb[0].mxu0
  %v636 = vadd.f32 %v583, %v635
  %v637 = vpop.f32.mrb[0].mxu0
  %v638 = vadd.f32 %v585, %v637
  %v639 = vpop.f32.mrb[0].mxu0
  %v640 = vadd.f32 %v587, %v639
  %641 = vmatprep.mubr.bf16.mxu0 0
  %642 = vmatmul.mubr.bf16.gmra.mrb[0].mxu0 %v484
  %v643 = vpop.f32.mrb[0].mxu0
  %v644 = vadd.f32 %v591, %v643
  %v645 = vpop.f32.mrb[0].mxu0
  %v646 = vadd.f32 %v593, %v645
  %v647 = vpop.f32.mrb[0].mxu0
  %v648 = vadd.f32 %v595, %v647
  %v649 = vpop.f32.mrb[0].mxu0
  %v650 = vadd.f32 %v597, %v649
  %651 = vdwg.mxu0
  %v652 = vmax.f32 %v634, 0.0
  %v653 = vmax.f32 %v636, 0.0
  %v654 = vmax.f32 %v638, 0.0
  %v655 = vmax.f32 %v640, 0.0
  %v656 = vmax.f32 %v644, 0.0
  %v657 = vmax.f32 %v646, 0.0
  %v658 = vmax.f32 %v648, 0.0
  %v659 = vmax.f32 %v650, 0.0
  %v660 = vpack.c.bf16 %v654, %v652
  %v661 = vpack.c.bf16 %v655, %v653
  %v662 = vpack.c.bf16 %v658, %v656
  %v663 = vpack.c.bf16 %v659, %v657
  %v668 = vunpack.c.l.b16 %v660
  %v669 = vunpack.c.l.b16 %v661
  %v670 = vunpack.c.h.b16 %v660
  %v671 = vunpack.c.h.b16 %v661
  %v672 = vunpack.c.l.b16 %v662
  %v673 = vunpack.c.l.b16 %v663
  %v674 = vunpack.c.h.b16 %v662
  %v675 = vunpack.c.h.b16 %v663
  %v676 = vpack.c.b16 %v669, %v668
  %v677 = vpack.c.b16 %v671, %v670
  %v678 = vpack.c.b16 %v673, %v672
  %v679 = vpack.c.b16 %v675, %v674
  %684 = vst [vmem:[%s3] sm:$0xff] %v676
  %685 = vst [vmem:[%s3 + $0x8] sm:$0xff] %v677
  %686 = vst [vmem:[%s3 + $0x10] sm:$0xff] %v678
  %687 = vst [vmem:[%s3 + $0x18] sm:$0xff] %v679
  // Predicated region
  $region14: #{dae_forward.16} parent=0 // pred_check
    _
  $region15: #{dae_forward.16} parent=0 // pred_check_branch
    %689 = sbr.rel (0) target = $region17
  $region16: #{dae_forward.16} parent=0 // pred_region
    _
  $region17: #{dae_forward.16} parent=0 // pred_fallthru
    _
  // Predicated region
  $region18: #{dae_forward.16} parent=0 // pred_check
    _
  $region19: #{dae_forward.16} parent=0 // pred_check_branch
    %691 = sbr.rel (0) target = $region21
  $region20: #{dae_forward.16} parent=0 // pred_region
    _
  $region21: #{dae_forward.16} parent=0 // pred_fallthru
    _

// kernel: dae_forward.17
$region0: #{dae_forward.17}
  #allocation0 [shape = 'u32[]', space=smem, size = 0x4, offset = 0x4, fixed_abs, tag = 'smem constant byte address 0x4 - core index']
  #allocation1 [shape = 'u32[144,128]{1,0:T(1,128)}', space=vmem, size = 0x12000, scoped, tag = 'internal scratch']
  %s0 = inlined_call_operand.vmem [shape: bf16[128,260], index: 0, kind: input, shape index: {}]
  %s1 = inlined_call_operand.vmem [shape: bf16[260,128], index: 1, kind: input, shape index: {}]
  %s2 = inlined_call_operand.vmem [shape: f32[1,128], index: 2, kind: input, shape index: {}]
  %s3 = inlined_call_operand.vmem [shape: bf16[128,128], index: 3, kind: output, shape index: {}]
  %s4 = sld [smem:[#allocation0]]
  $region22: #{dae_forward.17} parent=0
    _
  %s6 = ssub.s32 1, %s4
  %s7 = scalar_select 0, %s6, %s4
  // Predicated region
  $region2: #{dae_forward.17} parent=0 // pred_check
    _
  $region3: #{dae_forward.17} parent=0 // pred_check_branch
    %9 = sbr.rel (0) target = $region5
  $region4: #{dae_forward.17} parent=0 // pred_region
    _
  $region5: #{dae_forward.17} parent=0 // pred_fallthru
    _
  // Predicated region
  $region6: #{dae_forward.17} parent=0 // pred_check
    _
  $region7: #{dae_forward.17} parent=0 // pred_check_branch
    %11 = sbr.rel (0) target = $region9
  $region8: #{dae_forward.17} parent=0 // pred_region
    _
  $region9: #{dae_forward.17} parent=0 // pred_fallthru
    _
  // Predicated region
  $region10: #{dae_forward.17} parent=0 // pred_check
    _
  $region11: #{dae_forward.17} parent=0 // pred_check_branch
    %13 = sbr.rel (0) target = $region13
  $region12: #{dae_forward.17} parent=0 // pred_region
    _
  $region13: #{dae_forward.17} parent=0 // pred_fallthru
    _
  %v15 = vld [vmem:[%s0] sm:$0xff]
  %v16 = vld [vmem:[%s0 + $0x8] sm:$0xf]
  %v17 = vld [vmem:[%s0 + $0xc] sm:$0xff]
  %v18 = vld [vmem:[%s0 + $0x14] sm:$0xf]
  %v19 = vld [vmem:[%s0 + $0x18] sm:$0xff]
  %v20 = vld [vmem:[%s0 + $0x20] sm:$0xf]
  %v21 = vld [vmem:[%s0 + $0x24] sm:$0xff]
  %v22 = vld [vmem:[%s0 + $0x2c] sm:$0xf]
  %v23 = vld [vmem:[%s0 + $0x30] sm:$0xff]
  %v24 = vld [vmem:[%s0 + $0x38] sm:$0xf]
  %v25 = vld [vmem:[%s0 + $0x3c] sm:$0xff]
  %v26 = vld [vmem:[%s0 + $0x44] sm:$0xf]
  %v27 = vld [vmem:[%s0 + $0x48] sm:$0xff]
  %v28 = vld [vmem:[%s0 + $0x50] sm:$0xf]
  %v29 = vld [vmem:[%s0 + $0x54] sm:$0xff]
  %v30 = vld [vmem:[%s0 + $0x5c] sm:$0xf]
  %v31 = vld [vmem:[%s0 + $0x60] sm:$0xff]
  %v32 = vld [vmem:[%s0 + $0x68] sm:$0xf]
  %v33 = vld [vmem:[%s0 + $0x6c] sm:$0xff]
  %v34 = vld [vmem:[%s0 + $0x74] sm:$0xf]
  %v35 = vld [vmem:[%s0 + $0x78] sm:$0xff]
  %v36 = vld [vmem:[%s0 + $0x80] sm:$0xf]
  %v37 = vld [vmem:[%s0 + $0x84] sm:$0xff]
  %v38 = vld [vmem:[%s0 + $0x8c] sm:$0xf]
  %v39 = vld [vmem:[%s0 + $0x90] sm:$0xff]
  %v40 = vld [vmem:[%s0 + $0x98] sm:$0xf]
  %v41 = vld [vmem:[%s0 + $0x9c] sm:$0xff]
  %v42 = vld [vmem:[%s0 + $0xa4] sm:$0xf]
  %v43 = vld [vmem:[%s0 + $0xa8] sm:$0xff]
  %v44 = vld [vmem:[%s0 + $0xb0] sm:$0xf]
  %v45 = vld [vmem:[%s0 + $0xb4] sm:$0xff]
  %v46 = vld [vmem:[%s0 + $0xbc] sm:$0xf]
  %v47 = vld [vmem:[%s1] sm:$0xf]
  %v48 = vld [vmem:[%s1 + $0x4] sm:$0xf]
  %v49 = vld [vmem:[%s1 + $0x8] sm:$0xf]
  %v50 = vld [vmem:[%s1 + $0xc] sm:$0xf]
  %v51 = vld [vmem:[%s1 + $0x10] sm:$0xf]
  %v52 = vld [vmem:[%s1 + $0x14] sm:$0xf]
  %v53 = vld [vmem:[%s1 + $0x18] sm:$0xf]
  %v54 = vld [vmem:[%s1 + $0x1c] sm:$0xf]
  %v55 = vld [vmem:[%s1 + $0x20] sm:$0xf]
  %v56 = vld [vmem:[%s1 + $0x24] sm:$0xf]
  %v57 = vld [vmem:[%s1 + $0x28] sm:$0xf]
  %v58 = vld [vmem:[%s1 + $0x2c] sm:$0xf]
  %v59 = vld [vmem:[%s1 + $0x30] sm:$0xf]
  %v60 = vld [vmem:[%s1 + $0x34] sm:$0xf]
  %v61 = vld [vmem:[%s1 + $0x38] sm:$0xf]
  %v62 = vld [vmem:[%s1 + $0x3c] sm:$0xf]
  %v63 = vld [vmem:[%s1 + $0x40] sm:$0xf]
  %v64 = vld [vmem:[%s1 + $0x44] sm:$0xf]
  %v65 = vld [vmem:[%s1 + $0x48] sm:$0xf]
  %v66 = vld [vmem:[%s1 + $0x4c] sm:$0xf]
  %v67 = vld [vmem:[%s1 + $0x50] sm:$0xf]
  %v68 = vld [vmem:[%s1 + $0x54] sm:$0xf]
  %v69 = vld [vmem:[%s1 + $0x58] sm:$0xf]
  %v70 = vld [vmem:[%s1 + $0x5c] sm:$0xf]
  %v71 = vld [vmem:[%s1 + $0x60] sm:$0xf]
  %v72 = vld [vmem:[%s1 + $0x64] sm:$0xf]
  %v73 = vld [vmem:[%s1 + $0x68] sm:$0xf]
  %v74 = vld [vmem:[%s1 + $0x6c] sm:$0xf]
  %v75 = vld [vmem:[%s1 + $0x70] sm:$0xf]
  %v76 = vld [vmem:[%s1 + $0x74] sm:$0xf]
  %v77 = vld [vmem:[%s1 + $0x78] sm:$0xf]
  %v78 = vld [vmem:[%s1 + $0x7c] sm:$0xf]
  %v79 = vld [vmem:[%s1 + $0x80] sm:$0x3]
  %v80 = vld [vmem:[%s2] sm:$0x1]
  %v82 = vlaneseq
  %v83 = vshrl.u32 %v82, 7
  %v84 = vsub.s32 0, %v83
  %v85 = vrot.slane %v80, %v84
  %v119 = vunpack.c.l.b16 %v15
  %v120 = vunpack.c.h.b16 %v15
  %v121 = vunpack.c.l.b16 %v16
  %v122 = vunpack.c.l.b16 %v17
  %v123 = vunpack.c.h.b16 %v17
  %v124 = vunpack.c.l.b16 %v18
  %v125 = vunpack.c.l.b16 %v19
  %v126 = vunpack.c.h.b16 %v19
  %v127 = vunpack.c.l.b16 %v20
  %v128 = vunpack.c.l.b16 %v21
  %v129 = vunpack.c.h.b16 %v21
  %v130 = vunpack.c.l.b16 %v22
  %v131 = vunpack.c.l.b16 %v23
  %v132 = vunpack.c.h.b16 %v23
  %v133 = vunpack.c.l.b16 %v24
  %v134 = vunpack.c.l.b16 %v25
  %v135 = vunpack.c.h.b16 %v25
  %v136 = vunpack.c.l.b16 %v26
  %v137 = vunpack.c.l.b16 %v27
  %v138 = vunpack.c.h.b16 %v27
  %v139 = vunpack.c.l.b16 %v28
  %v140 = vunpack.c.l.b16 %v29
  %v141 = vunpack.c.h.b16 %v29
  %v142 = vunpack.c.l.b16 %v30
  %v143 = vunpack.c.l.b16 %v31
  %v144 = vunpack.c.h.b16 %v31
  %v145 = vunpack.c.l.b16 %v32
  %v146 = vunpack.c.l.b16 %v33
  %v147 = vunpack.c.h.b16 %v33
  %v148 = vunpack.c.l.b16 %v34
  %v149 = vunpack.c.l.b16 %v35
  %v150 = vunpack.c.h.b16 %v35
  %v151 = vunpack.c.l.b16 %v36
  %v152 = vunpack.c.l.b16 %v37
  %v153 = vunpack.c.h.b16 %v37
  %v154 = vunpack.c.l.b16 %v38
  %v155 = vunpack.c.l.b16 %v39
  %v156 = vunpack.c.h.b16 %v39
  %v157 = vunpack.c.l.b16 %v40
  %v158 = vunpack.c.l.b16 %v41
  %v159 = vunpack.c.h.b16 %v41
  %v160 = vunpack.c.l.b16 %v42
  %v161 = vunpack.c.l.b16 %v43
  %v162 = vunpack.c.h.b16 %v43
  %v163 = vunpack.c.l.b16 %v44
  %v164 = vunpack.c.l.b16 %v45
  %v165 = vunpack.c.h.b16 %v45
  %v166 = vunpack.c.l.b16 %v46
  %v167 = vpack.c.b16 %v122, %v119
  %v168 = vpack.c.b16 %v123, %v120
  %v169 = vpack.c.b16 %v124, %v121
  %v170 = vpack.c.b16 %v128, %v125
  %v171 = vpack.c.b16 %v129, %v126
  %v172 = vpack.c.b16 %v130, %v127
  %v173 = vpack.c.b16 %v134, %v131
  %v174 = vpack.c.b16 %v135, %v132
  %v175 = vpack.c.b16 %v136, %v133
  %v176 = vpack.c.b16 %v140, %v137
  %v177 = vpack.c.b16 %v141, %v138
  %v178 = vpack.c.b16 %v142, %v139
  %v179 = vpack.c.b16 %v146, %v143
  %v180 = vpack.c.b16 %v147, %v144
  %v181 = vpack.c.b16 %v148, %v145
  %v182 = vpack.c.b16 %v152, %v149
  %v183 = vpack.c.b16 %v153, %v150
  %v184 = vpack.c.b16 %v154, %v151
  %v185 = vpack.c.b16 %v158, %v155
  %v186 = vpack.c.b16 %v159, %v156
  %v187 = vpack.c.b16 %v160, %v157
  %v188 = vpack.c.b16 %v164, %v161
  %v189 = vpack.c.b16 %v165, %v162
  %v190 = vpack.c.b16 %v166, %v163
  %v240 = vunpack.c.l.b16 %v47
  %v241 = vunpack.c.l.b16 %v48
  %v242 = vunpack.c.l.b16 %v49
  %v243 = vunpack.c.l.b16 %v50
  %v244 = vunpack.c.l.b16 %v51
  %v245 = vunpack.c.l.b16 %v52
  %v246 = vunpack.c.l.b16 %v53
  %v247 = vunpack.c.l.b16 %v54
  %v248 = vunpack.c.l.b16 %v55
  %v249 = vunpack.c.l.b16 %v56
  %v250 = vunpack.c.l.b16 %v57
  %v251 = vunpack.c.l.b16 %v58
  %v252 = vunpack.c.l.b16 %v59
  %v253 = vunpack.c.l.b16 %v60
  %v254 = vunpack.c.l.b16 %v61
  %v255 = vunpack.c.l.b16 %v62
  %v256 = vunpack.c.l.b16 %v63
  %v257 = vunpack.c.l.b16 %v64
  %v258 = vunpack.c.l.b16 %v65
  %v259 = vunpack.c.l.b16 %v66
  %v260 = vunpack.c.l.b16 %v67
  %v261 = vunpack.c.l.b16 %v68
  %v262 = vunpack.c.l.b16 %v69
  %v263 = vunpack.c.l.b16 %v70
  %v264 = vunpack.c.l.b16 %v71
  %v265 = vunpack.c.l.b16 %v72
  %v266 = vunpack.c.l.b16 %v73
  %v267 = vunpack.c.l.b16 %v74
  %v268 = vunpack.c.l.b16 %v75
  %v269 = vunpack.c.l.b16 %v76
  %v270 = vunpack.c.l.b16 %v77
  %v271 = vunpack.c.l.b16 %v78
  %v272 = vunpack.c.l.b16 %v79
  %v273 = vpack.c.b16 %v241, %v240
  %v274 = vpack.c.b16 %v243, %v242
  %v275 = vpack.c.b16 %v245, %v244
  %v276 = vpack.c.b16 %v247, %v246
  %v277 = vpack.c.b16 %v249, %v248
  %v278 = vpack.c.b16 %v251, %v250
  %v279 = vpack.c.b16 %v253, %v252
  %v280 = vpack.c.b16 %v255, %v254
  %v281 = vpack.c.b16 %v257, %v256
  %v282 = vpack.c.b16 %v259, %v258
  %v283 = vpack.c.b16 %v261, %v260
  %v284 = vpack.c.b16 %v263, %v262
  %v285 = vpack.c.b16 %v265, %v264
  %v286 = vpack.c.b16 %v267, %v266
  %v287 = vpack.c.b16 %v269, %v268
  %v288 = vpack.c.b16 %v271, %v270
  %v289 = vpack.c.b16 %v272, %v272
  %vm306 = vcmask 31744
  %v308 = vsel %vm306, %v169, 0
  %v311 = vsel %vm306, %v172, 0
  %v314 = vsel %vm306, %v175, 0
  %v317 = vsel %vm306, %v178, 0
  %v320 = vsel %vm306, %v181, 0
  %v323 = vsel %vm306, %v184, 0
  %v326 = vsel %vm306, %v187, 0
  %v329 = vsel %vm306, %v190, 0
  %vm331 = vcmask 1041408
  %v333 = vsel %vm331, %v289, 0
  %335 = vmatprep.subr.bf16.mxu0 0
  %336 = vmatpush1.bf16.msra.mxu0 %v273
  %337 = vmatprep.subr.bf16.mxu0 0
  %338 = vmatpush1.bf16.msra.mxu0 %v274
  %339 = vmatprep.subr.bf16.mxu0 0
  %340 = vmatpush1.bf16.msra.mxu0 %v275
  %341 = vmatprep.subr.bf16.mxu0 0
  %342 = vmatpush1.bf16.msra.mxu0 %v276
  %343 = vmatprep.subr.bf16.mxu0 0
  %344 = vmatpush1.bf16.msra.mxu0 %v277
  %345 = vmatprep.subr.bf16.mxu0 0
  %346 = vmatpush1.bf16.msra.mxu0 %v278
  %347 = vmatprep.subr.bf16.mxu0 0
  %348 = vmatpush1.bf16.msra.mxu0 %v279
  %349 = vmatprep.subr.bf16.mxu0 0
  %350 = vmatpush1.bf16.msra.mxu0 %v280
  %351 = vmatprep.subr.bf16.mxu0 0
  %352 = vmatpush1.bf16.msra.mxu0 %v281
  %353 = vmatprep.subr.bf16.mxu0 0
  %354 = vmatpush1.bf16.msra.mxu0 %v282
  %355 = vmatprep.subr.bf16.mxu0 0
  %356 = vmatpush1.bf16.msra.mxu0 %v283
  %357 = vmatprep.subr.bf16.mxu0 0
  %358 = vmatpush1.bf16.msra.mxu0 %v284
  %359 = vmatprep.subr.bf16.mxu0 0
  %360 = vmatpush1.bf16.msra.mxu0 %v285
  %361 = vmatprep.subr.bf16.mxu0 0
  %362 = vmatpush1.bf16.msra.mxu0 %v286
  %363 = vmatprep.subr.bf16.mxu0 0
  %364 = vmatpush1.bf16.msra.mxu0 %v287
  %365 = vmatprep.subr.bf16.mxu0 0
  %366 = vmatpush1.bf16.msra.mxu0 %v288
  %367 = vmatprep.mubr.bf16.mxu0 %v168
  %368 = vmatmul.mubr.bf16.gmra.mrb[0].mxu0 %v167
  %v369 = vpop.f32.mrb[0].mxu0
  %v370 = vadd.f32 %v85, %v369
  %v371 = vpop.f32.mrb[0].mxu0
  %v372 = vpop.f32.mrb[0].mxu0
  %v373 = vadd.f32 %v85, %v372
  %v374 = vpop.f32.mrb[0].mxu0
  %375 = vmatprep.mubr.bf16.mxu0 %v171
  %376 = vmatmul.mubr.bf16.gmra.mrb[0].mxu0 %v170
  %v377 = vpop.f32.mrb[0].mxu0
  %v378 = vadd.f32 %v85, %v377
  %v379 = vpop.f32.mrb[0].mxu0
  %v380 = vpop.f32.mrb[0].mxu0
  %v381 = vadd.f32 %v85, %v380
  %v382 = vpop.f32.mrb[0].mxu0
  %383 = vmatprep.mubr.bf16.mxu0 %v174
  %384 = vmatmul.mubr.bf16.gmra.mrb[0].mxu0 %v173
  %v385 = vpop.f32.mrb[0].mxu0
  %v386 = vadd.f32 %v85, %v385
  %v387 = vpop.f32.mrb[0].mxu0
  %v388 = vpop.f32.mrb[0].mxu0
  %v389 = vadd.f32 %v85, %v388
  %v390 = vpop.f32.mrb[0].mxu0
  %391 = vmatprep.mubr.bf16.mxu0 %v177
  %392 = vmatmul.mubr.bf16.gmra.mrb[0].mxu0 %v176
  %v393 = vpop.f32.mrb[0].mxu0
  %v394 = vadd.f32 %v85, %v393
  %v395 = vpop.f32.mrb[0].mxu0
  %v396 = vpop.f32.mrb[0].mxu0
  %v397 = vadd.f32 %v85, %v396
  %v398 = vpop.f32.mrb[0].mxu0
  %399 = vmatprep.mubr.bf16.mxu0 %v180
  %400 = vmatmul.mubr.bf16.gmra.mrb[0].mxu0 %v179
  %v401 = vpop.f32.mrb[0].mxu0
  %v402 = vadd.f32 %v85, %v401
  %v403 = vpop.f32.mrb[0].mxu0
  %v404 = vpop.f32.mrb[0].mxu0
  %v405 = vadd.f32 %v85, %v404
  %v406 = vpop.f32.mrb[0].mxu0
  %407 = vmatprep.mubr.bf16.mxu0 %v183
  %408 = vmatmul.mubr.bf16.gmra.mrb[0].mxu0 %v182
  %v409 = vpop.f32.mrb[0].mxu0
  %v410 = vadd.f32 %v85, %v409
  %v411 = vpop.f32.mrb[0].mxu0
  %v412 = vpop.f32.mrb[0].mxu0
  %v413 = vadd.f32 %v85, %v412
  %v414 = vpop.f32.mrb[0].mxu0
  %415 = vmatprep.mubr.bf16.mxu0 %v186
  %416 = vmatmul.mubr.bf16.gmra.mrb[0].mxu0 %v185
  %v417 = vpop.f32.mrb[0].mxu0
  %v418 = vadd.f32 %v85, %v417
  %v419 = vpop.f32.mrb[0].mxu0
  %v420 = vpop.f32.mrb[0].mxu0
  %v421 = vadd.f32 %v85, %v420
  %v422 = vpop.f32.mrb[0].mxu0
  %423 = vmatprep.mubr.bf16.mxu0 %v189
  %424 = vmatmul.mubr.bf16.gmra.mrb[0].mxu0 %v188
  %v425 = vpop.f32.mrb[0].mxu0
  %v426 = vadd.f32 %v85, %v425
  %v427 = vpop.f32.mrb[0].mxu0
  %v428 = vpop.f32.mrb[0].mxu0
  %v429 = vadd.f32 %v85, %v428
  %v430 = vpop.f32.mrb[0].mxu0
  %431 = vdwg.mxu0
  %432 = vmatprep.subr.bf16.mxu0 0
  %433 = vmatpush1.bf16.msra.mxu0 %v333
  %434 = vmatprep.subr.bf16.mxu0 0
  %435 = vmatpush1.bf16.msra.mxu0 0
  %436 = vmatprep.subr.bf16.mxu0 0
  %437 = vmatpush1.bf16.msra.mxu0 0
  %438 = vmatprep.subr.bf16.mxu0 0
  %439 = vmatpush1.bf16.msra.mxu0 0
  %440 = vmatprep.subr.bf16.mxu0 0
  %441 = vmatpush1.bf16.msra.mxu0 0
  %442 = vmatprep.subr.bf16.mxu0 0
  %443 = vmatpush1.bf16.msra.mxu0 0
  %444 = vmatprep.subr.bf16.mxu0 0
  %445 = vmatpush1.bf16.msra.mxu0 0
  %446 = vmatprep.subr.bf16.mxu0 0
  %447 = vmatpush1.bf16.msra.mxu0 0
  %448 = vmatprep.subr.bf16.mxu0 0
  %449 = vmatpush1.bf16.msra.mxu0 0
  %450 = vmatprep.subr.bf16.mxu0 0
  %451 = vmatpush1.bf16.msra.mxu0 0
  %452 = vmatprep.subr.bf16.mxu0 0
  %453 = vmatpush1.bf16.msra.mxu0 0
  %454 = vmatprep.subr.bf16.mxu0 0
  %455 = vmatpush1.bf16.msra.mxu0 0
  %456 = vmatprep.subr.bf16.mxu0 0
  %457 = vmatpush1.bf16.msra.mxu0 0
  %458 = vmatprep.subr.bf16.mxu0 0
  %459 = vmatpush1.bf16.msra.mxu0 0
  %460 = vmatprep.subr.bf16.mxu0 0
  %461 = vmatpush1.bf16.msra.mxu0 0
  %462 = vmatprep.subr.bf16.mxu0 0
  %463 = vmatpush1.bf16.msra.mxu0 0
  %464 = vmatprep.mubr.bf16.mxu0 0
  %465 = vmatmul.mubr.bf16.gmra.mrb[0].mxu0 %v308
  %v466 = vpop.f32.mrb[0].mxu0
  %v467 = vadd.f32 %v370, %v466
  %v468 = vpop.f32.mrb[0].mxu0
  %v469 = vpop.f32.mrb[0].mxu0
  %v470 = vadd.f32 %v373, %v469
  %v471 = vpop.f32.mrb[0].mxu0
  %472 = vmatprep.mubr.bf16.mxu0 0
  %473 = vmatmul.mubr.bf16.gmra.mrb[0].mxu0 %v311
  %v474 = vpop.f32.mrb[0].mxu0
  %v475 = vadd.f32 %v378, %v474
  %v476 = vpop.f32.mrb[0].mxu0
  %v477 = vpop.f32.mrb[0].mxu0
  %v478 = vadd.f32 %v381, %v477
  %v479 = vpop.f32.mrb[0].mxu0
  %480 = vmatprep.mubr.bf16.mxu0 0
  %481 = vmatmul.mubr.bf16.gmra.mrb[0].mxu0 %v314
  %v482 = vpop.f32.mrb[0].mxu0
  %v483 = vadd.f32 %v386, %v482
  %v484 = vpop.f32.mrb[0].mxu0
  %v485 = vpop.f32.mrb[0].mxu0
  %v486 = vadd.f32 %v389, %v485
  %v487 = vpop.f32.mrb[0].mxu0
  %488 = vmatprep.mubr.bf16.mxu0 0
  %489 = vmatmul.mubr.bf16.gmra.mrb[0].mxu0 %v317
  %v490 = vpop.f32.mrb[0].mxu0
  %v491 = vadd.f32 %v394, %v490
  %v492 = vpop.f32.mrb[0].mxu0
  %v493 = vpop.f32.mrb[0].mxu0
  %v494 = vadd.f32 %v397, %v493
  %v495 = vpop.f32.mrb[0].mxu0
  %496 = vmatprep.mubr.bf16.mxu0 0
  %497 = vmatmul.mubr.bf16.gmra.mrb[0].mxu0 %v320
  %v498 = vpop.f32.mrb[0].mxu0
  %v499 = vadd.f32 %v402, %v498
  %v500 = vpop.f32.mrb[0].mxu0
  %v501 = vpop.f32.mrb[0].mxu0
  %v502 = vadd.f32 %v405, %v501
  %v503 = vpop.f32.mrb[0].mxu0
  %504 = vmatprep.mubr.bf16.mxu0 0
  %505 = vmatmul.mubr.bf16.gmra.mrb[0].mxu0 %v323
  %v506 = vpop.f32.mrb[0].mxu0
  %v507 = vadd.f32 %v410, %v506
  %v508 = vpop.f32.mrb[0].mxu0
  %v509 = vpop.f32.mrb[0].mxu0
  %v510 = vadd.f32 %v413, %v509
  %v511 = vpop.f32.mrb[0].mxu0
  %512 = vmatprep.mubr.bf16.mxu0 0
  %513 = vmatmul.mubr.bf16.gmra.mrb[0].mxu0 %v326
  %v514 = vpop.f32.mrb[0].mxu0
  %v515 = vadd.f32 %v418, %v514
  %v516 = vpop.f32.mrb[0].mxu0
  %v517 = vpop.f32.mrb[0].mxu0
  %v518 = vadd.f32 %v421, %v517
  %v519 = vpop.f32.mrb[0].mxu0
  %520 = vmatprep.mubr.bf16.mxu0 0
  %521 = vmatmul.mubr.bf16.gmra.mrb[0].mxu0 %v329
  %v522 = vpop.f32.mrb[0].mxu0
  %v523 = vadd.f32 %v426, %v522
  %v524 = vpop.f32.mrb[0].mxu0
  %v525 = vpop.f32.mrb[0].mxu0
  %v526 = vadd.f32 %v429, %v525
  %v527 = vpop.f32.mrb[0].mxu0
  %528 = vdwg.mxu0
  %v529 = vmax.f32 %v467, 0.0
  %v530 = vmax.f32 %v470, 0.0
  %v531 = vmax.f32 %v475, 0.0
  %v532 = vmax.f32 %v478, 0.0
  %v533 = vmax.f32 %v483, 0.0
  %v534 = vmax.f32 %v486, 0.0
  %v535 = vmax.f32 %v491, 0.0
  %v536 = vmax.f32 %v494, 0.0
  %v537 = vmax.f32 %v499, 0.0
  %v538 = vmax.f32 %v502, 0.0
  %v539 = vmax.f32 %v507, 0.0
  %v540 = vmax.f32 %v510, 0.0
  %v541 = vmax.f32 %v515, 0.0
  %v542 = vmax.f32 %v518, 0.0
  %v543 = vmax.f32 %v523, 0.0
  %v544 = vmax.f32 %v526, 0.0
  %v545 = vpack.c.bf16 %v530, %v529
  %v546 = vpack.c.bf16 %v532, %v531
  %v547 = vpack.c.bf16 %v534, %v533
  %v548 = vpack.c.bf16 %v536, %v535
  %v549 = vpack.c.bf16 %v538, %v537
  %v550 = vpack.c.bf16 %v540, %v539
  %v551 = vpack.c.bf16 %v542, %v541
  %v552 = vpack.c.bf16 %v544, %v543
  %v561 = vunpack.c.l.b16 %v545
  %v562 = vunpack.c.h.b16 %v545
  %v563 = vunpack.c.l.b16 %v546
  %v564 = vunpack.c.h.b16 %v546
  %v565 = vunpack.c.l.b16 %v547
  %v566 = vunpack.c.h.b16 %v547
  %v567 = vunpack.c.l.b16 %v548
  %v568 = vunpack.c.h.b16 %v548
  %v569 = vunpack.c.l.b16 %v549
  %v570 = vunpack.c.h.b16 %v549
  %v571 = vunpack.c.l.b16 %v550
  %v572 = vunpack.c.h.b16 %v550
  %v573 = vunpack.c.l.b16 %v551
  %v574 = vunpack.c.h.b16 %v551
  %v575 = vunpack.c.l.b16 %v552
  %v576 = vunpack.c.h.b16 %v552
  %v577 = vpack.c.b16 %v561, %v561
  %v578 = vpack.c.b16 %v562, %v562
  %v579 = vpack.c.b16 %v563, %v563
  %v580 = vpack.c.b16 %v564, %v564
  %v581 = vpack.c.b16 %v565, %v565
  %v582 = vpack.c.b16 %v566, %v566
  %v583 = vpack.c.b16 %v567, %v567
  %v584 = vpack.c.b16 %v568, %v568
  %v585 = vpack.c.b16 %v569, %v569
  %v586 = vpack.c.b16 %v570, %v570
  %v587 = vpack.c.b16 %v571, %v571
  %v588 = vpack.c.b16 %v572, %v572
  %v589 = vpack.c.b16 %v573, %v573
  %v590 = vpack.c.b16 %v574, %v574
  %v591 = vpack.c.b16 %v575, %v575
  %v592 = vpack.c.b16 %v576, %v576
  %609 = vst [vmem:[%s3] sm:$0xf] %v577
  %610 = vst [vmem:[%s3 + $0x4] sm:$0xf] %v578
  %611 = vst [vmem:[%s3 + $0x8] sm:$0xf] %v579
  %612 = vst [vmem:[%s3 + $0xc] sm:$0xf] %v580
  %613 = vst [vmem:[%s3 + $0x10] sm:$0xf] %v581
  %614 = vst [vmem:[%s3 + $0x14] sm:$0xf] %v582
  %615 = vst [vmem:[%s3 + $0x18] sm:$0xf] %v583
  %616 = vst [vmem:[%s3 + $0x1c] sm:$0xf] %v584
  %617 = vst [vmem:[%s3 + $0x20] sm:$0xf] %v585
  %618 = vst [vmem:[%s3 + $0x24] sm:$0xf] %v586
  %619 = vst [vmem:[%s3 + $0x28] sm:$0xf] %v587
  %620 = vst [vmem:[%s3 + $0x2c] sm:$0xf] %v588
  %621 = vst [vmem:[%s3 + $0x30] sm:$0xf] %v589
  %622 = vst [vmem:[%s3 + $0x34] sm:$0xf] %v590
  %623 = vst [vmem:[%s3 + $0x38] sm:$0xf] %v591
  %624 = vst [vmem:[%s3 + $0x3c] sm:$0xf] %v592
  // Predicated region
  $region14: #{dae_forward.17} parent=0 // pred_check
    _
  $region15: #{dae_forward.17} parent=0 // pred_check_branch
    %626 = sbr.rel (0) target = $region17
  $region16: #{dae_forward.17} parent=0 // pred_region
    _
  $region17: #{dae_forward.17} parent=0 // pred_fallthru
    _
  // Predicated region
  $region18: #{dae_forward.17} parent=0 // pred_check
    _
  $region19: #{dae_forward.17} parent=0 // pred_check_branch
    %628 = sbr.rel (0) target = $region21
  $region20: #{dae_forward.17} parent=0 // pred_region
    _
  $region21: #{dae_forward.17} parent=0 // pred_fallthru
    _

// kernel: dae_forward.18
$region0: #{dae_forward.18}
  #allocation0 [shape = 'u32[]', space=smem, size = 0x4, offset = 0x4, fixed_abs, tag = 'smem constant byte address 0x4 - core index']
  #allocation1 [shape = 'u32[144,128]{1,0:T(1,128)}', space=vmem, size = 0x12000, scoped, tag = 'internal scratch']
  %s0 = inlined_call_operand.vmem [shape: bf16[512,297], index: 0, kind: input, shape index: {}]
  %s1 = inlined_call_operand.vmem [shape: bf16[297,16], index: 1, kind: input, shape index: {}]
  %s2 = inlined_call_operand.vmem [shape: f32[1,16], index: 2, kind: input, shape index: {}]
  %s3 = inlined_call_operand.vmem [shape: bf16[512,16], index: 3, kind: output, shape index: {}]
  %s4 = sld [smem:[#allocation0]]
  $region45: #{dae_forward.18} parent=0
    _
  %s6 = ssub.s32 1, %s4
  %s7 = scalar_select 0, %s6, %s4
  loop: start=0, step=1, limit=4
  $region2: #{dae_forward.18} parent=0 // loop_pre_header
    _
  $region3: #{dae_forward.18} parent=0 // loop_header
    %s9 = sphi 0, %s13
    %p10 = scmp.ge.s32.totalorder %s9, 4
    %s16 = sphi 0, %s28
    %s17 = sphi 0, %s24
    %s18 = sphi 0, %s16
    %s19 = sphi 0, %s17
    %s20 = sphi 0, %s18
    %s21 = sphi 0, %s19
    %s31 = sphi 0, %s33
    %s34 = sphi 0, %s31
    %s35 = sphi 0, %s34
    %s51 = sphi 0, %s35
    %s57 = sphi 0, %s59
    %s60 = sphi 0, %s57
    %s61 = sphi 0, %s60
    %s77 = sphi 0, %s61
    %s83 = sphi 0, %s85
    %s86 = sphi 0, %s83
    %s87 = sphi 0, %s86
    %s103 = sphi 0, %s87
    %s111 = sphi 0, %s113
    %s114 = sphi 0, %s111
    %s115 = sphi 0, %s114
    %s131 = sphi 0, %s115
  $region4: #{dae_forward.18} parent=0 // loop_header_branch
    %12 = sbr.rel (%p10) target = $region8
  $region5: #{dae_forward.18} parent=0 // loop_body
    %s14 = ssub.s32 %s9, 1
    %s15 = ssub.s32 %s9, 2
    %s22 = sadd.s32 1, %s17
    %p23 = scmp.ge.s32.totalorder %s22, 1
    %s24 = scalar_select %p23, 0, %s22
    %s25 = sadd.s32 1, %s16
    %s26 = scalar_select %p23, %s25, %s16
    %p27 = scmp.ge.s32.totalorder %s26, 2
    %s28 = scalar_select %p27, 0, %s26
    %s29 = ssub.s32 %s16, %s28
    %p30 = scmp.eq.s32.totalorder %s29, 0
    %s32 = sadd.s32 %s31, 1
    %s33 = scalar_select %p30, %s31, %s32
    %p36 = pneg %p30
    %p37 = scmp.eq.s32.totalorder %s9, 1
    %p38 = por %p36, %p37
    %p39 = scmp.ne.s32.totalorder %s31, %s34
    %p40 = scmp.eq.s32.totalorder %s9, 0
    %p41 = por %p39, %p40
    %p42 = scmp.ne.s32.totalorder %s31, %s34
    %p43 = scmp.eq.s32.totalorder %s14, 1
    %p44 = por %p42, %p43
    %p45 = scmp.ne.s32.totalorder %s34, %s35
    %p46 = scmp.eq.s32.totalorder %s14, 0
    %p47 = por %p45, %p46
    %p48 = scmp.ne.s32.totalorder %s34, %s35
    %p49 = scmp.eq.s32.totalorder %s15, 1
    %p50 = por %p48, %p49
    %p52 = scmp.ne.s32.totalorder %s35, %s51
    %p53 = scmp.eq.s32.totalorder %s15, 0
    %p54 = por %p52, %p53
    %s55 = ssub.s32 %s17, %s24
    %p56 = scmp.eq.s32.totalorder %s55, 0
    %s58 = sadd.s32 %s57, 1
    %s59 = scalar_select %p56, %s57, %s58
    %p62 = pneg %p56
    %p63 = scmp.eq.s32.totalorder %s9, 1
    %p64 = por %p62, %p63
    %p65 = scmp.ne.s32.totalorder %s57, %s60
    %p66 = scmp.eq.s32.totalorder %s9, 0
    %p67 = por %p65, %p66
    %p68 = scmp.ne.s32.totalorder %s57, %s60
    %p69 = scmp.eq.s32.totalorder %s14, 1
    %p70 = por %p68, %p69
    %p71 = scmp.ne.s32.totalorder %s60, %s61
    %p72 = scmp.eq.s32.totalorder %s14, 0
    %p73 = por %p71, %p72
    %p74 = scmp.ne.s32.totalorder %s60, %s61
    %p75 = scmp.eq.s32.totalorder %s15, 1
    %p76 = por %p74, %p75
    %p78 = scmp.ne.s32.totalorder %s61, %s77
    %p79 = scmp.eq.s32.totalorder %s15, 0
    %p80 = por %p78, %p79
    %s81 = ssub.s32 %s17, %s24
    %p82 = scmp.eq.s32.totalorder %s81, 0
    %s84 = sadd.s32 %s83, 1
    %s85 = scalar_select %p82, %s83, %s84
    %p88 = pneg %p82
    %p89 = scmp.eq.s32.totalorder %s9, 1
    %p90 = por %p88, %p89
    %p91 = scmp.ne.s32.totalorder %s83, %s86
    %p92 = scmp.eq.s32.totalorder %s9, 0
    %p93 = por %p91, %p92
    %p94 = scmp.ne.s32.totalorder %s83, %s86
    %p95 = scmp.eq.s32.totalorder %s14, 1
    %p96 = por %p94, %p95
    %p97 = scmp.ne.s32.totalorder %s86, %s87
    %p98 = scmp.eq.s32.totalorder %s14, 0
    %p99 = por %p97, %p98
    %p100 = scmp.ne.s32.totalorder %s86, %s87
    %p101 = scmp.eq.s32.totalorder %s15, 1
    %p102 = por %p100, %p101
    %p104 = scmp.ne.s32.totalorder %s87, %s103
    %p105 = scmp.eq.s32.totalorder %s15, 0
    %p106 = por %p104, %p105
    %s107 = ssub.s32 %s16, %s28
    %s108 = ssub.s32 %s17, %s24
    %s109 = sor.u32 %s107, %s108
    %p110 = scmp.eq.s32.totalorder %s109, 0
    %s112 = sadd.s32 %s111, 1
    %s113 = scalar_select %p110, %s111, %s112
    %p116 = pneg %p110
    %p117 = scmp.eq.s32.totalorder %s9, 1
    %p118 = por %p116, %p117
    %p119 = scmp.ne.s32.totalorder %s111, %s114
    %p120 = scmp.eq.s32.totalorder %s9, 0
    %p121 = por %p119, %p120
    %p122 = scmp.ne.s32.totalorder %s111, %s114
    %p123 = scmp.eq.s32.totalorder %s14, 1
    %p124 = por %p122, %p123
    %p125 = scmp.ne.s32.totalorder %s114, %s115
    %p126 = scmp.eq.s32.totalorder %s14, 0
    %p127 = por %p125, %p126
    %p128 = scmp.ne.s32.totalorder %s114, %s115
    %p129 = scmp.eq.s32.totalorder %s15, 1
    %p130 = por %p128, %p129
    %p132 = scmp.ne.s32.totalorder %s115, %s131
    %p133 = scmp.eq.s32.totalorder %s15, 0
    %p134 = por %p132, %p133
    %p135 = scmp.le.s32.totalorder 1, %s9
    %p136 = scmp.lt.s32.totalorder %s9, 3
    %p137 = pnand %p135, %p136
    %p138 = pneg %p137
    // Predicated region
    $region9: #{dae_forward.18} parent=5 // pred_check
      _
    $region10: #{dae_forward.18} parent=5 // pred_check_branch
      %140 = sbr.rel (%p137) target = $region12
    $region11: #{dae_forward.18} parent=5 // pred_region
      %s141 = ssub.s32 %s9, 1
      // Predicated region
      $region13: #{dae_forward.18} parent=11 // pred_check
        %p142 = pneg %p73
      $region14: #{dae_forward.18} parent=11 // pred_check_branch
        %144 = sbr.rel (%p142) target = $region16
      $region15: #{dae_forward.18} parent=11 // pred_region
        %p145 = scmp.lt.s32.totalorder %s19, 0
        %s146 = scalar_select %p145, %s19, 0
        %s147 = smul.addr %s146, 4
        %s148 = scalar_lea.vmem %s1, %s147
      $region16: #{dae_forward.18} parent=11 // pred_fallthru
        _
      // Predicated region
      $region17: #{dae_forward.18} parent=11 // pred_check
        %p149 = pneg %p99
      $region18: #{dae_forward.18} parent=11 // pred_check_branch
        %151 = sbr.rel (%p149) target = $region20
      $region19: #{dae_forward.18} parent=11 // pred_region
        %p152 = scmp.lt.s32.totalorder %s19, 0
        %s153 = scalar_select %p152, %s19, 0
        %s154 = scalar_lea.vmem %s2, %s153
      $region20: #{dae_forward.18} parent=11 // pred_fallthru
        _
    $region12: #{dae_forward.18} parent=5 // pred_fallthru
      _
    %p155 = scmp.lt.s32.totalorder %s9, 2
    // Predicated region
    $region21: #{dae_forward.18} parent=5 // pred_check
      %p156 = pneg %p155
    $region22: #{dae_forward.18} parent=5 // pred_check_branch
      %158 = sbr.rel (%p156) target = $region24
    $region23: #{dae_forward.18} parent=5 // pred_region
      // Predicated region
      $region25: #{dae_forward.18} parent=23 // pred_check
        %p159 = pneg %p41
      $region26: #{dae_forward.18} parent=23 // pred_check_branch
        %161 = sbr.rel (%p159) target = $region28
      $region27: #{dae_forward.18} parent=23 // pred_region
        %s162 = smul.u32 32, %s16
        %p163 = scmp.lt.s32.totalorder %s162, 63
        %s164 = scalar_select %p163, %s162, 63
        %s165 = smul.addr %s164, 3
        %s166 = smul.addr %s165, 4
        %s167 = scalar_lea.vmem %s0, %s166
        %s168 = smul.u32 32, %s16
      $region28: #{dae_forward.18} parent=23 // pred_fallthru
        _
    $region24: #{dae_forward.18} parent=5 // pred_fallthru
      _
    %p169 = scmp.le.s32.totalorder 1, %s9
    %p170 = scmp.lt.s32.totalorder %s9, 3
    %p171 = pnand %p169, %p170
    %p172 = pneg %p171
    // Predicated region
    $region29: #{dae_forward.18} parent=5 // pred_check
      _
    $region30: #{dae_forward.18} parent=5 // pred_check_branch
      %174 = sbr.rel (%p171) target = $region32
    $region31: #{dae_forward.18} parent=5 // pred_region
      %s175 = ssub.s32 %s9, 1
      %s176 = smul.u32 32, %s18
      %p177 = scmp.lt.s32.totalorder %s176, 63
      %s178 = scalar_select %p177, %s176, 63
      %s179 = smul.addr %s178, 3
      %s180 = smul.addr %s179, 4
      %s181 = scalar_lea.vmem %s0, %s180
      %p182 = pneg %p47
      %p183 = pneg %p44
      %p184 = scmp.lt.s32.totalorder %s19, 0
      %s185 = scalar_select %p184, %s19, 0
      %s186 = smul.addr %s185, 4
      %s187 = scalar_lea.vmem %s1, %s186
      %p188 = pneg %p73
      %p189 = pneg %p70
      %p190 = scmp.lt.s32.totalorder %s19, 0
      %s191 = scalar_select %p190, %s19, 0
      %s192 = scalar_lea.vmem %s2, %s191
      %p193 = pneg %p99
      %p194 = pneg %p96
      %p195 = pneg %p127
      %p196 = pneg %p124
      %s197 = smul.u32 32, %s18
      %p198 = scmp.lt.s32.totalorder %s197, 63
      %s199 = scalar_select %p198, %s197, 63
      %p200 = scmp.lt.s32.totalorder %s19, 0
      %s201 = scalar_select %p200, %s19, 0
      %s202 = sadd.s32 %s201, %s199
      %s203 = smul.addr %s202, 4
      %s204 = scalar_lea.vmem %s3, %s203
      %s205 = smul.u32 32, %s18
      %p206 = scmp.lt.s32.totalorder %s205, 63
      %s207 = scalar_select %p206, %s205, 63
      %s208 = smul.addr %s207, 3
      %s209 = smul.addr %s208, 4
      %s210 = scalar_lea.vmem %s0, %s209
      %s211 = smul.u32 32, %s18
      %p212 = scmp.lt.s32.totalorder %s19, 0
      %s213 = scalar_select %p212, %s19, 0
      %s214 = smul.addr %s213, 4
      %s215 = scalar_lea.vmem %s1, %s214
      %p216 = scmp.lt.s32.totalorder %s19, 0
      %s217 = scalar_select %p216, %s19, 0
      %s218 = scalar_lea.vmem %s2, %s217
      %s219 = smul.u32 32, %s18
      %p220 = scmp.lt.s32.totalorder %s219, 63
      %s221 = scalar_select %p220, %s219, 63
      %p222 = scmp.lt.s32.totalorder %s19, 0
      %s223 = scalar_select %p222, %s19, 0
      %s224 = sadd.s32 %s223, %s221
      %s225 = smul.addr %s224, 4
      %s226 = scalar_lea.vmem %s3, %s225
      %s227 = smul.u32 32, %s18
      %v229 = vld [vmem:[%s210] sm:$0xff]
      %v230 = vld [vmem:[%s210 + $0x8] sm:$0xf]
      %v231 = vld [vmem:[%s210 + $0xc] sm:$0xff]
      %v232 = vld [vmem:[%s210 + $0x14] sm:$0xf]
      %v233 = vld [vmem:[%s210 + $0x18] sm:$0xff]
      %v234 = vld [vmem:[%s210 + $0x20] sm:$0xf]
      %v235 = vld [vmem:[%s210 + $0x24] sm:$0xff]
      %v236 = vld [vmem:[%s210 + $0x2c] sm:$0xf]
      %v237 = vld [vmem:[%s210 + $0x30] sm:$0xff]
      %v238 = vld [vmem:[%s210 + $0x38] sm:$0xf]
      %v239 = vld [vmem:[%s210 + $0x3c] sm:$0xff]
      %v240 = vld [vmem:[%s210 + $0x44] sm:$0xf]
      %v241 = vld [vmem:[%s210 + $0x48] sm:$0xff]
      %v242 = vld [vmem:[%s210 + $0x50] sm:$0xf]
      %v243 = vld [vmem:[%s210 + $0x54] sm:$0xff]
      %v244 = vld [vmem:[%s210 + $0x5c] sm:$0xf]
      %v245 = vld [vmem:[%s210 + $0x60] sm:$0xff]
      %v246 = vld [vmem:[%s210 + $0x68] sm:$0xf]
      %v247 = vld [vmem:[%s210 + $0x6c] sm:$0xff]
      %v248 = vld [vmem:[%s210 + $0x74] sm:$0xf]
      %v249 = vld [vmem:[%s210 + $0x78] sm:$0xff]
      %v250 = vld [vmem:[%s210 + $0x80] sm:$0xf]
      %v251 = vld [vmem:[%s210 + $0x84] sm:$0xff]
      %v252 = vld [vmem:[%s210 + $0x8c] sm:$0xf]
      %v253 = vld [vmem:[%s210 + $0x90] sm:$0xff]
      %v254 = vld [vmem:[%s210 + $0x98] sm:$0xf]
      %v255 = vld [vmem:[%s210 + $0x9c] sm:$0xff]
      %v256 = vld [vmem:[%s210 + $0xa4] sm:$0xf]
      %v257 = vld [vmem:[%s210 + $0xa8] sm:$0xff]
      %v258 = vld [vmem:[%s210 + $0xb0] sm:$0xf]
      %v259 = vld [vmem:[%s210 + $0xb4] sm:$0xff]
      %v260 = vld [vmem:[%s210 + $0xbc] sm:$0xf]
      %v261 = vld [vmem:[%s210 + $0xc0] sm:$0xff]
      %v262 = vld [vmem:[%s210 + $0xc8] sm:$0xf]
      %v263 = vld [vmem:[%s210 + $0xcc] sm:$0xff]
      %v264 = vld [vmem:[%s210 + $0xd4] sm:$0xf]
      %v265 = vld [vmem:[%s210 + $0xd8] sm:$0xff]
      %v266 = vld [vmem:[%s210 + $0xe0] sm:$0xf]
      %v267 = vld [vmem:[%s210 + $0xe4] sm:$0xff]
      %v268 = vld [vmem:[%s210 + $0xec] sm:$0xf]
      %v269 = vld [vmem:[%s210 + $0xf0] sm:$0xff]
      %v270 = vld [vmem:[%s210 + $0xf8] sm:$0xf]
      %v271 = vld [vmem:[%s210 + $0xfc] sm:$0xff]
      %v272 = vld [vmem:[%s210 + $0x104] sm:$0xf]
      %v273 = vld [vmem:[%s210 + $0x108] sm:$0xff]
      %v274 = vld [vmem:[%s210 + $0x110] sm:$0xf]
      %v275 = vld [vmem:[%s210 + $0x114] sm:$0xff]
      %v276 = vld [vmem:[%s210 + $0x11c] sm:$0xf]
      %v277 = vld [vmem:[%s210 + $0x120] sm:$0xff]
      %v278 = vld [vmem:[%s210 + $0x128] sm:$0xf]
      %v279 = vld [vmem:[%s210 + $0x12c] sm:$0xff]
      %v280 = vld [vmem:[%s210 + $0x134] sm:$0xf]
      %v281 = vld [vmem:[%s210 + $0x138] sm:$0xff]
      %v282 = vld [vmem:[%s210 + $0x140] sm:$0xf]
      %v283 = vld [vmem:[%s210 + $0x144] sm:$0xff]
      %v284 = vld [vmem:[%s210 + $0x14c] sm:$0xf]
      %v285 = vld [vmem:[%s210 + $0x150] sm:$0xff]
      %v286 = vld [vmem:[%s210 + $0x158] sm:$0xf]
      %v287 = vld [vmem:[%s210 + $0x15c] sm:$0xff]
      %v288 = vld [vmem:[%s210 + $0x164] sm:$0xf]
      %v289 = vld [vmem:[%s210 + $0x168] sm:$0xff]
      %v290 = vld [vmem:[%s210 + $0x170] sm:$0xf]
      %v291 = vld [vmem:[%s210 + $0x174] sm:$0xff]
      %v292 = vld [vmem:[%s210 + $0x17c] sm:$0xf]
      %v293 = vld [vmem:[%s215] sm:$0xf]
      %v294 = vld [vmem:[%s215 + $0x4] sm:$0xf]
      %v295 = vld [vmem:[%s215 + $0x8] sm:$0xf]
      %v296 = vld [vmem:[%s215 + $0xc] sm:$0xf]
      %v297 = vld [vmem:[%s215 + $0x10] sm:$0xf]
      %v298 = vld [vmem:[%s215 + $0x14] sm:$0xf]
      %v299 = vld [vmem:[%s215 + $0x18] sm:$0xf]
      %v300 = vld [vmem:[%s215 + $0x1c] sm:$0xf]
      %v301 = vld [vmem:[%s215 + $0x20] sm:$0xf]
      %v302 = vld [vmem:[%s215 + $0x24] sm:$0xf]
      %v303 = vld [vmem:[%s215 + $0x28] sm:$0xf]
      %v304 = vld [vmem:[%s215 + $0x2c] sm:$0xf]
      %v305 = vld [vmem:[%s215 + $0x30] sm:$0xf]
      %v306 = vld [vmem:[%s215 + $0x34] sm:$0xf]
      %v307 = vld [vmem:[%s215 + $0x38] sm:$0xf]
      %v308 = vld [vmem:[%s215 + $0x3c] sm:$0xf]
      %v309 = vld [vmem:[%s215 + $0x40] sm:$0xf]
      %v310 = vld [vmem:[%s215 + $0x44] sm:$0xf]
      %v311 = vld [vmem:[%s215 + $0x48] sm:$0xf]
      %v312 = vld [vmem:[%s215 + $0x4c] sm:$0xf]
      %v313 = vld [vmem:[%s215 + $0x50] sm:$0xf]
      %v314 = vld [vmem:[%s215 + $0x54] sm:$0xf]
      %v315 = vld [vmem:[%s215 + $0x58] sm:$0xf]
      %v316 = vld [vmem:[%s215 + $0x5c] sm:$0xf]
      %v317 = vld [vmem:[%s215 + $0x60] sm:$0xf]
      %v318 = vld [vmem:[%s215 + $0x64] sm:$0xf]
      %v319 = vld [vmem:[%s215 + $0x68] sm:$0xf]
      %v320 = vld [vmem:[%s215 + $0x6c] sm:$0xf]
      %v321 = vld [vmem:[%s215 + $0x70] sm:$0xf]
      %v322 = vld [vmem:[%s215 + $0x74] sm:$0xf]
      %v323 = vld [vmem:[%s215 + $0x78] sm:$0xf]
      %v324 = vld [vmem:[%s215 + $0x7c] sm:$0xf]
      %v325 = vld [vmem:[%s215 + $0x80] sm:$0xf]
      %v326 = vld [vmem:[%s215 + $0x84] sm:$0xf]
      %v327 = vld [vmem:[%s215 + $0x88] sm:$0xf]
      %v328 = vld [vmem:[%s215 + $0x8c] sm:$0xf]
      %v329 = vld [vmem:[%s215 + $0x90] sm:$0xf]
      %v330 = vld [vmem:[%s215 + $0x94] sm:$0x1]
      %v331 = vld [vmem:[%s218] sm:$0x1]
      %v333 = vlaneseq
      %v334 = vshrl.u32 %v333, 7
      %v335 = vsub.s32 0, %v334
      %v336 = vrot.slane %v331, %v335
      %v402 = vunpack.c.l.b16 %v229
      %v403 = vunpack.c.h.b16 %v229
      %v404 = vunpack.c.l.b16 %v230
      %v405 = vunpack.c.l.b16 %v231
      %v406 = vunpack.c.h.b16 %v231
      %v407 = vunpack.c.l.b16 %v232
      %v408 = vunpack.c.l.b16 %v233
      %v409 = vunpack.c.h.b16 %v233
      %v410 = vunpack.c.l.b16 %v234
      %v411 = vunpack.c.l.b16 %v235
      %v412 = vunpack.c.h.b16 %v235
      %v413 = vunpack.c.l.b16 %v236
      %v414 = vunpack.c.l.b16 %v237
      %v415 = vunpack.c.h.b16 %v237
      %v416 = vunpack.c.l.b16 %v238
      %v417 = vunpack.c.l.b16 %v239
      %v418 = vunpack.c.h.b16 %v239
      %v419 = vunpack.c.l.b16 %v240
      %v420 = vunpack.c.l.b16 %v241
      %v421 = vunpack.c.h.b16 %v241
      %v422 = vunpack.c.l.b16 %v242
      %v423 = vunpack.c.l.b16 %v243
      %v424 = vunpack.c.h.b16 %v243
      %v425 = vunpack.c.l.b16 %v244
      %v426 = vunpack.c.l.b16 %v245
      %v427 = vunpack.c.h.b16 %v245
      %v428 = vunpack.c.l.b16 %v246
      %v429 = vunpack.c.l.b16 %v247
      %v430 = vunpack.c.h.b16 %v247
      %v431 = vunpack.c.l.b16 %v248
      %v432 = vunpack.c.l.b16 %v249
      %v433 = vunpack.c.h.b16 %v249
      %v434 = vunpack.c.l.b16 %v250
      %v435 = vunpack.c.l.b16 %v251
      %v436 = vunpack.c.h.b16 %v251
      %v437 = vunpack.c.l.b16 %v252
      %v438 = vunpack.c.l.b16 %v253
      %v439 = vunpack.c.h.b16 %v253
      %v440 = vunpack.c.l.b16 %v254
      %v441 = vunpack.c.l.b16 %v255
      %v442 = vunpack.c.h.b16 %v255
      %v443 = vunpack.c.l.b16 %v256
      %v444 = vunpack.c.l.b16 %v257
      %v445 = vunpack.c.h.b16 %v257
      %v446 = vunpack.c.l.b16 %v258
      %v447 = vunpack.c.l.b16 %v259
      %v448 = vunpack.c.h.b16 %v259
      %v449 = vunpack.c.l.b16 %v260
      %v450 = vunpack.c.l.b16 %v261
      %v451 = vunpack.c.h.b16 %v261
      %v452 = vunpack.c.l.b16 %v262
      %v453 = vunpack.c.l.b16 %v263
      %v454 = vunpack.c.h.b16 %v263
      %v455 = vunpack.c.l.b16 %v264
      %v456 = vunpack.c.l.b16 %v265
      %v457 = vunpack.c.h.b16 %v265
      %v458 = vunpack.c.l.b16 %v266
      %v459 = vunpack.c.l.b16 %v267
      %v460 = vunpack.c.h.b16 %v267
      %v461 = vunpack.c.l.b16 %v268
      %v462 = vunpack.c.l.b16 %v269
      %v463 = vunpack.c.h.b16 %v269
      %v464 = vunpack.c.l.b16 %v270
      %v465 = vunpack.c.l.b16 %v271
      %v466 = vunpack.c.h.b16 %v271
      %v467 = vunpack.c.l.b16 %v272
      %v468 = vunpack.c.l.b16 %v273
      %v469 = vunpack.c.h.b16 %v273
      %v470 = vunpack.c.l.b16 %v274
      %v471 = vunpack.c.l.b16 %v275
      %v472 = vunpack.c.h.b16 %v275
      %v473 = vunpack.c.l.b16 %v276
      %v474 = vunpack.c.l.b16 %v277
      %v475 = vunpack.c.h.b16 %v277
      %v476 = vunpack.c.l.b16 %v278
      %v477 = vunpack.c.l.b16 %v279
      %v478 = vunpack.c.h.b16 %v279
      %v479 = vunpack.c.l.b16 %v280
      %v480 = vunpack.c.l.b16 %v281
      %v481 = vunpack.c.h.b16 %v281
      %v482 = vunpack.c.l.b16 %v282
      %v483 = vunpack.c.l.b16 %v283
      %v484 = vunpack.c.h.b16 %v283
      %v485 = vunpack.c.l.b16 %v284
      %v486 = vunpack.c.l.b16 %v285
      %v487 = vunpack.c.h.b16 %v285
      %v488 = vunpack.c.l.b16 %v286
      %v489 = vunpack.c.l.b16 %v287
      %v490 = vunpack.c.h.b16 %v287
      %v491 = vunpack.c.l.b16 %v288
      %v492 = vunpack.c.l.b16 %v289
      %v493 = vunpack.c.h.b16 %v289
      %v494 = vunpack.c.l.b16 %v290
      %v495 = vunpack.c.l.b16 %v291
      %v496 = vunpack.c.h.b16 %v291
      %v497 = vunpack.c.l.b16 %v292
      %v498 = vpack.c.b16 %v405, %v402
      %v499 = vpack.c.b16 %v406, %v403
      %v500 = vpack.c.b16 %v407, %v404
      %v501 = vpack.c.b16 %v411, %v408
      %v502 = vpack.c.b16 %v412, %v409
      %v503 = vpack.c.b16 %v413, %v410
      %v504 = vpack.c.b16 %v417, %v414
      %v505 = vpack.c.b16 %v418, %v415
      %v506 = vpack.c.b16 %v419, %v416
      %v507 = vpack.c.b16 %v423, %v420
      %v508 = vpack.c.b16 %v424, %v421
      %v509 = vpack.c.b16 %v425, %v422
      %v510 = vpack.c.b16 %v429, %v426
      %v511 = vpack.c.b16 %v430, %v427
      %v512 = vpack.c.b16 %v431, %v428
      %v513 = vpack.c.b16 %v435, %v432
      %v514 = vpack.c.b16 %v436, %v433
      %v515 = vpack.c.b16 %v437, %v434
      %v516 = vpack.c.b16 %v441, %v438
      %v517 = vpack.c.b16 %v442, %v439
      %v518 = vpack.c.b16 %v443, %v440
      %v519 = vpack.c.b16 %v447, %v444
      %v520 = vpack.c.b16 %v448, %v445
      %v521 = vpack.c.b16 %v449, %v446
      %v522 = vpack.c.b16 %v453, %v450
      %v523 = vpack.c.b16 %v454, %v451
      %v524 = vpack.c.b16 %v455, %v452
      %v525 = vpack.c.b16 %v459, %v456
      %v526 = vpack.c.b16 %v460, %v457
      %v527 = vpack.c.b16 %v461, %v458
      %v528 = vpack.c.b16 %v465, %v462
      %v529 = vpack.c.b16 %v466, %v463
      %v530 = vpack.c.b16 %v467, %v464
      %v531 = vpack.c.b16 %v471, %v468
      %v532 = vpack.c.b16 %v472, %v469
      %v533 = vpack.c.b16 %v473, %v470
      %v534 = vpack.c.b16 %v477, %v474
      %v535 = vpack.c.b16 %v478, %v475
      %v536 = vpack.c.b16 %v479, %v476
      %v537 = vpack.c.b16 %v483, %v480
      %v538 = vpack.c.b16 %v484, %v481
      %v539 = vpack.c.b16 %v485, %v482
      %v540 = vpack.c.b16 %v489, %v486
      %v541 = vpack.c.b16 %v490, %v487
      %v542 = vpack.c.b16 %v491, %v488
      %v543 = vpack.c.b16 %v495, %v492
      %v544 = vpack.c.b16 %v496, %v493
      %v545 = vpack.c.b16 %v497, %v494
      %v616 = vunpack.c.l.b16 %v293
      %v617 = vunpack.c.l.b16 %v294
      %v618 = vunpack.c.l.b16 %v295
      %v619 = vunpack.c.l.b16 %v296
      %v620 = vunpack.c.l.b16 %v297
      %v621 = vunpack.c.l.b16 %v298
      %v622 = vunpack.c.l.b16 %v299
      %v623 = vunpack.c.l.b16 %v300
      %v624 = vunpack.c.l.b16 %v301
      %v625 = vunpack.c.l.b16 %v302
      %v626 = vunpack.c.l.b16 %v303
      %v627 = vunpack.c.l.b16 %v304
      %v628 = vunpack.c.l.b16 %v305
      %v629 = vunpack.c.l.b16 %v306
      %v630 = vunpack.c.l.b16 %v307
      %v631 = vunpack.c.l.b16 %v308
      %v632 = vunpack.c.l.b16 %v309
      %v633 = vunpack.c.l.b16 %v310
      %v634 = vunpack.c.l.b16 %v311
      %v635 = vunpack.c.l.b16 %v312
      %v636 = vunpack.c.l.b16 %v313
      %v637 = vunpack.c.l.b16 %v314
      %v638 = vunpack.c.l.b16 %v315
      %v639 = vunpack.c.l.b16 %v316
      %v640 = vunpack.c.l.b16 %v317
      %v641 = vunpack.c.l.b16 %v318
      %v642 = vunpack.c.l.b16 %v319
      %v643 = vunpack.c.l.b16 %v320
      %v644 = vunpack.c.l.b16 %v321
      %v645 = vunpack.c.l.b16 %v322
      %v646 = vunpack.c.l.b16 %v323
      %v647 = vunpack.c.l.b16 %v324
      %v648 = vunpack.c.l.b16 %v325
      %v649 = vunpack.c.l.b16 %v326
      %v650 = vunpack.c.l.b16 %v327
      %v651 = vunpack.c.l.b16 %v328
      %v652 = vunpack.c.l.b16 %v329
      %v653 = vunpack.c.l.b16 %v330
      %v654 = vpack.c.b16 %v617, %v616
      %v655 = vpack.c.b16 %v619, %v618
      %v656 = vpack.c.b16 %v621, %v620
      %v657 = vpack.c.b16 %v623, %v622
      %v658 = vpack.c.b16 %v625, %v624
      %v659 = vpack.c.b16 %v627, %v626
      %v660 = vpack.c.b16 %v629, %v628
      %v661 = vpack.c.b16 %v631, %v630
      %v662 = vpack.c.b16 %v633, %v632
      %v663 = vpack.c.b16 %v635, %v634
      %v664 = vpack.c.b16 %v637, %v636
      %v665 = vpack.c.b16 %v639, %v638
      %v666 = vpack.c.b16 %v641, %v640
      %v667 = vpack.c.b16 %v643, %v642
      %v668 = vpack.c.b16 %v645, %v644
      %v669 = vpack.c.b16 %v647, %v646
      %v670 = vpack.c.b16 %v649, %v648
      %v671 = vpack.c.b16 %v651, %v650
      %v672 = vpack.c.b16 %v653, %v652
      %vm691 = vcmask 334848
      %v693 = vsel %vm691, %v500, 0
      %v696 = vsel %vm691, %v503, 0
      %v699 = vsel %vm691, %v506, 0
      %v702 = vsel %vm691, %v509, 0
      %v705 = vsel %vm691, %v512, 0
      %v708 = vsel %vm691, %v515, 0
      %v711 = vsel %vm691, %v518, 0
      %v714 = vsel %vm691, %v521, 0
      %v717 = vsel %vm691, %v524, 0
      %v720 = vsel %vm691, %v527, 0
      %v723 = vsel %vm691, %v530, 0
      %v726 = vsel %vm691, %v533, 0
      %v729 = vsel %vm691, %v536, 0
      %v732 = vsel %vm691, %v539, 0
      %v735 = vsel %vm691, %v542, 0
      %v738 = vsel %vm691, %v545, 0
      %vm740 = vcmask 1043456
      %vm741 = vcmask 1044480
      %v742 = vsel %vm740, 4294967295, 65535
      %v743 = vsel %vm741, %v742, 0
      %v745 = vand.u32 %v672, %v743
      %747 = vmatprep.subr.bf16.mxu0 0
      %748 = vmatpush1.bf16.msra.mxu0 %v654
      %749 = vmatprep.subr.bf16.mxu0 0
      %750 = vmatpush1.bf16.msra.mxu0 %v655
      %751 = vmatprep.subr.bf16.mxu0 0
      %752 = vmatpush1.bf16.msra.mxu0 %v656
      %753 = vmatprep.subr.bf16.mxu0 0
      %754 = vmatpush1.bf16.msra.mxu0 %v657
      %755 = vmatprep.subr.bf16.mxu0 0
      %756 = vmatpush1.bf16.msra.mxu0 %v658
      %757 = vmatprep.subr.bf16.mxu0 0
      %758 = vmatpush1.bf16.msra.mxu0 %v659
      %759 = vmatprep.subr.bf16.mxu0 0
      %760 = vmatpush1.bf16.msra.mxu0 %v660
      %761 = vmatprep.subr.bf16.mxu0 0
      %762 = vmatpush1.bf16.msra.mxu0 %v661
      %763 = vmatprep.subr.bf16.mxu0 0
      %764 = vmatpush1.bf16.msra.mxu0 %v662
      %765 = vmatprep.subr.bf16.mxu0 0
      %766 = vmatpush1.bf16.msra.mxu0 %v663
      %767 = vmatprep.subr.bf16.mxu0 0
      %768 = vmatpush1.bf16.msra.mxu0 %v664
      %769 = vmatprep.subr.bf16.mxu0 0
      %770 = vmatpush1.bf16.msra.mxu0 %v665
      %771 = vmatprep.subr.bf16.mxu0 0
      %772 = vmatpush1.bf16.msra.mxu0 %v666
      %773 = vmatprep.subr.bf16.mxu0 0
      %774 = vmatpush1.bf16.msra.mxu0 %v667
      %775 = vmatprep.subr.bf16.mxu0 0
      %776 = vmatpush1.bf16.msra.mxu0 %v668
      %777 = vmatprep.subr.bf16.mxu0 0
      %778 = vmatpush1.bf16.msra.mxu0 %v669
      %779 = vmatprep.mubr.bf16.mxu0 %v499
      %780 = vmatmul.mubr.bf16.gmra.mrb[0].mxu0 %v498
      %v781 = vpop.f32.mrb[0].mxu0
      %v782 = vadd.f32 %v336, %v781
      %v783 = vpop.f32.mrb[0].mxu0
      %v784 = vpop.f32.mrb[0].mxu0
      %v785 = vadd.f32 %v336, %v784
      %v786 = vpop.f32.mrb[0].mxu0
      %787 = vmatprep.mubr.bf16.mxu0 %v502
      %788 = vmatmul.mubr.bf16.gmra.mrb[0].mxu0 %v501
      %v789 = vpop.f32.mrb[0].mxu0
      %v790 = vadd.f32 %v336, %v789
      %v791 = vpop.f32.mrb[0].mxu0
      %v792 = vpop.f32.mrb[0].mxu0
      %v793 = vadd.f32 %v336, %v792
      %v794 = vpop.f32.mrb[0].mxu0
      %795 = vmatprep.mubr.bf16.mxu0 %v505
      %796 = vmatmul.mubr.bf16.gmra.mrb[0].mxu0 %v504
      %v797 = vpop.f32.mrb[0].mxu0
      %v798 = vadd.f32 %v336, %v797
      %v799 = vpop.f32.mrb[0].mxu0
      %v800 = vpop.f32.mrb[0].mxu0
      %v801 = vadd.f32 %v336, %v800
      %v802 = vpop.f32.mrb[0].mxu0
      %803 = vmatprep.mubr.bf16.mxu0 %v508
      %804 = vmatmul.mubr.bf16.gmra.mrb[0].mxu0 %v507
      %v805 = vpop.f32.mrb[0].mxu0
      %v806 = vadd.f32 %v336, %v805
      %v807 = vpop.f32.mrb[0].mxu0
      %v808 = vpop.f32.mrb[0].mxu0
      %v809 = vadd.f32 %v336, %v808
      %v810 = vpop.f32.mrb[0].mxu0
      %811 = vmatprep.mubr.bf16.mxu0 %v511
      %812 = vmatmul.mubr.bf16.gmra.mrb[0].mxu0 %v510
      %v813 = vpop.f32.mrb[0].mxu0
      %v814 = vadd.f32 %v336, %v813
      %v815 = vpop.f32.mrb[0].mxu0
      %v816 = vpop.f32.mrb[0].mxu0
      %v817 = vadd.f32 %v336, %v816
      %v818 = vpop.f32.mrb[0].mxu0
      %819 = vmatprep.mubr.bf16.mxu0 %v514
      %820 = vmatmul.mubr.bf16.gmra.mrb[0].mxu0 %v513
      %v821 = vpop.f32.mrb[0].mxu0
      %v822 = vadd.f32 %v336, %v821
      %v823 = vpop.f32.mrb[0].mxu0
      %v824 = vpop.f32.mrb[0].mxu0
      %v825 = vadd.f32 %v336, %v824
      %v826 = vpop.f32.mrb[0].mxu0
      %827 = vmatprep.mubr.bf16.mxu0 %v517
      %828 = vmatmul.mubr.bf16.gmra.mrb[0].mxu0 %v516
      %v829 = vpop.f32.mrb[0].mxu0
      %v830 = vadd.f32 %v336, %v829
      %v831 = vpop.f32.mrb[0].mxu0
      %v832 = vpop.f32.mrb[0].mxu0
      %v833 = vadd.f32 %v336, %v832
      %v834 = vpop.f32.mrb[0].mxu0
      %835 = vmatprep.mubr.bf16.mxu0 %v520
      %836 = vmatmul.mubr.bf16.gmra.mrb[0].mxu0 %v519
      %v837 = vpop.f32.mrb[0].mxu0
      %v838 = vadd.f32 %v336, %v837
      %v839 = vpop.f32.mrb[0].mxu0
      %v840 = vpop.f32.mrb[0].mxu0
      %v841 = vadd.f32 %v336, %v840
      %v842 = vpop.f32.mrb[0].mxu0
      %843 = vmatprep.mubr.bf16.mxu0 %v523
      %844 = vmatmul.mubr.bf16.gmra.mrb[0].mxu0 %v522
      %v845 = vpop.f32.mrb[0].mxu0
      %v846 = vadd.f32 %v336, %v845
      %v847 = vpop.f32.mrb[0].mxu0
      %v848 = vpop.f32.mrb[0].mxu0
      %v849 = vadd.f32 %v336, %v848
      %v850 = vpop.f32.mrb[0].mxu0
      %851 = vmatprep.mubr.bf16.mxu0 %v526
      %852 = vmatmul.mubr.bf16.gmra.mrb[0].mxu0 %v525
      %v853 = vpop.f32.mrb[0].mxu0
      %v854 = vadd.f32 %v336, %v853
      %v855 = vpop.f32.mrb[0].mxu0
      %v856 = vpop.f32.mrb[0].mxu0
      %v857 = vadd.f32 %v336, %v856
      %v858 = vpop.f32.mrb[0].mxu0
      %859 = vmatprep.mubr.bf16.mxu0 %v529
      %860 = vmatmul.mubr.bf16.gmra.mrb[0].mxu0 %v528
      %v861 = vpop.f32.mrb[0].mxu0
      %v862 = vadd.f32 %v336, %v861
      %v863 = vpop.f32.mrb[0].mxu0
      %v864 = vpop.f32.mrb[0].mxu0
      %v865 = vadd.f32 %v336, %v864
      %v866 = vpop.f32.mrb[0].mxu0
      %867 = vmatprep.mubr.bf16.mxu0 %v532
      %868 = vmatmul.mubr.bf16.gmra.mrb[0].mxu0 %v531
      %v869 = vpop.f32.mrb[0].mxu0
      %v870 = vadd.f32 %v336, %v869
      %v871 = vpop.f32.mrb[0].mxu0
      %v872 = vpop.f32.mrb[0].mxu0
      %v873 = vadd.f32 %v336, %v872
      %v874 = vpop.f32.mrb[0].mxu0
      %875 = vmatprep.mubr.bf16.mxu0 %v535
      %876 = vmatmul.mubr.bf16.gmra.mrb[0].mxu0 %v534
      %v877 = vpop.f32.mrb[0].mxu0
      %v878 = vadd.f32 %v336, %v877
      %v879 = vpop.f32.mrb[0].mxu0
      %v880 = vpop.f32.mrb[0].mxu0
      %v881 = vadd.f32 %v336, %v880
      %v882 = vpop.f32.mrb[0].mxu0
      %883 = vmatprep.mubr.bf16.mxu0 %v538
      %884 = vmatmul.mubr.bf16.gmra.mrb[0].mxu0 %v537
      %v885 = vpop.f32.mrb[0].mxu0
      %v886 = vadd.f32 %v336, %v885
      %v887 = vpop.f32.mrb[0].mxu0
      %v888 = vpop.f32.mrb[0].mxu0
      %v889 = vadd.f32 %v336, %v888
      %v890 = vpop.f32.mrb[0].mxu0
      %891 = vmatprep.mubr.bf16.mxu0 %v541
      %892 = vmatmul.mubr.bf16.gmra.mrb[0].mxu0 %v540
      %v893 = vpop.f32.mrb[0].mxu0
      %v894 = vadd.f32 %v336, %v893
      %v895 = vpop.f32.mrb[0].mxu0
      %v896 = vpop.f32.mrb[0].mxu0
      %v897 = vadd.f32 %v336, %v896
      %v898 = vpop.f32.mrb[0].mxu0
      %899 = vmatprep.mubr.bf16.mxu0 %v544
      %900 = vmatmul.mubr.bf16.gmra.mrb[0].mxu0 %v543
      %v901 = vpop.f32.mrb[0].mxu0
      %v902 = vadd.f32 %v336, %v901
      %v903 = vpop.f32.mrb[0].mxu0
      %v904 = vpop.f32.mrb[0].mxu0
      %v905 = vadd.f32 %v336, %v904
      %v906 = vpop.f32.mrb[0].mxu0
      %907 = vdwg.mxu0
      %908 = vmatprep.subr.bf16.mxu0 0
      %909 = vmatpush1.bf16.msra.mxu0 %v670
      %910 = vmatprep.subr.bf16.mxu0 0
      %911 = vmatpush1.bf16.msra.mxu0 %v671
      %912 = vmatprep.subr.bf16.mxu0 0
      %913 = vmatpush1.bf16.msra.mxu0 %v745
      %914 = vmatprep.subr.bf16.mxu0 0
      %915 = vmatpush1.bf16.msra.mxu0 0
      %916 = vmatprep.subr.bf16.mxu0 0
      %917 = vmatpush1.bf16.msra.mxu0 0
      %918 = vmatprep.subr.bf16.mxu0 0
      %919 = vmatpush1.bf16.msra.mxu0 0
      %920 = vmatprep.subr.bf16.mxu0 0
      %921 = vmatpush1.bf16.msra.mxu0 0
      %922 = vmatprep.subr.bf16.mxu0 0
      %923 = vmatpush1.bf16.msra.mxu0 0
      %924 = vmatprep.subr.bf16.mxu0 0
      %925 = vmatpush1.bf16.msra.mxu0 0
      %926 = vmatprep.subr.bf16.mxu0 0
      %927 = vmatpush1.bf16.msra.mxu0 0
      %928 = vmatprep.subr.bf16.mxu0 0
      %929 = vmatpush1.bf16.msra.mxu0 0
      %930 = vmatprep.subr.bf16.mxu0 0
      %931 = vmatpush1.bf16.msra.mxu0 0
      %932 = vmatprep.subr.bf16.mxu0 0
      %933 = vmatpush1.bf16.msra.mxu0 0
      %934 = vmatprep.subr.bf16.mxu0 0
      %935 = vmatpush1.bf16.msra.mxu0 0
      %936 = vmatprep.subr.bf16.mxu0 0
      %937 = vmatpush1.bf16.msra.mxu0 0
      %938 = vmatprep.subr.bf16.mxu0 0
      %939 = vmatpush1.bf16.msra.mxu0 0
      %940 = vmatprep.mubr.bf16.mxu0 0
      %941 = vmatmul.mubr.bf16.gmra.mrb[0].mxu0 %v693
      %v942 = vpop.f32.mrb[0].mxu0
      %v943 = vadd.f32 %v782, %v942
      %v944 = vpop.f32.mrb[0].mxu0
      %v945 = vpop.f32.mrb[0].mxu0
      %v946 = vadd.f32 %v785, %v945
      %v947 = vpop.f32.mrb[0].mxu0
      %948 = vmatprep.mubr.bf16.mxu0 0
      %949 = vmatmul.mubr.bf16.gmra.mrb[0].mxu0 %v696
      %v950 = vpop.f32.mrb[0].mxu0
      %v951 = vadd.f32 %v790, %v950
      %v952 = vpop.f32.mrb[0].mxu0
      %v953 = vpop.f32.mrb[0].mxu0
      %v954 = vadd.f32 %v793, %v953
      %v955 = vpop.f32.mrb[0].mxu0
      %956 = vmatprep.mubr.bf16.mxu0 0
      %957 = vmatmul.mubr.bf16.gmra.mrb[0].mxu0 %v699
      %v958 = vpop.f32.mrb[0].mxu0
      %v959 = vadd.f32 %v798, %v958
      %v960 = vpop.f32.mrb[0].mxu0
      %v961 = vpop.f32.mrb[0].mxu0
      %v962 = vadd.f32 %v801, %v961
      %v963 = vpop.f32.mrb[0].mxu0
      %964 = vmatprep.mubr.bf16.mxu0 0
      %965 = vmatmul.mubr.bf16.gmra.mrb[0].mxu0 %v702
      %v966 = vpop.f32.mrb[0].mxu0
      %v967 = vadd.f32 %v806, %v966
      %v968 = vpop.f32.mrb[0].mxu0
      %v969 = vpop.f32.mrb[0].mxu0
      %v970 = vadd.f32 %v809, %v969
      %v971 = vpop.f32.mrb[0].mxu0
      %972 = vmatprep.mubr.bf16.mxu0 0
      %973 = vmatmul.mubr.bf16.gmra.mrb[0].mxu0 %v705
      %v974 = vpop.f32.mrb[0].mxu0
      %v975 = vadd.f32 %v814, %v974
      %v976 = vpop.f32.mrb[0].mxu0
      %v977 = vpop.f32.mrb[0].mxu0
      %v978 = vadd.f32 %v817, %v977
      %v979 = vpop.f32.mrb[0].mxu0
      %980 = vmatprep.mubr.bf16.mxu0 0
      %981 = vmatmul.mubr.bf16.gmra.mrb[0].mxu0 %v708
      %v982 = vpop.f32.mrb[0].mxu0
      %v983 = vadd.f32 %v822, %v982
      %v984 = vpop.f32.mrb[0].mxu0
      %v985 = vpop.f32.mrb[0].mxu0
      %v986 = vadd.f32 %v825, %v985
      %v987 = vpop.f32.mrb[0].mxu0
      %988 = vmatprep.mubr.bf16.mxu0 0
      %989 = vmatmul.mubr.bf16.gmra.mrb[0].mxu0 %v711
      %v990 = vpop.f32.mrb[0].mxu0
      %v991 = vadd.f32 %v830, %v990
      %v992 = vpop.f32.mrb[0].mxu0
      %v993 = vpop.f32.mrb[0].mxu0
      %v994 = vadd.f32 %v833, %v993
      %v995 = vpop.f32.mrb[0].mxu0
      %996 = vmatprep.mubr.bf16.mxu0 0
      %997 = vmatmul.mubr.bf16.gmra.mrb[0].mxu0 %v714
      %v998 = vpop.f32.mrb[0].mxu0
      %v999 = vadd.f32 %v838, %v998
      %v1000 = vpop.f32.mrb[0].mxu0
      %v1001 = vpop.f32.mrb[0].mxu0
      %v1002 = vadd.f32 %v841, %v1001
      %v1003 = vpop.f32.mrb[0].mxu0
      %1004 = vmatprep.mubr.bf16.mxu0 0
      %1005 = vmatmul.mubr.bf16.gmra.mrb[0].mxu0 %v717
      %v1006 = vpop.f32.mrb[0].mxu0
      %v1007 = vadd.f32 %v846, %v1006
      %v1008 = vpop.f32.mrb[0].mxu0
      %v1009 = vpop.f32.mrb[0].mxu0
      %v1010 = vadd.f32 %v849, %v1009
      %v1011 = vpop.f32.mrb[0].mxu0
      %1012 = vmatprep.mubr.bf16.mxu0 0
      %1013 = vmatmul.mubr.bf16.gmra.mrb[0].mxu0 %v720
      %v1014 = vpop.f32.mrb[0].mxu0
      %v1015 = vadd.f32 %v854, %v1014
      %v1016 = vpop.f32.mrb[0].mxu0
      %v1017 = vpop.f32.mrb[0].mxu0
      %v1018 = vadd.f32 %v857, %v1017
      %v1019 = vpop.f32.mrb[0].mxu0
      %1020 = vmatprep.mubr.bf16.mxu0 0
      %1021 = vmatmul.mubr.bf16.gmra.mrb[0].mxu0 %v723
      %v1022 = vpop.f32.mrb[0].mxu0
      %v1023 = vadd.f32 %v862, %v1022
      %v1024 = vpop.f32.mrb[0].mxu0
      %v1025 = vpop.f32.mrb[0].mxu0
      %v1026 = vadd.f32 %v865, %v1025
      %v1027 = vpop.f32.mrb[0].mxu0
      %1028 = vmatprep.mubr.bf16.mxu0 0
      %1029 = vmatmul.mubr.bf16.gmra.mrb[0].mxu0 %v726
      %v1030 = vpop.f32.mrb[0].mxu0
      %v1031 = vadd.f32 %v870, %v1030
      %v1032 = vpop.f32.mrb[0].mxu0
      %v1033 = vpop.f32.mrb[0].mxu0
      %v1034 = vadd.f32 %v873, %v1033
      %v1035 = vpop.f32.mrb[0].mxu0
      %1036 = vmatprep.mubr.bf16.mxu0 0
      %1037 = vmatmul.mubr.bf16.gmra.mrb[0].mxu0 %v729
      %v1038 = vpop.f32.mrb[0].mxu0
      %v1039 = vadd.f32 %v878, %v1038
      %v1040 = vpop.f32.mrb[0].mxu0
      %v1041 = vpop.f32.mrb[0].mxu0
      %v1042 = vadd.f32 %v881, %v1041
      %v1043 = vpop.f32.mrb[0].mxu0
      %1044 = vmatprep.mubr.bf16.mxu0 0
      %1045 = vmatmul.mubr.bf16.gmra.mrb[0].mxu0 %v732
      %v1046 = vpop.f32.mrb[0].mxu0
      %v1047 = vadd.f32 %v886, %v1046
      %v1048 = vpop.f32.mrb[0].mxu0
      %v1049 = vpop.f32.mrb[0].mxu0
      %v1050 = vadd.f32 %v889, %v1049
      %v1051 = vpop.f32.mrb[0].mxu0
      %1052 = vmatprep.mubr.bf16.mxu0 0
      %1053 = vmatmul.mubr.bf16.gmra.mrb[0].mxu0 %v735
      %v1054 = vpop.f32.mrb[0].mxu0
      %v1055 = vadd.f32 %v894, %v1054
      %v1056 = vpop.f32.mrb[0].mxu0
      %v1057 = vpop.f32.mrb[0].mxu0
      %v1058 = vadd.f32 %v897, %v1057
      %v1059 = vpop.f32.mrb[0].mxu0
      %1060 = vmatprep.mubr.bf16.mxu0 0
      %1061 = vmatmul.mubr.bf16.gmra.mrb[0].mxu0 %v738
      %v1062 = vpop.f32.mrb[0].mxu0
      %v1063 = vadd.f32 %v902, %v1062
      %v1064 = vpop.f32.mrb[0].mxu0
      %v1065 = vpop.f32.mrb[0].mxu0
      %v1066 = vadd.f32 %v905, %v1065
      %v1067 = vpop.f32.mrb[0].mxu0
      %1068 = vdwg.mxu0
      %v1069 = vmax.f32 %v943, 0.0
      %v1070 = vmax.f32 %v946, 0.0
      %v1071 = vmax.f32 %v951, 0.0
      %v1072 = vmax.f32 %v954, 0.0
      %v1073 = vmax.f32 %v959, 0.0
      %v1074 = vmax.f32 %v962, 0.0
      %v1075 = vmax.f32 %v967, 0.0
      %v1076 = vmax.f32 %v970, 0.0
      %v1077 = vmax.f32 %v975, 0.0
      %v1078 = vmax.f32 %v978, 0.0
      %v1079 = vmax.f32 %v983, 0.0
      %v1080 = vmax.f32 %v986, 0.0
      %v1081 = vmax.f32 %v991, 0.0
      %v1082 = vmax.f32 %v994, 0.0
      %v1083 = vmax.f32 %v999, 0.0
      %v1084 = vmax.f32 %v1002, 0.0
      %v1085 = vmax.f32 %v1007, 0.0
      %v1086 = vmax.f32 %v1010, 0.0
      %v1087 = vmax.f32 %v1015, 0.0
      %v1088 = vmax.f32 %v1018, 0.0
      %v1089 = vmax.f32 %v1023, 0.0
      %v1090 = vmax.f32 %v1026, 0.0
      %v1091 = vmax.f32 %v1031, 0.0
      %v1092 = vmax.f32 %v1034, 0.0
      %v1093 = vmax.f32 %v1039, 0.0
      %v1094 = vmax.f32 %v1042, 0.0
      %v1095 = vmax.f32 %v1047, 0.0
      %v1096 = vmax.f32 %v1050, 0.0
      %v1097 = vmax.f32 %v1055, 0.0
      %v1098 = vmax.f32 %v1058, 0.0
      %v1099 = vmax.f32 %v1063, 0.0
      %v1100 = vmax.f32 %v1066, 0.0
      %v1101 = vpack.c.bf16 %v1070, %v1069
      %v1102 = vpack.c.bf16 %v1072, %v1071
      %v1103 = vpack.c.bf16 %v1074, %v1073
      %v1104 = vpack.c.bf16 %v1076, %v1075
      %v1105 = vpack.c.bf16 %v1078, %v1077
      %v1106 = vpack.c.bf16 %v1080, %v1079
      %v1107 = vpack.c.bf16 %v1082, %v1081
      %v1108 = vpack.c.bf16 %v1084, %v1083
      %v1109 = vpack.c.bf16 %v1086, %v1085
      %v1110 = vpack.c.bf16 %v1088, %v1087
      %v1111 = vpack.c.bf16 %v1090, %v1089
      %v1112 = vpack.c.bf16 %v1092, %v1091
      %v1113 = vpack.c.bf16 %v1094, %v1093
      %v1114 = vpack.c.bf16 %v1096, %v1095
      %v1115 = vpack.c.bf16 %v1098, %v1097
      %v1116 = vpack.c.bf16 %v1100, %v1099
      %v1133 = vunpack.c.l.b16 %v1101
      %v1134 = vunpack.c.h.b16 %v1101
      %v1135 = vunpack.c.l.b16 %v1102
      %v1136 = vunpack.c.h.b16 %v1102
      %v1137 = vunpack.c.l.b16 %v1103
      %v1138 = vunpack.c.h.b16 %v1103
      %v1139 = vunpack.c.l.b16 %v1104
      %v1140 = vunpack.c.h.b16 %v1104
      %v1141 = vunpack.c.l.b16 %v1105
      %v1142 = vunpack.c.h.b16 %v1105
      %v1143 = vunpack.c.l.b16 %v1106
      %v1144 = vunpack.c.h.b16 %v1106
      %v1145 = vunpack.c.l.b16 %v1107
      %v1146 = vunpack.c.h.b16 %v1107
      %v1147 = vunpack.c.l.b16 %v1108
      %v1148 = vunpack.c.h.b16 %v1108
      %v1149 = vunpack.c.l.b16 %v1109
      %v1150 = vunpack.c.h.b16 %v1109
      %v1151 = vunpack.c.l.b16 %v1110
      %v1152 = vunpack.c.h.b16 %v1110
      %v1153 = vunpack.c.l.b16 %v1111
      %v1154 = vunpack.c.h.b16 %v1111
      %v1155 = vunpack.c.l.b16 %v1112
      %v1156 = vunpack.c.h.b16 %v1112
      %v1157 = vunpack.c.l.b16 %v1113
      %v1158 = vunpack.c.h.b16 %v1113
      %v1159 = vunpack.c.l.b16 %v1114
      %v1160 = vunpack.c.h.b16 %v1114
      %v1161 = vunpack.c.l.b16 %v1115
      %v1162 = vunpack.c.h.b16 %v1115
      %v1163 = vunpack.c.l.b16 %v1116
      %v1164 = vunpack.c.h.b16 %v1116
      %v1165 = vpack.c.b16 %v1133, %v1133
      %v1166 = vpack.c.b16 %v1134, %v1134
      %v1167 = vpack.c.b16 %v1135, %v1135
      %v1168 = vpack.c.b16 %v1136, %v1136
      %v1169 = vpack.c.b16 %v1137, %v1137
      %v1170 = vpack.c.b16 %v1138, %v1138
      %v1171 = vpack.c.b16 %v1139, %v1139
      %v1172 = vpack.c.b16 %v1140, %v1140
      %v1173 = vpack.c.b16 %v1141, %v1141
      %v1174 = vpack.c.b16 %v1142, %v1142
      %v1175 = vpack.c.b16 %v1143, %v1143
      %v1176 = vpack.c.b16 %v1144, %v1144
      %v1177 = vpack.c.b16 %v1145, %v1145
      %v1178 = vpack.c.b16 %v1146, %v1146
      %v1179 = vpack.c.b16 %v1147, %v1147
      %v1180 = vpack.c.b16 %v1148, %v1148
      %v1181 = vpack.c.b16 %v1149, %v1149
      %v1182 = vpack.c.b16 %v1150, %v1150
      %v1183 = vpack.c.b16 %v1151, %v1151
      %v1184 = vpack.c.b16 %v1152, %v1152
      %v1185 = vpack.c.b16 %v1153, %v1153
      %v1186 = vpack.c.b16 %v1154, %v1154
      %v1187 = vpack.c.b16 %v1155, %v1155
      %v1188 = vpack.c.b16 %v1156, %v1156
      %v1189 = vpack.c.b16 %v1157, %v1157
      %v1190 = vpack.c.b16 %v1158, %v1158
      %v1191 = vpack.c.b16 %v1159, %v1159
      %v1192 = vpack.c.b16 %v1160, %v1160
      %v1193 = vpack.c.b16 %v1161, %v1161
      %v1194 = vpack.c.b16 %v1162, %v1162
      %v1195 = vpack.c.b16 %v1163, %v1163
      %v1196 = vpack.c.b16 %v1164, %v1164
      %vm1229 = vcmask 125952
      %1230 = vst.msk [vmem:[%s226] sm:$0xf] %vm1229, %v1165
      %1231 = vst.msk [vmem:[%s226 + $0x4] sm:$0xf] %vm1229, %v1166
      %1232 = vst.msk [vmem:[%s226 + $0x8] sm:$0xf] %vm1229, %v1167
      %1233 = vst.msk [vmem:[%s226 + $0xc] sm:$0xf] %vm1229, %v1168
      %1234 = vst.msk [vmem:[%s226 + $0x10] sm:$0xf] %vm1229, %v1169
      %1235 = vst.msk [vmem:[%s226 + $0x14] sm:$0xf] %vm1229, %v1170
      %1236 = vst.msk [vmem:[%s226 + $0x18] sm:$0xf] %vm1229, %v1171
      %1237 = vst.msk [vmem:[%s226 + $0x1c] sm:$0xf] %vm1229, %v1172
      %1238 = vst.msk [vmem:[%s226 + $0x20] sm:$0xf] %vm1229, %v1173
      %1239 = vst.msk [vmem:[%s226 + $0x24] sm:$0xf] %vm1229, %v1174
      %1240 = vst.msk [vmem:[%s226 + $0x28] sm:$0xf] %vm1229, %v1175
      %1241 = vst.msk [vmem:[%s226 + $0x2c] sm:$0xf] %vm1229, %v1176
      %1242 = vst.msk [vmem:[%s226 + $0x30] sm:$0xf] %vm1229, %v1177
      %1243 = vst.msk [vmem:[%s226 + $0x34] sm:$0xf] %vm1229, %v1178
      %1244 = vst.msk [vmem:[%s226 + $0x38] sm:$0xf] %vm1229, %v1179
      %1245 = vst.msk [vmem:[%s226 + $0x3c] sm:$0xf] %vm1229, %v1180
      %1246 = vst.msk [vmem:[%s226 + $0x40] sm:$0xf] %vm1229, %v1181
      %1247 = vst.msk [vmem:[%s226 + $0x44] sm:$0xf] %vm1229, %v1182
      %1248 = vst.msk [vmem:[%s226 + $0x48] sm:$0xf] %vm1229, %v1183
      %1249 = vst.msk [vmem:[%s226 + $0x4c] sm:$0xf] %vm1229, %v1184
      %1250 = vst.msk [vmem:[%s226 + $0x50] sm:$0xf] %vm1229, %v1185
      %1251 = vst.msk [vmem:[%s226 + $0x54] sm:$0xf] %vm1229, %v1186
      %1252 = vst.msk [vmem:[%s226 + $0x58] sm:$0xf] %vm1229, %v1187
      %1253 = vst.msk [vmem:[%s226 + $0x5c] sm:$0xf] %vm1229, %v1188
      %1254 = vst.msk [vmem:[%s226 + $0x60] sm:$0xf] %vm1229, %v1189
      %1255 = vst.msk [vmem:[%s226 + $0x64] sm:$0xf] %vm1229, %v1190
      %1256 = vst.msk [vmem:[%s226 + $0x68] sm:$0xf] %vm1229, %v1191
      %1257 = vst.msk [vmem:[%s226 + $0x6c] sm:$0xf] %vm1229, %v1192
      %1258 = vst.msk [vmem:[%s226 + $0x70] sm:$0xf] %vm1229, %v1193
      %1259 = vst.msk [vmem:[%s226 + $0x74] sm:$0xf] %vm1229, %v1194
      %1260 = vst.msk [vmem:[%s226 + $0x78] sm:$0xf] %vm1229, %v1195
      %1261 = vst.msk [vmem:[%s226 + $0x7c] sm:$0xf] %vm1229, %v1196
      %s1262 = smul.u32 32, %s18
      %p1263 = scmp.lt.s32.totalorder %s1262, 63
      %s1264 = scalar_select %p1263, %s1262, 63
      %p1265 = scmp.lt.s32.totalorder %s19, 0
      %s1266 = scalar_select %p1265, %s19, 0
      %s1267 = sadd.s32 %s1266, %s1264
      %s1268 = smul.addr %s1267, 4
      %s1269 = scalar_lea.vmem %s3, %s1268
      // Predicated region
      $region33: #{dae_forward.18} parent=31 // pred_check
        %p1270 = pneg %p124
      $region34: #{dae_forward.18} parent=31 // pred_check_branch
        %1272 = sbr.rel (%p1270) target = $region36
      $region35: #{dae_forward.18} parent=31 // pred_region
        %s1273 = smul.u32 32, %s18
      $region36: #{dae_forward.18} parent=31 // pred_fallthru
        _
    $region32: #{dae_forward.18} parent=5 // pred_fallthru
      _
    %p1274 = scmp.le.s32.totalorder 2, %s9
    // Predicated region
    $region37: #{dae_forward.18} parent=5 // pred_check
      %p1275 = pneg %p1274
    $region38: #{dae_forward.18} parent=5 // pred_check_branch
      %1277 = sbr.rel (%p1275) target = $region40
    $region39: #{dae_forward.18} parent=5 // pred_region
      %s1278 = ssub.s32 %s9, 2
      // Predicated region
      $region41: #{dae_forward.18} parent=39 // pred_check
        %p1279 = pneg %p130
      $region42: #{dae_forward.18} parent=39 // pred_check_branch
        %1281 = sbr.rel (%p1279) target = $region44
      $region43: #{dae_forward.18} parent=39 // pred_region
        %s1282 = smul.u32 32, %s20
        %p1283 = scmp.lt.s32.totalorder %s1282, 63
        %s1284 = scalar_select %p1283, %s1282, 63
        %p1285 = scmp.lt.s32.totalorder %s21, 0
        %s1286 = scalar_select %p1285, %s21, 0
        %s1287 = sadd.s32 %s1286, %s1284
        %s1288 = smul.addr %s1287, 4
        %s1289 = scalar_lea.vmem %s3, %s1288
      $region44: #{dae_forward.18} parent=39 // pred_fallthru
        _
    $region40: #{dae_forward.18} parent=5 // pred_fallthru
      _
  $region6: #{dae_forward.18} parent=0 // loop_footer
    %s13 = sadd.s32 1, %s9
  $region7: #{dae_forward.18} parent=0 // loop_footer_branch
    %8 = sbr.rel target = $region3
  $region8: #{dae_forward.18} parent=0 // loop_exit
    _

// kernel: dae_forward.19
$region0: #{dae_forward.19}
  #allocation0 [shape = 'u32[]', space=smem, size = 0x4, offset = 0x4, fixed_abs, tag = 'smem constant byte address 0x4 - core index']
  #allocation1 [shape = 'u32[144,128]{1,0:T(1,128)}', space=vmem, size = 0x12000, scoped, tag = 'internal scratch']
  %s0 = inlined_call_operand.vmem [shape: bf16[512,153], index: 0, kind: input, shape index: {}]
  %s1 = inlined_call_operand.vmem [shape: bf16[153,3], index: 1, kind: input, shape index: {}]
  %s2 = inlined_call_operand.vmem [shape: f32[1,3], index: 2, kind: input, shape index: {}]
  %s3 = inlined_call_operand.vmem [shape: f32[512,3], index: 3, kind: output, shape index: {}]
  %s4 = sld [smem:[#allocation0]]
  $region45: #{dae_forward.19} parent=0
    _
  %s6 = ssub.s32 1, %s4
  %s7 = scalar_select 0, %s6, %s4
  loop: start=0, step=1, limit=4
  $region2: #{dae_forward.19} parent=0 // loop_pre_header
    _
  $region3: #{dae_forward.19} parent=0 // loop_header
    %s9 = sphi 0, %s13
    %p10 = scmp.ge.s32.totalorder %s9, 4
    %s16 = sphi 0, %s28
    %s17 = sphi 0, %s24
    %s18 = sphi 0, %s16
    %s19 = sphi 0, %s17
    %s20 = sphi 0, %s18
    %s21 = sphi 0, %s19
    %s31 = sphi 0, %s33
    %s34 = sphi 0, %s31
    %s35 = sphi 0, %s34
    %s51 = sphi 0, %s35
    %s57 = sphi 0, %s59
    %s60 = sphi 0, %s57
    %s61 = sphi 0, %s60
    %s77 = sphi 0, %s61
    %s83 = sphi 0, %s85
    %s86 = sphi 0, %s83
    %s87 = sphi 0, %s86
    %s103 = sphi 0, %s87
    %s111 = sphi 0, %s113
    %s114 = sphi 0, %s111
    %s115 = sphi 0, %s114
    %s131 = sphi 0, %s115
  $region4: #{dae_forward.19} parent=0 // loop_header_branch
    %12 = sbr.rel (%p10) target = $region8
  $region5: #{dae_forward.19} parent=0 // loop_body
    %s14 = ssub.s32 %s9, 1
    %s15 = ssub.s32 %s9, 2
    %s22 = sadd.s32 1, %s17
    %p23 = scmp.ge.s32.totalorder %s22, 1
    %s24 = scalar_select %p23, 0, %s22
    %s25 = sadd.s32 1, %s16
    %s26 = scalar_select %p23, %s25, %s16
    %p27 = scmp.ge.s32.totalorder %s26, 2
    %s28 = scalar_select %p27, 0, %s26
    %s29 = ssub.s32 %s16, %s28
    %p30 = scmp.eq.s32.totalorder %s29, 0
    %s32 = sadd.s32 %s31, 1
    %s33 = scalar_select %p30, %s31, %s32
    %p36 = pneg %p30
    %p37 = scmp.eq.s32.totalorder %s9, 1
    %p38 = por %p36, %p37
    %p39 = scmp.ne.s32.totalorder %s31, %s34
    %p40 = scmp.eq.s32.totalorder %s9, 0
    %p41 = por %p39, %p40
    %p42 = scmp.ne.s32.totalorder %s31, %s34
    %p43 = scmp.eq.s32.totalorder %s14, 1
    %p44 = por %p42, %p43
    %p45 = scmp.ne.s32.totalorder %s34, %s35
    %p46 = scmp.eq.s32.totalorder %s14, 0
    %p47 = por %p45, %p46
    %p48 = scmp.ne.s32.totalorder %s34, %s35
    %p49 = scmp.eq.s32.totalorder %s15, 1
    %p50 = por %p48, %p49
    %p52 = scmp.ne.s32.totalorder %s35, %s51
    %p53 = scmp.eq.s32.totalorder %s15, 0
    %p54 = por %p52, %p53
    %s55 = ssub.s32 %s17, %s24
    %p56 = scmp.eq.s32.totalorder %s55, 0
    %s58 = sadd.s32 %s57, 1
    %s59 = scalar_select %p56, %s57, %s58
    %p62 = pneg %p56
    %p63 = scmp.eq.s32.totalorder %s9, 1
    %p64 = por %p62, %p63
    %p65 = scmp.ne.s32.totalorder %s57, %s60
    %p66 = scmp.eq.s32.totalorder %s9, 0
    %p67 = por %p65, %p66
    %p68 = scmp.ne.s32.totalorder %s57, %s60
    %p69 = scmp.eq.s32.totalorder %s14, 1
    %p70 = por %p68, %p69
    %p71 = scmp.ne.s32.totalorder %s60, %s61
    %p72 = scmp.eq.s32.totalorder %s14, 0
    %p73 = por %p71, %p72
    %p74 = scmp.ne.s32.totalorder %s60, %s61
    %p75 = scmp.eq.s32.totalorder %s15, 1
    %p76 = por %p74, %p75
    %p78 = scmp.ne.s32.totalorder %s61, %s77
    %p79 = scmp.eq.s32.totalorder %s15, 0
    %p80 = por %p78, %p79
    %s81 = ssub.s32 %s17, %s24
    %p82 = scmp.eq.s32.totalorder %s81, 0
    %s84 = sadd.s32 %s83, 1
    %s85 = scalar_select %p82, %s83, %s84
    %p88 = pneg %p82
    %p89 = scmp.eq.s32.totalorder %s9, 1
    %p90 = por %p88, %p89
    %p91 = scmp.ne.s32.totalorder %s83, %s86
    %p92 = scmp.eq.s32.totalorder %s9, 0
    %p93 = por %p91, %p92
    %p94 = scmp.ne.s32.totalorder %s83, %s86
    %p95 = scmp.eq.s32.totalorder %s14, 1
    %p96 = por %p94, %p95
    %p97 = scmp.ne.s32.totalorder %s86, %s87
    %p98 = scmp.eq.s32.totalorder %s14, 0
    %p99 = por %p97, %p98
    %p100 = scmp.ne.s32.totalorder %s86, %s87
    %p101 = scmp.eq.s32.totalorder %s15, 1
    %p102 = por %p100, %p101
    %p104 = scmp.ne.s32.totalorder %s87, %s103
    %p105 = scmp.eq.s32.totalorder %s15, 0
    %p106 = por %p104, %p105
    %s107 = ssub.s32 %s16, %s28
    %s108 = ssub.s32 %s17, %s24
    %s109 = sor.u32 %s107, %s108
    %p110 = scmp.eq.s32.totalorder %s109, 0
    %s112 = sadd.s32 %s111, 1
    %s113 = scalar_select %p110, %s111, %s112
    %p116 = pneg %p110
    %p117 = scmp.eq.s32.totalorder %s9, 1
    %p118 = por %p116, %p117
    %p119 = scmp.ne.s32.totalorder %s111, %s114
    %p120 = scmp.eq.s32.totalorder %s9, 0
    %p121 = por %p119, %p120
    %p122 = scmp.ne.s32.totalorder %s111, %s114
    %p123 = scmp.eq.s32.totalorder %s14, 1
    %p124 = por %p122, %p123
    %p125 = scmp.ne.s32.totalorder %s114, %s115
    %p126 = scmp.eq.s32.totalorder %s14, 0
    %p127 = por %p125, %p126
    %p128 = scmp.ne.s32.totalorder %s114, %s115
    %p129 = scmp.eq.s32.totalorder %s15, 1
    %p130 = por %p128, %p129
    %p132 = scmp.ne.s32.totalorder %s115, %s131
    %p133 = scmp.eq.s32.totalorder %s15, 0
    %p134 = por %p132, %p133
    %p135 = scmp.le.s32.totalorder 1, %s9
    %p136 = scmp.lt.s32.totalorder %s9, 3
    %p137 = pnand %p135, %p136
    %p138 = pneg %p137
    // Predicated region
    $region9: #{dae_forward.19} parent=5 // pred_check
      _
    $region10: #{dae_forward.19} parent=5 // pred_check_branch
      %140 = sbr.rel (%p137) target = $region12
    $region11: #{dae_forward.19} parent=5 // pred_region
      %s141 = ssub.s32 %s9, 1
      // Predicated region
      $region13: #{dae_forward.19} parent=11 // pred_check
        %p142 = pneg %p73
      $region14: #{dae_forward.19} parent=11 // pred_check_branch
        %144 = sbr.rel (%p142) target = $region16
      $region15: #{dae_forward.19} parent=11 // pred_region
        %p145 = scmp.lt.s32.totalorder %s19, 0
        %s146 = scalar_select %p145, %s19, 0
        %s147 = smul.addr %s146, 4
        %s148 = scalar_lea.vmem %s1, %s147
      $region16: #{dae_forward.19} parent=11 // pred_fallthru
        _
      // Predicated region
      $region17: #{dae_forward.19} parent=11 // pred_check
        %p149 = pneg %p99
      $region18: #{dae_forward.19} parent=11 // pred_check_branch
        %151 = sbr.rel (%p149) target = $region20
      $region19: #{dae_forward.19} parent=11 // pred_region
        %p152 = scmp.lt.s32.totalorder %s19, 0
        %s153 = scalar_select %p152, %s19, 0
        %s154 = scalar_lea.vmem %s2, %s153
      $region20: #{dae_forward.19} parent=11 // pred_fallthru
        _
    $region12: #{dae_forward.19} parent=5 // pred_fallthru
      _
    %p155 = scmp.lt.s32.totalorder %s9, 2
    // Predicated region
    $region21: #{dae_forward.19} parent=5 // pred_check
      %p156 = pneg %p155
    $region22: #{dae_forward.19} parent=5 // pred_check_branch
      %158 = sbr.rel (%p156) target = $region24
    $region23: #{dae_forward.19} parent=5 // pred_region
      // Predicated region
      $region25: #{dae_forward.19} parent=23 // pred_check
        %p159 = pneg %p41
      $region26: #{dae_forward.19} parent=23 // pred_check_branch
        %161 = sbr.rel (%p159) target = $region28
      $region27: #{dae_forward.19} parent=23 // pred_region
        %s162 = smul.u32 32, %s16
        %p163 = scmp.lt.s32.totalorder %s162, 63
        %s164 = scalar_select %p163, %s162, 63
        %s165 = smul.addr %s164, 2
        %s166 = smul.addr %s165, 4
        %s167 = scalar_lea.vmem %s0, %s166
        %s168 = smul.u32 32, %s16
      $region28: #{dae_forward.19} parent=23 // pred_fallthru
        _
    $region24: #{dae_forward.19} parent=5 // pred_fallthru
      _
    %p169 = scmp.le.s32.totalorder 1, %s9
    %p170 = scmp.lt.s32.totalorder %s9, 3
    %p171 = pnand %p169, %p170
    %p172 = pneg %p171
    // Predicated region
    $region29: #{dae_forward.19} parent=5 // pred_check
      _
    $region30: #{dae_forward.19} parent=5 // pred_check_branch
      %174 = sbr.rel (%p171) target = $region32
    $region31: #{dae_forward.19} parent=5 // pred_region
      %s175 = ssub.s32 %s9, 1
      %s176 = smul.u32 32, %s18
      %p177 = scmp.lt.s32.totalorder %s176, 63
      %s178 = scalar_select %p177, %s176, 63
      %s179 = smul.addr %s178, 2
      %s180 = smul.addr %s179, 4
      %s181 = scalar_lea.vmem %s0, %s180
      %p182 = pneg %p47
      %p183 = pneg %p44
      %p184 = scmp.lt.s32.totalorder %s19, 0
      %s185 = scalar_select %p184, %s19, 0
      %s186 = smul.addr %s185, 4
      %s187 = scalar_lea.vmem %s1, %s186
      %p188 = pneg %p73
      %p189 = pneg %p70
      %p190 = scmp.lt.s32.totalorder %s19, 0
      %s191 = scalar_select %p190, %s19, 0
      %s192 = scalar_lea.vmem %s2, %s191
      %p193 = pneg %p99
      %p194 = pneg %p96
      %p195 = pneg %p127
      %p196 = pneg %p124
      %s197 = smul.u32 32, %s18
      %p198 = scmp.lt.s32.totalorder %s197, 63
      %s199 = scalar_select %p198, %s197, 63
      %p200 = scmp.lt.s32.totalorder %s19, 0
      %s201 = scalar_select %p200, %s19, 0
      %s202 = sadd.s32 %s201, %s199
      %s203 = smul.addr %s202, 8
      %s204 = scalar_lea.vmem %s3, %s203
      %s205 = smul.u32 32, %s18
      %p206 = scmp.lt.s32.totalorder %s205, 63
      %s207 = scalar_select %p206, %s205, 63
      %s208 = smul.addr %s207, 2
      %s209 = smul.addr %s208, 4
      %s210 = scalar_lea.vmem %s0, %s209
      %s211 = smul.u32 32, %s18
      %p212 = scmp.lt.s32.totalorder %s19, 0
      %s213 = scalar_select %p212, %s19, 0
      %s214 = smul.addr %s213, 4
      %s215 = scalar_lea.vmem %s1, %s214
      %p216 = scmp.lt.s32.totalorder %s19, 0
      %s217 = scalar_select %p216, %s19, 0
      %s218 = scalar_lea.vmem %s2, %s217
      %s219 = smul.u32 32, %s18
      %p220 = scmp.lt.s32.totalorder %s219, 63
      %s221 = scalar_select %p220, %s219, 63
      %p222 = scmp.lt.s32.totalorder %s19, 0
      %s223 = scalar_select %p222, %s19, 0
      %s224 = sadd.s32 %s223, %s221
      %s225 = smul.addr %s224, 8
      %s226 = scalar_lea.vmem %s3, %s225
      %s227 = smul.u32 32, %s18
      %v229 = vld [vmem:[%s210] sm:$0xff]
      %v230 = vld [vmem:[%s210 + $0x8] sm:$0xff]
      %v231 = vld [vmem:[%s210 + $0x10] sm:$0xff]
      %v232 = vld [vmem:[%s210 + $0x18] sm:$0xff]
      %v233 = vld [vmem:[%s210 + $0x20] sm:$0xff]
      %v234 = vld [vmem:[%s210 + $0x28] sm:$0xff]
      %v235 = vld [vmem:[%s210 + $0x30] sm:$0xff]
      %v236 = vld [vmem:[%s210 + $0x38] sm:$0xff]
      %v237 = vld [vmem:[%s210 + $0x40] sm:$0xff]
      %v238 = vld [vmem:[%s210 + $0x48] sm:$0xff]
      %v239 = vld [vmem:[%s210 + $0x50] sm:$0xff]
      %v240 = vld [vmem:[%s210 + $0x58] sm:$0xff]
      %v241 = vld [vmem:[%s210 + $0x60] sm:$0xff]
      %v242 = vld [vmem:[%s210 + $0x68] sm:$0xff]
      %v243 = vld [vmem:[%s210 + $0x70] sm:$0xff]
      %v244 = vld [vmem:[%s210 + $0x78] sm:$0xff]
      %v245 = vld [vmem:[%s210 + $0x80] sm:$0xff]
      %v246 = vld [vmem:[%s210 + $0x88] sm:$0xff]
      %v247 = vld [vmem:[%s210 + $0x90] sm:$0xff]
      %v248 = vld [vmem:[%s210 + $0x98] sm:$0xff]
      %v249 = vld [vmem:[%s210 + $0xa0] sm:$0xff]
      %v250 = vld [vmem:[%s210 + $0xa8] sm:$0xff]
      %v251 = vld [vmem:[%s210 + $0xb0] sm:$0xff]
      %v252 = vld [vmem:[%s210 + $0xb8] sm:$0xff]
      %v253 = vld [vmem:[%s210 + $0xc0] sm:$0xff]
      %v254 = vld [vmem:[%s210 + $0xc8] sm:$0xff]
      %v255 = vld [vmem:[%s210 + $0xd0] sm:$0xff]
      %v256 = vld [vmem:[%s210 + $0xd8] sm:$0xff]
      %v257 = vld [vmem:[%s210 + $0xe0] sm:$0xff]
      %v258 = vld [vmem:[%s210 + $0xe8] sm:$0xff]
      %v259 = vld [vmem:[%s210 + $0xf0] sm:$0xff]
      %v260 = vld [vmem:[%s210 + $0xf8] sm:$0xff]
      %v261 = vld [vmem:[%s215] sm:$0xf]
      %v262 = vld [vmem:[%s215 + $0x4] sm:$0xf]
      %v263 = vld [vmem:[%s215 + $0x8] sm:$0xf]
      %v264 = vld [vmem:[%s215 + $0xc] sm:$0xf]
      %v265 = vld [vmem:[%s215 + $0x10] sm:$0xf]
      %v266 = vld [vmem:[%s215 + $0x14] sm:$0xf]
      %v267 = vld [vmem:[%s215 + $0x18] sm:$0xf]
      %v268 = vld [vmem:[%s215 + $0x1c] sm:$0xf]
      %v269 = vld [vmem:[%s215 + $0x20] sm:$0xf]
      %v270 = vld [vmem:[%s215 + $0x24] sm:$0xf]
      %v271 = vld [vmem:[%s215 + $0x28] sm:$0xf]
      %v272 = vld [vmem:[%s215 + $0x2c] sm:$0xf]
      %v273 = vld [vmem:[%s215 + $0x30] sm:$0xf]
      %v274 = vld [vmem:[%s215 + $0x34] sm:$0xf]
      %v275 = vld [vmem:[%s215 + $0x38] sm:$0xf]
      %v276 = vld [vmem:[%s215 + $0x3c] sm:$0xf]
      %v277 = vld [vmem:[%s215 + $0x40] sm:$0xf]
      %v278 = vld [vmem:[%s215 + $0x44] sm:$0xf]
      %v279 = vld [vmem:[%s215 + $0x48] sm:$0xf]
      %v280 = vld [vmem:[%s215 + $0x4c] sm:$0x1]
      %v281 = vld [vmem:[%s218] sm:$0x1]
      %v283 = vlaneseq
      %v284 = vshrl.u32 %v283, 7
      %v285 = vsub.s32 0, %v284
      %v286 = vrot.slane %v281, %v285
      %v320 = vunpack.c.l.b16 %v229
      %v321 = vunpack.c.h.b16 %v229
      %v322 = vunpack.c.l.b16 %v230
      %v323 = vunpack.c.h.b16 %v230
      %v324 = vunpack.c.l.b16 %v231
      %v325 = vunpack.c.h.b16 %v231
      %v326 = vunpack.c.l.b16 %v232
      %v327 = vunpack.c.h.b16 %v232
      %v328 = vunpack.c.l.b16 %v233
      %v329 = vunpack.c.h.b16 %v233
      %v330 = vunpack.c.l.b16 %v234
      %v331 = vunpack.c.h.b16 %v234
      %v332 = vunpack.c.l.b16 %v235
      %v333 = vunpack.c.h.b16 %v235
      %v334 = vunpack.c.l.b16 %v236
      %v335 = vunpack.c.h.b16 %v236
      %v336 = vunpack.c.l.b16 %v237
      %v337 = vunpack.c.h.b16 %v237
      %v338 = vunpack.c.l.b16 %v238
      %v339 = vunpack.c.h.b16 %v238
      %v340 = vunpack.c.l.b16 %v239
      %v341 = vunpack.c.h.b16 %v239
      %v342 = vunpack.c.l.b16 %v240
      %v343 = vunpack.c.h.b16 %v240
      %v344 = vunpack.c.l.b16 %v241
      %v345 = vunpack.c.h.b16 %v241
      %v346 = vunpack.c.l.b16 %v242
      %v347 = vunpack.c.h.b16 %v242
      %v348 = vunpack.c.l.b16 %v243
      %v349 = vunpack.c.h.b16 %v243
      %v350 = vunpack.c.l.b16 %v244
      %v351 = vunpack.c.h.b16 %v244
      %v352 = vunpack.c.l.b16 %v245
      %v353 = vunpack.c.h.b16 %v245
      %v354 = vunpack.c.l.b16 %v246
      %v355 = vunpack.c.h.b16 %v246
      %v356 = vunpack.c.l.b16 %v247
      %v357 = vunpack.c.h.b16 %v247
      %v358 = vunpack.c.l.b16 %v248
      %v359 = vunpack.c.h.b16 %v248
      %v360 = vunpack.c.l.b16 %v249
      %v361 = vunpack.c.h.b16 %v249
      %v362 = vunpack.c.l.b16 %v250
      %v363 = vunpack.c.h.b16 %v250
      %v364 = vunpack.c.l.b16 %v251
      %v365 = vunpack.c.h.b16 %v251
      %v366 = vunpack.c.l.b16 %v252
      %v367 = vunpack.c.h.b16 %v252
      %v368 = vunpack.c.l.b16 %v253
      %v369 = vunpack.c.h.b16 %v253
      %v370 = vunpack.c.l.b16 %v254
      %v371 = vunpack.c.h.b16 %v254
      %v372 = vunpack.c.l.b16 %v255
      %v373 = vunpack.c.h.b16 %v255
      %v374 = vunpack.c.l.b16 %v256
      %v375 = vunpack.c.h.b16 %v256
      %v376 = vunpack.c.l.b16 %v257
      %v377 = vunpack.c.h.b16 %v257
      %v378 = vunpack.c.l.b16 %v258
      %v379 = vunpack.c.h.b16 %v258
      %v380 = vunpack.c.l.b16 %v259
      %v381 = vunpack.c.h.b16 %v259
      %v382 = vunpack.c.l.b16 %v260
      %v383 = vunpack.c.h.b16 %v260
      %v384 = vpack.c.b16 %v322, %v320
      %v385 = vpack.c.b16 %v323, %v321
      %v386 = vpack.c.b16 %v326, %v324
      %v387 = vpack.c.b16 %v327, %v325
      %v388 = vpack.c.b16 %v330, %v328
      %v389 = vpack.c.b16 %v331, %v329
      %v390 = vpack.c.b16 %v334, %v332
      %v391 = vpack.c.b16 %v335, %v333
      %v392 = vpack.c.b16 %v338, %v336
      %v393 = vpack.c.b16 %v339, %v337
      %v394 = vpack.c.b16 %v342, %v340
      %v395 = vpack.c.b16 %v343, %v341
      %v396 = vpack.c.b16 %v346, %v344
      %v397 = vpack.c.b16 %v347, %v345
      %v398 = vpack.c.b16 %v350, %v348
      %v399 = vpack.c.b16 %v351, %v349
      %v400 = vpack.c.b16 %v354, %v352
      %v401 = vpack.c.b16 %v355, %v353
      %v402 = vpack.c.b16 %v358, %v356
      %v403 = vpack.c.b16 %v359, %v357
      %v404 = vpack.c.b16 %v362, %v360
      %v405 = vpack.c.b16 %v363, %v361
      %v406 = vpack.c.b16 %v366, %v364
      %v407 = vpack.c.b16 %v367, %v365
      %v408 = vpack.c.b16 %v370, %v368
      %v409 = vpack.c.b16 %v371, %v369
      %v410 = vpack.c.b16 %v374, %v372
      %v411 = vpack.c.b16 %v375, %v373
      %v412 = vpack.c.b16 %v378, %v376
      %v413 = vpack.c.b16 %v379, %v377
      %v414 = vpack.c.b16 %v382, %v380
      %v415 = vpack.c.b16 %v383, %v381
      %v452 = vunpack.c.l.b16 %v261
      %v453 = vunpack.c.l.b16 %v262
      %v454 = vunpack.c.l.b16 %v263
      %v455 = vunpack.c.l.b16 %v264
      %v456 = vunpack.c.l.b16 %v265
      %v457 = vunpack.c.l.b16 %v266
      %v458 = vunpack.c.l.b16 %v267
      %v459 = vunpack.c.l.b16 %v268
      %v460 = vunpack.c.l.b16 %v269
      %v461 = vunpack.c.l.b16 %v270
      %v462 = vunpack.c.l.b16 %v271
      %v463 = vunpack.c.l.b16 %v272
      %v464 = vunpack.c.l.b16 %v273
      %v465 = vunpack.c.l.b16 %v274
      %v466 = vunpack.c.l.b16 %v275
      %v467 = vunpack.c.l.b16 %v276
      %v468 = vunpack.c.l.b16 %v277
      %v469 = vunpack.c.l.b16 %v278
      %v470 = vunpack.c.l.b16 %v279
      %v471 = vunpack.c.l.b16 %v280
      %v472 = vpack.c.b16 %v453, %v452
      %v473 = vpack.c.b16 %v455, %v454
      %v474 = vpack.c.b16 %v457, %v456
      %v475 = vpack.c.b16 %v459, %v458
      %v476 = vpack.c.b16 %v461, %v460
      %v477 = vpack.c.b16 %v463, %v462
      %v478 = vpack.c.b16 %v465, %v464
      %v479 = vpack.c.b16 %v467, %v466
      %v480 = vpack.c.b16 %v469, %v468
      %v481 = vpack.c.b16 %v471, %v470
      %vm491 = vcmask 203776
      %v493 = vsel %vm491, %v385, 0
      %v496 = vsel %vm491, %v387, 0
      %v499 = vsel %vm491, %v389, 0
      %v502 = vsel %vm491, %v391, 0
      %v505 = vsel %vm491, %v393, 0
      %v508 = vsel %vm491, %v395, 0
      %v511 = vsel %vm491, %v397, 0
      %v514 = vsel %vm491, %v399, 0
      %v517 = vsel %vm491, %v401, 0
      %v520 = vsel %vm491, %v403, 0
      %v523 = vsel %vm491, %v405, 0
      %v526 = vsel %vm491, %v407, 0
      %v529 = vsel %vm491, %v409, 0
      %v532 = vsel %vm491, %v411, 0
      %v535 = vsel %vm491, %v413, 0
      %v538 = vsel %vm491, %v415, 0
      %vm540 = vcmask 1043456
      %vm541 = vcmask 1044480
      %v542 = vsel %vm540, 4294967295, 65535
      %v543 = vsel %vm541, %v542, 0
      %v545 = vand.u32 %v481, %v543
      %547 = vmatprep.subr.bf16.mxu0 0
      %548 = vmatpush1.bf16.msra.mxu0 %v472
      %549 = vmatprep.subr.bf16.mxu0 0
      %550 = vmatpush1.bf16.msra.mxu0 %v473
      %551 = vmatprep.subr.bf16.mxu0 0
      %552 = vmatpush1.bf16.msra.mxu0 %v474
      %553 = vmatprep.subr.bf16.mxu0 0
      %554 = vmatpush1.bf16.msra.mxu0 %v475
      %555 = vmatprep.subr.bf16.mxu0 0
      %556 = vmatpush1.bf16.msra.mxu0 %v476
      %557 = vmatprep.subr.bf16.mxu0 0
      %558 = vmatpush1.bf16.msra.mxu0 %v477
      %559 = vmatprep.subr.bf16.mxu0 0
      %560 = vmatpush1.bf16.msra.mxu0 %v478
      %561 = vmatprep.subr.bf16.mxu0 0
      %562 = vmatpush1.bf16.msra.mxu0 %v479
      %563 = vmatprep.subr.bf16.mxu0 0
      %564 = vmatpush1.bf16.msra.mxu0 %v480
      %565 = vmatprep.subr.bf16.mxu0 0
      %566 = vmatpush1.bf16.msra.mxu0 %v545
      %567 = vmatprep.subr.bf16.mxu0 0
      %568 = vmatpush1.bf16.msra.mxu0 0
      %569 = vmatprep.subr.bf16.mxu0 0
      %570 = vmatpush1.bf16.msra.mxu0 0
      %571 = vmatprep.subr.bf16.mxu0 0
      %572 = vmatpush1.bf16.msra.mxu0 0
      %573 = vmatprep.subr.bf16.mxu0 0
      %574 = vmatpush1.bf16.msra.mxu0 0
      %575 = vmatprep.subr.bf16.mxu0 0
      %576 = vmatpush1.bf16.msra.mxu0 0
      %577 = vmatprep.subr.bf16.mxu0 0
      %578 = vmatpush1.bf16.msra.mxu0 0
      %579 = vmatprep.mubr.bf16.mxu0 %v493
      %580 = vmatmul.mubr.bf16.gmra.mrb[0].mxu0 %v384
      %v581 = vpop.f32.mrb[0].mxu0
      %v582 = vadd.f32 %v286, %v581
      %v583 = vpop.f32.mrb[0].mxu0
      %v584 = vpop.f32.mrb[0].mxu0
      %v585 = vadd.f32 %v286, %v584
      %v586 = vpop.f32.mrb[0].mxu0
      %587 = vmatprep.mubr.bf16.mxu0 %v496
      %588 = vmatmul.mubr.bf16.gmra.mrb[0].mxu0 %v386
      %v589 = vpop.f32.mrb[0].mxu0
      %v590 = vadd.f32 %v286, %v589
      %v591 = vpop.f32.mrb[0].mxu0
      %v592 = vpop.f32.mrb[0].mxu0
      %v593 = vadd.f32 %v286, %v592
      %v594 = vpop.f32.mrb[0].mxu0
      %595 = vmatprep.mubr.bf16.mxu0 %v499
      %596 = vmatmul.mubr.bf16.gmra.mrb[0].mxu0 %v388
      %v597 = vpop.f32.mrb[0].mxu0
      %v598 = vadd.f32 %v286, %v597
      %v599 = vpop.f32.mrb[0].mxu0
      %v600 = vpop.f32.mrb[0].mxu0
      %v601 = vadd.f32 %v286, %v600
      %v602 = vpop.f32.mrb[0].mxu0
      %603 = vmatprep.mubr.bf16.mxu0 %v502
      %604 = vmatmul.mubr.bf16.gmra.mrb[0].mxu0 %v390
      %v605 = vpop.f32.mrb[0].mxu0
      %v606 = vadd.f32 %v286, %v605
      %v607 = vpop.f32.mrb[0].mxu0
      %v608 = vpop.f32.mrb[0].mxu0
      %v609 = vadd.f32 %v286, %v608
      %v610 = vpop.f32.mrb[0].mxu0
      %611 = vmatprep.mubr.bf16.mxu0 %v505
      %612 = vmatmul.mubr.bf16.gmra.mrb[0].mxu0 %v392
      %v613 = vpop.f32.mrb[0].mxu0
      %v614 = vadd.f32 %v286, %v613
      %v615 = vpop.f32.mrb[0].mxu0
      %v616 = vpop.f32.mrb[0].mxu0
      %v617 = vadd.f32 %v286, %v616
      %v618 = vpop.f32.mrb[0].mxu0
      %619 = vmatprep.mubr.bf16.mxu0 %v508
      %620 = vmatmul.mubr.bf16.gmra.mrb[0].mxu0 %v394
      %v621 = vpop.f32.mrb[0].mxu0
      %v622 = vadd.f32 %v286, %v621
      %v623 = vpop.f32.mrb[0].mxu0
      %v624 = vpop.f32.mrb[0].mxu0
      %v625 = vadd.f32 %v286, %v624
      %v626 = vpop.f32.mrb[0].mxu0
      %627 = vmatprep.mubr.bf16.mxu0 %v511
      %628 = vmatmul.mubr.bf16.gmra.mrb[0].mxu0 %v396
      %v629 = vpop.f32.mrb[0].mxu0
      %v630 = vadd.f32 %v286, %v629
      %v631 = vpop.f32.mrb[0].mxu0
      %v632 = vpop.f32.mrb[0].mxu0
      %v633 = vadd.f32 %v286, %v632
      %v634 = vpop.f32.mrb[0].mxu0
      %635 = vmatprep.mubr.bf16.mxu0 %v514
      %636 = vmatmul.mubr.bf16.gmra.mrb[0].mxu0 %v398
      %v637 = vpop.f32.mrb[0].mxu0
      %v638 = vadd.f32 %v286, %v637
      %v639 = vpop.f32.mrb[0].mxu0
      %v640 = vpop.f32.mrb[0].mxu0
      %v641 = vadd.f32 %v286, %v640
      %v642 = vpop.f32.mrb[0].mxu0
      %643 = vmatprep.mubr.bf16.mxu0 %v517
      %644 = vmatmul.mubr.bf16.gmra.mrb[0].mxu0 %v400
      %v645 = vpop.f32.mrb[0].mxu0
      %v646 = vadd.f32 %v286, %v645
      %v647 = vpop.f32.mrb[0].mxu0
      %v648 = vpop.f32.mrb[0].mxu0
      %v649 = vadd.f32 %v286, %v648
      %v650 = vpop.f32.mrb[0].mxu0
      %651 = vmatprep.mubr.bf16.mxu0 %v520
      %652 = vmatmul.mubr.bf16.gmra.mrb[0].mxu0 %v402
      %v653 = vpop.f32.mrb[0].mxu0
      %v654 = vadd.f32 %v286, %v653
      %v655 = vpop.f32.mrb[0].mxu0
      %v656 = vpop.f32.mrb[0].mxu0
      %v657 = vadd.f32 %v286, %v656
      %v658 = vpop.f32.mrb[0].mxu0
      %659 = vmatprep.mubr.bf16.mxu0 %v523
      %660 = vmatmul.mubr.bf16.gmra.mrb[0].mxu0 %v404
      %v661 = vpop.f32.mrb[0].mxu0
      %v662 = vadd.f32 %v286, %v661
      %v663 = vpop.f32.mrb[0].mxu0
      %v664 = vpop.f32.mrb[0].mxu0
      %v665 = vadd.f32 %v286, %v664
      %v666 = vpop.f32.mrb[0].mxu0
      %667 = vmatprep.mubr.bf16.mxu0 %v526
      %668 = vmatmul.mubr.bf16.gmra.mrb[0].mxu0 %v406
      %v669 = vpop.f32.mrb[0].mxu0
      %v670 = vadd.f32 %v286, %v669
      %v671 = vpop.f32.mrb[0].mxu0
      %v672 = vpop.f32.mrb[0].mxu0
      %v673 = vadd.f32 %v286, %v672
      %v674 = vpop.f32.mrb[0].mxu0
      %675 = vmatprep.mubr.bf16.mxu0 %v529
      %676 = vmatmul.mubr.bf16.gmra.mrb[0].mxu0 %v408
      %v677 = vpop.f32.mrb[0].mxu0
      %v678 = vadd.f32 %v286, %v677
      %v679 = vpop.f32.mrb[0].mxu0
      %v680 = vpop.f32.mrb[0].mxu0
      %v681 = vadd.f32 %v286, %v680
      %v682 = vpop.f32.mrb[0].mxu0
      %683 = vmatprep.mubr.bf16.mxu0 %v532
      %684 = vmatmul.mubr.bf16.gmra.mrb[0].mxu0 %v410
      %v685 = vpop.f32.mrb[0].mxu0
      %v686 = vadd.f32 %v286, %v685
      %v687 = vpop.f32.mrb[0].mxu0
      %v688 = vpop.f32.mrb[0].mxu0
      %v689 = vadd.f32 %v286, %v688
      %v690 = vpop.f32.mrb[0].mxu0
      %691 = vmatprep.mubr.bf16.mxu0 %v535
      %692 = vmatmul.mubr.bf16.gmra.mrb[0].mxu0 %v412
      %v693 = vpop.f32.mrb[0].mxu0
      %v694 = vadd.f32 %v286, %v693
      %v695 = vpop.f32.mrb[0].mxu0
      %v696 = vpop.f32.mrb[0].mxu0
      %v697 = vadd.f32 %v286, %v696
      %v698 = vpop.f32.mrb[0].mxu0
      %699 = vmatprep.mubr.bf16.mxu0 %v538
      %700 = vmatmul.mubr.bf16.gmra.mrb[0].mxu0 %v414
      %v701 = vpop.f32.mrb[0].mxu0
      %v702 = vadd.f32 %v286, %v701
      %v703 = vpop.f32.mrb[0].mxu0
      %v704 = vpop.f32.mrb[0].mxu0
      %v705 = vadd.f32 %v286, %v704
      %v706 = vpop.f32.mrb[0].mxu0
      %707 = vdwg.mxu0
      %vm708 = vcmask 23552
      %709 = vst.msk [vmem:[%s226] sm:$0xff] %vm708, %v582
      %710 = vst.msk [vmem:[%s226 + $0x8] sm:$0xff] %vm708, %v585
      %711 = vst.msk [vmem:[%s226 + $0x10] sm:$0xff] %vm708, %v590
      %712 = vst.msk [vmem:[%s226 + $0x18] sm:$0xff] %vm708, %v593
      %713 = vst.msk [vmem:[%s226 + $0x20] sm:$0xff] %vm708, %v598
      %714 = vst.msk [vmem:[%s226 + $0x28] sm:$0xff] %vm708, %v601
      %715 = vst.msk [vmem:[%s226 + $0x30] sm:$0xff] %vm708, %v606
      %716 = vst.msk [vmem:[%s226 + $0x38] sm:$0xff] %vm708, %v609
      %717 = vst.msk [vmem:[%s226 + $0x40] sm:$0xff] %vm708, %v614
      %718 = vst.msk [vmem:[%s226 + $0x48] sm:$0xff] %vm708, %v617
      %719 = vst.msk [vmem:[%s226 + $0x50] sm:$0xff] %vm708, %v622
      %720 = vst.msk [vmem:[%s226 + $0x58] sm:$0xff] %vm708, %v625
      %721 = vst.msk [vmem:[%s226 + $0x60] sm:$0xff] %vm708, %v630
      %722 = vst.msk [vmem:[%s226 + $0x68] sm:$0xff] %vm708, %v633
      %723 = vst.msk [vmem:[%s226 + $0x70] sm:$0xff] %vm708, %v638
      %724 = vst.msk [vmem:[%s226 + $0x78] sm:$0xff] %vm708, %v641
      %725 = vst.msk [vmem:[%s226 + $0x80] sm:$0xff] %vm708, %v646
      %726 = vst.msk [vmem:[%s226 + $0x88] sm:$0xff] %vm708, %v649
      %727 = vst.msk [vmem:[%s226 + $0x90] sm:$0xff] %vm708, %v654
      %728 = vst.msk [vmem:[%s226 + $0x98] sm:$0xff] %vm708, %v657
      %729 = vst.msk [vmem:[%s226 + $0xa0] sm:$0xff] %vm708, %v662
      %730 = vst.msk [vmem:[%s226 + $0xa8] sm:$0xff] %vm708, %v665
      %731 = vst.msk [vmem:[%s226 + $0xb0] sm:$0xff] %vm708, %v670
      %732 = vst.msk [vmem:[%s226 + $0xb8] sm:$0xff] %vm708, %v673
      %733 = vst.msk [vmem:[%s226 + $0xc0] sm:$0xff] %vm708, %v678
      %734 = vst.msk [vmem:[%s226 + $0xc8] sm:$0xff] %vm708, %v681
      %735 = vst.msk [vmem:[%s226 + $0xd0] sm:$0xff] %vm708, %v686
      %736 = vst.msk [vmem:[%s226 + $0xd8] sm:$0xff] %vm708, %v689
      %737 = vst.msk [vmem:[%s226 + $0xe0] sm:$0xff] %vm708, %v694
      %738 = vst.msk [vmem:[%s226 + $0xe8] sm:$0xff] %vm708, %v697
      %739 = vst.msk [vmem:[%s226 + $0xf0] sm:$0xff] %vm708, %v702
      %740 = vst.msk [vmem:[%s226 + $0xf8] sm:$0xff] %vm708, %v705
      %s741 = smul.u32 32, %s18
      %p742 = scmp.lt.s32.totalorder %s741, 63
      %s743 = scalar_select %p742, %s741, 63
      %p744 = scmp.lt.s32.totalorder %s19, 0
      %s745 = scalar_select %p744, %s19, 0
      %s746 = sadd.s32 %s745, %s743
      %s747 = smul.addr %s746, 8
      %s748 = scalar_lea.vmem %s3, %s747
      // Predicated region
      $region33: #{dae_forward.19} parent=31 // pred_check
        %p749 = pneg %p124
      $region34: #{dae_forward.19} parent=31 // pred_check_branch
        %751 = sbr.rel (%p749) target = $region36
      $region35: #{dae_forward.19} parent=31 // pred_region
        %s752 = smul.u32 32, %s18
      $region36: #{dae_forward.19} parent=31 // pred_fallthru
        _
    $region32: #{dae_forward.19} parent=5 // pred_fallthru
      _
    %p753 = scmp.le.s32.totalorder 2, %s9
    // Predicated region
    $region37: #{dae_forward.19} parent=5 // pred_check
      %p754 = pneg %p753
    $region38: #{dae_forward.19} parent=5 // pred_check_branch
      %756 = sbr.rel (%p754) target = $region40
    $region39: #{dae_forward.19} parent=5 // pred_region
      %s757 = ssub.s32 %s9, 2
      // Predicated region
      $region41: #{dae_forward.19} parent=39 // pred_check
        %p758 = pneg %p130
      $region42: #{dae_forward.19} parent=39 // pred_check_branch
        %760 = sbr.rel (%p758) target = $region44
      $region43: #{dae_forward.19} parent=39 // pred_region
        %s761 = smul.u32 32, %s20
        %p762 = scmp.lt.s32.totalorder %s761, 63
        %s763 = scalar_select %p762, %s761, 63
        %p764 = scmp.lt.s32.totalorder %s21, 0
        %s765 = scalar_select %p764, %s21, 0
        %s766 = sadd.s32 %s765, %s763
        %s767 = smul.addr %s766, 8
        %s768 = scalar_lea.vmem %s3, %s767
      $region44: #{dae_forward.19} parent=39 // pred_fallthru
        _
    $region40: #{dae_forward.19} parent=5 // pred_fallthru
      _
  $region6: #{dae_forward.19} parent=0 // loop_footer
    %s13 = sadd.s32 1, %s9
  $region7: #{dae_forward.19} parent=0 // loop_footer_branch
    %8 = sbr.rel target = $region3
  $region8: #{dae_forward.19} parent=0 // loop_exit
    _

</llo_original>
